<compile_context>
chip_gen: v6e
topology: v6e:2x2x1
jax: 0.10.0
libtpu: 0.0.40
codegen_flags: <defaults>
</compile_context>

<pallas_src>
import functools

import jax
import jax.numpy as jnp
from jax import lax
from jax.experimental import pallas as pl
from jax.experimental.pallas import tpu as pltpu


# ---------------------------------------------------------------------------
# Kernels
# ---------------------------------------------------------------------------
def _zero_pad_into(xp_ref, x_ref, *, B, H, W, Cin):
    """Write the b-image NHWC bf16 block into the interior of the padded slab
    and zero only the 1-pixel halo ring (2 row slabs + 2 column strips)."""
    z_row = jnp.zeros((B, 1, W + 2, Cin), jnp.bfloat16)
    z_col = jnp.zeros((B, H, 1, Cin), jnp.bfloat16)
    xp_ref[:, 0:1, :, :] = z_row
    xp_ref[:, H + 1:H + 2, :, :] = z_row
    xp_ref[:, 1:H + 1, 0:1, :] = z_col
    xp_ref[:, 1:H + 1, W + 1:W + 2, :] = z_col
    xp_ref[:, 1:H + 1, 1:W + 1, :] = x_ref[...]


def _repvgg_kernel_im2col(x_ref, w_ref, b_ref, o_ref, xp_ref, col_ref,
                          *, B, H, W, Cin):
    """Small-Cin path: deep-K im2col + one (B*H*W, 9*Cin) @ (9*Cin, tCo)."""
    j = pl.program_id(1)

    # Padded slab + im2col are built once per batch block (j == 0) and reused
    # by every Cout tile (the Cout axis is the innermost, sequential axis).
    @pl.when(j == 0)
    def _():
        _zero_pad_into(xp_ref, x_ref, B=B, H=H, W=W, Cin=Cin)
        for dy in range(3):
            for dx in range(3):
                t = dy * 3 + dx
                # Lane-dense write into the last dim; no per-tap reshape/cast.
                col_ref[:, :, :, t * Cin:(t + 1) * Cin] = \
                    xp_ref[:, dy:dy + H, dx:dx + W, :]

    col = col_ref[...].reshape(B * H * W, 9 * Cin)
    acc = jnp.dot(col, w_ref[...], preferred_element_type=jnp.float32)
    o_ref[...] = jnp.maximum(acc + b_ref[...], 0.0).astype(o_ref.dtype)


def _repvgg_kernel_direct(x_ref, w_ref, b_ref, o_ref, xp_ref,
                          *, B, H, W, Cin):
    """Large-Cin path: no im2col; accumulate 9 MXU matmuls in f32 directly
    from shifted views of the padded slab (K = Cin already fills the MXU)."""
    j = pl.program_id(1)
    t_cout = w_ref.shape[1]

    @pl.when(j == 0)
    def _():
        _zero_pad_into(xp_ref, x_ref, B=B, H=H, W=W, Cin=Cin)

    acc = jnp.zeros((B * H * W, t_cout), jnp.float32)
    for dy in range(3):
        for dx in range(3):
            t = dy * 3 + dx
            patch = xp_ref[:, dy:dy + H, dx:dx + W, :].reshape(B * H * W, Cin)
            acc = acc + jnp.dot(patch, w_ref[t * Cin:(t + 1) * Cin, :],
                                preferred_element_type=jnp.float32)
    o_ref[...] = jnp.maximum(acc + b_ref[...], 0.0).astype(o_ref.dtype)


# ---------------------------------------------------------------------------
# Tiling / VMEM budgeting
# ---------------------------------------------------------------------------
def _vmem_budget_bytes():
    try:
        cap = int(pltpu.get_tpu_info().vmem_capacity_bytes)
    except Exception:
        cap = 64 * 2 ** 20
    if cap <= 64 * 2 ** 20:
        # 64-MiB parts (v7x-class): leave headroom for compiler scratch/sems.
        return 52 * 2 ** 20
    # 128-MiB parts (v5e/v6e): use most of the physical VMEM.
    return min(100 * 2 ** 20, int(cap * 0.8))


def _vmem_estimate(b, H, W, Cin, t_cout, use_im2col, out_itemsize):
    m = b * H * W
    v = (2 * m * Cin * 2                      # x blocks (bf16), double-buffered
         + 2 * 9 * Cin * t_cout * 2           # weight blocks (bf16), x2
         + 2 * t_cout * 4                     # bias blocks (f32), x2
         + 2 * m * t_cout * out_itemsize      # output blocks, x2
         + b * (H + 2) * (W + 2) * Cin * 2    # padded slab scratch (bf16)
         + m * t_cout * 4)                    # f32 matmul accumulator
    if use_im2col:
        v += m * 9 * Cin * 2                  # im2col scratch (bf16)
    return v


def _pick_tiling(N, H, W, Cin, Cout_p, budget, out_itemsize, use_im2col):
    def est(b, tc):
        return _vmem_estimate(b, H, W, Cin, tc, use_im2col, out_itemsize)

    # Cout tile: prefer full weight residency (n_cout == 1); otherwise the
    # largest multiple of 128 dividing Cout_p that fits with b = 1.
    cands = [t for t in range(Cout_p, 127, -128) if Cout_p % t == 0]
    t_cout = cands[-1]
    for t in cands:
        if est(1, t) <= budget:
            t_cout = t
            break

    # Batch block: pack images into the matmul M dim.  Prefer the smallest
    # divisor of N with M = b*H*W >= 512 that fits; the (8,128) store tiling
    # requires b == N or M % 8 == 0.
    divs = [d for d in range(1, N + 1) if N % d == 0]
    ok = [d for d in divs
          if (d == N or (d * H * W) % 8 == 0) and est(d, t_cout) <= budget]
    if not ok:
        ok = [1]
    big = [d for d in ok if d * H * W >= 512]
    b = min(big) if big else max(ok)
    return b, t_cout


# ---------------------------------------------------------------------------
# Wrapper
# ---------------------------------------------------------------------------
def _bn_scale_shift(gamma, beta, mean, var, eps=1e-5):
    scale = gamma / jnp.sqrt(var + eps)
    shift = beta - mean * scale
    return scale, shift


def repvgg_block_pallas(x_nchw, params, *, out_dtype=jnp.float32):
    """RepVGGBlock forward (stride=1, padding=1, groups=1, non-deploy)."""
    N, Cin, H, W = x_nchw.shape
    Cout = params["w3"].shape[0]
    has_identity = (Cin == Cout)

    # ---- fold 3x3-BN + 1x1-BN + identity-BN into one 3x3 conv + bias -------
    s3, t3 = _bn_scale_shift(*params["bn3"])
    s1, t1 = _bn_scale_shift(*params["bn1"])
    # (Cout, Cin, 3, 3) -> (3, 3, Cin, Cout) -> (9, Cin, Cout), BN folded.
    w_eff = jnp.transpose(params["w3"], (2, 3, 1, 0)).reshape(9, Cin, Cout)
    w_eff = w_eff * s3[None, None, :]
    w1 = jnp.transpose(params["w1"][:, :, 0, 0], (1, 0)) * s1[None, :]
    w_eff = w_eff.at[4].add(w1)                       # 1x1 -> center tap
    bias = t3 + t1
    if has_identity:
        sid, tid = _bn_scale_shift(*params["bnid"])
        w_eff = w_eff.at[4].add(jnp.eye(Cin, dtype=jnp.float32) * sid[None, :])
        bias = bias + tid

    # ---- pad Cout to a multiple of 128 for lane-dense (unmasked) stores ----
    Cout_p = max(128, ((Cout + 127) // 128) * 128)
    if Cout_p != Cout:
        w_eff = jnp.pad(w_eff, ((0, 0), (0, 0), (0, Cout_p - Cout)))
        bias = jnp.pad(bias, ((0, Cout_p - Cout),))
    w_flat = w_eff.reshape(9 * Cin, Cout_p).astype(jnp.bfloat16)
    bias = bias.reshape(1, Cout_p).astype(jnp.float32)

    # NCHW -> NHWC, bf16 activations (f32 accumulation inside the kernel).
    x = jnp.transpose(x_nchw, (0, 2, 3, 1)).astype(jnp.bfloat16)

    # ---- tiling + real VMEM budget -----------------------------------------
    out_itemsize = jnp.dtype(out_dtype).itemsize
    use_im2col = Cin < 128            # large Cin -> direct 9-matmul path
    budget = _vmem_budget_bytes()
    b, t_cout = _pick_tiling(N, H, W, Cin, Cout_p, budget, out_itemsize,
                             use_im2col)
    n_cout = Cout_p // t_cout
    grid = (N // b, n_cout)

    est = _vmem_estimate(b, H, W, Cin, t_cout, use_im2col, out_itemsize)
    vmem_limit = int(min(budget, max(32 * 2 ** 20, est + est // 4 + (2 << 20))))

    w_fetches = 1 if n_cout == 1 else grid[0] * grid[1]
    cost = pl.CostEstimate(
        flops=2 * N * H * W * 9 * Cin * Cout_p,
        transcendentals=0,
        bytes_accessed=int(x.size * 2 + w_fetches * w_flat.size * 2
                           + bias.size * 4
                           + N * H * W * Cout_p * out_itemsize))

    if use_im2col:
        kernel = functools.partial(_repvgg_kernel_im2col, B=b, H=H, W=W, Cin=Cin)
        scratch = [pltpu.VMEM((b, H + 2, W + 2, Cin), jnp.bfloat16),
                   pltpu.VMEM((b, H, W, 9 * Cin), jnp.bfloat16)]
    else:
        kernel = functools.partial(_repvgg_kernel_direct, B=b, H=H, W=W, Cin=Cin)
        scratch = [pltpu.VMEM((b, H + 2, W + 2, Cin), jnp.bfloat16)]

    # The x block index only changes with the outer batch-block axis; when Cout
    # is tiled it can be single-buffered with negligible pipelining loss.
    if n_cout > 1:
        x_spec = pl.BlockSpec((b, H, W, Cin), lambda n, j: (n, 0, 0, 0),
                              pipeline_mode=pl.Buffered(1))
    else:
        x_spec = pl.BlockSpec((b, H, W, Cin), lambda n, j: (n, 0, 0, 0))

    out_flat = pl.pallas_call(
        kernel,
        out_shape=jax.ShapeDtypeStruct((N * H * W, Cout_p), out_dtype),
        grid_spec=pltpu.PrefetchScalarGridSpec(
            num_scalar_prefetch=0,
            grid=grid,
            in_specs=[
                x_spec,
                pl.BlockSpec((9 * Cin, t_cout), lambda n, j: (0, j)),
                pl.BlockSpec((1, t_cout), lambda n, j: (0, j)),
            ],
            out_specs=pl.BlockSpec((b * H * W, t_cout), lambda n, j: (n, j)),
            scratch_shapes=scratch),
        compiler_params=pltpu.CompilerParams(
            dimension_semantics=("parallel", "arbitrary"),
            vmem_limit_bytes=vmem_limit),
        cost_estimate=cost,
    )(x, w_flat, bias)

    out_nhwc = out_flat.reshape(N, H, W, Cout_p)[..., :Cout]
    return jnp.transpose(out_nhwc, (0, 3, 1, 2))   # back to NCHW


# ---------------------------------------------------------------------------
# Reference + test
# ---------------------------------------------------------------------------
def repvgg_block_reference(x_nchw, params):
    """Pure-JAX reference (lax convs, f32) for correctness checking."""
    Cin = x_nchw.shape[1]
    Cout = params["w3"].shape[0]

    def bn(y, p):
        g, b, m, v = p
        g = g.reshape(1, -1, 1, 1); b = b.reshape(1, -1, 1, 1)
        m = m.reshape(1, -1, 1, 1); v = v.reshape(1, -1, 1, 1)
        return (y - m) / jnp.sqrt(v + 1e-5) * g + b

    dn = ("NCHW", "OIHW", "NCHW")
    dense = lax.conv_general_dilated(x_nchw, params["w3"], (1, 1),
                                     ((1, 1), (1, 1)), dimension_numbers=dn)
    one = lax.conv_general_dilated(x_nchw, params["w1"], (1, 1),
                                   ((0, 0), (0, 0)), dimension_numbers=dn)
    out = bn(dense, params["bn3"]) + bn(one, params["bn1"])
    if Cin == Cout:
        out = out + bn(x_nchw, params["bnid"])
    return jnp.maximum(out, 0.0)


def make_params(key, in_channels, out_channels):
    ks = jax.random.split(key, 16)

    def bn_params(k0, k1, k2, k3, c):
        gamma = jax.random.uniform(k0, (c,), jnp.float32, 0.5, 1.5)
        beta = 0.1 * jax.random.normal(k1, (c,), jnp.float32)
        mean = 0.1 * jax.random.normal(k2, (c,), jnp.float32)
        var = jax.random.uniform(k3, (c,), jnp.float32, 0.5, 1.5)
        return (gamma, beta, mean, var)

    params = {
        "w3": 0.1 * jax.random.normal(ks[0], (out_channels, in_channels, 3, 3),
                                      jnp.float32),
        "w1": 0.1 * jax.random.normal(ks[1], (out_channels, in_channels, 1, 1),
                                      jnp.float32),
        "bn3": bn_params(ks[2], ks[3], ks[4], ks[5], out_channels),
        "bn1": bn_params(ks[6], ks[7], ks[8], ks[9], out_channels),
    }
    if in_channels == out_channels:
        params["bnid"] = bn_params(ks[10], ks[11], ks[12], ks[13], in_channels)
    return params


if __name__ == "__main__":
    key = jax.random.PRNGKey(0)
    k_x, k_p = jax.random.split(key)

    N, C, H, W = 2, 4, 16, 16   # in_channels == out_channels -> identity branch
    x = jax.random.normal(k_x, (N, C, H, W), jnp.float32)
    params = make_params(k_p, C, C)

    out = repvgg_block_pallas(x, params)
    out = jax.block_until_ready(out)

    ref = repvgg_block_reference(x, params)
    assert out.shape == ref.shape == (N, C, H, W)

    err = float(jnp.max(jnp.abs(out - ref)))
    scale = float(jnp.max(jnp.abs(ref))) + 1e-6
    # bf16 MXU inputs (f32 accumulate): tolerance loosened vs. the f32 reference.
    assert err / scale < 3e-2, f"mismatch vs reference: abs={err:.3e} rel={err / scale:.3e}"

    print("KERNEL_OK")
</pallas_src>

<mosaic_0001>
module attributes {stable_mosaic.version = 11 : i64} {
  func.func @_repvgg_kernel_im2col(%arg0: i32, %arg1: i32, %arg2: memref<2x16x16x4xbf16, #tpu.memory_space<vmem>>, %arg3: memref<36x128xbf16, #tpu.memory_space<vmem>>, %arg4: memref<1x128xf32, #tpu.memory_space<vmem>>, %arg5: memref<512x128xf32, #tpu.memory_space<vmem>>, %arg6: memref<2x18x18x4xbf16, #tpu.memory_space<vmem>>, %arg7: memref<2x16x16x36xbf16, #tpu.memory_space<vmem>>) attributes {dimension_semantics = [#tpu.dimension_semantics<parallel>, #tpu.dimension_semantics<arbitrary>], iteration_bounds = array<i64: 1, 1>, scalar_prefetch = 0 : i64, scratch_operands = 2 : i64, tpu.core_type = #tpu.core_type<tc>, window_params = [{transform_indices = @transform_0, window_bounds = array<i64: 2, 16, 16, 4>}, {transform_indices = @transform_1, window_bounds = array<i64: 36, 128>}, {transform_indices = @transform_2, window_bounds = array<i64: 1, 128>}, {transform_indices = @transform_3, window_bounds = array<i64: 512, 128>}]} {
    %c0_i32 = arith.constant 0 : i32
    %0 = arith.cmpi eq, %arg1, %c0_i32 : i32
    %1 = arith.extui %0 : i1 to i32
    %c0_i32_0 = arith.constant 0 : i32
    %2 = arith.cmpi ne, %1, %c0_i32_0 : i32
    scf.if %2 {
      %cst_11 = arith.constant 0.000000e+00 : bf16
      %13 = vector.broadcast %cst_11 : bf16 to vector<2x1x18x4xbf16>
      %cst_12 = arith.constant 0.000000e+00 : bf16
      %14 = vector.broadcast %cst_12 : bf16 to vector<2x16x1x4xbf16>
      %c0_13 = arith.constant 0 : index
      %c0_14 = arith.constant 0 : index
      %c0_15 = arith.constant 0 : index
      %c0_16 = arith.constant 0 : index
      %15 = vector.load %arg6[%c0_13, %c0_14, %c0_15, %c0_16] : memref<2x18x18x4xbf16, #tpu.memory_space<vmem>>, vector<2x1x18x4xbf16>
      tpu.vector_store %arg6[%c0_13, %c0_14, %c0_15, %c0_16], %13 {strides = array<i32>} : memref<2x18x18x4xbf16, #tpu.memory_space<vmem>>, vector<2x1x18x4xbf16>,
      %c0_17 = arith.constant 0 : index
      %c17 = arith.constant 17 : index
      %c0_18 = arith.constant 0 : index
      %c0_19 = arith.constant 0 : index
      %16 = vector.load %arg6[%c0_17, %c17, %c0_18, %c0_19] : memref<2x18x18x4xbf16, #tpu.memory_space<vmem>>, vector<2x1x18x4xbf16>
      tpu.vector_store %arg6[%c0_17, %c17, %c0_18, %c0_19], %13 {strides = array<i32>} : memref<2x18x18x4xbf16, #tpu.memory_space<vmem>>, vector<2x1x18x4xbf16>,
      %c0_20 = arith.constant 0 : index
      %c1 = arith.constant 1 : index
      %c0_21 = arith.constant 0 : index
      %c0_22 = arith.constant 0 : index
      %17 = vector.load %arg6[%c0_20, %c1, %c0_21, %c0_22] : memref<2x18x18x4xbf16, #tpu.memory_space<vmem>>, vector<2x16x1x4xbf16>
      tpu.vector_store %arg6[%c0_20, %c1, %c0_21, %c0_22], %14 {strides = array<i32>} : memref<2x18x18x4xbf16, #tpu.memory_space<vmem>>, vector<2x16x1x4xbf16>,
      %c0_23 = arith.constant 0 : index
      %c1_24 = arith.constant 1 : index
      %c17_25 = arith.constant 17 : index
      %c0_26 = arith.constant 0 : index
      %18 = vector.load %arg6[%c0_23, %c1_24, %c17_25, %c0_26] : memref<2x18x18x4xbf16, #tpu.memory_space<vmem>>, vector<2x16x1x4xbf16>
      tpu.vector_store %arg6[%c0_23, %c1_24, %c17_25, %c0_26], %14 {strides = array<i32>} : memref<2x18x18x4xbf16, #tpu.memory_space<vmem>>, vector<2x16x1x4xbf16>,
      %c0_27 = arith.constant 0 : index
      %c0_28 = arith.constant 0 : index
      %c0_29 = arith.constant 0 : index
      %c0_30 = arith.constant 0 : index
      %19 = vector.load %arg2[%c0_27, %c0_28, %c0_29, %c0_30] : memref<2x16x16x4xbf16, #tpu.memory_space<vmem>>, vector<2x16x16x4xbf16>
      %c0_31 = arith.constant 0 : index
      %c1_32 = arith.constant 1 : index
      %c1_33 = arith.constant 1 : index
      %c0_34 = arith.constant 0 : index
      %20 = vector.load %arg6[%c0_31, %c1_32, %c1_33, %c0_34] : memref<2x18x18x4xbf16, #tpu.memory_space<vmem>>, vector<2x16x16x4xbf16>
      tpu.vector_store %arg6[%c0_31, %c1_32, %c1_33, %c0_34], %19 {strides = array<i32>} : memref<2x18x18x4xbf16, #tpu.memory_space<vmem>>, vector<2x16x16x4xbf16>,
      %c0_35 = arith.constant 0 : index
      %c0_36 = arith.constant 0 : index
      %c0_37 = arith.constant 0 : index
      %c0_38 = arith.constant 0 : index
      %21 = vector.load %arg6[%c0_35, %c0_36, %c0_37, %c0_38] : memref<2x18x18x4xbf16, #tpu.memory_space<vmem>>, vector<2x16x16x4xbf16>
      %c0_39 = arith.constant 0 : index
      %c0_40 = arith.constant 0 : index
      %c0_41 = arith.constant 0 : index
      %c0_42 = arith.constant 0 : index
      %22 = vector.load %arg7[%c0_39, %c0_40, %c0_41, %c0_42] : memref<2x16x16x36xbf16, #tpu.memory_space<vmem>>, vector<2x16x16x4xbf16>
      tpu.vector_store %arg7[%c0_39, %c0_40, %c0_41, %c0_42], %21 {strides = array<i32>} : memref<2x16x16x36xbf16, #tpu.memory_space<vmem>>, vector<2x16x16x4xbf16>,
      %c0_43 = arith.constant 0 : index
      %c0_44 = arith.constant 0 : index
      %c1_45 = arith.constant 1 : index
      %c0_46 = arith.constant 0 : index
      %23 = vector.load %arg6[%c0_43, %c0_44, %c1_45, %c0_46] : memref<2x18x18x4xbf16, #tpu.memory_space<vmem>>, vector<2x16x16x4xbf16>
      %c0_47 = arith.constant 0 : index
      %c0_48 = arith.constant 0 : index
      %c0_49 = arith.constant 0 : index
      %c4 = arith.constant 4 : index
      %24 = vector.load %arg7[%c0_47, %c0_48, %c0_49, %c4] : memref<2x16x16x36xbf16, #tpu.memory_space<vmem>>, vector<2x16x16x4xbf16>
      tpu.vector_store %arg7[%c0_47, %c0_48, %c0_49, %c4], %23 {strides = array<i32>} : memref<2x16x16x36xbf16, #tpu.memory_space<vmem>>, vector<2x16x16x4xbf16>,
      %c0_50 = arith.constant 0 : index
      %c0_51 = arith.constant 0 : index
      %c2 = arith.constant 2 : index
      %c0_52 = arith.constant 0 : index
      %25 = vector.load %arg6[%c0_50, %c0_51, %c2, %c0_52] : memref<2x18x18x4xbf16, #tpu.memory_space<vmem>>, vector<2x16x16x4xbf16>
      %c0_53 = arith.constant 0 : index
      %c0_54 = arith.constant 0 : index
      %c0_55 = arith.constant 0 : index
      %c8 = arith.constant 8 : index
      %26 = vector.load %arg7[%c0_53, %c0_54, %c0_55, %c8] : memref<2x16x16x36xbf16, #tpu.memory_space<vmem>>, vector<2x16x16x4xbf16>
      tpu.vector_store %arg7[%c0_53, %c0_54, %c0_55, %c8], %25 {strides = array<i32>} : memref<2x16x16x36xbf16, #tpu.memory_space<vmem>>, vector<2x16x16x4xbf16>,
      %c0_56 = arith.constant 0 : index
      %c1_57 = arith.constant 1 : index
      %c0_58 = arith.constant 0 : index
      %c0_59 = arith.constant 0 : index
      %27 = vector.load %arg6[%c0_56, %c1_57, %c0_58, %c0_59] : memref<2x18x18x4xbf16, #tpu.memory_space<vmem>>, vector<2x16x16x4xbf16>
      %c0_60 = arith.constant 0 : index
      %c0_61 = arith.constant 0 : index
      %c0_62 = arith.constant 0 : index
      %c12 = arith.constant 12 : index
      %28 = vector.load %arg7[%c0_60, %c0_61, %c0_62, %c12] : memref<2x16x16x36xbf16, #tpu.memory_space<vmem>>, vector<2x16x16x4xbf16>
      tpu.vector_store %arg7[%c0_60, %c0_61, %c0_62, %c12], %27 {strides = array<i32>} : memref<2x16x16x36xbf16, #tpu.memory_space<vmem>>, vector<2x16x16x4xbf16>,
      %c0_63 = arith.constant 0 : index
      %c1_64 = arith.constant 1 : index
      %c1_65 = arith.constant 1 : index
      %c0_66 = arith.constant 0 : index
      %29 = vector.load %arg6[%c0_63, %c1_64, %c1_65, %c0_66] : memref<2x18x18x4xbf16, #tpu.memory_space<vmem>>, vector<2x16x16x4xbf16>
      %c0_67 = arith.constant 0 : index
      %c0_68 = arith.constant 0 : index
      %c0_69 = arith.constant 0 : index
      %c16 = arith.constant 16 : index
      %30 = vector.load %arg7[%c0_67, %c0_68, %c0_69, %c16] : memref<2x16x16x36xbf16, #tpu.memory_space<vmem>>, vector<2x16x16x4xbf16>
      tpu.vector_store %arg7[%c0_67, %c0_68, %c0_69, %c16], %29 {strides = array<i32>} : memref<2x16x16x36xbf16, #tpu.memory_space<vmem>>, vector<2x16x16x4xbf16>,
      %c0_70 = arith.constant 0 : index
      %c1_71 = arith.constant 1 : index
      %c2_72 = arith.constant 2 : index
      %c0_73 = arith.constant 0 : index
      %31 = vector.load %arg6[%c0_70, %c1_71, %c2_72, %c0_73] : memref<2x18x18x4xbf16, #tpu.memory_space<vmem>>, vector<2x16x16x4xbf16>
      %c0_74 = arith.constant 0 : index
      %c0_75 = arith.constant 0 : index
      %c0_76 = arith.constant 0 : index
      %c20 = arith.constant 20 : index
      %32 = vector.load %arg7[%c0_74, %c0_75, %c0_76, %c20] : memref<2x16x16x36xbf16, #tpu.memory_space<vmem>>, vector<2x16x16x4xbf16>
      tpu.vector_store %arg7[%c0_74, %c0_75, %c0_76, %c20], %31 {strides = array<i32>} : memref<2x16x16x36xbf16, #tpu.memory_space<vmem>>, vector<2x16x16x4xbf16>,
      %c0_77 = arith.constant 0 : index
      %c2_78 = arith.constant 2 : index
      %c0_79 = arith.constant 0 : index
      %c0_80 = arith.constant 0 : index
      %33 = vector.load %arg6[%c0_77, %c2_78, %c0_79, %c0_80] : memref<2x18x18x4xbf16, #tpu.memory_space<vmem>>, vector<2x16x16x4xbf16>
      %c0_81 = arith.constant 0 : index
      %c0_82 = arith.constant 0 : index
      %c0_83 = arith.constant 0 : index
      %c24 = arith.constant 24 : index
      %34 = vector.load %arg7[%c0_81, %c0_82, %c0_83, %c24] : memref<2x16x16x36xbf16, #tpu.memory_space<vmem>>, vector<2x16x16x4xbf16>
      tpu.vector_store %arg7[%c0_81, %c0_82, %c0_83, %c24], %33 {strides = array<i32>} : memref<2x16x16x36xbf16, #tpu.memory_space<vmem>>, vector<2x16x16x4xbf16>,
      %c0_84 = arith.constant 0 : index
      %c2_85 = arith.constant 2 : index
      %c1_86 = arith.constant 1 : index
      %c0_87 = arith.constant 0 : index
      %35 = vector.load %arg6[%c0_84, %c2_85, %c1_86, %c0_87] : memref<2x18x18x4xbf16, #tpu.memory_space<vmem>>, vector<2x16x16x4xbf16>
      %c0_88 = arith.constant 0 : index
      %c0_89 = arith.constant 0 : index
      %c0_90 = arith.constant 0 : index
      %c28 = arith.constant 28 : index
      %36 = vector.load %arg7[%c0_88, %c0_89, %c0_90, %c28] : memref<2x16x16x36xbf16, #tpu.memory_space<vmem>>, vector<2x16x16x4xbf16>
      tpu.vector_store %arg7[%c0_88, %c0_89, %c0_90, %c28], %35 {strides = array<i32>} : memref<2x16x16x36xbf16, #tpu.memory_space<vmem>>, vector<2x16x16x4xbf16>,
      %c0_91 = arith.constant 0 : index
      %c2_92 = arith.constant 2 : index
      %c2_93 = arith.constant 2 : index
      %c0_94 = arith.constant 0 : index
      %37 = vector.load %arg6[%c0_91, %c2_92, %c2_93, %c0_94] : memref<2x18x18x4xbf16, #tpu.memory_space<vmem>>, vector<2x16x16x4xbf16>
      %c0_95 = arith.constant 0 : index
      %c0_96 = arith.constant 0 : index
      %c0_97 = arith.constant 0 : index
      %c32 = arith.constant 32 : index
      %38 = vector.load %arg7[%c0_95, %c0_96, %c0_97, %c32] : memref<2x16x16x36xbf16, #tpu.memory_space<vmem>>, vector<2x16x16x4xbf16>
      tpu.vector_store %arg7[%c0_95, %c0_96, %c0_97, %c32], %37 {strides = array<i32>} : memref<2x16x16x36xbf16, #tpu.memory_space<vmem>>, vector<2x16x16x4xbf16>,
    } else {
    }
    %c0 = arith.constant 0 : index
    %c0_1 = arith.constant 0 : index
    %c0_2 = arith.constant 0 : index
    %c0_3 = arith.constant 0 : index
    %3 = vector.load %arg7[%c0, %c0_1, %c0_2, %c0_3] : memref<2x16x16x36xbf16, #tpu.memory_space<vmem>>, vector<2x16x16x36xbf16>
    %4 = vector.shape_cast %3 : vector<2x16x16x36xbf16> to vector<512x36xbf16>
    %c0_4 = arith.constant 0 : index
    %c0_5 = arith.constant 0 : index
    %5 = vector.load %arg3[%c0_4, %c0_5] : memref<36x128xbf16, #tpu.memory_space<vmem>>, vector<36x128xbf16>
    %cst = arith.constant dense<0.000000e+00> : vector<512x128xf32>
    %6 = tpu.matmul %4, %5, %cst {dimension_numbers = #tpu.dot_dimension_numbers<[1], [0], [0], [1], [0, 0, 1, 1], [], []>} : vector<512x36xbf16>, vector<36x128xbf16>, vector<512x128xf32> -> vector<512x128xf32>
    %c0_6 = arith.constant 0 : index
    %c0_7 = arith.constant 0 : index
    %7 = vector.load %arg4[%c0_6, %c0_7] : memref<1x128xf32, #tpu.memory_space<vmem>>, vector<1x128xf32>
    %8 = vector.broadcast %7 : vector<1x128xf32> to vector<512x128xf32>
    %9 = arith.addf %6, %8 : vector<512x128xf32>
    %cst_8 = arith.constant 0.000000e+00 : f32
    %10 = vector.broadcast %cst_8 : f32 to vector<512x128xf32>
    %11 = arith.maximumf %9, %10 : vector<512x128xf32>
    %c0_9 = arith.constant 0 : index
    %c0_10 = arith.constant 0 : index
    %12 = vector.load %arg5[%c0_9, %c0_10] : memref<512x128xf32, #tpu.memory_space<vmem>>, vector<512x128xf32>
    tpu.vector_store %arg5[%c0_9, %c0_10], %11 {strides = array<i32>} : memref<512x128xf32, #tpu.memory_space<vmem>>, vector<512x128xf32>,
    return
  }
  func.func @transform_0(%arg0: i32, %arg1: i32) -> (i32, i32, i32, i32) {
    %c0_i32 = arith.constant 0 : i32
    %c0_i32_0 = arith.constant 0 : i32
    %c0_i32_1 = arith.constant 0 : i32
    %c0_i32_2 = arith.constant 0 : i32
    return %arg0, %c0_i32, %c0_i32_0, %c0_i32_1 : i32, i32, i32, i32
  }
  func.func @transform_1(%arg0: i32, %arg1: i32) -> (i32, i32) {
    %c0_i32 = arith.constant 0 : i32
    %c0_i32_0 = arith.constant 0 : i32
    return %c0_i32, %arg1 : i32, i32
  }
  func.func @transform_2(%arg0: i32, %arg1: i32) -> (i32, i32) {
    %c0_i32 = arith.constant 0 : i32
    %c0_i32_0 = arith.constant 0 : i32
    return %c0_i32, %arg1 : i32, i32
  }
  func.func @transform_3(%arg0: i32, %arg1: i32) -> (i32, i32) {
    %c0_i32 = arith.constant 0 : i32
    return %arg0, %arg1 : i32, i32
  }
}

</mosaic_0001>

<llo_original>
// kernel: tpu_custom_call.1
$region0: #{tpu_custom_call.1}
  #allocation0 [shape = 'u32[]', space=smem, size = 0x4, offset = 0x4, fixed_abs, tag = 'smem constant byte address 0x4 - core index']
  #allocation1 [shape = 'u32[144,128]{1,0:T(1,128)}', space=vmem, size = 0x12000, scoped, tag = 'internal scratch']
  #allocation2 [shape = 'bf16[2,18,18,4]{3,2,1,0:T(8,128)(2,1)}', space=vmem, size = 0x36000, scoped, tag = 'scratch operand']
  #allocation3 [shape = 'bf16[2,16,16,36]{3,2,1,0:T(8,128)(2,1)}', space=vmem, size = 0x20000, scoped, tag = 'scratch operand']
  %s0 = inlined_call_operand.vmem [shape: bf16[2,16,16,4], index: 0, kind: input, shape index: {}]
  %s1 = inlined_call_operand.vmem [shape: bf16[36,128], index: 1, kind: input, shape index: {}]
  %s2 = inlined_call_operand.vmem [shape: f32[1,128], index: 2, kind: input, shape index: {}]
  %s3 = inlined_call_operand.hbm [shape: f32[512,128], index: 3, kind: output, shape index: {}]
  %s4 = sld [smem:[#allocation0]]
  $region26: #{tpu_custom_call.1} parent=0
    _
  %s6 = ssub.s32 1, %s4
  %s7 = scalar_select 0, %s6, %s4
  $region1: #{tpu_custom_call.1} parent=0
    #allocation4 [shape = 'u8[262144]{0}', space=vmem, size = 0x40000, scoped, tag = 'output window, operand 0, single buffered']
    #allocation5 [shape = 's32[1]{0}', space=sflag, size = 0x4, scoped, tag = 'scoped memory for tpu_custom_call.1']
    %8 = vsyncpa [#allocation5], 0
    // Predicated region
    $region2: #{tpu_custom_call.1} parent=1 // pred_check
      _
    $region3: #{tpu_custom_call.1} parent=1 // pred_check_branch
      %10 = sbr.rel (0) target = $region5
    $region4: #{tpu_custom_call.1} parent=1 // pred_region
      _
    $region5: #{tpu_custom_call.1} parent=1 // pred_fallthru
      _
    // Predicated region
    $region6: #{tpu_custom_call.1} parent=1 // pred_check
      _
    $region7: #{tpu_custom_call.1} parent=1 // pred_check_branch
      %12 = sbr.rel (0) target = $region9
    $region8: #{tpu_custom_call.1} parent=1 // pred_region
      _
    $region9: #{tpu_custom_call.1} parent=1 // pred_fallthru
      _
    // Predicated region
    $region10: #{tpu_custom_call.1} parent=1 // pred_check
      _
    $region11: #{tpu_custom_call.1} parent=1 // pred_check_branch
      %14 = sbr.rel (0) target = $region13
    $region12: #{tpu_custom_call.1} parent=1 // pred_region
      _
    $region13: #{tpu_custom_call.1} parent=1 // pred_fallthru
      _
    %p16 = scmp.eq.s32.totalorder 0, 0
    // Predicated region
    $region14: #{tpu_custom_call.1} parent=1 // pred_check
      %p17 = pneg %p16
    $region15: #{tpu_custom_call.1} parent=1 // pred_check_branch
      %19 = sbr.rel (%p17) target = $region17
    $region16: #{tpu_custom_call.1} parent=1 // pred_region
      %vm20 = vcmask 27648
      %21 = vst.msk [vmem:[#allocation2] sm:$0xf] %vm20, 0
      %22 = vst.msk [vmem:[#allocation2 + $0x4] sm:$0xf] %vm20, 0
      %vm23 = vcmask 24576
      %24 = vst.msk [vmem:[#allocation2 + $0x8] sm:$0x1] %vm23, 0
      %25 = vst.msk [vmem:[#allocation2 + $0xd8] sm:$0xf] %vm20, 0
      %26 = vst.msk [vmem:[#allocation2 + $0xdc] sm:$0xf] %vm20, 0
      %27 = vst.msk [vmem:[#allocation2 + $0xe0] sm:$0x1] %vm23, 0
      %s28 = scalar_lea.vmem [#allocation2], 204
      %29 = vst.msk [vmem:[%s28] sm:$0xf] %vm20, 0
      %30 = vst.msk [vmem:[%s28 + $0x4] sm:$0xf] %vm20, 0
      %31 = vst.msk [vmem:[%s28 + $0x8] sm:$0x1] %vm23, 0
      %32 = vst.msk [vmem:[%s28 + $0xd8] sm:$0xf] %vm20, 0
      %33 = vst.msk [vmem:[%s28 + $0xdc] sm:$0xf] %vm20, 0
      %34 = vst.msk [vmem:[%s28 + $0xe0] sm:$0x1] %vm23, 0
      %s35 = scalar_lea.vmem [#allocation2], 12
      %vm36 = vcmask 24576
      %vm37 = vsmask.f32 256
      %vm38 = vmand %vm36, %vm37
      %v39 = vld [vmem:[%s35] sm:$0x1]
      %v40 = vsel %vm38, 0, %v39
      %41 = vst [vmem:[%s35] sm:$0x1] %v40
      %v42 = vld [vmem:[%s35 + $0xc] sm:$0x1]
      %v43 = vsel %vm38, 0, %v42
      %44 = vst [vmem:[%s35 + $0xc] sm:$0x1] %v43
      %v45 = vld [vmem:[%s35 + $0x18] sm:$0x1]
      %v46 = vsel %vm38, 0, %v45
      %47 = vst [vmem:[%s35 + $0x18] sm:$0x1] %v46
      %v48 = vld [vmem:[%s35 + $0x24] sm:$0x1]
      %v49 = vsel %vm38, 0, %v48
      %50 = vst [vmem:[%s35 + $0x24] sm:$0x1] %v49
      %v51 = vld [vmem:[%s35 + $0x30] sm:$0x1]
      %v52 = vsel %vm38, 0, %v51
      %53 = vst [vmem:[%s35 + $0x30] sm:$0x1] %v52
      %v54 = vld [vmem:[%s35 + $0x3c] sm:$0x1]
      %v55 = vsel %vm38, 0, %v54
      %56 = vst [vmem:[%s35 + $0x3c] sm:$0x1] %v55
      %v57 = vld [vmem:[%s35 + $0x48] sm:$0x1]
      %v58 = vsel %vm38, 0, %v57
      %59 = vst [vmem:[%s35 + $0x48] sm:$0x1] %v58
      %v60 = vld [vmem:[%s35 + $0x54] sm:$0x1]
      %v61 = vsel %vm38, 0, %v60
      %62 = vst [vmem:[%s35 + $0x54] sm:$0x1] %v61
      %v63 = vld [vmem:[%s35 + $0x60] sm:$0x1]
      %v64 = vsel %vm38, 0, %v63
      %65 = vst [vmem:[%s35 + $0x60] sm:$0x1] %v64
      %v66 = vld [vmem:[%s35 + $0x6c] sm:$0x1]
      %v67 = vsel %vm38, 0, %v66
      %68 = vst [vmem:[%s35 + $0x6c] sm:$0x1] %v67
      %v69 = vld [vmem:[%s35 + $0x78] sm:$0x1]
      %v70 = vsel %vm38, 0, %v69
      %71 = vst [vmem:[%s35 + $0x78] sm:$0x1] %v70
      %v72 = vld [vmem:[%s35 + $0x84] sm:$0x1]
      %v73 = vsel %vm38, 0, %v72
      %74 = vst [vmem:[%s35 + $0x84] sm:$0x1] %v73
      %v75 = vld [vmem:[%s35 + $0x90] sm:$0x1]
      %v76 = vsel %vm38, 0, %v75
      %77 = vst [vmem:[%s35 + $0x90] sm:$0x1] %v76
      %v78 = vld [vmem:[%s35 + $0x9c] sm:$0x1]
      %v79 = vsel %vm38, 0, %v78
      %80 = vst [vmem:[%s35 + $0x9c] sm:$0x1] %v79
      %v81 = vld [vmem:[%s35 + $0xa8] sm:$0x1]
      %v82 = vsel %vm38, 0, %v81
      %83 = vst [vmem:[%s35 + $0xa8] sm:$0x1] %v82
      %v84 = vld [vmem:[%s35 + $0xb4] sm:$0x1]
      %v85 = vsel %vm38, 0, %v84
      %86 = vst [vmem:[%s35 + $0xb4] sm:$0x1] %v85
      %v87 = vld [vmem:[%s35 + $0xd8] sm:$0x1]
      %v88 = vsel %vm38, 0, %v87
      %89 = vst [vmem:[%s35 + $0xd8] sm:$0x1] %v88
      %v90 = vld [vmem:[%s35 + $0xe4] sm:$0x1]
      %v91 = vsel %vm38, 0, %v90
      %92 = vst [vmem:[%s35 + $0xe4] sm:$0x1] %v91
      %v93 = vld [vmem:[%s35 + $0xf0] sm:$0x1]
      %v94 = vsel %vm38, 0, %v93
      %95 = vst [vmem:[%s35 + $0xf0] sm:$0x1] %v94
      %v96 = vld [vmem:[%s35 + $0xfc] sm:$0x1]
      %v97 = vsel %vm38, 0, %v96
      %98 = vst [vmem:[%s35 + $0xfc] sm:$0x1] %v97
      %v99 = vld [vmem:[%s35 + $0x108] sm:$0x1]
      %v100 = vsel %vm38, 0, %v99
      %101 = vst [vmem:[%s35 + $0x108] sm:$0x1] %v100
      %v102 = vld [vmem:[%s35 + $0x114] sm:$0x1]
      %v103 = vsel %vm38, 0, %v102
      %104 = vst [vmem:[%s35 + $0x114] sm:$0x1] %v103
      %v105 = vld [vmem:[%s35 + $0x120] sm:$0x1]
      %v106 = vsel %vm38, 0, %v105
      %107 = vst [vmem:[%s35 + $0x120] sm:$0x1] %v106
      %v108 = vld [vmem:[%s35 + $0x12c] sm:$0x1]
      %v109 = vsel %vm38, 0, %v108
      %110 = vst [vmem:[%s35 + $0x12c] sm:$0x1] %v109
      %v111 = vld [vmem:[%s35 + $0x138] sm:$0x1]
      %v112 = vsel %vm38, 0, %v111
      %113 = vst [vmem:[%s35 + $0x138] sm:$0x1] %v112
      %v114 = vld [vmem:[%s35 + $0x144] sm:$0x1]
      %v115 = vsel %vm38, 0, %v114
      %116 = vst [vmem:[%s35 + $0x144] sm:$0x1] %v115
      %v117 = vld [vmem:[%s35 + $0x150] sm:$0x1]
      %v118 = vsel %vm38, 0, %v117
      %119 = vst [vmem:[%s35 + $0x150] sm:$0x1] %v118
      %v120 = vld [vmem:[%s35 + $0x15c] sm:$0x1]
      %v121 = vsel %vm38, 0, %v120
      %122 = vst [vmem:[%s35 + $0x15c] sm:$0x1] %v121
      %v123 = vld [vmem:[%s35 + $0x168] sm:$0x1]
      %v124 = vsel %vm38, 0, %v123
      %125 = vst [vmem:[%s35 + $0x168] sm:$0x1] %v124
      %v126 = vld [vmem:[%s35 + $0x174] sm:$0x1]
      %v127 = vsel %vm38, 0, %v126
      %128 = vst [vmem:[%s35 + $0x174] sm:$0x1] %v127
      %v129 = vld [vmem:[%s35 + $0x180] sm:$0x1]
      %v130 = vsel %vm38, 0, %v129
      %131 = vst [vmem:[%s35 + $0x180] sm:$0x1] %v130
      %v132 = vld [vmem:[%s35 + $0x18c] sm:$0x1]
      %v133 = vsel %vm38, 0, %v132
      %134 = vst [vmem:[%s35 + $0x18c] sm:$0x1] %v133
      %vm135 = vsmask.f32 7938
      %vm136 = vmand %vm36, %vm135
      %v137 = vld [vmem:[%s35 + $0x8] sm:$0x1]
      %v138 = vsel %vm136, 0, %v137
      %139 = vst [vmem:[%s35 + $0x8] sm:$0x1] %v138
      %v140 = vld [vmem:[%s35 + $0x14] sm:$0x1]
      %v141 = vsel %vm136, 0, %v140
      %142 = vst [vmem:[%s35 + $0x14] sm:$0x1] %v141
      %v143 = vld [vmem:[%s35 + $0x20] sm:$0x1]
      %v144 = vsel %vm136, 0, %v143
      %145 = vst [vmem:[%s35 + $0x20] sm:$0x1] %v144
      %v146 = vld [vmem:[%s35 + $0x2c] sm:$0x1]
      %v147 = vsel %vm136, 0, %v146
      %148 = vst [vmem:[%s35 + $0x2c] sm:$0x1] %v147
      %v149 = vld [vmem:[%s35 + $0x38] sm:$0x1]
      %v150 = vsel %vm136, 0, %v149
      %151 = vst [vmem:[%s35 + $0x38] sm:$0x1] %v150
      %v152 = vld [vmem:[%s35 + $0x44] sm:$0x1]
      %v153 = vsel %vm136, 0, %v152
      %154 = vst [vmem:[%s35 + $0x44] sm:$0x1] %v153
      %v155 = vld [vmem:[%s35 + $0x50] sm:$0x1]
      %v156 = vsel %vm136, 0, %v155
      %157 = vst [vmem:[%s35 + $0x50] sm:$0x1] %v156
      %v158 = vld [vmem:[%s35 + $0x5c] sm:$0x1]
      %v159 = vsel %vm136, 0, %v158
      %160 = vst [vmem:[%s35 + $0x5c] sm:$0x1] %v159
      %v161 = vld [vmem:[%s35 + $0x68] sm:$0x1]
      %v162 = vsel %vm136, 0, %v161
      %163 = vst [vmem:[%s35 + $0x68] sm:$0x1] %v162
      %v164 = vld [vmem:[%s35 + $0x74] sm:$0x1]
      %v165 = vsel %vm136, 0, %v164
      %166 = vst [vmem:[%s35 + $0x74] sm:$0x1] %v165
      %v167 = vld [vmem:[%s35 + $0x80] sm:$0x1]
      %v168 = vsel %vm136, 0, %v167
      %169 = vst [vmem:[%s35 + $0x80] sm:$0x1] %v168
      %v170 = vld [vmem:[%s35 + $0x8c] sm:$0x1]
      %v171 = vsel %vm136, 0, %v170
      %172 = vst [vmem:[%s35 + $0x8c] sm:$0x1] %v171
      %v173 = vld [vmem:[%s35 + $0x98] sm:$0x1]
      %v174 = vsel %vm136, 0, %v173
      %175 = vst [vmem:[%s35 + $0x98] sm:$0x1] %v174
      %v176 = vld [vmem:[%s35 + $0xa4] sm:$0x1]
      %v177 = vsel %vm136, 0, %v176
      %178 = vst [vmem:[%s35 + $0xa4] sm:$0x1] %v177
      %v179 = vld [vmem:[%s35 + $0xb0] sm:$0x1]
      %v180 = vsel %vm136, 0, %v179
      %181 = vst [vmem:[%s35 + $0xb0] sm:$0x1] %v180
      %v182 = vld [vmem:[%s35 + $0xbc] sm:$0x1]
      %v183 = vsel %vm136, 0, %v182
      %184 = vst [vmem:[%s35 + $0xbc] sm:$0x1] %v183
      %v185 = vld [vmem:[%s35 + $0xe0] sm:$0x1]
      %v186 = vsel %vm136, 0, %v185
      %187 = vst [vmem:[%s35 + $0xe0] sm:$0x1] %v186
      %v188 = vld [vmem:[%s35 + $0xec] sm:$0x1]
      %v189 = vsel %vm136, 0, %v188
      %190 = vst [vmem:[%s35 + $0xec] sm:$0x1] %v189
      %v191 = vld [vmem:[%s35 + $0xf8] sm:$0x1]
      %v192 = vsel %vm136, 0, %v191
      %193 = vst [vmem:[%s35 + $0xf8] sm:$0x1] %v192
      %v194 = vld [vmem:[%s35 + $0x104] sm:$0x1]
      %v195 = vsel %vm136, 0, %v194
      %196 = vst [vmem:[%s35 + $0x104] sm:$0x1] %v195
      %v197 = vld [vmem:[%s35 + $0x110] sm:$0x1]
      %v198 = vsel %vm136, 0, %v197
      %199 = vst [vmem:[%s35 + $0x110] sm:$0x1] %v198
      %v200 = vld [vmem:[%s35 + $0x11c] sm:$0x1]
      %v201 = vsel %vm136, 0, %v200
      %202 = vst [vmem:[%s35 + $0x11c] sm:$0x1] %v201
      %v203 = vld [vmem:[%s35 + $0x128] sm:$0x1]
      %v204 = vsel %vm136, 0, %v203
      %205 = vst [vmem:[%s35 + $0x128] sm:$0x1] %v204
      %v206 = vld [vmem:[%s35 + $0x134] sm:$0x1]
      %v207 = vsel %vm136, 0, %v206
      %208 = vst [vmem:[%s35 + $0x134] sm:$0x1] %v207
      %v209 = vld [vmem:[%s35 + $0x140] sm:$0x1]
      %v210 = vsel %vm136, 0, %v209
      %211 = vst [vmem:[%s35 + $0x140] sm:$0x1] %v210
      %v212 = vld [vmem:[%s35 + $0x14c] sm:$0x1]
      %v213 = vsel %vm136, 0, %v212
      %214 = vst [vmem:[%s35 + $0x14c] sm:$0x1] %v213
      %v215 = vld [vmem:[%s35 + $0x158] sm:$0x1]
      %v216 = vsel %vm136, 0, %v215
      %217 = vst [vmem:[%s35 + $0x158] sm:$0x1] %v216
      %v218 = vld [vmem:[%s35 + $0x164] sm:$0x1]
      %v219 = vsel %vm136, 0, %v218
      %220 = vst [vmem:[%s35 + $0x164] sm:$0x1] %v219
      %v221 = vld [vmem:[%s35 + $0x170] sm:$0x1]
      %v222 = vsel %vm136, 0, %v221
      %223 = vst [vmem:[%s35 + $0x170] sm:$0x1] %v222
      %v224 = vld [vmem:[%s35 + $0x17c] sm:$0x1]
      %v225 = vsel %vm136, 0, %v224
      %226 = vst [vmem:[%s35 + $0x17c] sm:$0x1] %v225
      %v227 = vld [vmem:[%s35 + $0x188] sm:$0x1]
      %v228 = vsel %vm136, 0, %v227
      %229 = vst [vmem:[%s35 + $0x188] sm:$0x1] %v228
      %v230 = vld [vmem:[%s35 + $0x194] sm:$0x1]
      %v231 = vsel %vm136, 0, %v230
      %232 = vst [vmem:[%s35 + $0x194] sm:$0x1] %v231
      %v233 = vld [vmem:[%s0] sm:$0xf]
      %v234 = vld [vmem:[%s0 + $0x4] sm:$0xf]
      %v235 = vld [vmem:[%s0 + $0x8] sm:$0xf]
      %v236 = vld [vmem:[%s0 + $0xc] sm:$0xf]
      %v237 = vld [vmem:[%s0 + $0x10] sm:$0xf]
      %v238 = vld [vmem:[%s0 + $0x14] sm:$0xf]
      %v239 = vld [vmem:[%s0 + $0x18] sm:$0xf]
      %v240 = vld [vmem:[%s0 + $0x1c] sm:$0xf]
      %v241 = vld [vmem:[%s0 + $0x20] sm:$0xf]
      %v242 = vld [vmem:[%s0 + $0x24] sm:$0xf]
      %v243 = vld [vmem:[%s0 + $0x28] sm:$0xf]
      %v244 = vld [vmem:[%s0 + $0x2c] sm:$0xf]
      %v245 = vld [vmem:[%s0 + $0x30] sm:$0xf]
      %v246 = vld [vmem:[%s0 + $0x34] sm:$0xf]
      %v247 = vld [vmem:[%s0 + $0x38] sm:$0xf]
      %v248 = vld [vmem:[%s0 + $0x3c] sm:$0xf]
      %v249 = vld [vmem:[%s0 + $0x40] sm:$0xf]
      %v250 = vld [vmem:[%s0 + $0x44] sm:$0xf]
      %v251 = vld [vmem:[%s0 + $0x48] sm:$0xf]
      %v252 = vld [vmem:[%s0 + $0x4c] sm:$0xf]
      %v253 = vld [vmem:[%s0 + $0x50] sm:$0xf]
      %v254 = vld [vmem:[%s0 + $0x54] sm:$0xf]
      %v255 = vld [vmem:[%s0 + $0x58] sm:$0xf]
      %v256 = vld [vmem:[%s0 + $0x5c] sm:$0xf]
      %v257 = vld [vmem:[%s0 + $0x60] sm:$0xf]
      %v258 = vld [vmem:[%s0 + $0x64] sm:$0xf]
      %v259 = vld [vmem:[%s0 + $0x68] sm:$0xf]
      %v260 = vld [vmem:[%s0 + $0x6c] sm:$0xf]
      %v261 = vld [vmem:[%s0 + $0x70] sm:$0xf]
      %v262 = vld [vmem:[%s0 + $0x74] sm:$0xf]
      %v263 = vld [vmem:[%s0 + $0x78] sm:$0xf]
      %v264 = vld [vmem:[%s0 + $0x7c] sm:$0xf]
      %v265 = vld [vmem:[%s0 + $0x80] sm:$0xf]
      %v266 = vld [vmem:[%s0 + $0x84] sm:$0xf]
      %v267 = vld [vmem:[%s0 + $0x88] sm:$0xf]
      %v268 = vld [vmem:[%s0 + $0x8c] sm:$0xf]
      %v269 = vld [vmem:[%s0 + $0x90] sm:$0xf]
      %v270 = vld [vmem:[%s0 + $0x94] sm:$0xf]
      %v271 = vld [vmem:[%s0 + $0x98] sm:$0xf]
      %v272 = vld [vmem:[%s0 + $0x9c] sm:$0xf]
      %v273 = vld [vmem:[%s0 + $0xa0] sm:$0xf]
      %v274 = vld [vmem:[%s0 + $0xa4] sm:$0xf]
      %v275 = vld [vmem:[%s0 + $0xa8] sm:$0xf]
      %v276 = vld [vmem:[%s0 + $0xac] sm:$0xf]
      %v277 = vld [vmem:[%s0 + $0xb0] sm:$0xf]
      %v278 = vld [vmem:[%s0 + $0xb4] sm:$0xf]
      %v279 = vld [vmem:[%s0 + $0xb8] sm:$0xf]
      %v280 = vld [vmem:[%s0 + $0xbc] sm:$0xf]
      %v281 = vld [vmem:[%s0 + $0xc0] sm:$0xf]
      %v282 = vld [vmem:[%s0 + $0xc4] sm:$0xf]
      %v283 = vld [vmem:[%s0 + $0xc8] sm:$0xf]
      %v284 = vld [vmem:[%s0 + $0xcc] sm:$0xf]
      %v285 = vld [vmem:[%s0 + $0xd0] sm:$0xf]
      %v286 = vld [vmem:[%s0 + $0xd4] sm:$0xf]
      %v287 = vld [vmem:[%s0 + $0xd8] sm:$0xf]
      %v288 = vld [vmem:[%s0 + $0xdc] sm:$0xf]
      %v289 = vld [vmem:[%s0 + $0xe0] sm:$0xf]
      %v290 = vld [vmem:[%s0 + $0xe4] sm:$0xf]
      %v291 = vld [vmem:[%s0 + $0xe8] sm:$0xf]
      %v292 = vld [vmem:[%s0 + $0xec] sm:$0xf]
      %v293 = vld [vmem:[%s0 + $0xf0] sm:$0xf]
      %v294 = vld [vmem:[%s0 + $0xf4] sm:$0xf]
      %v295 = vld [vmem:[%s0 + $0xf8] sm:$0xf]
      %v296 = vld [vmem:[%s0 + $0xfc] sm:$0xf]
      %vm297 = vsmask.f32 4368
      %vm298 = vmor %vm37, %vm297
      %v300 = vshrl.u32 %v233, 16
      %v302 = vrot.slane %v300, 7
      %v303 = vshll.u32 %v233, 16
      %v305 = vor.u32 %v302, %v303
      %v306 = vrot.slane %v302, 4
      %v308 = vshrl.u32 %v234, 16
      %v310 = vrot.slane %v308, 7
      %v311 = vshll.u32 %v234, 16
      %v313 = vor.u32 %v310, %v311
      %v314 = vsel %vm298, %v306, %v313
      %v315 = vrot.slane %v310, 4
      %v317 = vshrl.u32 %v235, 16
      %v319 = vrot.slane %v317, 7
      %v320 = vshll.u32 %v235, 16
      %v322 = vor.u32 %v319, %v320
      %v323 = vrot.slane %v319, 4
      %v325 = vshrl.u32 %v236, 16
      %v327 = vrot.slane %v325, 7
      %v328 = vshll.u32 %v236, 16
      %v330 = vor.u32 %v327, %v328
      %v331 = vsel %vm298, %v323, %v330
      %v332 = vrot.slane %v327, 4
      %v334 = vshrl.u32 %v237, 16
      %v336 = vrot.slane %v334, 7
      %v337 = vshll.u32 %v237, 16
      %v339 = vor.u32 %v336, %v337
      %v340 = vrot.slane %v336, 4
      %v342 = vshrl.u32 %v238, 16
      %v344 = vrot.slane %v342, 7
      %v345 = vshll.u32 %v238, 16
      %v347 = vor.u32 %v344, %v345
      %v348 = vsel %vm298, %v340, %v347
      %v349 = vrot.slane %v344, 4
      %v351 = vshrl.u32 %v239, 16
      %v353 = vrot.slane %v351, 7
      %v354 = vshll.u32 %v239, 16
      %v356 = vor.u32 %v353, %v354
      %v357 = vrot.slane %v353, 4
      %v359 = vshrl.u32 %v240, 16
      %v361 = vrot.slane %v359, 7
      %v362 = vshll.u32 %v240, 16
      %v364 = vor.u32 %v361, %v362
      %v365 = vsel %vm298, %v357, %v364
      %v366 = vrot.slane %v361, 4
      %v368 = vshrl.u32 %v241, 16
      %v370 = vrot.slane %v368, 7
      %v371 = vshll.u32 %v241, 16
      %v373 = vor.u32 %v370, %v371
      %v374 = vrot.slane %v370, 4
      %v376 = vshrl.u32 %v242, 16
      %v378 = vrot.slane %v376, 7
      %v379 = vshll.u32 %v242, 16
      %v381 = vor.u32 %v378, %v379
      %v382 = vsel %vm298, %v374, %v381
      %v383 = vrot.slane %v378, 4
      %v385 = vshrl.u32 %v243, 16
      %v387 = vrot.slane %v385, 7
      %v388 = vshll.u32 %v243, 16
      %v390 = vor.u32 %v387, %v388
      %v391 = vrot.slane %v387, 4
      %v393 = vshrl.u32 %v244, 16
      %v395 = vrot.slane %v393, 7
      %v396 = vshll.u32 %v244, 16
      %v398 = vor.u32 %v395, %v396
      %v399 = vsel %vm298, %v391, %v398
      %v400 = vrot.slane %v395, 4
      %v402 = vshrl.u32 %v245, 16
      %v404 = vrot.slane %v402, 7
      %v405 = vshll.u32 %v245, 16
      %v407 = vor.u32 %v404, %v405
      %v408 = vrot.slane %v404, 4
      %v410 = vshrl.u32 %v246, 16
      %v412 = vrot.slane %v410, 7
      %v413 = vshll.u32 %v246, 16
      %v415 = vor.u32 %v412, %v413
      %v416 = vsel %vm298, %v408, %v415
      %v417 = vrot.slane %v412, 4
      %v419 = vshrl.u32 %v247, 16
      %v421 = vrot.slane %v419, 7
      %v422 = vshll.u32 %v247, 16
      %v424 = vor.u32 %v421, %v422
      %v425 = vrot.slane %v421, 4
      %v427 = vshrl.u32 %v248, 16
      %v429 = vrot.slane %v427, 7
      %v430 = vshll.u32 %v248, 16
      %v432 = vor.u32 %v429, %v430
      %v433 = vsel %vm298, %v425, %v432
      %v434 = vrot.slane %v429, 4
      %v436 = vshrl.u32 %v249, 16
      %v438 = vrot.slane %v436, 7
      %v439 = vshll.u32 %v249, 16
      %v441 = vor.u32 %v438, %v439
      %v442 = vrot.slane %v438, 4
      %v444 = vshrl.u32 %v250, 16
      %v446 = vrot.slane %v444, 7
      %v447 = vshll.u32 %v250, 16
      %v449 = vor.u32 %v446, %v447
      %v450 = vsel %vm298, %v442, %v449
      %v451 = vrot.slane %v446, 4
      %v453 = vshrl.u32 %v251, 16
      %v455 = vrot.slane %v453, 7
      %v456 = vshll.u32 %v251, 16
      %v458 = vor.u32 %v455, %v456
      %v459 = vrot.slane %v455, 4
      %v461 = vshrl.u32 %v252, 16
      %v463 = vrot.slane %v461, 7
      %v464 = vshll.u32 %v252, 16
      %v466 = vor.u32 %v463, %v464
      %v467 = vsel %vm298, %v459, %v466
      %v468 = vrot.slane %v463, 4
      %v470 = vshrl.u32 %v253, 16
      %v472 = vrot.slane %v470, 7
      %v473 = vshll.u32 %v253, 16
      %v475 = vor.u32 %v472, %v473
      %v476 = vrot.slane %v472, 4
      %v478 = vshrl.u32 %v254, 16
      %v480 = vrot.slane %v478, 7
      %v481 = vshll.u32 %v254, 16
      %v483 = vor.u32 %v480, %v481
      %v484 = vsel %vm298, %v476, %v483
      %v485 = vrot.slane %v480, 4
      %v487 = vshrl.u32 %v255, 16
      %v489 = vrot.slane %v487, 7
      %v490 = vshll.u32 %v255, 16
      %v492 = vor.u32 %v489, %v490
      %v493 = vrot.slane %v489, 4
      %v495 = vshrl.u32 %v256, 16
      %v497 = vrot.slane %v495, 7
      %v498 = vshll.u32 %v256, 16
      %v500 = vor.u32 %v497, %v498
      %v501 = vsel %vm298, %v493, %v500
      %v502 = vrot.slane %v497, 4
      %v504 = vshrl.u32 %v257, 16
      %v506 = vrot.slane %v504, 7
      %v507 = vshll.u32 %v257, 16
      %v509 = vor.u32 %v506, %v507
      %v510 = vrot.slane %v506, 4
      %v512 = vshrl.u32 %v258, 16
      %v514 = vrot.slane %v512, 7
      %v515 = vshll.u32 %v258, 16
      %v517 = vor.u32 %v514, %v515
      %v518 = vsel %vm298, %v510, %v517
      %v519 = vrot.slane %v514, 4
      %v521 = vshrl.u32 %v259, 16
      %v523 = vrot.slane %v521, 7
      %v524 = vshll.u32 %v259, 16
      %v526 = vor.u32 %v523, %v524
      %v527 = vrot.slane %v523, 4
      %v529 = vshrl.u32 %v260, 16
      %v531 = vrot.slane %v529, 7
      %v532 = vshll.u32 %v260, 16
      %v534 = vor.u32 %v531, %v532
      %v535 = vsel %vm298, %v527, %v534
      %v536 = vrot.slane %v531, 4
      %v538 = vshrl.u32 %v261, 16
      %v540 = vrot.slane %v538, 7
      %v541 = vshll.u32 %v261, 16
      %v543 = vor.u32 %v540, %v541
      %v544 = vrot.slane %v540, 4
      %v546 = vshrl.u32 %v262, 16
      %v548 = vrot.slane %v546, 7
      %v549 = vshll.u32 %v262, 16
      %v551 = vor.u32 %v548, %v549
      %v552 = vsel %vm298, %v544, %v551
      %v553 = vrot.slane %v548, 4
      %v555 = vshrl.u32 %v263, 16
      %v557 = vrot.slane %v555, 7
      %v558 = vshll.u32 %v263, 16
      %v560 = vor.u32 %v557, %v558
      %v561 = vrot.slane %v557, 4
      %v563 = vshrl.u32 %v264, 16
      %v565 = vrot.slane %v563, 7
      %v566 = vshll.u32 %v264, 16
      %v568 = vor.u32 %v565, %v566
      %v569 = vsel %vm298, %v561, %v568
      %v570 = vrot.slane %v565, 4
      %v572 = vshrl.u32 %v265, 16
      %v574 = vrot.slane %v572, 7
      %v575 = vshll.u32 %v265, 16
      %v577 = vor.u32 %v574, %v575
      %v578 = vrot.slane %v574, 4
      %v580 = vshrl.u32 %v266, 16
      %v582 = vrot.slane %v580, 7
      %v583 = vshll.u32 %v266, 16
      %v585 = vor.u32 %v582, %v583
      %v586 = vsel %vm298, %v578, %v585
      %v587 = vrot.slane %v582, 4
      %v589 = vshrl.u32 %v267, 16
      %v591 = vrot.slane %v589, 7
      %v592 = vshll.u32 %v267, 16
      %v594 = vor.u32 %v591, %v592
      %v595 = vrot.slane %v591, 4
      %v597 = vshrl.u32 %v268, 16
      %v599 = vrot.slane %v597, 7
      %v600 = vshll.u32 %v268, 16
      %v602 = vor.u32 %v599, %v600
      %v603 = vsel %vm298, %v595, %v602
      %v604 = vrot.slane %v599, 4
      %v606 = vshrl.u32 %v269, 16
      %v608 = vrot.slane %v606, 7
      %v609 = vshll.u32 %v269, 16
      %v611 = vor.u32 %v608, %v609
      %v612 = vrot.slane %v608, 4
      %v614 = vshrl.u32 %v270, 16
      %v616 = vrot.slane %v614, 7
      %v617 = vshll.u32 %v270, 16
      %v619 = vor.u32 %v616, %v617
      %v620 = vsel %vm298, %v612, %v619
      %v621 = vrot.slane %v616, 4
      %v623 = vshrl.u32 %v271, 16
      %v625 = vrot.slane %v623, 7
      %v626 = vshll.u32 %v271, 16
      %v628 = vor.u32 %v625, %v626
      %v629 = vrot.slane %v625, 4
      %v631 = vshrl.u32 %v272, 16
      %v633 = vrot.slane %v631, 7
      %v634 = vshll.u32 %v272, 16
      %v636 = vor.u32 %v633, %v634
      %v637 = vsel %vm298, %v629, %v636
      %v638 = vrot.slane %v633, 4
      %v640 = vshrl.u32 %v273, 16
      %v642 = vrot.slane %v640, 7
      %v643 = vshll.u32 %v273, 16
      %v645 = vor.u32 %v642, %v643
      %v646 = vrot.slane %v642, 4
      %v648 = vshrl.u32 %v274, 16
      %v650 = vrot.slane %v648, 7
      %v651 = vshll.u32 %v274, 16
      %v653 = vor.u32 %v650, %v651
      %v654 = vsel %vm298, %v646, %v653
      %v655 = vrot.slane %v650, 4
      %v657 = vshrl.u32 %v275, 16
      %v659 = vrot.slane %v657, 7
      %v660 = vshll.u32 %v275, 16
      %v662 = vor.u32 %v659, %v660
      %v663 = vrot.slane %v659, 4
      %v665 = vshrl.u32 %v276, 16
      %v667 = vrot.slane %v665, 7
      %v668 = vshll.u32 %v276, 16
      %v670 = vor.u32 %v667, %v668
      %v671 = vsel %vm298, %v663, %v670
      %v672 = vrot.slane %v667, 4
      %v674 = vshrl.u32 %v277, 16
      %v676 = vrot.slane %v674, 7
      %v677 = vshll.u32 %v277, 16
      %v679 = vor.u32 %v676, %v677
      %v680 = vrot.slane %v676, 4
      %v682 = vshrl.u32 %v278, 16
      %v684 = vrot.slane %v682, 7
      %v685 = vshll.u32 %v278, 16
      %v687 = vor.u32 %v684, %v685
      %v688 = vsel %vm298, %v680, %v687
      %v689 = vrot.slane %v684, 4
      %v691 = vshrl.u32 %v279, 16
      %v693 = vrot.slane %v691, 7
      %v694 = vshll.u32 %v279, 16
      %v696 = vor.u32 %v693, %v694
      %v697 = vrot.slane %v693, 4
      %v699 = vshrl.u32 %v280, 16
      %v701 = vrot.slane %v699, 7
      %v702 = vshll.u32 %v280, 16
      %v704 = vor.u32 %v701, %v702
      %v705 = vsel %vm298, %v697, %v704
      %v706 = vrot.slane %v701, 4
      %v708 = vshrl.u32 %v281, 16
      %v710 = vrot.slane %v708, 7
      %v711 = vshll.u32 %v281, 16
      %v713 = vor.u32 %v710, %v711
      %v714 = vrot.slane %v710, 4
      %v716 = vshrl.u32 %v282, 16
      %v718 = vrot.slane %v716, 7
      %v719 = vshll.u32 %v282, 16
      %v721 = vor.u32 %v718, %v719
      %v722 = vsel %vm298, %v714, %v721
      %v723 = vrot.slane %v718, 4
      %v725 = vshrl.u32 %v283, 16
      %v727 = vrot.slane %v725, 7
      %v728 = vshll.u32 %v283, 16
      %v730 = vor.u32 %v727, %v728
      %v731 = vrot.slane %v727, 4
      %v733 = vshrl.u32 %v284, 16
      %v735 = vrot.slane %v733, 7
      %v736 = vshll.u32 %v284, 16
      %v738 = vor.u32 %v735, %v736
      %v739 = vsel %vm298, %v731, %v738
      %v740 = vrot.slane %v735, 4
      %v742 = vshrl.u32 %v285, 16
      %v744 = vrot.slane %v742, 7
      %v745 = vshll.u32 %v285, 16
      %v747 = vor.u32 %v744, %v745
      %v748 = vrot.slane %v744, 4
      %v750 = vshrl.u32 %v286, 16
      %v752 = vrot.slane %v750, 7
      %v753 = vshll.u32 %v286, 16
      %v755 = vor.u32 %v752, %v753
      %v756 = vsel %vm298, %v748, %v755
      %v757 = vrot.slane %v752, 4
      %v759 = vshrl.u32 %v287, 16
      %v761 = vrot.slane %v759, 7
      %v762 = vshll.u32 %v287, 16
      %v764 = vor.u32 %v761, %v762
      %v765 = vrot.slane %v761, 4
      %v767 = vshrl.u32 %v288, 16
      %v769 = vrot.slane %v767, 7
      %v770 = vshll.u32 %v288, 16
      %v772 = vor.u32 %v769, %v770
      %v773 = vsel %vm298, %v765, %v772
      %v774 = vrot.slane %v769, 4
      %v776 = vshrl.u32 %v289, 16
      %v778 = vrot.slane %v776, 7
      %v779 = vshll.u32 %v289, 16
      %v781 = vor.u32 %v778, %v779
      %v782 = vrot.slane %v778, 4
      %v784 = vshrl.u32 %v290, 16
      %v786 = vrot.slane %v784, 7
      %v787 = vshll.u32 %v290, 16
      %v789 = vor.u32 %v786, %v787
      %v790 = vsel %vm298, %v782, %v789
      %v791 = vrot.slane %v786, 4
      %v793 = vshrl.u32 %v291, 16
      %v795 = vrot.slane %v793, 7
      %v796 = vshll.u32 %v291, 16
      %v798 = vor.u32 %v795, %v796
      %v799 = vrot.slane %v795, 4
      %v801 = vshrl.u32 %v292, 16
      %v803 = vrot.slane %v801, 7
      %v804 = vshll.u32 %v292, 16
      %v806 = vor.u32 %v803, %v804
      %v807 = vsel %vm298, %v799, %v806
      %v808 = vrot.slane %v803, 4
      %v810 = vshrl.u32 %v293, 16
      %v812 = vrot.slane %v810, 7
      %v813 = vshll.u32 %v293, 16
      %v815 = vor.u32 %v812, %v813
      %v816 = vrot.slane %v812, 4
      %v818 = vshrl.u32 %v294, 16
      %v820 = vrot.slane %v818, 7
      %v821 = vshll.u32 %v294, 16
      %v823 = vor.u32 %v820, %v821
      %v824 = vsel %vm298, %v816, %v823
      %v825 = vrot.slane %v820, 4
      %v827 = vshrl.u32 %v295, 16
      %v829 = vrot.slane %v827, 7
      %v830 = vshll.u32 %v295, 16
      %v832 = vor.u32 %v829, %v830
      %v833 = vrot.slane %v829, 4
      %v835 = vshrl.u32 %v296, 16
      %v837 = vrot.slane %v835, 7
      %v838 = vshll.u32 %v296, 16
      %v840 = vor.u32 %v837, %v838
      %v841 = vsel %vm298, %v833, %v840
      %v842 = vrot.slane %v837, 4
      %vm939 = vcmask 27648
      %vm940 = vmand %vm939, %vm135
      %v941 = vld [vmem:[%s35] sm:$0xf]
      %v942 = vsel %vm940, %v305, %v941
      %943 = vst [vmem:[%s35] sm:$0xf] %v942
      %944 = vst.msk [vmem:[%s35 + $0x4] sm:$0xf] %vm20, %v314
      %v945 = vld [vmem:[%s35 + $0x8] sm:$0x1]
      %v946 = vsel %vm38, %v315, %v945
      %947 = vst [vmem:[%s35 + $0x8] sm:$0x1] %v946
      %v948 = vld [vmem:[%s35 + $0xc] sm:$0xf]
      %v949 = vsel %vm940, %v322, %v948
      %950 = vst [vmem:[%s35 + $0xc] sm:$0xf] %v949
      %951 = vst.msk [vmem:[%s35 + $0x10] sm:$0xf] %vm20, %v331
      %v952 = vld [vmem:[%s35 + $0x14] sm:$0x1]
      %v953 = vsel %vm38, %v332, %v952
      %954 = vst [vmem:[%s35 + $0x14] sm:$0x1] %v953
      %v955 = vld [vmem:[%s35 + $0x18] sm:$0xf]
      %v956 = vsel %vm940, %v339, %v955
      %957 = vst [vmem:[%s35 + $0x18] sm:$0xf] %v956
      %958 = vst.msk [vmem:[%s35 + $0x1c] sm:$0xf] %vm20, %v348
      %v959 = vld [vmem:[%s35 + $0x20] sm:$0x1]
      %v960 = vsel %vm38, %v349, %v959
      %961 = vst [vmem:[%s35 + $0x20] sm:$0x1] %v960
      %v962 = vld [vmem:[%s35 + $0x24] sm:$0xf]
      %v963 = vsel %vm940, %v356, %v962
      %964 = vst [vmem:[%s35 + $0x24] sm:$0xf] %v963
      %965 = vst.msk [vmem:[%s35 + $0x28] sm:$0xf] %vm20, %v365
      %v966 = vld [vmem:[%s35 + $0x2c] sm:$0x1]
      %v967 = vsel %vm38, %v366, %v966
      %968 = vst [vmem:[%s35 + $0x2c] sm:$0x1] %v967
      %v969 = vld [vmem:[%s35 + $0x30] sm:$0xf]
      %v970 = vsel %vm940, %v373, %v969
      %971 = vst [vmem:[%s35 + $0x30] sm:$0xf] %v970
      %972 = vst.msk [vmem:[%s35 + $0x34] sm:$0xf] %vm20, %v382
      %v973 = vld [vmem:[%s35 + $0x38] sm:$0x1]
      %v974 = vsel %vm38, %v383, %v973
      %975 = vst [vmem:[%s35 + $0x38] sm:$0x1] %v974
      %v976 = vld [vmem:[%s35 + $0x3c] sm:$0xf]
      %v977 = vsel %vm940, %v390, %v976
      %978 = vst [vmem:[%s35 + $0x3c] sm:$0xf] %v977
      %979 = vst.msk [vmem:[%s35 + $0x40] sm:$0xf] %vm20, %v399
      %v980 = vld [vmem:[%s35 + $0x44] sm:$0x1]
      %v981 = vsel %vm38, %v400, %v980
      %982 = vst [vmem:[%s35 + $0x44] sm:$0x1] %v981
      %v983 = vld [vmem:[%s35 + $0x48] sm:$0xf]
      %v984 = vsel %vm940, %v407, %v983
      %985 = vst [vmem:[%s35 + $0x48] sm:$0xf] %v984
      %986 = vst.msk [vmem:[%s35 + $0x4c] sm:$0xf] %vm20, %v416
      %v987 = vld [vmem:[%s35 + $0x50] sm:$0x1]
      %v988 = vsel %vm38, %v417, %v987
      %989 = vst [vmem:[%s35 + $0x50] sm:$0x1] %v988
      %v990 = vld [vmem:[%s35 + $0x54] sm:$0xf]
      %v991 = vsel %vm940, %v424, %v990
      %992 = vst [vmem:[%s35 + $0x54] sm:$0xf] %v991
      %993 = vst.msk [vmem:[%s35 + $0x58] sm:$0xf] %vm20, %v433
      %v994 = vld [vmem:[%s35 + $0x5c] sm:$0x1]
      %v995 = vsel %vm38, %v434, %v994
      %996 = vst [vmem:[%s35 + $0x5c] sm:$0x1] %v995
      %v997 = vld [vmem:[%s35 + $0x60] sm:$0xf]
      %v998 = vsel %vm940, %v441, %v997
      %999 = vst [vmem:[%s35 + $0x60] sm:$0xf] %v998
      %1000 = vst.msk [vmem:[%s35 + $0x64] sm:$0xf] %vm20, %v450
      %v1001 = vld [vmem:[%s35 + $0x68] sm:$0x1]
      %v1002 = vsel %vm38, %v451, %v1001
      %1003 = vst [vmem:[%s35 + $0x68] sm:$0x1] %v1002
      %v1004 = vld [vmem:[%s35 + $0x6c] sm:$0xf]
      %v1005 = vsel %vm940, %v458, %v1004
      %1006 = vst [vmem:[%s35 + $0x6c] sm:$0xf] %v1005
      %1007 = vst.msk [vmem:[%s35 + $0x70] sm:$0xf] %vm20, %v467
      %v1008 = vld [vmem:[%s35 + $0x74] sm:$0x1]
      %v1009 = vsel %vm38, %v468, %v1008
      %1010 = vst [vmem:[%s35 + $0x74] sm:$0x1] %v1009
      %v1011 = vld [vmem:[%s35 + $0x78] sm:$0xf]
      %v1012 = vsel %vm940, %v475, %v1011
      %1013 = vst [vmem:[%s35 + $0x78] sm:$0xf] %v1012
      %1014 = vst.msk [vmem:[%s35 + $0x7c] sm:$0xf] %vm20, %v484
      %v1015 = vld [vmem:[%s35 + $0x80] sm:$0x1]
      %v1016 = vsel %vm38, %v485, %v1015
      %1017 = vst [vmem:[%s35 + $0x80] sm:$0x1] %v1016
      %v1018 = vld [vmem:[%s35 + $0x84] sm:$0xf]
      %v1019 = vsel %vm940, %v492, %v1018
      %1020 = vst [vmem:[%s35 + $0x84] sm:$0xf] %v1019
      %1021 = vst.msk [vmem:[%s35 + $0x88] sm:$0xf] %vm20, %v501
      %v1022 = vld [vmem:[%s35 + $0x8c] sm:$0x1]
      %v1023 = vsel %vm38, %v502, %v1022
      %1024 = vst [vmem:[%s35 + $0x8c] sm:$0x1] %v1023
      %v1025 = vld [vmem:[%s35 + $0x90] sm:$0xf]
      %v1026 = vsel %vm940, %v509, %v1025
      %1027 = vst [vmem:[%s35 + $0x90] sm:$0xf] %v1026
      %1028 = vst.msk [vmem:[%s35 + $0x94] sm:$0xf] %vm20, %v518
      %v1029 = vld [vmem:[%s35 + $0x98] sm:$0x1]
      %v1030 = vsel %vm38, %v519, %v1029
      %1031 = vst [vmem:[%s35 + $0x98] sm:$0x1] %v1030
      %v1032 = vld [vmem:[%s35 + $0x9c] sm:$0xf]
      %v1033 = vsel %vm940, %v526, %v1032
      %1034 = vst [vmem:[%s35 + $0x9c] sm:$0xf] %v1033
      %1035 = vst.msk [vmem:[%s35 + $0xa0] sm:$0xf] %vm20, %v535
      %v1036 = vld [vmem:[%s35 + $0xa4] sm:$0x1]
      %v1037 = vsel %vm38, %v536, %v1036
      %1038 = vst [vmem:[%s35 + $0xa4] sm:$0x1] %v1037
      %v1039 = vld [vmem:[%s35 + $0xa8] sm:$0xf]
      %v1040 = vsel %vm940, %v543, %v1039
      %1041 = vst [vmem:[%s35 + $0xa8] sm:$0xf] %v1040
      %1042 = vst.msk [vmem:[%s35 + $0xac] sm:$0xf] %vm20, %v552
      %v1043 = vld [vmem:[%s35 + $0xb0] sm:$0x1]
      %v1044 = vsel %vm38, %v553, %v1043
      %1045 = vst [vmem:[%s35 + $0xb0] sm:$0x1] %v1044
      %v1046 = vld [vmem:[%s35 + $0xb4] sm:$0xf]
      %v1047 = vsel %vm940, %v560, %v1046
      %1048 = vst [vmem:[%s35 + $0xb4] sm:$0xf] %v1047
      %1049 = vst.msk [vmem:[%s35 + $0xb8] sm:$0xf] %vm20, %v569
      %v1050 = vld [vmem:[%s35 + $0xbc] sm:$0x1]
      %v1051 = vsel %vm38, %v570, %v1050
      %1052 = vst [vmem:[%s35 + $0xbc] sm:$0x1] %v1051
      %v1053 = vld [vmem:[%s35 + $0xd8] sm:$0xf]
      %v1054 = vsel %vm940, %v577, %v1053
      %1055 = vst [vmem:[%s35 + $0xd8] sm:$0xf] %v1054
      %1056 = vst.msk [vmem:[%s35 + $0xdc] sm:$0xf] %vm20, %v586
      %v1057 = vld [vmem:[%s35 + $0xe0] sm:$0x1]
      %v1058 = vsel %vm38, %v587, %v1057
      %1059 = vst [vmem:[%s35 + $0xe0] sm:$0x1] %v1058
      %v1060 = vld [vmem:[%s35 + $0xe4] sm:$0xf]
      %v1061 = vsel %vm940, %v594, %v1060
      %1062 = vst [vmem:[%s35 + $0xe4] sm:$0xf] %v1061
      %1063 = vst.msk [vmem:[%s35 + $0xe8] sm:$0xf] %vm20, %v603
      %v1064 = vld [vmem:[%s35 + $0xec] sm:$0x1]
      %v1065 = vsel %vm38, %v604, %v1064
      %1066 = vst [vmem:[%s35 + $0xec] sm:$0x1] %v1065
      %v1067 = vld [vmem:[%s35 + $0xf0] sm:$0xf]
      %v1068 = vsel %vm940, %v611, %v1067
      %1069 = vst [vmem:[%s35 + $0xf0] sm:$0xf] %v1068
      %1070 = vst.msk [vmem:[%s35 + $0xf4] sm:$0xf] %vm20, %v620
      %v1071 = vld [vmem:[%s35 + $0xf8] sm:$0x1]
      %v1072 = vsel %vm38, %v621, %v1071
      %1073 = vst [vmem:[%s35 + $0xf8] sm:$0x1] %v1072
      %v1074 = vld [vmem:[%s35 + $0xfc] sm:$0xf]
      %v1075 = vsel %vm940, %v628, %v1074
      %1076 = vst [vmem:[%s35 + $0xfc] sm:$0xf] %v1075
      %1077 = vst.msk [vmem:[%s35 + $0x100] sm:$0xf] %vm20, %v637
      %v1078 = vld [vmem:[%s35 + $0x104] sm:$0x1]
      %v1079 = vsel %vm38, %v638, %v1078
      %1080 = vst [vmem:[%s35 + $0x104] sm:$0x1] %v1079
      %v1081 = vld [vmem:[%s35 + $0x108] sm:$0xf]
      %v1082 = vsel %vm940, %v645, %v1081
      %1083 = vst [vmem:[%s35 + $0x108] sm:$0xf] %v1082
      %1084 = vst.msk [vmem:[%s35 + $0x10c] sm:$0xf] %vm20, %v654
      %v1085 = vld [vmem:[%s35 + $0x110] sm:$0x1]
      %v1086 = vsel %vm38, %v655, %v1085
      %1087 = vst [vmem:[%s35 + $0x110] sm:$0x1] %v1086
      %v1088 = vld [vmem:[%s35 + $0x114] sm:$0xf]
      %v1089 = vsel %vm940, %v662, %v1088
      %1090 = vst [vmem:[%s35 + $0x114] sm:$0xf] %v1089
      %1091 = vst.msk [vmem:[%s35 + $0x118] sm:$0xf] %vm20, %v671
      %v1092 = vld [vmem:[%s35 + $0x11c] sm:$0x1]
      %v1093 = vsel %vm38, %v672, %v1092
      %1094 = vst [vmem:[%s35 + $0x11c] sm:$0x1] %v1093
      %v1095 = vld [vmem:[%s35 + $0x120] sm:$0xf]
      %v1096 = vsel %vm940, %v679, %v1095
      %1097 = vst [vmem:[%s35 + $0x120] sm:$0xf] %v1096
      %1098 = vst.msk [vmem:[%s35 + $0x124] sm:$0xf] %vm20, %v688
      %v1099 = vld [vmem:[%s35 + $0x128] sm:$0x1]
      %v1100 = vsel %vm38, %v689, %v1099
      %1101 = vst [vmem:[%s35 + $0x128] sm:$0x1] %v1100
      %v1102 = vld [vmem:[%s35 + $0x12c] sm:$0xf]
      %v1103 = vsel %vm940, %v696, %v1102
      %1104 = vst [vmem:[%s35 + $0x12c] sm:$0xf] %v1103
      %1105 = vst.msk [vmem:[%s35 + $0x130] sm:$0xf] %vm20, %v705
      %v1106 = vld [vmem:[%s35 + $0x134] sm:$0x1]
      %v1107 = vsel %vm38, %v706, %v1106
      %1108 = vst [vmem:[%s35 + $0x134] sm:$0x1] %v1107
      %v1109 = vld [vmem:[%s35 + $0x138] sm:$0xf]
      %v1110 = vsel %vm940, %v713, %v1109
      %1111 = vst [vmem:[%s35 + $0x138] sm:$0xf] %v1110
      %1112 = vst.msk [vmem:[%s35 + $0x13c] sm:$0xf] %vm20, %v722
      %v1113 = vld [vmem:[%s35 + $0x140] sm:$0x1]
      %v1114 = vsel %vm38, %v723, %v1113
      %1115 = vst [vmem:[%s35 + $0x140] sm:$0x1] %v1114
      %v1116 = vld [vmem:[%s35 + $0x144] sm:$0xf]
      %v1117 = vsel %vm940, %v730, %v1116
      %1118 = vst [vmem:[%s35 + $0x144] sm:$0xf] %v1117
      %1119 = vst.msk [vmem:[%s35 + $0x148] sm:$0xf] %vm20, %v739
      %v1120 = vld [vmem:[%s35 + $0x14c] sm:$0x1]
      %v1121 = vsel %vm38, %v740, %v1120
      %1122 = vst [vmem:[%s35 + $0x14c] sm:$0x1] %v1121
      %v1123 = vld [vmem:[%s35 + $0x150] sm:$0xf]
      %v1124 = vsel %vm940, %v747, %v1123
      %1125 = vst [vmem:[%s35 + $0x150] sm:$0xf] %v1124
      %1126 = vst.msk [vmem:[%s35 + $0x154] sm:$0xf] %vm20, %v756
      %v1127 = vld [vmem:[%s35 + $0x158] sm:$0x1]
      %v1128 = vsel %vm38, %v757, %v1127
      %1129 = vst [vmem:[%s35 + $0x158] sm:$0x1] %v1128
      %v1130 = vld [vmem:[%s35 + $0x15c] sm:$0xf]
      %v1131 = vsel %vm940, %v764, %v1130
      %1132 = vst [vmem:[%s35 + $0x15c] sm:$0xf] %v1131
      %1133 = vst.msk [vmem:[%s35 + $0x160] sm:$0xf] %vm20, %v773
      %v1134 = vld [vmem:[%s35 + $0x164] sm:$0x1]
      %v1135 = vsel %vm38, %v774, %v1134
      %1136 = vst [vmem:[%s35 + $0x164] sm:$0x1] %v1135
      %v1137 = vld [vmem:[%s35 + $0x168] sm:$0xf]
      %v1138 = vsel %vm940, %v781, %v1137
      %1139 = vst [vmem:[%s35 + $0x168] sm:$0xf] %v1138
      %1140 = vst.msk [vmem:[%s35 + $0x16c] sm:$0xf] %vm20, %v790
      %v1141 = vld [vmem:[%s35 + $0x170] sm:$0x1]
      %v1142 = vsel %vm38, %v791, %v1141
      %1143 = vst [vmem:[%s35 + $0x170] sm:$0x1] %v1142
      %v1144 = vld [vmem:[%s35 + $0x174] sm:$0xf]
      %v1145 = vsel %vm940, %v798, %v1144
      %1146 = vst [vmem:[%s35 + $0x174] sm:$0xf] %v1145
      %1147 = vst.msk [vmem:[%s35 + $0x178] sm:$0xf] %vm20, %v807
      %v1148 = vld [vmem:[%s35 + $0x17c] sm:$0x1]
      %v1149 = vsel %vm38, %v808, %v1148
      %1150 = vst [vmem:[%s35 + $0x17c] sm:$0x1] %v1149
      %v1151 = vld [vmem:[%s35 + $0x180] sm:$0xf]
      %v1152 = vsel %vm940, %v815, %v1151
      %1153 = vst [vmem:[%s35 + $0x180] sm:$0xf] %v1152
      %1154 = vst.msk [vmem:[%s35 + $0x184] sm:$0xf] %vm20, %v824
      %v1155 = vld [vmem:[%s35 + $0x188] sm:$0x1]
      %v1156 = vsel %vm38, %v825, %v1155
      %1157 = vst [vmem:[%s35 + $0x188] sm:$0x1] %v1156
      %v1158 = vld [vmem:[%s35 + $0x18c] sm:$0xf]
      %v1159 = vsel %vm940, %v832, %v1158
      %1160 = vst [vmem:[%s35 + $0x18c] sm:$0xf] %v1159
      %1161 = vst.msk [vmem:[%s35 + $0x190] sm:$0xf] %vm20, %v841
      %v1162 = vld [vmem:[%s35 + $0x194] sm:$0x1]
      %v1163 = vsel %vm38, %v842, %v1162
      %1164 = vst [vmem:[%s35 + $0x194] sm:$0x1] %v1163
      %v1165 = vld [vmem:[#allocation2] sm:$0xf]
      %v1166 = vld [vmem:[#allocation2 + $0x4] sm:$0xf]
      %v1167 = vld [vmem:[#allocation2 + $0xc] sm:$0xf]
      %v1168 = vld [vmem:[#allocation2 + $0x10] sm:$0xf]
      %v1169 = vld [vmem:[#allocation2 + $0x18] sm:$0xf]
      %v1170 = vld [vmem:[#allocation2 + $0x1c] sm:$0xf]
      %v1171 = vld [vmem:[#allocation2 + $0x24] sm:$0xf]
      %v1172 = vld [vmem:[#allocation2 + $0x28] sm:$0xf]
      %v1173 = vld [vmem:[#allocation2 + $0x30] sm:$0xf]
      %v1174 = vld [vmem:[#allocation2 + $0x34] sm:$0xf]
      %v1175 = vld [vmem:[#allocation2 + $0x3c] sm:$0xf]
      %v1176 = vld [vmem:[#allocation2 + $0x40] sm:$0xf]
      %v1177 = vld [vmem:[#allocation2 + $0x48] sm:$0xf]
      %v1178 = vld [vmem:[#allocation2 + $0x4c] sm:$0xf]
      %v1179 = vld [vmem:[#allocation2 + $0x54] sm:$0xf]
      %v1180 = vld [vmem:[#allocation2 + $0x58] sm:$0xf]
      %v1181 = vld [vmem:[#allocation2 + $0x60] sm:$0xf]
      %v1182 = vld [vmem:[#allocation2 + $0x64] sm:$0xf]
      %v1183 = vld [vmem:[#allocation2 + $0x6c] sm:$0xf]
      %v1184 = vld [vmem:[#allocation2 + $0x70] sm:$0xf]
      %v1185 = vld [vmem:[#allocation2 + $0x78] sm:$0xf]
      %v1186 = vld [vmem:[#allocation2 + $0x7c] sm:$0xf]
      %v1187 = vld [vmem:[#allocation2 + $0x84] sm:$0xf]
      %v1188 = vld [vmem:[#allocation2 + $0x88] sm:$0xf]
      %v1189 = vld [vmem:[#allocation2 + $0x90] sm:$0xf]
      %v1190 = vld [vmem:[#allocation2 + $0x94] sm:$0xf]
      %v1191 = vld [vmem:[#allocation2 + $0x9c] sm:$0xf]
      %v1192 = vld [vmem:[#allocation2 + $0xa0] sm:$0xf]
      %v1193 = vld [vmem:[#allocation2 + $0xa8] sm:$0xf]
      %v1194 = vld [vmem:[#allocation2 + $0xac] sm:$0xf]
      %v1195 = vld [vmem:[#allocation2 + $0xb4] sm:$0xf]
      %v1196 = vld [vmem:[#allocation2 + $0xb8] sm:$0xf]
      %v1197 = vld [vmem:[#allocation2 + $0xd8] sm:$0xf]
      %v1198 = vld [vmem:[#allocation2 + $0xdc] sm:$0xf]
      %v1199 = vld [vmem:[#allocation2 + $0xe4] sm:$0xf]
      %v1200 = vld [vmem:[#allocation2 + $0xe8] sm:$0xf]
      %v1201 = vld [vmem:[#allocation2 + $0xf0] sm:$0xf]
      %v1202 = vld [vmem:[#allocation2 + $0xf4] sm:$0xf]
      %v1203 = vld [vmem:[#allocation2 + $0xfc] sm:$0xf]
      %v1204 = vld [vmem:[#allocation2 + $0x100] sm:$0xf]
      %v1205 = vld [vmem:[#allocation2 + $0x108] sm:$0xf]
      %v1206 = vld [vmem:[#allocation2 + $0x10c] sm:$0xf]
      %v1207 = vld [vmem:[#allocation2 + $0x114] sm:$0xf]
      %v1208 = vld [vmem:[#allocation2 + $0x118] sm:$0xf]
      %v1209 = vld [vmem:[#allocation2 + $0x120] sm:$0xf]
      %v1210 = vld [vmem:[#allocation2 + $0x124] sm:$0xf]
      %v1211 = vld [vmem:[#allocation2 + $0x12c] sm:$0xf]
      %v1212 = vld [vmem:[#allocation2 + $0x130] sm:$0xf]
      %v1213 = vld [vmem:[#allocation2 + $0x138] sm:$0xf]
      %v1214 = vld [vmem:[#allocation2 + $0x13c] sm:$0xf]
      %v1215 = vld [vmem:[#allocation2 + $0x144] sm:$0xf]
      %v1216 = vld [vmem:[#allocation2 + $0x148] sm:$0xf]
      %v1217 = vld [vmem:[#allocation2 + $0x150] sm:$0xf]
      %v1218 = vld [vmem:[#allocation2 + $0x154] sm:$0xf]
      %v1219 = vld [vmem:[#allocation2 + $0x15c] sm:$0xf]
      %v1220 = vld [vmem:[#allocation2 + $0x160] sm:$0xf]
      %v1221 = vld [vmem:[#allocation2 + $0x168] sm:$0xf]
      %v1222 = vld [vmem:[#allocation2 + $0x16c] sm:$0xf]
      %v1223 = vld [vmem:[#allocation2 + $0x174] sm:$0xf]
      %v1224 = vld [vmem:[#allocation2 + $0x178] sm:$0xf]
      %v1225 = vld [vmem:[#allocation2 + $0x180] sm:$0xf]
      %v1226 = vld [vmem:[#allocation2 + $0x184] sm:$0xf]
      %v1227 = vld [vmem:[#allocation2 + $0x18c] sm:$0xf]
      %v1228 = vld [vmem:[#allocation2 + $0x190] sm:$0xf]
      %1229 = vst.msk [vmem:[#allocation3] sm:$0xf] %vm20, %v1165
      %1230 = vst.msk [vmem:[#allocation3 + $0x4] sm:$0xf] %vm20, %v1166
      %1231 = vst.msk [vmem:[#allocation3 + $0x8] sm:$0xf] %vm20, %v1167
      %1232 = vst.msk [vmem:[#allocation3 + $0xc] sm:$0xf] %vm20, %v1168
      %1233 = vst.msk [vmem:[#allocation3 + $0x10] sm:$0xf] %vm20, %v1169
      %1234 = vst.msk [vmem:[#allocation3 + $0x14] sm:$0xf] %vm20, %v1170
      %1235 = vst.msk [vmem:[#allocation3 + $0x18] sm:$0xf] %vm20, %v1171
      %1236 = vst.msk [vmem:[#allocation3 + $0x1c] sm:$0xf] %vm20, %v1172
      %1237 = vst.msk [vmem:[#allocation3 + $0x20] sm:$0xf] %vm20, %v1173
      %1238 = vst.msk [vmem:[#allocation3 + $0x24] sm:$0xf] %vm20, %v1174
      %1239 = vst.msk [vmem:[#allocation3 + $0x28] sm:$0xf] %vm20, %v1175
      %1240 = vst.msk [vmem:[#allocation3 + $0x2c] sm:$0xf] %vm20, %v1176
      %1241 = vst.msk [vmem:[#allocation3 + $0x30] sm:$0xf] %vm20, %v1177
      %1242 = vst.msk [vmem:[#allocation3 + $0x34] sm:$0xf] %vm20, %v1178
      %1243 = vst.msk [vmem:[#allocation3 + $0x38] sm:$0xf] %vm20, %v1179
      %1244 = vst.msk [vmem:[#allocation3 + $0x3c] sm:$0xf] %vm20, %v1180
      %1245 = vst.msk [vmem:[#allocation3 + $0x40] sm:$0xf] %vm20, %v1181
      %1246 = vst.msk [vmem:[#allocation3 + $0x44] sm:$0xf] %vm20, %v1182
      %1247 = vst.msk [vmem:[#allocation3 + $0x48] sm:$0xf] %vm20, %v1183
      %1248 = vst.msk [vmem:[#allocation3 + $0x4c] sm:$0xf] %vm20, %v1184
      %1249 = vst.msk [vmem:[#allocation3 + $0x50] sm:$0xf] %vm20, %v1185
      %1250 = vst.msk [vmem:[#allocation3 + $0x54] sm:$0xf] %vm20, %v1186
      %1251 = vst.msk [vmem:[#allocation3 + $0x58] sm:$0xf] %vm20, %v1187
      %1252 = vst.msk [vmem:[#allocation3 + $0x5c] sm:$0xf] %vm20, %v1188
      %1253 = vst.msk [vmem:[#allocation3 + $0x60] sm:$0xf] %vm20, %v1189
      %1254 = vst.msk [vmem:[#allocation3 + $0x64] sm:$0xf] %vm20, %v1190
      %1255 = vst.msk [vmem:[#allocation3 + $0x68] sm:$0xf] %vm20, %v1191
      %1256 = vst.msk [vmem:[#allocation3 + $0x6c] sm:$0xf] %vm20, %v1192
      %1257 = vst.msk [vmem:[#allocation3 + $0x70] sm:$0xf] %vm20, %v1193
      %1258 = vst.msk [vmem:[#allocation3 + $0x74] sm:$0xf] %vm20, %v1194
      %1259 = vst.msk [vmem:[#allocation3 + $0x78] sm:$0xf] %vm20, %v1195
      %1260 = vst.msk [vmem:[#allocation3 + $0x7c] sm:$0xf] %vm20, %v1196
      %1261 = vst.msk [vmem:[#allocation3 + $0x80] sm:$0xf] %vm20, %v1197
      %1262 = vst.msk [vmem:[#allocation3 + $0x84] sm:$0xf] %vm20, %v1198
      %1263 = vst.msk [vmem:[#allocation3 + $0x88] sm:$0xf] %vm20, %v1199
      %1264 = vst.msk [vmem:[#allocation3 + $0x8c] sm:$0xf] %vm20, %v1200
      %1265 = vst.msk [vmem:[#allocation3 + $0x90] sm:$0xf] %vm20, %v1201
      %1266 = vst.msk [vmem:[#allocation3 + $0x94] sm:$0xf] %vm20, %v1202
      %1267 = vst.msk [vmem:[#allocation3 + $0x98] sm:$0xf] %vm20, %v1203
      %1268 = vst.msk [vmem:[#allocation3 + $0x9c] sm:$0xf] %vm20, %v1204
      %1269 = vst.msk [vmem:[#allocation3 + $0xa0] sm:$0xf] %vm20, %v1205
      %1270 = vst.msk [vmem:[#allocation3 + $0xa4] sm:$0xf] %vm20, %v1206
      %1271 = vst.msk [vmem:[#allocation3 + $0xa8] sm:$0xf] %vm20, %v1207
      %1272 = vst.msk [vmem:[#allocation3 + $0xac] sm:$0xf] %vm20, %v1208
      %1273 = vst.msk [vmem:[#allocation3 + $0xb0] sm:$0xf] %vm20, %v1209
      %1274 = vst.msk [vmem:[#allocation3 + $0xb4] sm:$0xf] %vm20, %v1210
      %1275 = vst.msk [vmem:[#allocation3 + $0xb8] sm:$0xf] %vm20, %v1211
      %1276 = vst.msk [vmem:[#allocation3 + $0xbc] sm:$0xf] %vm20, %v1212
      %1277 = vst.msk [vmem:[#allocation3 + $0xc0] sm:$0xf] %vm20, %v1213
      %1278 = vst.msk [vmem:[#allocation3 + $0xc4] sm:$0xf] %vm20, %v1214
      %1279 = vst.msk [vmem:[#allocation3 + $0xc8] sm:$0xf] %vm20, %v1215
      %1280 = vst.msk [vmem:[#allocation3 + $0xcc] sm:$0xf] %vm20, %v1216
      %1281 = vst.msk [vmem:[#allocation3 + $0xd0] sm:$0xf] %vm20, %v1217
      %1282 = vst.msk [vmem:[#allocation3 + $0xd4] sm:$0xf] %vm20, %v1218
      %1283 = vst.msk [vmem:[#allocation3 + $0xd8] sm:$0xf] %vm20, %v1219
      %1284 = vst.msk [vmem:[#allocation3 + $0xdc] sm:$0xf] %vm20, %v1220
      %1285 = vst.msk [vmem:[#allocation3 + $0xe0] sm:$0xf] %vm20, %v1221
      %1286 = vst.msk [vmem:[#allocation3 + $0xe4] sm:$0xf] %vm20, %v1222
      %1287 = vst.msk [vmem:[#allocation3 + $0xe8] sm:$0xf] %vm20, %v1223
      %1288 = vst.msk [vmem:[#allocation3 + $0xec] sm:$0xf] %vm20, %v1224
      %1289 = vst.msk [vmem:[#allocation3 + $0xf0] sm:$0xf] %vm20, %v1225
      %1290 = vst.msk [vmem:[#allocation3 + $0xf4] sm:$0xf] %vm20, %v1226
      %1291 = vst.msk [vmem:[#allocation3 + $0xf8] sm:$0xf] %vm20, %v1227
      %1292 = vst.msk [vmem:[#allocation3 + $0xfc] sm:$0xf] %vm20, %v1228
      %v1293 = vld [vmem:[#allocation2] sm:$0xf]
      %v1294 = vld [vmem:[#allocation2 + $0x4] sm:$0xf]
      %v1295 = vld [vmem:[#allocation2 + $0x8] sm:$0x1]
      %v1296 = vld [vmem:[#allocation2 + $0xc] sm:$0xf]
      %v1297 = vld [vmem:[#allocation2 + $0x10] sm:$0xf]
      %v1298 = vld [vmem:[#allocation2 + $0x14] sm:$0x1]
      %v1299 = vld [vmem:[#allocation2 + $0x18] sm:$0xf]
      %v1300 = vld [vmem:[#allocation2 + $0x1c] sm:$0xf]
      %v1301 = vld [vmem:[#allocation2 + $0x20] sm:$0x1]
      %v1302 = vld [vmem:[#allocation2 + $0x24] sm:$0xf]
      %v1303 = vld [vmem:[#allocation2 + $0x28] sm:$0xf]
      %v1304 = vld [vmem:[#allocation2 + $0x2c] sm:$0x1]
      %v1305 = vld [vmem:[#allocation2 + $0x30] sm:$0xf]
      %v1306 = vld [vmem:[#allocation2 + $0x34] sm:$0xf]
      %v1307 = vld [vmem:[#allocation2 + $0x38] sm:$0x1]
      %v1308 = vld [vmem:[#allocation2 + $0x3c] sm:$0xf]
      %v1309 = vld [vmem:[#allocation2 + $0x40] sm:$0xf]
      %v1310 = vld [vmem:[#allocation2 + $0x44] sm:$0x1]
      %v1311 = vld [vmem:[#allocation2 + $0x48] sm:$0xf]
      %v1312 = vld [vmem:[#allocation2 + $0x4c] sm:$0xf]
      %v1313 = vld [vmem:[#allocation2 + $0x50] sm:$0x1]
      %v1314 = vld [vmem:[#allocation2 + $0x54] sm:$0xf]
      %v1315 = vld [vmem:[#allocation2 + $0x58] sm:$0xf]
      %v1316 = vld [vmem:[#allocation2 + $0x5c] sm:$0x1]
      %v1317 = vld [vmem:[#allocation2 + $0x60] sm:$0xf]
      %v1318 = vld [vmem:[#allocation2 + $0x64] sm:$0xf]
      %v1319 = vld [vmem:[#allocation2 + $0x68] sm:$0x1]
      %v1320 = vld [vmem:[#allocation2 + $0x6c] sm:$0xf]
      %v1321 = vld [vmem:[#allocation2 + $0x70] sm:$0xf]
      %v1322 = vld [vmem:[#allocation2 + $0x74] sm:$0x1]
      %v1323 = vld [vmem:[#allocation2 + $0x78] sm:$0xf]
      %v1324 = vld [vmem:[#allocation2 + $0x7c] sm:$0xf]
      %v1325 = vld [vmem:[#allocation2 + $0x80] sm:$0x1]
      %v1326 = vld [vmem:[#allocation2 + $0x84] sm:$0xf]
      %v1327 = vld [vmem:[#allocation2 + $0x88] sm:$0xf]
      %v1328 = vld [vmem:[#allocation2 + $0x8c] sm:$0x1]
      %v1329 = vld [vmem:[#allocation2 + $0x90] sm:$0xf]
      %v1330 = vld [vmem:[#allocation2 + $0x94] sm:$0xf]
      %v1331 = vld [vmem:[#allocation2 + $0x98] sm:$0x1]
      %v1332 = vld [vmem:[#allocation2 + $0x9c] sm:$0xf]
      %v1333 = vld [vmem:[#allocation2 + $0xa0] sm:$0xf]
      %v1334 = vld [vmem:[#allocation2 + $0xa4] sm:$0x1]
      %v1335 = vld [vmem:[#allocation2 + $0xa8] sm:$0xf]
      %v1336 = vld [vmem:[#allocation2 + $0xac] sm:$0xf]
      %v1337 = vld [vmem:[#allocation2 + $0xb0] sm:$0x1]
      %v1338 = vld [vmem:[#allocation2 + $0xb4] sm:$0xf]
      %v1339 = vld [vmem:[#allocation2 + $0xb8] sm:$0xf]
      %v1340 = vld [vmem:[#allocation2 + $0xbc] sm:$0x1]
      %v1341 = vld [vmem:[#allocation2 + $0xd8] sm:$0xf]
      %v1342 = vld [vmem:[#allocation2 + $0xdc] sm:$0xf]
      %v1343 = vld [vmem:[#allocation2 + $0xe0] sm:$0x1]
      %v1344 = vld [vmem:[#allocation2 + $0xe4] sm:$0xf]
      %v1345 = vld [vmem:[#allocation2 + $0xe8] sm:$0xf]
      %v1346 = vld [vmem:[#allocation2 + $0xec] sm:$0x1]
      %v1347 = vld [vmem:[#allocation2 + $0xf0] sm:$0xf]
      %v1348 = vld [vmem:[#allocation2 + $0xf4] sm:$0xf]
      %v1349 = vld [vmem:[#allocation2 + $0xf8] sm:$0x1]
      %v1350 = vld [vmem:[#allocation2 + $0xfc] sm:$0xf]
      %v1351 = vld [vmem:[#allocation2 + $0x100] sm:$0xf]
      %v1352 = vld [vmem:[#allocation2 + $0x104] sm:$0x1]
      %v1353 = vld [vmem:[#allocation2 + $0x108] sm:$0xf]
      %v1354 = vld [vmem:[#allocation2 + $0x10c] sm:$0xf]
      %v1355 = vld [vmem:[#allocation2 + $0x110] sm:$0x1]
      %v1356 = vld [vmem:[#allocation2 + $0x114] sm:$0xf]
      %v1357 = vld [vmem:[#allocation2 + $0x118] sm:$0xf]
      %v1358 = vld [vmem:[#allocation2 + $0x11c] sm:$0x1]
      %v1359 = vld [vmem:[#allocation2 + $0x120] sm:$0xf]
      %v1360 = vld [vmem:[#allocation2 + $0x124] sm:$0xf]
      %v1361 = vld [vmem:[#allocation2 + $0x128] sm:$0x1]
      %v1362 = vld [vmem:[#allocation2 + $0x12c] sm:$0xf]
      %v1363 = vld [vmem:[#allocation2 + $0x130] sm:$0xf]
      %v1364 = vld [vmem:[#allocation2 + $0x134] sm:$0x1]
      %v1365 = vld [vmem:[#allocation2 + $0x138] sm:$0xf]
      %v1366 = vld [vmem:[#allocation2 + $0x13c] sm:$0xf]
      %v1367 = vld [vmem:[#allocation2 + $0x140] sm:$0x1]
      %v1368 = vld [vmem:[#allocation2 + $0x144] sm:$0xf]
      %v1369 = vld [vmem:[#allocation2 + $0x148] sm:$0xf]
      %v1370 = vld [vmem:[#allocation2 + $0x14c] sm:$0x1]
      %v1371 = vld [vmem:[#allocation2 + $0x150] sm:$0xf]
      %v1372 = vld [vmem:[#allocation2 + $0x154] sm:$0xf]
      %v1373 = vld [vmem:[#allocation2 + $0x158] sm:$0x1]
      %v1374 = vld [vmem:[#allocation2 + $0x15c] sm:$0xf]
      %v1375 = vld [vmem:[#allocation2 + $0x160] sm:$0xf]
      %v1376 = vld [vmem:[#allocation2 + $0x164] sm:$0x1]
      %v1377 = vld [vmem:[#allocation2 + $0x168] sm:$0xf]
      %v1378 = vld [vmem:[#allocation2 + $0x16c] sm:$0xf]
      %v1379 = vld [vmem:[#allocation2 + $0x170] sm:$0x1]
      %v1380 = vld [vmem:[#allocation2 + $0x174] sm:$0xf]
      %v1381 = vld [vmem:[#allocation2 + $0x178] sm:$0xf]
      %v1382 = vld [vmem:[#allocation2 + $0x17c] sm:$0x1]
      %v1383 = vld [vmem:[#allocation2 + $0x180] sm:$0xf]
      %v1384 = vld [vmem:[#allocation2 + $0x184] sm:$0xf]
      %v1385 = vld [vmem:[#allocation2 + $0x188] sm:$0x1]
      %v1386 = vld [vmem:[#allocation2 + $0x18c] sm:$0xf]
      %v1387 = vld [vmem:[#allocation2 + $0x190] sm:$0xf]
      %v1388 = vld [vmem:[#allocation2 + $0x194] sm:$0x1]
      %vm1389 = vsmask.f32 3328
      %vm1390 = vsmask.f32 7440
      %vm1391 = vmor %vm1389, %vm1390
      %v1393 = vshrl.u32 %v1293, 16
      %v1395 = vrot.slane %v1393, 4
      %v1396 = vshll.u32 %v1293, 16
      %v1398 = vrot.slane %v1396, 5
      %v1399 = vor.u32 %v1395, %v1398
      %v1400 = vrot.slane %v1399, 4
      %v1402 = vshll.u32 %v1294, 16
      %v1404 = vrot.slane %v1402, 5
      %v1405 = vsel %vm1391, %v1400, %v1404
      %v1406 = vshrl.u32 %v1294, 16
      %v1408 = vrot.slane %v1406, 4
      %v1409 = vor.u32 %v1408, %v1404
      %v1410 = vrot.slane %v1409, 4
      %v1412 = vshll.u32 %v1295, 16
      %v1414 = vrot.slane %v1412, 5
      %v1415 = vsel %vm1391, %v1410, %v1414
      %v1417 = vshrl.u32 %v1296, 16
      %v1419 = vrot.slane %v1417, 4
      %v1420 = vshll.u32 %v1296, 16
      %v1422 = vrot.slane %v1420, 5
      %v1423 = vor.u32 %v1419, %v1422
      %v1424 = vrot.slane %v1423, 4
      %v1426 = vshll.u32 %v1297, 16
      %v1428 = vrot.slane %v1426, 5
      %v1429 = vsel %vm1391, %v1424, %v1428
      %v1430 = vshrl.u32 %v1297, 16
      %v1432 = vrot.slane %v1430, 4
      %v1433 = vor.u32 %v1432, %v1428
      %v1434 = vrot.slane %v1433, 4
      %v1436 = vshll.u32 %v1298, 16
      %v1438 = vrot.slane %v1436, 5
      %v1439 = vsel %vm1391, %v1434, %v1438
      %v1441 = vshrl.u32 %v1299, 16
      %v1443 = vrot.slane %v1441, 4
      %v1444 = vshll.u32 %v1299, 16
      %v1446 = vrot.slane %v1444, 5
      %v1447 = vor.u32 %v1443, %v1446
      %v1448 = vrot.slane %v1447, 4
      %v1450 = vshll.u32 %v1300, 16
      %v1452 = vrot.slane %v1450, 5
      %v1453 = vsel %vm1391, %v1448, %v1452
      %v1454 = vshrl.u32 %v1300, 16
      %v1456 = vrot.slane %v1454, 4
      %v1457 = vor.u32 %v1456, %v1452
      %v1458 = vrot.slane %v1457, 4
      %v1460 = vshll.u32 %v1301, 16
      %v1462 = vrot.slane %v1460, 5
      %v1463 = vsel %vm1391, %v1458, %v1462
      %v1465 = vshrl.u32 %v1302, 16
      %v1467 = vrot.slane %v1465, 4
      %v1468 = vshll.u32 %v1302, 16
      %v1470 = vrot.slane %v1468, 5
      %v1471 = vor.u32 %v1467, %v1470
      %v1472 = vrot.slane %v1471, 4
      %v1474 = vshll.u32 %v1303, 16
      %v1476 = vrot.slane %v1474, 5
      %v1477 = vsel %vm1391, %v1472, %v1476
      %v1478 = vshrl.u32 %v1303, 16
      %v1480 = vrot.slane %v1478, 4
      %v1481 = vor.u32 %v1480, %v1476
      %v1482 = vrot.slane %v1481, 4
      %v1484 = vshll.u32 %v1304, 16
      %v1486 = vrot.slane %v1484, 5
      %v1487 = vsel %vm1391, %v1482, %v1486
      %v1489 = vshrl.u32 %v1305, 16
      %v1491 = vrot.slane %v1489, 4
      %v1492 = vshll.u32 %v1305, 16
      %v1494 = vrot.slane %v1492, 5
      %v1495 = vor.u32 %v1491, %v1494
      %v1496 = vrot.slane %v1495, 4
      %v1498 = vshll.u32 %v1306, 16
      %v1500 = vrot.slane %v1498, 5
      %v1501 = vsel %vm1391, %v1496, %v1500
      %v1502 = vshrl.u32 %v1306, 16
      %v1504 = vrot.slane %v1502, 4
      %v1505 = vor.u32 %v1504, %v1500
      %v1506 = vrot.slane %v1505, 4
      %v1508 = vshll.u32 %v1307, 16
      %v1510 = vrot.slane %v1508, 5
      %v1511 = vsel %vm1391, %v1506, %v1510
      %v1513 = vshrl.u32 %v1308, 16
      %v1515 = vrot.slane %v1513, 4
      %v1516 = vshll.u32 %v1308, 16
      %v1518 = vrot.slane %v1516, 5
      %v1519 = vor.u32 %v1515, %v1518
      %v1520 = vrot.slane %v1519, 4
      %v1522 = vshll.u32 %v1309, 16
      %v1524 = vrot.slane %v1522, 5
      %v1525 = vsel %vm1391, %v1520, %v1524
      %v1526 = vshrl.u32 %v1309, 16
      %v1528 = vrot.slane %v1526, 4
      %v1529 = vor.u32 %v1528, %v1524
      %v1530 = vrot.slane %v1529, 4
      %v1532 = vshll.u32 %v1310, 16
      %v1534 = vrot.slane %v1532, 5
      %v1535 = vsel %vm1391, %v1530, %v1534
      %v1537 = vshrl.u32 %v1311, 16
      %v1539 = vrot.slane %v1537, 4
      %v1540 = vshll.u32 %v1311, 16
      %v1542 = vrot.slane %v1540, 5
      %v1543 = vor.u32 %v1539, %v1542
      %v1544 = vrot.slane %v1543, 4
      %v1546 = vshll.u32 %v1312, 16
      %v1548 = vrot.slane %v1546, 5
      %v1549 = vsel %vm1391, %v1544, %v1548
      %v1550 = vshrl.u32 %v1312, 16
      %v1552 = vrot.slane %v1550, 4
      %v1553 = vor.u32 %v1552, %v1548
      %v1554 = vrot.slane %v1553, 4
      %v1556 = vshll.u32 %v1313, 16
      %v1558 = vrot.slane %v1556, 5
      %v1559 = vsel %vm1391, %v1554, %v1558
      %v1561 = vshrl.u32 %v1314, 16
      %v1563 = vrot.slane %v1561, 4
      %v1564 = vshll.u32 %v1314, 16
      %v1566 = vrot.slane %v1564, 5
      %v1567 = vor.u32 %v1563, %v1566
      %v1568 = vrot.slane %v1567, 4
      %v1570 = vshll.u32 %v1315, 16
      %v1572 = vrot.slane %v1570, 5
      %v1573 = vsel %vm1391, %v1568, %v1572
      %v1574 = vshrl.u32 %v1315, 16
      %v1576 = vrot.slane %v1574, 4
      %v1577 = vor.u32 %v1576, %v1572
      %v1578 = vrot.slane %v1577, 4
      %v1580 = vshll.u32 %v1316, 16
      %v1582 = vrot.slane %v1580, 5
      %v1583 = vsel %vm1391, %v1578, %v1582
      %v1585 = vshrl.u32 %v1317, 16
      %v1587 = vrot.slane %v1585, 4
      %v1588 = vshll.u32 %v1317, 16
      %v1590 = vrot.slane %v1588, 5
      %v1591 = vor.u32 %v1587, %v1590
      %v1592 = vrot.slane %v1591, 4
      %v1594 = vshll.u32 %v1318, 16
      %v1596 = vrot.slane %v1594, 5
      %v1597 = vsel %vm1391, %v1592, %v1596
      %v1598 = vshrl.u32 %v1318, 16
      %v1600 = vrot.slane %v1598, 4
      %v1601 = vor.u32 %v1600, %v1596
      %v1602 = vrot.slane %v1601, 4
      %v1604 = vshll.u32 %v1319, 16
      %v1606 = vrot.slane %v1604, 5
      %v1607 = vsel %vm1391, %v1602, %v1606
      %v1609 = vshrl.u32 %v1320, 16
      %v1611 = vrot.slane %v1609, 4
      %v1612 = vshll.u32 %v1320, 16
      %v1614 = vrot.slane %v1612, 5
      %v1615 = vor.u32 %v1611, %v1614
      %v1616 = vrot.slane %v1615, 4
      %v1618 = vshll.u32 %v1321, 16
      %v1620 = vrot.slane %v1618, 5
      %v1621 = vsel %vm1391, %v1616, %v1620
      %v1622 = vshrl.u32 %v1321, 16
      %v1624 = vrot.slane %v1622, 4
      %v1625 = vor.u32 %v1624, %v1620
      %v1626 = vrot.slane %v1625, 4
      %v1628 = vshll.u32 %v1322, 16
      %v1630 = vrot.slane %v1628, 5
      %v1631 = vsel %vm1391, %v1626, %v1630
      %v1633 = vshrl.u32 %v1323, 16
      %v1635 = vrot.slane %v1633, 4
      %v1636 = vshll.u32 %v1323, 16
      %v1638 = vrot.slane %v1636, 5
      %v1639 = vor.u32 %v1635, %v1638
      %v1640 = vrot.slane %v1639, 4
      %v1642 = vshll.u32 %v1324, 16
      %v1644 = vrot.slane %v1642, 5
      %v1645 = vsel %vm1391, %v1640, %v1644
      %v1646 = vshrl.u32 %v1324, 16
      %v1648 = vrot.slane %v1646, 4
      %v1649 = vor.u32 %v1648, %v1644
      %v1650 = vrot.slane %v1649, 4
      %v1652 = vshll.u32 %v1325, 16
      %v1654 = vrot.slane %v1652, 5
      %v1655 = vsel %vm1391, %v1650, %v1654
      %v1657 = vshrl.u32 %v1326, 16
      %v1659 = vrot.slane %v1657, 4
      %v1660 = vshll.u32 %v1326, 16
      %v1662 = vrot.slane %v1660, 5
      %v1663 = vor.u32 %v1659, %v1662
      %v1664 = vrot.slane %v1663, 4
      %v1666 = vshll.u32 %v1327, 16
      %v1668 = vrot.slane %v1666, 5
      %v1669 = vsel %vm1391, %v1664, %v1668
      %v1670 = vshrl.u32 %v1327, 16
      %v1672 = vrot.slane %v1670, 4
      %v1673 = vor.u32 %v1672, %v1668
      %v1674 = vrot.slane %v1673, 4
      %v1676 = vshll.u32 %v1328, 16
      %v1678 = vrot.slane %v1676, 5
      %v1679 = vsel %vm1391, %v1674, %v1678
      %v1681 = vshrl.u32 %v1329, 16
      %v1683 = vrot.slane %v1681, 4
      %v1684 = vshll.u32 %v1329, 16
      %v1686 = vrot.slane %v1684, 5
      %v1687 = vor.u32 %v1683, %v1686
      %v1688 = vrot.slane %v1687, 4
      %v1690 = vshll.u32 %v1330, 16
      %v1692 = vrot.slane %v1690, 5
      %v1693 = vsel %vm1391, %v1688, %v1692
      %v1694 = vshrl.u32 %v1330, 16
      %v1696 = vrot.slane %v1694, 4
      %v1697 = vor.u32 %v1696, %v1692
      %v1698 = vrot.slane %v1697, 4
      %v1700 = vshll.u32 %v1331, 16
      %v1702 = vrot.slane %v1700, 5
      %v1703 = vsel %vm1391, %v1698, %v1702
      %v1705 = vshrl.u32 %v1332, 16
      %v1707 = vrot.slane %v1705, 4
      %v1708 = vshll.u32 %v1332, 16
      %v1710 = vrot.slane %v1708, 5
      %v1711 = vor.u32 %v1707, %v1710
      %v1712 = vrot.slane %v1711, 4
      %v1714 = vshll.u32 %v1333, 16
      %v1716 = vrot.slane %v1714, 5
      %v1717 = vsel %vm1391, %v1712, %v1716
      %v1718 = vshrl.u32 %v1333, 16
      %v1720 = vrot.slane %v1718, 4
      %v1721 = vor.u32 %v1720, %v1716
      %v1722 = vrot.slane %v1721, 4
      %v1724 = vshll.u32 %v1334, 16
      %v1726 = vrot.slane %v1724, 5
      %v1727 = vsel %vm1391, %v1722, %v1726
      %v1729 = vshrl.u32 %v1335, 16
      %v1731 = vrot.slane %v1729, 4
      %v1732 = vshll.u32 %v1335, 16
      %v1734 = vrot.slane %v1732, 5
      %v1735 = vor.u32 %v1731, %v1734
      %v1736 = vrot.slane %v1735, 4
      %v1738 = vshll.u32 %v1336, 16
      %v1740 = vrot.slane %v1738, 5
      %v1741 = vsel %vm1391, %v1736, %v1740
      %v1742 = vshrl.u32 %v1336, 16
      %v1744 = vrot.slane %v1742, 4
      %v1745 = vor.u32 %v1744, %v1740
      %v1746 = vrot.slane %v1745, 4
      %v1748 = vshll.u32 %v1337, 16
      %v1750 = vrot.slane %v1748, 5
      %v1751 = vsel %vm1391, %v1746, %v1750
      %v1753 = vshrl.u32 %v1338, 16
      %v1755 = vrot.slane %v1753, 4
      %v1756 = vshll.u32 %v1338, 16
      %v1758 = vrot.slane %v1756, 5
      %v1759 = vor.u32 %v1755, %v1758
      %v1760 = vrot.slane %v1759, 4
      %v1762 = vshll.u32 %v1339, 16
      %v1764 = vrot.slane %v1762, 5
      %v1765 = vsel %vm1391, %v1760, %v1764
      %v1766 = vshrl.u32 %v1339, 16
      %v1768 = vrot.slane %v1766, 4
      %v1769 = vor.u32 %v1768, %v1764
      %v1770 = vrot.slane %v1769, 4
      %v1772 = vshll.u32 %v1340, 16
      %v1774 = vrot.slane %v1772, 5
      %v1775 = vsel %vm1391, %v1770, %v1774
      %v1777 = vshrl.u32 %v1341, 16
      %v1779 = vrot.slane %v1777, 4
      %v1780 = vshll.u32 %v1341, 16
      %v1782 = vrot.slane %v1780, 5
      %v1783 = vor.u32 %v1779, %v1782
      %v1784 = vrot.slane %v1783, 4
      %v1786 = vshll.u32 %v1342, 16
      %v1788 = vrot.slane %v1786, 5
      %v1789 = vsel %vm1391, %v1784, %v1788
      %v1790 = vshrl.u32 %v1342, 16
      %v1792 = vrot.slane %v1790, 4
      %v1793 = vor.u32 %v1792, %v1788
      %v1794 = vrot.slane %v1793, 4
      %v1796 = vshll.u32 %v1343, 16
      %v1798 = vrot.slane %v1796, 5
      %v1799 = vsel %vm1391, %v1794, %v1798
      %v1801 = vshrl.u32 %v1344, 16
      %v1803 = vrot.slane %v1801, 4
      %v1804 = vshll.u32 %v1344, 16
      %v1806 = vrot.slane %v1804, 5
      %v1807 = vor.u32 %v1803, %v1806
      %v1808 = vrot.slane %v1807, 4
      %v1810 = vshll.u32 %v1345, 16
      %v1812 = vrot.slane %v1810, 5
      %v1813 = vsel %vm1391, %v1808, %v1812
      %v1814 = vshrl.u32 %v1345, 16
      %v1816 = vrot.slane %v1814, 4
      %v1817 = vor.u32 %v1816, %v1812
      %v1818 = vrot.slane %v1817, 4
      %v1820 = vshll.u32 %v1346, 16
      %v1822 = vrot.slane %v1820, 5
      %v1823 = vsel %vm1391, %v1818, %v1822
      %v1825 = vshrl.u32 %v1347, 16
      %v1827 = vrot.slane %v1825, 4
      %v1828 = vshll.u32 %v1347, 16
      %v1830 = vrot.slane %v1828, 5
      %v1831 = vor.u32 %v1827, %v1830
      %v1832 = vrot.slane %v1831, 4
      %v1834 = vshll.u32 %v1348, 16
      %v1836 = vrot.slane %v1834, 5
      %v1837 = vsel %vm1391, %v1832, %v1836
      %v1838 = vshrl.u32 %v1348, 16
      %v1840 = vrot.slane %v1838, 4
      %v1841 = vor.u32 %v1840, %v1836
      %v1842 = vrot.slane %v1841, 4
      %v1844 = vshll.u32 %v1349, 16
      %v1846 = vrot.slane %v1844, 5
      %v1847 = vsel %vm1391, %v1842, %v1846
      %v1849 = vshrl.u32 %v1350, 16
      %v1851 = vrot.slane %v1849, 4
      %v1852 = vshll.u32 %v1350, 16
      %v1854 = vrot.slane %v1852, 5
      %v1855 = vor.u32 %v1851, %v1854
      %v1856 = vrot.slane %v1855, 4
      %v1858 = vshll.u32 %v1351, 16
      %v1860 = vrot.slane %v1858, 5
      %v1861 = vsel %vm1391, %v1856, %v1860
      %v1862 = vshrl.u32 %v1351, 16
      %v1864 = vrot.slane %v1862, 4
      %v1865 = vor.u32 %v1864, %v1860
      %v1866 = vrot.slane %v1865, 4
      %v1868 = vshll.u32 %v1352, 16
      %v1870 = vrot.slane %v1868, 5
      %v1871 = vsel %vm1391, %v1866, %v1870
      %v1873 = vshrl.u32 %v1353, 16
      %v1875 = vrot.slane %v1873, 4
      %v1876 = vshll.u32 %v1353, 16
      %v1878 = vrot.slane %v1876, 5
      %v1879 = vor.u32 %v1875, %v1878
      %v1880 = vrot.slane %v1879, 4
      %v1882 = vshll.u32 %v1354, 16
      %v1884 = vrot.slane %v1882, 5
      %v1885 = vsel %vm1391, %v1880, %v1884
      %v1886 = vshrl.u32 %v1354, 16
      %v1888 = vrot.slane %v1886, 4
      %v1889 = vor.u32 %v1888, %v1884
      %v1890 = vrot.slane %v1889, 4
      %v1892 = vshll.u32 %v1355, 16
      %v1894 = vrot.slane %v1892, 5
      %v1895 = vsel %vm1391, %v1890, %v1894
      %v1897 = vshrl.u32 %v1356, 16
      %v1899 = vrot.slane %v1897, 4
      %v1900 = vshll.u32 %v1356, 16
      %v1902 = vrot.slane %v1900, 5
      %v1903 = vor.u32 %v1899, %v1902
      %v1904 = vrot.slane %v1903, 4
      %v1906 = vshll.u32 %v1357, 16
      %v1908 = vrot.slane %v1906, 5
      %v1909 = vsel %vm1391, %v1904, %v1908
      %v1910 = vshrl.u32 %v1357, 16
      %v1912 = vrot.slane %v1910, 4
      %v1913 = vor.u32 %v1912, %v1908
      %v1914 = vrot.slane %v1913, 4
      %v1916 = vshll.u32 %v1358, 16
      %v1918 = vrot.slane %v1916, 5
      %v1919 = vsel %vm1391, %v1914, %v1918
      %v1921 = vshrl.u32 %v1359, 16
      %v1923 = vrot.slane %v1921, 4
      %v1924 = vshll.u32 %v1359, 16
      %v1926 = vrot.slane %v1924, 5
      %v1927 = vor.u32 %v1923, %v1926
      %v1928 = vrot.slane %v1927, 4
      %v1930 = vshll.u32 %v1360, 16
      %v1932 = vrot.slane %v1930, 5
      %v1933 = vsel %vm1391, %v1928, %v1932
      %v1934 = vshrl.u32 %v1360, 16
      %v1936 = vrot.slane %v1934, 4
      %v1937 = vor.u32 %v1936, %v1932
      %v1938 = vrot.slane %v1937, 4
      %v1940 = vshll.u32 %v1361, 16
      %v1942 = vrot.slane %v1940, 5
      %v1943 = vsel %vm1391, %v1938, %v1942
      %v1945 = vshrl.u32 %v1362, 16
      %v1947 = vrot.slane %v1945, 4
      %v1948 = vshll.u32 %v1362, 16
      %v1950 = vrot.slane %v1948, 5
      %v1951 = vor.u32 %v1947, %v1950
      %v1952 = vrot.slane %v1951, 4
      %v1954 = vshll.u32 %v1363, 16
      %v1956 = vrot.slane %v1954, 5
      %v1957 = vsel %vm1391, %v1952, %v1956
      %v1958 = vshrl.u32 %v1363, 16
      %v1960 = vrot.slane %v1958, 4
      %v1961 = vor.u32 %v1960, %v1956
      %v1962 = vrot.slane %v1961, 4
      %v1964 = vshll.u32 %v1364, 16
      %v1966 = vrot.slane %v1964, 5
      %v1967 = vsel %vm1391, %v1962, %v1966
      %v1969 = vshrl.u32 %v1365, 16
      %v1971 = vrot.slane %v1969, 4
      %v1972 = vshll.u32 %v1365, 16
      %v1974 = vrot.slane %v1972, 5
      %v1975 = vor.u32 %v1971, %v1974
      %v1976 = vrot.slane %v1975, 4
      %v1978 = vshll.u32 %v1366, 16
      %v1980 = vrot.slane %v1978, 5
      %v1981 = vsel %vm1391, %v1976, %v1980
      %v1982 = vshrl.u32 %v1366, 16
      %v1984 = vrot.slane %v1982, 4
      %v1985 = vor.u32 %v1984, %v1980
      %v1986 = vrot.slane %v1985, 4
      %v1988 = vshll.u32 %v1367, 16
      %v1990 = vrot.slane %v1988, 5
      %v1991 = vsel %vm1391, %v1986, %v1990
      %v1993 = vshrl.u32 %v1368, 16
      %v1995 = vrot.slane %v1993, 4
      %v1996 = vshll.u32 %v1368, 16
      %v1998 = vrot.slane %v1996, 5
      %v1999 = vor.u32 %v1995, %v1998
      %v2000 = vrot.slane %v1999, 4
      %v2002 = vshll.u32 %v1369, 16
      %v2004 = vrot.slane %v2002, 5
      %v2005 = vsel %vm1391, %v2000, %v2004
      %v2006 = vshrl.u32 %v1369, 16
      %v2008 = vrot.slane %v2006, 4
      %v2009 = vor.u32 %v2008, %v2004
      %v2010 = vrot.slane %v2009, 4
      %v2012 = vshll.u32 %v1370, 16
      %v2014 = vrot.slane %v2012, 5
      %v2015 = vsel %vm1391, %v2010, %v2014
      %v2017 = vshrl.u32 %v1371, 16
      %v2019 = vrot.slane %v2017, 4
      %v2020 = vshll.u32 %v1371, 16
      %v2022 = vrot.slane %v2020, 5
      %v2023 = vor.u32 %v2019, %v2022
      %v2024 = vrot.slane %v2023, 4
      %v2026 = vshll.u32 %v1372, 16
      %v2028 = vrot.slane %v2026, 5
      %v2029 = vsel %vm1391, %v2024, %v2028
      %v2030 = vshrl.u32 %v1372, 16
      %v2032 = vrot.slane %v2030, 4
      %v2033 = vor.u32 %v2032, %v2028
      %v2034 = vrot.slane %v2033, 4
      %v2036 = vshll.u32 %v1373, 16
      %v2038 = vrot.slane %v2036, 5
      %v2039 = vsel %vm1391, %v2034, %v2038
      %v2041 = vshrl.u32 %v1374, 16
      %v2043 = vrot.slane %v2041, 4
      %v2044 = vshll.u32 %v1374, 16
      %v2046 = vrot.slane %v2044, 5
      %v2047 = vor.u32 %v2043, %v2046
      %v2048 = vrot.slane %v2047, 4
      %v2050 = vshll.u32 %v1375, 16
      %v2052 = vrot.slane %v2050, 5
      %v2053 = vsel %vm1391, %v2048, %v2052
      %v2054 = vshrl.u32 %v1375, 16
      %v2056 = vrot.slane %v2054, 4
      %v2057 = vor.u32 %v2056, %v2052
      %v2058 = vrot.slane %v2057, 4
      %v2060 = vshll.u32 %v1376, 16
      %v2062 = vrot.slane %v2060, 5
      %v2063 = vsel %vm1391, %v2058, %v2062
      %v2065 = vshrl.u32 %v1377, 16
      %v2067 = vrot.slane %v2065, 4
      %v2068 = vshll.u32 %v1377, 16
      %v2070 = vrot.slane %v2068, 5
      %v2071 = vor.u32 %v2067, %v2070
      %v2072 = vrot.slane %v2071, 4
      %v2074 = vshll.u32 %v1378, 16
      %v2076 = vrot.slane %v2074, 5
      %v2077 = vsel %vm1391, %v2072, %v2076
      %v2078 = vshrl.u32 %v1378, 16
      %v2080 = vrot.slane %v2078, 4
      %v2081 = vor.u32 %v2080, %v2076
      %v2082 = vrot.slane %v2081, 4
      %v2084 = vshll.u32 %v1379, 16
      %v2086 = vrot.slane %v2084, 5
      %v2087 = vsel %vm1391, %v2082, %v2086
      %v2089 = vshrl.u32 %v1380, 16
      %v2091 = vrot.slane %v2089, 4
      %v2092 = vshll.u32 %v1380, 16
      %v2094 = vrot.slane %v2092, 5
      %v2095 = vor.u32 %v2091, %v2094
      %v2096 = vrot.slane %v2095, 4
      %v2098 = vshll.u32 %v1381, 16
      %v2100 = vrot.slane %v2098, 5
      %v2101 = vsel %vm1391, %v2096, %v2100
      %v2102 = vshrl.u32 %v1381, 16
      %v2104 = vrot.slane %v2102, 4
      %v2105 = vor.u32 %v2104, %v2100
      %v2106 = vrot.slane %v2105, 4
      %v2108 = vshll.u32 %v1382, 16
      %v2110 = vrot.slane %v2108, 5
      %v2111 = vsel %vm1391, %v2106, %v2110
      %v2113 = vshrl.u32 %v1383, 16
      %v2115 = vrot.slane %v2113, 4
      %v2116 = vshll.u32 %v1383, 16
      %v2118 = vrot.slane %v2116, 5
      %v2119 = vor.u32 %v2115, %v2118
      %v2120 = vrot.slane %v2119, 4
      %v2122 = vshll.u32 %v1384, 16
      %v2124 = vrot.slane %v2122, 5
      %v2125 = vsel %vm1391, %v2120, %v2124
      %v2126 = vshrl.u32 %v1384, 16
      %v2128 = vrot.slane %v2126, 4
      %v2129 = vor.u32 %v2128, %v2124
      %v2130 = vrot.slane %v2129, 4
      %v2132 = vshll.u32 %v1385, 16
      %v2134 = vrot.slane %v2132, 5
      %v2135 = vsel %vm1391, %v2130, %v2134
      %v2137 = vshrl.u32 %v1386, 16
      %v2139 = vrot.slane %v2137, 4
      %v2140 = vshll.u32 %v1386, 16
      %v2142 = vrot.slane %v2140, 5
      %v2143 = vor.u32 %v2139, %v2142
      %v2144 = vrot.slane %v2143, 4
      %v2146 = vshll.u32 %v1387, 16
      %v2148 = vrot.slane %v2146, 5
      %v2149 = vsel %vm1391, %v2144, %v2148
      %v2150 = vshrl.u32 %v1387, 16
      %v2152 = vrot.slane %v2150, 4
      %v2153 = vor.u32 %v2152, %v2148
      %v2154 = vrot.slane %v2153, 4
      %v2156 = vshll.u32 %v1388, 16
      %v2158 = vrot.slane %v2156, 5
      %v2159 = vsel %vm1391, %v2154, %v2158
      %2160 = vrot.lane.b32.xlu0 %v1405, 4
      %v2161 = vpop.permute.xlu0 %2160
      %2162 = vrot.lane.b32.xlu0 %v1415, 4
      %v2163 = vpop.permute.xlu0 %2162
      %2164 = vrot.lane.b32.xlu0 %v1429, 4
      %v2165 = vpop.permute.xlu0 %2164
      %2166 = vrot.lane.b32.xlu0 %v1439, 4
      %v2167 = vpop.permute.xlu0 %2166
      %2168 = vrot.lane.b32.xlu0 %v1453, 4
      %v2169 = vpop.permute.xlu0 %2168
      %2170 = vrot.lane.b32.xlu0 %v1463, 4
      %v2171 = vpop.permute.xlu0 %2170
      %2172 = vrot.lane.b32.xlu0 %v1477, 4
      %v2173 = vpop.permute.xlu0 %2172
      %2174 = vrot.lane.b32.xlu0 %v1487, 4
      %v2175 = vpop.permute.xlu0 %2174
      %2176 = vrot.lane.b32.xlu0 %v1501, 4
      %v2177 = vpop.permute.xlu0 %2176
      %2178 = vrot.lane.b32.xlu0 %v1511, 4
      %v2179 = vpop.permute.xlu0 %2178
      %2180 = vrot.lane.b32.xlu0 %v1525, 4
      %v2181 = vpop.permute.xlu0 %2180
      %2182 = vrot.lane.b32.xlu0 %v1535, 4
      %v2183 = vpop.permute.xlu0 %2182
      %2184 = vrot.lane.b32.xlu0 %v1549, 4
      %v2185 = vpop.permute.xlu0 %2184
      %2186 = vrot.lane.b32.xlu0 %v1559, 4
      %v2187 = vpop.permute.xlu0 %2186
      %2188 = vrot.lane.b32.xlu0 %v1573, 4
      %v2189 = vpop.permute.xlu0 %2188
      %2190 = vrot.lane.b32.xlu0 %v1583, 4
      %v2191 = vpop.permute.xlu0 %2190
      %2192 = vrot.lane.b32.xlu0 %v1597, 4
      %v2193 = vpop.permute.xlu0 %2192
      %2194 = vrot.lane.b32.xlu0 %v1607, 4
      %v2195 = vpop.permute.xlu0 %2194
      %2196 = vrot.lane.b32.xlu0 %v1621, 4
      %v2197 = vpop.permute.xlu0 %2196
      %2198 = vrot.lane.b32.xlu0 %v1631, 4
      %v2199 = vpop.permute.xlu0 %2198
      %2200 = vrot.lane.b32.xlu0 %v1645, 4
      %v2201 = vpop.permute.xlu0 %2200
      %2202 = vrot.lane.b32.xlu0 %v1655, 4
      %v2203 = vpop.permute.xlu0 %2202
      %2204 = vrot.lane.b32.xlu0 %v1669, 4
      %v2205 = vpop.permute.xlu0 %2204
      %2206 = vrot.lane.b32.xlu0 %v1679, 4
      %v2207 = vpop.permute.xlu0 %2206
      %2208 = vrot.lane.b32.xlu0 %v1693, 4
      %v2209 = vpop.permute.xlu0 %2208
      %2210 = vrot.lane.b32.xlu0 %v1703, 4
      %v2211 = vpop.permute.xlu0 %2210
      %2212 = vrot.lane.b32.xlu0 %v1717, 4
      %v2213 = vpop.permute.xlu0 %2212
      %2214 = vrot.lane.b32.xlu0 %v1727, 4
      %v2215 = vpop.permute.xlu0 %2214
      %2216 = vrot.lane.b32.xlu0 %v1741, 4
      %v2217 = vpop.permute.xlu0 %2216
      %2218 = vrot.lane.b32.xlu0 %v1751, 4
      %v2219 = vpop.permute.xlu0 %2218
      %2220 = vrot.lane.b32.xlu0 %v1765, 4
      %v2221 = vpop.permute.xlu0 %2220
      %2222 = vrot.lane.b32.xlu0 %v1775, 4
      %v2223 = vpop.permute.xlu0 %2222
      %2224 = vrot.lane.b32.xlu0 %v1789, 4
      %v2225 = vpop.permute.xlu0 %2224
      %2226 = vrot.lane.b32.xlu0 %v1799, 4
      %v2227 = vpop.permute.xlu0 %2226
      %2228 = vrot.lane.b32.xlu0 %v1813, 4
      %v2229 = vpop.permute.xlu0 %2228
      %2230 = vrot.lane.b32.xlu0 %v1823, 4
      %v2231 = vpop.permute.xlu0 %2230
      %2232 = vrot.lane.b32.xlu0 %v1837, 4
      %v2233 = vpop.permute.xlu0 %2232
      %2234 = vrot.lane.b32.xlu0 %v1847, 4
      %v2235 = vpop.permute.xlu0 %2234
      %2236 = vrot.lane.b32.xlu0 %v1861, 4
      %v2237 = vpop.permute.xlu0 %2236
      %2238 = vrot.lane.b32.xlu0 %v1871, 4
      %v2239 = vpop.permute.xlu0 %2238
      %2240 = vrot.lane.b32.xlu0 %v1885, 4
      %v2241 = vpop.permute.xlu0 %2240
      %2242 = vrot.lane.b32.xlu0 %v1895, 4
      %v2243 = vpop.permute.xlu0 %2242
      %2244 = vrot.lane.b32.xlu0 %v1909, 4
      %v2245 = vpop.permute.xlu0 %2244
      %2246 = vrot.lane.b32.xlu0 %v1919, 4
      %v2247 = vpop.permute.xlu0 %2246
      %2248 = vrot.lane.b32.xlu0 %v1933, 4
      %v2249 = vpop.permute.xlu0 %2248
      %2250 = vrot.lane.b32.xlu0 %v1943, 4
      %v2251 = vpop.permute.xlu0 %2250
      %2252 = vrot.lane.b32.xlu0 %v1957, 4
      %v2253 = vpop.permute.xlu0 %2252
      %2254 = vrot.lane.b32.xlu0 %v1967, 4
      %v2255 = vpop.permute.xlu0 %2254
      %2256 = vrot.lane.b32.xlu0 %v1981, 4
      %v2257 = vpop.permute.xlu0 %2256
      %2258 = vrot.lane.b32.xlu0 %v1991, 4
      %v2259 = vpop.permute.xlu0 %2258
      %2260 = vrot.lane.b32.xlu0 %v2005, 4
      %v2261 = vpop.permute.xlu0 %2260
      %2262 = vrot.lane.b32.xlu0 %v2015, 4
      %v2263 = vpop.permute.xlu0 %2262
      %2264 = vrot.lane.b32.xlu0 %v2029, 4
      %v2265 = vpop.permute.xlu0 %2264
      %2266 = vrot.lane.b32.xlu0 %v2039, 4
      %v2267 = vpop.permute.xlu0 %2266
      %2268 = vrot.lane.b32.xlu0 %v2053, 4
      %v2269 = vpop.permute.xlu0 %2268
      %2270 = vrot.lane.b32.xlu0 %v2063, 4
      %v2271 = vpop.permute.xlu0 %2270
      %2272 = vrot.lane.b32.xlu0 %v2077, 4
      %v2273 = vpop.permute.xlu0 %2272
      %2274 = vrot.lane.b32.xlu0 %v2087, 4
      %v2275 = vpop.permute.xlu0 %2274
      %2276 = vrot.lane.b32.xlu0 %v2101, 4
      %v2277 = vpop.permute.xlu0 %2276
      %2278 = vrot.lane.b32.xlu0 %v2111, 4
      %v2279 = vpop.permute.xlu0 %2278
      %2280 = vrot.lane.b32.xlu0 %v2125, 4
      %v2281 = vpop.permute.xlu0 %2280
      %2282 = vrot.lane.b32.xlu0 %v2135, 4
      %v2283 = vpop.permute.xlu0 %2282
      %2284 = vrot.lane.b32.xlu0 %v2149, 4
      %v2285 = vpop.permute.xlu0 %2284
      %2286 = vrot.lane.b32.xlu0 %v2159, 4
      %v2287 = vpop.permute.xlu0 %2286
      %vm2352 = vcmask 60448
      %2353 = vst.msk [vmem:[#allocation3] sm:$0xf] %vm2352, %v2161
      %2354 = vst.msk [vmem:[#allocation3 + $0x4] sm:$0xf] %vm2352, %v2163
      %2355 = vst.msk [vmem:[#allocation3 + $0x8] sm:$0xf] %vm2352, %v2165
      %2356 = vst.msk [vmem:[#allocation3 + $0xc] sm:$0xf] %vm2352, %v2167
      %2357 = vst.msk [vmem:[#allocation3 + $0x10] sm:$0xf] %vm2352, %v2169
      %2358 = vst.msk [vmem:[#allocation3 + $0x14] sm:$0xf] %vm2352, %v2171
      %2359 = vst.msk [vmem:[#allocation3 + $0x18] sm:$0xf] %vm2352, %v2173
      %2360 = vst.msk [vmem:[#allocation3 + $0x1c] sm:$0xf] %vm2352, %v2175
      %2361 = vst.msk [vmem:[#allocation3 + $0x20] sm:$0xf] %vm2352, %v2177
      %2362 = vst.msk [vmem:[#allocation3 + $0x24] sm:$0xf] %vm2352, %v2179
      %2363 = vst.msk [vmem:[#allocation3 + $0x28] sm:$0xf] %vm2352, %v2181
      %2364 = vst.msk [vmem:[#allocation3 + $0x2c] sm:$0xf] %vm2352, %v2183
      %2365 = vst.msk [vmem:[#allocation3 + $0x30] sm:$0xf] %vm2352, %v2185
      %2366 = vst.msk [vmem:[#allocation3 + $0x34] sm:$0xf] %vm2352, %v2187
      %2367 = vst.msk [vmem:[#allocation3 + $0x38] sm:$0xf] %vm2352, %v2189
      %2368 = vst.msk [vmem:[#allocation3 + $0x3c] sm:$0xf] %vm2352, %v2191
      %2369 = vst.msk [vmem:[#allocation3 + $0x40] sm:$0xf] %vm2352, %v2193
      %2370 = vst.msk [vmem:[#allocation3 + $0x44] sm:$0xf] %vm2352, %v2195
      %2371 = vst.msk [vmem:[#allocation3 + $0x48] sm:$0xf] %vm2352, %v2197
      %2372 = vst.msk [vmem:[#allocation3 + $0x4c] sm:$0xf] %vm2352, %v2199
      %2373 = vst.msk [vmem:[#allocation3 + $0x50] sm:$0xf] %vm2352, %v2201
      %2374 = vst.msk [vmem:[#allocation3 + $0x54] sm:$0xf] %vm2352, %v2203
      %2375 = vst.msk [vmem:[#allocation3 + $0x58] sm:$0xf] %vm2352, %v2205
      %2376 = vst.msk [vmem:[#allocation3 + $0x5c] sm:$0xf] %vm2352, %v2207
      %2377 = vst.msk [vmem:[#allocation3 + $0x60] sm:$0xf] %vm2352, %v2209
      %2378 = vst.msk [vmem:[#allocation3 + $0x64] sm:$0xf] %vm2352, %v2211
      %2379 = vst.msk [vmem:[#allocation3 + $0x68] sm:$0xf] %vm2352, %v2213
      %2380 = vst.msk [vmem:[#allocation3 + $0x6c] sm:$0xf] %vm2352, %v2215
      %2381 = vst.msk [vmem:[#allocation3 + $0x70] sm:$0xf] %vm2352, %v2217
      %2382 = vst.msk [vmem:[#allocation3 + $0x74] sm:$0xf] %vm2352, %v2219
      %2383 = vst.msk [vmem:[#allocation3 + $0x78] sm:$0xf] %vm2352, %v2221
      %2384 = vst.msk [vmem:[#allocation3 + $0x7c] sm:$0xf] %vm2352, %v2223
      %2385 = vst.msk [vmem:[#allocation3 + $0x80] sm:$0xf] %vm2352, %v2225
      %2386 = vst.msk [vmem:[#allocation3 + $0x84] sm:$0xf] %vm2352, %v2227
      %2387 = vst.msk [vmem:[#allocation3 + $0x88] sm:$0xf] %vm2352, %v2229
      %2388 = vst.msk [vmem:[#allocation3 + $0x8c] sm:$0xf] %vm2352, %v2231
      %2389 = vst.msk [vmem:[#allocation3 + $0x90] sm:$0xf] %vm2352, %v2233
      %2390 = vst.msk [vmem:[#allocation3 + $0x94] sm:$0xf] %vm2352, %v2235
      %2391 = vst.msk [vmem:[#allocation3 + $0x98] sm:$0xf] %vm2352, %v2237
      %2392 = vst.msk [vmem:[#allocation3 + $0x9c] sm:$0xf] %vm2352, %v2239
      %2393 = vst.msk [vmem:[#allocation3 + $0xa0] sm:$0xf] %vm2352, %v2241
      %2394 = vst.msk [vmem:[#allocation3 + $0xa4] sm:$0xf] %vm2352, %v2243
      %2395 = vst.msk [vmem:[#allocation3 + $0xa8] sm:$0xf] %vm2352, %v2245
      %2396 = vst.msk [vmem:[#allocation3 + $0xac] sm:$0xf] %vm2352, %v2247
      %2397 = vst.msk [vmem:[#allocation3 + $0xb0] sm:$0xf] %vm2352, %v2249
      %2398 = vst.msk [vmem:[#allocation3 + $0xb4] sm:$0xf] %vm2352, %v2251
      %2399 = vst.msk [vmem:[#allocation3 + $0xb8] sm:$0xf] %vm2352, %v2253
      %2400 = vst.msk [vmem:[#allocation3 + $0xbc] sm:$0xf] %vm2352, %v2255
      %2401 = vst.msk [vmem:[#allocation3 + $0xc0] sm:$0xf] %vm2352, %v2257
      %2402 = vst.msk [vmem:[#allocation3 + $0xc4] sm:$0xf] %vm2352, %v2259
      %2403 = vst.msk [vmem:[#allocation3 + $0xc8] sm:$0xf] %vm2352, %v2261
      %2404 = vst.msk [vmem:[#allocation3 + $0xcc] sm:$0xf] %vm2352, %v2263
      %2405 = vst.msk [vmem:[#allocation3 + $0xd0] sm:$0xf] %vm2352, %v2265
      %2406 = vst.msk [vmem:[#allocation3 + $0xd4] sm:$0xf] %vm2352, %v2267
      %2407 = vst.msk [vmem:[#allocation3 + $0xd8] sm:$0xf] %vm2352, %v2269
      %2408 = vst.msk [vmem:[#allocation3 + $0xdc] sm:$0xf] %vm2352, %v2271
      %2409 = vst.msk [vmem:[#allocation3 + $0xe0] sm:$0xf] %vm2352, %v2273
      %2410 = vst.msk [vmem:[#allocation3 + $0xe4] sm:$0xf] %vm2352, %v2275
      %2411 = vst.msk [vmem:[#allocation3 + $0xe8] sm:$0xf] %vm2352, %v2277
      %2412 = vst.msk [vmem:[#allocation3 + $0xec] sm:$0xf] %vm2352, %v2279
      %2413 = vst.msk [vmem:[#allocation3 + $0xf0] sm:$0xf] %vm2352, %v2281
      %2414 = vst.msk [vmem:[#allocation3 + $0xf4] sm:$0xf] %vm2352, %v2283
      %2415 = vst.msk [vmem:[#allocation3 + $0xf8] sm:$0xf] %vm2352, %v2285
      %2416 = vst.msk [vmem:[#allocation3 + $0xfc] sm:$0xf] %vm2352, %v2287
      %v2417 = vld [vmem:[#allocation2] sm:$0xe]
      %v2418 = vld [vmem:[#allocation2 + $0x4] sm:$0xf]
      %v2419 = vld [vmem:[#allocation2 + $0x8] sm:$0x1]
      %v2420 = vld [vmem:[#allocation2 + $0xc] sm:$0xe]
      %v2421 = vld [vmem:[#allocation2 + $0x10] sm:$0xf]
      %v2422 = vld [vmem:[#allocation2 + $0x14] sm:$0x1]
      %v2423 = vld [vmem:[#allocation2 + $0x18] sm:$0xe]
      %v2424 = vld [vmem:[#allocation2 + $0x1c] sm:$0xf]
      %v2425 = vld [vmem:[#allocation2 + $0x20] sm:$0x1]
      %v2426 = vld [vmem:[#allocation2 + $0x24] sm:$0xe]
      %v2427 = vld [vmem:[#allocation2 + $0x28] sm:$0xf]
      %v2428 = vld [vmem:[#allocation2 + $0x2c] sm:$0x1]
      %v2429 = vld [vmem:[#allocation2 + $0x30] sm:$0xe]
      %v2430 = vld [vmem:[#allocation2 + $0x34] sm:$0xf]
      %v2431 = vld [vmem:[#allocation2 + $0x38] sm:$0x1]
      %v2432 = vld [vmem:[#allocation2 + $0x3c] sm:$0xe]
      %v2433 = vld [vmem:[#allocation2 + $0x40] sm:$0xf]
      %v2434 = vld [vmem:[#allocation2 + $0x44] sm:$0x1]
      %v2435 = vld [vmem:[#allocation2 + $0x48] sm:$0xe]
      %v2436 = vld [vmem:[#allocation2 + $0x4c] sm:$0xf]
      %v2437 = vld [vmem:[#allocation2 + $0x50] sm:$0x1]
      %v2438 = vld [vmem:[#allocation2 + $0x54] sm:$0xe]
      %v2439 = vld [vmem:[#allocation2 + $0x58] sm:$0xf]
      %v2440 = vld [vmem:[#allocation2 + $0x5c] sm:$0x1]
      %v2441 = vld [vmem:[#allocation2 + $0x60] sm:$0xe]
      %v2442 = vld [vmem:[#allocation2 + $0x64] sm:$0xf]
      %v2443 = vld [vmem:[#allocation2 + $0x68] sm:$0x1]
      %v2444 = vld [vmem:[#allocation2 + $0x6c] sm:$0xe]
      %v2445 = vld [vmem:[#allocation2 + $0x70] sm:$0xf]
      %v2446 = vld [vmem:[#allocation2 + $0x74] sm:$0x1]
      %v2447 = vld [vmem:[#allocation2 + $0x78] sm:$0xe]
      %v2448 = vld [vmem:[#allocation2 + $0x7c] sm:$0xf]
      %v2449 = vld [vmem:[#allocation2 + $0x80] sm:$0x1]
      %v2450 = vld [vmem:[#allocation2 + $0x84] sm:$0xe]
      %v2451 = vld [vmem:[#allocation2 + $0x88] sm:$0xf]
      %v2452 = vld [vmem:[#allocation2 + $0x8c] sm:$0x1]
      %v2453 = vld [vmem:[#allocation2 + $0x90] sm:$0xe]
      %v2454 = vld [vmem:[#allocation2 + $0x94] sm:$0xf]
      %v2455 = vld [vmem:[#allocation2 + $0x98] sm:$0x1]
      %v2456 = vld [vmem:[#allocation2 + $0x9c] sm:$0xe]
      %v2457 = vld [vmem:[#allocation2 + $0xa0] sm:$0xf]
      %v2458 = vld [vmem:[#allocation2 + $0xa4] sm:$0x1]
      %v2459 = vld [vmem:[#allocation2 + $0xa8] sm:$0xe]
      %v2460 = vld [vmem:[#allocation2 + $0xac] sm:$0xf]
      %v2461 = vld [vmem:[#allocation2 + $0xb0] sm:$0x1]
      %v2462 = vld [vmem:[#allocation2 + $0xb4] sm:$0xe]
      %v2463 = vld [vmem:[#allocation2 + $0xb8] sm:$0xf]
      %v2464 = vld [vmem:[#allocation2 + $0xbc] sm:$0x1]
      %v2465 = vld [vmem:[#allocation2 + $0xd8] sm:$0xe]
      %v2466 = vld [vmem:[#allocation2 + $0xdc] sm:$0xf]
      %v2467 = vld [vmem:[#allocation2 + $0xe0] sm:$0x1]
      %v2468 = vld [vmem:[#allocation2 + $0xe4] sm:$0xe]
      %v2469 = vld [vmem:[#allocation2 + $0xe8] sm:$0xf]
      %v2470 = vld [vmem:[#allocation2 + $0xec] sm:$0x1]
      %v2471 = vld [vmem:[#allocation2 + $0xf0] sm:$0xe]
      %v2472 = vld [vmem:[#allocation2 + $0xf4] sm:$0xf]
      %v2473 = vld [vmem:[#allocation2 + $0xf8] sm:$0x1]
      %v2474 = vld [vmem:[#allocation2 + $0xfc] sm:$0xe]
      %v2475 = vld [vmem:[#allocation2 + $0x100] sm:$0xf]
      %v2476 = vld [vmem:[#allocation2 + $0x104] sm:$0x1]
      %v2477 = vld [vmem:[#allocation2 + $0x108] sm:$0xe]
      %v2478 = vld [vmem:[#allocation2 + $0x10c] sm:$0xf]
      %v2479 = vld [vmem:[#allocation2 + $0x110] sm:$0x1]
      %v2480 = vld [vmem:[#allocation2 + $0x114] sm:$0xe]
      %v2481 = vld [vmem:[#allocation2 + $0x118] sm:$0xf]
      %v2482 = vld [vmem:[#allocation2 + $0x11c] sm:$0x1]
      %v2483 = vld [vmem:[#allocation2 + $0x120] sm:$0xe]
      %v2484 = vld [vmem:[#allocation2 + $0x124] sm:$0xf]
      %v2485 = vld [vmem:[#allocation2 + $0x128] sm:$0x1]
      %v2486 = vld [vmem:[#allocation2 + $0x12c] sm:$0xe]
      %v2487 = vld [vmem:[#allocation2 + $0x130] sm:$0xf]
      %v2488 = vld [vmem:[#allocation2 + $0x134] sm:$0x1]
      %v2489 = vld [vmem:[#allocation2 + $0x138] sm:$0xe]
      %v2490 = vld [vmem:[#allocation2 + $0x13c] sm:$0xf]
      %v2491 = vld [vmem:[#allocation2 + $0x140] sm:$0x1]
      %v2492 = vld [vmem:[#allocation2 + $0x144] sm:$0xe]
      %v2493 = vld [vmem:[#allocation2 + $0x148] sm:$0xf]
      %v2494 = vld [vmem:[#allocation2 + $0x14c] sm:$0x1]
      %v2495 = vld [vmem:[#allocation2 + $0x150] sm:$0xe]
      %v2496 = vld [vmem:[#allocation2 + $0x154] sm:$0xf]
      %v2497 = vld [vmem:[#allocation2 + $0x158] sm:$0x1]
      %v2498 = vld [vmem:[#allocation2 + $0x15c] sm:$0xe]
      %v2499 = vld [vmem:[#allocation2 + $0x160] sm:$0xf]
      %v2500 = vld [vmem:[#allocation2 + $0x164] sm:$0x1]
      %v2501 = vld [vmem:[#allocation2 + $0x168] sm:$0xe]
      %v2502 = vld [vmem:[#allocation2 + $0x16c] sm:$0xf]
      %v2503 = vld [vmem:[#allocation2 + $0x170] sm:$0x1]
      %v2504 = vld [vmem:[#allocation2 + $0x174] sm:$0xe]
      %v2505 = vld [vmem:[#allocation2 + $0x178] sm:$0xf]
      %v2506 = vld [vmem:[#allocation2 + $0x17c] sm:$0x1]
      %v2507 = vld [vmem:[#allocation2 + $0x180] sm:$0xe]
      %v2508 = vld [vmem:[#allocation2 + $0x184] sm:$0xf]
      %v2509 = vld [vmem:[#allocation2 + $0x188] sm:$0x1]
      %v2510 = vld [vmem:[#allocation2 + $0x18c] sm:$0xe]
      %v2511 = vld [vmem:[#allocation2 + $0x190] sm:$0xf]
      %v2512 = vld [vmem:[#allocation2 + $0x194] sm:$0x1]
      %vm2609 = vcmask 1042432
      %vm2610 = vcmask 1046532
      %vm2611 = vmor %vm2609, %vm2610
      %v2612 = vrot.slane %v2417, 5
      %v2613 = vrot.slane %v2612, 4
      %v2614 = vrot.slane %v2418, 5
      %v2615 = vsel %vm2611, %v2613, %v2614
      %v2616 = vrot.slane %v2614, 4
      %v2617 = vrot.slane %v2419, 5
      %v2618 = vsel %vm2611, %v2616, %v2617
      %v2619 = vrot.slane %v2420, 5
      %v2620 = vrot.slane %v2619, 4
      %v2621 = vrot.slane %v2421, 5
      %v2622 = vsel %vm2611, %v2620, %v2621
      %v2623 = vrot.slane %v2621, 4
      %v2624 = vrot.slane %v2422, 5
      %v2625 = vsel %vm2611, %v2623, %v2624
      %v2626 = vrot.slane %v2423, 5
      %v2627 = vrot.slane %v2626, 4
      %v2628 = vrot.slane %v2424, 5
      %v2629 = vsel %vm2611, %v2627, %v2628
      %v2630 = vrot.slane %v2628, 4
      %v2631 = vrot.slane %v2425, 5
      %v2632 = vsel %vm2611, %v2630, %v2631
      %v2633 = vrot.slane %v2426, 5
      %v2634 = vrot.slane %v2633, 4
      %v2635 = vrot.slane %v2427, 5
      %v2636 = vsel %vm2611, %v2634, %v2635
      %v2637 = vrot.slane %v2635, 4
      %v2638 = vrot.slane %v2428, 5
      %v2639 = vsel %vm2611, %v2637, %v2638
      %v2640 = vrot.slane %v2429, 5
      %v2641 = vrot.slane %v2640, 4
      %v2642 = vrot.slane %v2430, 5
      %v2643 = vsel %vm2611, %v2641, %v2642
      %v2644 = vrot.slane %v2642, 4
      %v2645 = vrot.slane %v2431, 5
      %v2646 = vsel %vm2611, %v2644, %v2645
      %v2647 = vrot.slane %v2432, 5
      %v2648 = vrot.slane %v2647, 4
      %v2649 = vrot.slane %v2433, 5
      %v2650 = vsel %vm2611, %v2648, %v2649
      %v2651 = vrot.slane %v2649, 4
      %v2652 = vrot.slane %v2434, 5
      %v2653 = vsel %vm2611, %v2651, %v2652
      %v2654 = vrot.slane %v2435, 5
      %v2655 = vrot.slane %v2654, 4
      %v2656 = vrot.slane %v2436, 5
      %v2657 = vsel %vm2611, %v2655, %v2656
      %v2658 = vrot.slane %v2656, 4
      %v2659 = vrot.slane %v2437, 5
      %v2660 = vsel %vm2611, %v2658, %v2659
      %v2661 = vrot.slane %v2438, 5
      %v2662 = vrot.slane %v2661, 4
      %v2663 = vrot.slane %v2439, 5
      %v2664 = vsel %vm2611, %v2662, %v2663
      %v2665 = vrot.slane %v2663, 4
      %v2666 = vrot.slane %v2440, 5
      %v2667 = vsel %vm2611, %v2665, %v2666
      %v2668 = vrot.slane %v2441, 5
      %v2669 = vrot.slane %v2668, 4
      %v2670 = vrot.slane %v2442, 5
      %v2671 = vsel %vm2611, %v2669, %v2670
      %v2672 = vrot.slane %v2670, 4
      %v2673 = vrot.slane %v2443, 5
      %v2674 = vsel %vm2611, %v2672, %v2673
      %v2675 = vrot.slane %v2444, 5
      %v2676 = vrot.slane %v2675, 4
      %v2677 = vrot.slane %v2445, 5
      %v2678 = vsel %vm2611, %v2676, %v2677
      %v2679 = vrot.slane %v2677, 4
      %v2680 = vrot.slane %v2446, 5
      %v2681 = vsel %vm2611, %v2679, %v2680
      %v2682 = vrot.slane %v2447, 5
      %v2683 = vrot.slane %v2682, 4
      %v2684 = vrot.slane %v2448, 5
      %v2685 = vsel %vm2611, %v2683, %v2684
      %v2686 = vrot.slane %v2684, 4
      %v2687 = vrot.slane %v2449, 5
      %v2688 = vsel %vm2611, %v2686, %v2687
      %v2689 = vrot.slane %v2450, 5
      %v2690 = vrot.slane %v2689, 4
      %v2691 = vrot.slane %v2451, 5
      %v2692 = vsel %vm2611, %v2690, %v2691
      %v2693 = vrot.slane %v2691, 4
      %v2694 = vrot.slane %v2452, 5
      %v2695 = vsel %vm2611, %v2693, %v2694
      %v2696 = vrot.slane %v2453, 5
      %v2697 = vrot.slane %v2696, 4
      %v2698 = vrot.slane %v2454, 5
      %v2699 = vsel %vm2611, %v2697, %v2698
      %v2700 = vrot.slane %v2698, 4
      %v2701 = vrot.slane %v2455, 5
      %v2702 = vsel %vm2611, %v2700, %v2701
      %v2703 = vrot.slane %v2456, 5
      %v2704 = vrot.slane %v2703, 4
      %v2705 = vrot.slane %v2457, 5
      %v2706 = vsel %vm2611, %v2704, %v2705
      %v2707 = vrot.slane %v2705, 4
      %v2708 = vrot.slane %v2458, 5
      %v2709 = vsel %vm2611, %v2707, %v2708
      %v2710 = vrot.slane %v2459, 5
      %v2711 = vrot.slane %v2710, 4
      %v2712 = vrot.slane %v2460, 5
      %v2713 = vsel %vm2611, %v2711, %v2712
      %v2714 = vrot.slane %v2712, 4
      %v2715 = vrot.slane %v2461, 5
      %v2716 = vsel %vm2611, %v2714, %v2715
      %v2717 = vrot.slane %v2462, 5
      %v2718 = vrot.slane %v2717, 4
      %v2719 = vrot.slane %v2463, 5
      %v2720 = vsel %vm2611, %v2718, %v2719
      %v2721 = vrot.slane %v2719, 4
      %v2722 = vrot.slane %v2464, 5
      %v2723 = vsel %vm2611, %v2721, %v2722
      %v2724 = vrot.slane %v2465, 5
      %v2725 = vrot.slane %v2724, 4
      %v2726 = vrot.slane %v2466, 5
      %v2727 = vsel %vm2611, %v2725, %v2726
      %v2728 = vrot.slane %v2726, 4
      %v2729 = vrot.slane %v2467, 5
      %v2730 = vsel %vm2611, %v2728, %v2729
      %v2731 = vrot.slane %v2468, 5
      %v2732 = vrot.slane %v2731, 4
      %v2733 = vrot.slane %v2469, 5
      %v2734 = vsel %vm2611, %v2732, %v2733
      %v2735 = vrot.slane %v2733, 4
      %v2736 = vrot.slane %v2470, 5
      %v2737 = vsel %vm2611, %v2735, %v2736
      %v2738 = vrot.slane %v2471, 5
      %v2739 = vrot.slane %v2738, 4
      %v2740 = vrot.slane %v2472, 5
      %v2741 = vsel %vm2611, %v2739, %v2740
      %v2742 = vrot.slane %v2740, 4
      %v2743 = vrot.slane %v2473, 5
      %v2744 = vsel %vm2611, %v2742, %v2743
      %v2745 = vrot.slane %v2474, 5
      %v2746 = vrot.slane %v2745, 4
      %v2747 = vrot.slane %v2475, 5
      %v2748 = vsel %vm2611, %v2746, %v2747
      %v2749 = vrot.slane %v2747, 4
      %v2750 = vrot.slane %v2476, 5
      %v2751 = vsel %vm2611, %v2749, %v2750
      %v2752 = vrot.slane %v2477, 5
      %v2753 = vrot.slane %v2752, 4
      %v2754 = vrot.slane %v2478, 5
      %v2755 = vsel %vm2611, %v2753, %v2754
      %v2756 = vrot.slane %v2754, 4
      %v2757 = vrot.slane %v2479, 5
      %v2758 = vsel %vm2611, %v2756, %v2757
      %v2759 = vrot.slane %v2480, 5
      %v2760 = vrot.slane %v2759, 4
      %v2761 = vrot.slane %v2481, 5
      %v2762 = vsel %vm2611, %v2760, %v2761
      %v2763 = vrot.slane %v2761, 4
      %v2764 = vrot.slane %v2482, 5
      %v2765 = vsel %vm2611, %v2763, %v2764
      %v2766 = vrot.slane %v2483, 5
      %v2767 = vrot.slane %v2766, 4
      %v2768 = vrot.slane %v2484, 5
      %v2769 = vsel %vm2611, %v2767, %v2768
      %v2770 = vrot.slane %v2768, 4
      %v2771 = vrot.slane %v2485, 5
      %v2772 = vsel %vm2611, %v2770, %v2771
      %v2773 = vrot.slane %v2486, 5
      %v2774 = vrot.slane %v2773, 4
      %v2775 = vrot.slane %v2487, 5
      %v2776 = vsel %vm2611, %v2774, %v2775
      %v2777 = vrot.slane %v2775, 4
      %v2778 = vrot.slane %v2488, 5
      %v2779 = vsel %vm2611, %v2777, %v2778
      %v2780 = vrot.slane %v2489, 5
      %v2781 = vrot.slane %v2780, 4
      %v2782 = vrot.slane %v2490, 5
      %v2783 = vsel %vm2611, %v2781, %v2782
      %v2784 = vrot.slane %v2782, 4
      %v2785 = vrot.slane %v2491, 5
      %v2786 = vsel %vm2611, %v2784, %v2785
      %v2787 = vrot.slane %v2492, 5
      %v2788 = vrot.slane %v2787, 4
      %v2789 = vrot.slane %v2493, 5
      %v2790 = vsel %vm2611, %v2788, %v2789
      %v2791 = vrot.slane %v2789, 4
      %v2792 = vrot.slane %v2494, 5
      %v2793 = vsel %vm2611, %v2791, %v2792
      %v2794 = vrot.slane %v2495, 5
      %v2795 = vrot.slane %v2794, 4
      %v2796 = vrot.slane %v2496, 5
      %v2797 = vsel %vm2611, %v2795, %v2796
      %v2798 = vrot.slane %v2796, 4
      %v2799 = vrot.slane %v2497, 5
      %v2800 = vsel %vm2611, %v2798, %v2799
      %v2801 = vrot.slane %v2498, 5
      %v2802 = vrot.slane %v2801, 4
      %v2803 = vrot.slane %v2499, 5
      %v2804 = vsel %vm2611, %v2802, %v2803
      %v2805 = vrot.slane %v2803, 4
      %v2806 = vrot.slane %v2500, 5
      %v2807 = vsel %vm2611, %v2805, %v2806
      %v2808 = vrot.slane %v2501, 5
      %v2809 = vrot.slane %v2808, 4
      %v2810 = vrot.slane %v2502, 5
      %v2811 = vsel %vm2611, %v2809, %v2810
      %v2812 = vrot.slane %v2810, 4
      %v2813 = vrot.slane %v2503, 5
      %v2814 = vsel %vm2611, %v2812, %v2813
      %v2815 = vrot.slane %v2504, 5
      %v2816 = vrot.slane %v2815, 4
      %v2817 = vrot.slane %v2505, 5
      %v2818 = vsel %vm2611, %v2816, %v2817
      %v2819 = vrot.slane %v2817, 4
      %v2820 = vrot.slane %v2506, 5
      %v2821 = vsel %vm2611, %v2819, %v2820
      %v2822 = vrot.slane %v2507, 5
      %v2823 = vrot.slane %v2822, 4
      %v2824 = vrot.slane %v2508, 5
      %v2825 = vsel %vm2611, %v2823, %v2824
      %v2826 = vrot.slane %v2824, 4
      %v2827 = vrot.slane %v2509, 5
      %v2828 = vsel %vm2611, %v2826, %v2827
      %v2829 = vrot.slane %v2510, 5
      %v2830 = vrot.slane %v2829, 4
      %v2831 = vrot.slane %v2511, 5
      %v2832 = vsel %vm2611, %v2830, %v2831
      %v2833 = vrot.slane %v2831, 4
      %v2834 = vrot.slane %v2512, 5
      %v2835 = vsel %vm2611, %v2833, %v2834
      %2836 = vrot.lane.b32.xlu0 %v2615, 8
      %v2837 = vpop.permute.xlu0 %2836
      %2838 = vrot.lane.b32.xlu0 %v2618, 8
      %v2839 = vpop.permute.xlu0 %2838
      %2840 = vrot.lane.b32.xlu0 %v2622, 8
      %v2841 = vpop.permute.xlu0 %2840
      %2842 = vrot.lane.b32.xlu0 %v2625, 8
      %v2843 = vpop.permute.xlu0 %2842
      %2844 = vrot.lane.b32.xlu0 %v2629, 8
      %v2845 = vpop.permute.xlu0 %2844
      %2846 = vrot.lane.b32.xlu0 %v2632, 8
      %v2847 = vpop.permute.xlu0 %2846
      %2848 = vrot.lane.b32.xlu0 %v2636, 8
      %v2849 = vpop.permute.xlu0 %2848
      %2850 = vrot.lane.b32.xlu0 %v2639, 8
      %v2851 = vpop.permute.xlu0 %2850
      %2852 = vrot.lane.b32.xlu0 %v2643, 8
      %v2853 = vpop.permute.xlu0 %2852
      %2854 = vrot.lane.b32.xlu0 %v2646, 8
      %v2855 = vpop.permute.xlu0 %2854
      %2856 = vrot.lane.b32.xlu0 %v2650, 8
      %v2857 = vpop.permute.xlu0 %2856
      %2858 = vrot.lane.b32.xlu0 %v2653, 8
      %v2859 = vpop.permute.xlu0 %2858
      %2860 = vrot.lane.b32.xlu0 %v2657, 8
      %v2861 = vpop.permute.xlu0 %2860
      %2862 = vrot.lane.b32.xlu0 %v2660, 8
      %v2863 = vpop.permute.xlu0 %2862
      %2864 = vrot.lane.b32.xlu0 %v2664, 8
      %v2865 = vpop.permute.xlu0 %2864
      %2866 = vrot.lane.b32.xlu0 %v2667, 8
      %v2867 = vpop.permute.xlu0 %2866
      %2868 = vrot.lane.b32.xlu0 %v2671, 8
      %v2869 = vpop.permute.xlu0 %2868
      %2870 = vrot.lane.b32.xlu0 %v2674, 8
      %v2871 = vpop.permute.xlu0 %2870
      %2872 = vrot.lane.b32.xlu0 %v2678, 8
      %v2873 = vpop.permute.xlu0 %2872
      %2874 = vrot.lane.b32.xlu0 %v2681, 8
      %v2875 = vpop.permute.xlu0 %2874
      %2876 = vrot.lane.b32.xlu0 %v2685, 8
      %v2877 = vpop.permute.xlu0 %2876
      %2878 = vrot.lane.b32.xlu0 %v2688, 8
      %v2879 = vpop.permute.xlu0 %2878
      %2880 = vrot.lane.b32.xlu0 %v2692, 8
      %v2881 = vpop.permute.xlu0 %2880
      %2882 = vrot.lane.b32.xlu0 %v2695, 8
      %v2883 = vpop.permute.xlu0 %2882
      %2884 = vrot.lane.b32.xlu0 %v2699, 8
      %v2885 = vpop.permute.xlu0 %2884
      %2886 = vrot.lane.b32.xlu0 %v2702, 8
      %v2887 = vpop.permute.xlu0 %2886
      %2888 = vrot.lane.b32.xlu0 %v2706, 8
      %v2889 = vpop.permute.xlu0 %2888
      %2890 = vrot.lane.b32.xlu0 %v2709, 8
      %v2891 = vpop.permute.xlu0 %2890
      %2892 = vrot.lane.b32.xlu0 %v2713, 8
      %v2893 = vpop.permute.xlu0 %2892
      %2894 = vrot.lane.b32.xlu0 %v2716, 8
      %v2895 = vpop.permute.xlu0 %2894
      %2896 = vrot.lane.b32.xlu0 %v2720, 8
      %v2897 = vpop.permute.xlu0 %2896
      %2898 = vrot.lane.b32.xlu0 %v2723, 8
      %v2899 = vpop.permute.xlu0 %2898
      %2900 = vrot.lane.b32.xlu0 %v2727, 8
      %v2901 = vpop.permute.xlu0 %2900
      %2902 = vrot.lane.b32.xlu0 %v2730, 8
      %v2903 = vpop.permute.xlu0 %2902
      %2904 = vrot.lane.b32.xlu0 %v2734, 8
      %v2905 = vpop.permute.xlu0 %2904
      %2906 = vrot.lane.b32.xlu0 %v2737, 8
      %v2907 = vpop.permute.xlu0 %2906
      %2908 = vrot.lane.b32.xlu0 %v2741, 8
      %v2909 = vpop.permute.xlu0 %2908
      %2910 = vrot.lane.b32.xlu0 %v2744, 8
      %v2911 = vpop.permute.xlu0 %2910
      %2912 = vrot.lane.b32.xlu0 %v2748, 8
      %v2913 = vpop.permute.xlu0 %2912
      %2914 = vrot.lane.b32.xlu0 %v2751, 8
      %v2915 = vpop.permute.xlu0 %2914
      %2916 = vrot.lane.b32.xlu0 %v2755, 8
      %v2917 = vpop.permute.xlu0 %2916
      %2918 = vrot.lane.b32.xlu0 %v2758, 8
      %v2919 = vpop.permute.xlu0 %2918
      %2920 = vrot.lane.b32.xlu0 %v2762, 8
      %v2921 = vpop.permute.xlu0 %2920
      %2922 = vrot.lane.b32.xlu0 %v2765, 8
      %v2923 = vpop.permute.xlu0 %2922
      %2924 = vrot.lane.b32.xlu0 %v2769, 8
      %v2925 = vpop.permute.xlu0 %2924
      %2926 = vrot.lane.b32.xlu0 %v2772, 8
      %v2927 = vpop.permute.xlu0 %2926
      %2928 = vrot.lane.b32.xlu0 %v2776, 8
      %v2929 = vpop.permute.xlu0 %2928
      %2930 = vrot.lane.b32.xlu0 %v2779, 8
      %v2931 = vpop.permute.xlu0 %2930
      %2932 = vrot.lane.b32.xlu0 %v2783, 8
      %v2933 = vpop.permute.xlu0 %2932
      %2934 = vrot.lane.b32.xlu0 %v2786, 8
      %v2935 = vpop.permute.xlu0 %2934
      %2936 = vrot.lane.b32.xlu0 %v2790, 8
      %v2937 = vpop.permute.xlu0 %2936
      %2938 = vrot.lane.b32.xlu0 %v2793, 8
      %v2939 = vpop.permute.xlu0 %2938
      %2940 = vrot.lane.b32.xlu0 %v2797, 8
      %v2941 = vpop.permute.xlu0 %2940
      %2942 = vrot.lane.b32.xlu0 %v2800, 8
      %v2943 = vpop.permute.xlu0 %2942
      %2944 = vrot.lane.b32.xlu0 %v2804, 8
      %v2945 = vpop.permute.xlu0 %2944
      %2946 = vrot.lane.b32.xlu0 %v2807, 8
      %v2947 = vpop.permute.xlu0 %2946
      %2948 = vrot.lane.b32.xlu0 %v2811, 8
      %v2949 = vpop.permute.xlu0 %2948
      %2950 = vrot.lane.b32.xlu0 %v2814, 8
      %v2951 = vpop.permute.xlu0 %2950
      %2952 = vrot.lane.b32.xlu0 %v2818, 8
      %v2953 = vpop.permute.xlu0 %2952
      %2954 = vrot.lane.b32.xlu0 %v2821, 8
      %v2955 = vpop.permute.xlu0 %2954
      %2956 = vrot.lane.b32.xlu0 %v2825, 8
      %v2957 = vpop.permute.xlu0 %2956
      %2958 = vrot.lane.b32.xlu0 %v2828, 8
      %v2959 = vpop.permute.xlu0 %2958
      %2960 = vrot.lane.b32.xlu0 %v2832, 8
      %v2961 = vpop.permute.xlu0 %2960
      %2962 = vrot.lane.b32.xlu0 %v2835, 8
      %v2963 = vpop.permute.xlu0 %2962
      %vm3028 = vcmask 93248
      %3029 = vst.msk [vmem:[#allocation3] sm:$0xf] %vm3028, %v2837
      %3030 = vst.msk [vmem:[#allocation3 + $0x4] sm:$0xf] %vm3028, %v2839
      %3031 = vst.msk [vmem:[#allocation3 + $0x8] sm:$0xf] %vm3028, %v2841
      %3032 = vst.msk [vmem:[#allocation3 + $0xc] sm:$0xf] %vm3028, %v2843
      %3033 = vst.msk [vmem:[#allocation3 + $0x10] sm:$0xf] %vm3028, %v2845
      %3034 = vst.msk [vmem:[#allocation3 + $0x14] sm:$0xf] %vm3028, %v2847
      %3035 = vst.msk [vmem:[#allocation3 + $0x18] sm:$0xf] %vm3028, %v2849
      %3036 = vst.msk [vmem:[#allocation3 + $0x1c] sm:$0xf] %vm3028, %v2851
      %3037 = vst.msk [vmem:[#allocation3 + $0x20] sm:$0xf] %vm3028, %v2853
      %3038 = vst.msk [vmem:[#allocation3 + $0x24] sm:$0xf] %vm3028, %v2855
      %3039 = vst.msk [vmem:[#allocation3 + $0x28] sm:$0xf] %vm3028, %v2857
      %3040 = vst.msk [vmem:[#allocation3 + $0x2c] sm:$0xf] %vm3028, %v2859
      %3041 = vst.msk [vmem:[#allocation3 + $0x30] sm:$0xf] %vm3028, %v2861
      %3042 = vst.msk [vmem:[#allocation3 + $0x34] sm:$0xf] %vm3028, %v2863
      %3043 = vst.msk [vmem:[#allocation3 + $0x38] sm:$0xf] %vm3028, %v2865
      %3044 = vst.msk [vmem:[#allocation3 + $0x3c] sm:$0xf] %vm3028, %v2867
      %3045 = vst.msk [vmem:[#allocation3 + $0x40] sm:$0xf] %vm3028, %v2869
      %3046 = vst.msk [vmem:[#allocation3 + $0x44] sm:$0xf] %vm3028, %v2871
      %3047 = vst.msk [vmem:[#allocation3 + $0x48] sm:$0xf] %vm3028, %v2873
      %3048 = vst.msk [vmem:[#allocation3 + $0x4c] sm:$0xf] %vm3028, %v2875
      %3049 = vst.msk [vmem:[#allocation3 + $0x50] sm:$0xf] %vm3028, %v2877
      %3050 = vst.msk [vmem:[#allocation3 + $0x54] sm:$0xf] %vm3028, %v2879
      %3051 = vst.msk [vmem:[#allocation3 + $0x58] sm:$0xf] %vm3028, %v2881
      %3052 = vst.msk [vmem:[#allocation3 + $0x5c] sm:$0xf] %vm3028, %v2883
      %3053 = vst.msk [vmem:[#allocation3 + $0x60] sm:$0xf] %vm3028, %v2885
      %3054 = vst.msk [vmem:[#allocation3 + $0x64] sm:$0xf] %vm3028, %v2887
      %3055 = vst.msk [vmem:[#allocation3 + $0x68] sm:$0xf] %vm3028, %v2889
      %3056 = vst.msk [vmem:[#allocation3 + $0x6c] sm:$0xf] %vm3028, %v2891
      %3057 = vst.msk [vmem:[#allocation3 + $0x70] sm:$0xf] %vm3028, %v2893
      %3058 = vst.msk [vmem:[#allocation3 + $0x74] sm:$0xf] %vm3028, %v2895
      %3059 = vst.msk [vmem:[#allocation3 + $0x78] sm:$0xf] %vm3028, %v2897
      %3060 = vst.msk [vmem:[#allocation3 + $0x7c] sm:$0xf] %vm3028, %v2899
      %3061 = vst.msk [vmem:[#allocation3 + $0x80] sm:$0xf] %vm3028, %v2901
      %3062 = vst.msk [vmem:[#allocation3 + $0x84] sm:$0xf] %vm3028, %v2903
      %3063 = vst.msk [vmem:[#allocation3 + $0x88] sm:$0xf] %vm3028, %v2905
      %3064 = vst.msk [vmem:[#allocation3 + $0x8c] sm:$0xf] %vm3028, %v2907
      %3065 = vst.msk [vmem:[#allocation3 + $0x90] sm:$0xf] %vm3028, %v2909
      %3066 = vst.msk [vmem:[#allocation3 + $0x94] sm:$0xf] %vm3028, %v2911
      %3067 = vst.msk [vmem:[#allocation3 + $0x98] sm:$0xf] %vm3028, %v2913
      %3068 = vst.msk [vmem:[#allocation3 + $0x9c] sm:$0xf] %vm3028, %v2915
      %3069 = vst.msk [vmem:[#allocation3 + $0xa0] sm:$0xf] %vm3028, %v2917
      %3070 = vst.msk [vmem:[#allocation3 + $0xa4] sm:$0xf] %vm3028, %v2919
      %3071 = vst.msk [vmem:[#allocation3 + $0xa8] sm:$0xf] %vm3028, %v2921
      %3072 = vst.msk [vmem:[#allocation3 + $0xac] sm:$0xf] %vm3028, %v2923
      %3073 = vst.msk [vmem:[#allocation3 + $0xb0] sm:$0xf] %vm3028, %v2925
      %3074 = vst.msk [vmem:[#allocation3 + $0xb4] sm:$0xf] %vm3028, %v2927
      %3075 = vst.msk [vmem:[#allocation3 + $0xb8] sm:$0xf] %vm3028, %v2929
      %3076 = vst.msk [vmem:[#allocation3 + $0xbc] sm:$0xf] %vm3028, %v2931
      %3077 = vst.msk [vmem:[#allocation3 + $0xc0] sm:$0xf] %vm3028, %v2933
      %3078 = vst.msk [vmem:[#allocation3 + $0xc4] sm:$0xf] %vm3028, %v2935
      %3079 = vst.msk [vmem:[#allocation3 + $0xc8] sm:$0xf] %vm3028, %v2937
      %3080 = vst.msk [vmem:[#allocation3 + $0xcc] sm:$0xf] %vm3028, %v2939
      %3081 = vst.msk [vmem:[#allocation3 + $0xd0] sm:$0xf] %vm3028, %v2941
      %3082 = vst.msk [vmem:[#allocation3 + $0xd4] sm:$0xf] %vm3028, %v2943
      %3083 = vst.msk [vmem:[#allocation3 + $0xd8] sm:$0xf] %vm3028, %v2945
      %3084 = vst.msk [vmem:[#allocation3 + $0xdc] sm:$0xf] %vm3028, %v2947
      %3085 = vst.msk [vmem:[#allocation3 + $0xe0] sm:$0xf] %vm3028, %v2949
      %3086 = vst.msk [vmem:[#allocation3 + $0xe4] sm:$0xf] %vm3028, %v2951
      %3087 = vst.msk [vmem:[#allocation3 + $0xe8] sm:$0xf] %vm3028, %v2953
      %3088 = vst.msk [vmem:[#allocation3 + $0xec] sm:$0xf] %vm3028, %v2955
      %3089 = vst.msk [vmem:[#allocation3 + $0xf0] sm:$0xf] %vm3028, %v2957
      %3090 = vst.msk [vmem:[#allocation3 + $0xf4] sm:$0xf] %vm3028, %v2959
      %3091 = vst.msk [vmem:[#allocation3 + $0xf8] sm:$0xf] %vm3028, %v2961
      %3092 = vst.msk [vmem:[#allocation3 + $0xfc] sm:$0xf] %vm3028, %v2963
      %v3093 = vld [vmem:[%s35] sm:$0xf]
      %v3094 = vld [vmem:[%s35 + $0x4] sm:$0xf]
      %v3095 = vld [vmem:[%s35 + $0xc] sm:$0xf]
      %v3096 = vld [vmem:[%s35 + $0x10] sm:$0xf]
      %v3097 = vld [vmem:[%s35 + $0x18] sm:$0xf]
      %v3098 = vld [vmem:[%s35 + $0x1c] sm:$0xf]
      %v3099 = vld [vmem:[%s35 + $0x24] sm:$0xf]
      %v3100 = vld [vmem:[%s35 + $0x28] sm:$0xf]
      %v3101 = vld [vmem:[%s35 + $0x30] sm:$0xf]
      %v3102 = vld [vmem:[%s35 + $0x34] sm:$0xf]
      %v3103 = vld [vmem:[%s35 + $0x3c] sm:$0xf]
      %v3104 = vld [vmem:[%s35 + $0x40] sm:$0xf]
      %v3105 = vld [vmem:[%s35 + $0x48] sm:$0xf]
      %v3106 = vld [vmem:[%s35 + $0x4c] sm:$0xf]
      %v3107 = vld [vmem:[%s35 + $0x54] sm:$0xf]
      %v3108 = vld [vmem:[%s35 + $0x58] sm:$0xf]
      %v3109 = vld [vmem:[%s35 + $0x60] sm:$0xf]
      %v3110 = vld [vmem:[%s35 + $0x64] sm:$0xf]
      %v3111 = vld [vmem:[%s35 + $0x6c] sm:$0xf]
      %v3112 = vld [vmem:[%s35 + $0x70] sm:$0xf]
      %v3113 = vld [vmem:[%s35 + $0x78] sm:$0xf]
      %v3114 = vld [vmem:[%s35 + $0x7c] sm:$0xf]
      %v3115 = vld [vmem:[%s35 + $0x84] sm:$0xf]
      %v3116 = vld [vmem:[%s35 + $0x88] sm:$0xf]
      %v3117 = vld [vmem:[%s35 + $0x90] sm:$0xf]
      %v3118 = vld [vmem:[%s35 + $0x94] sm:$0xf]
      %v3119 = vld [vmem:[%s35 + $0x9c] sm:$0xf]
      %v3120 = vld [vmem:[%s35 + $0xa0] sm:$0xf]
      %v3121 = vld [vmem:[%s35 + $0xa8] sm:$0xf]
      %v3122 = vld [vmem:[%s35 + $0xac] sm:$0xf]
      %v3123 = vld [vmem:[%s35 + $0xb4] sm:$0xf]
      %v3124 = vld [vmem:[%s35 + $0xb8] sm:$0xf]
      %v3125 = vld [vmem:[%s35 + $0xd8] sm:$0xf]
      %v3126 = vld [vmem:[%s35 + $0xdc] sm:$0xf]
      %v3127 = vld [vmem:[%s35 + $0xe4] sm:$0xf]
      %v3128 = vld [vmem:[%s35 + $0xe8] sm:$0xf]
      %v3129 = vld [vmem:[%s35 + $0xf0] sm:$0xf]
      %v3130 = vld [vmem:[%s35 + $0xf4] sm:$0xf]
      %v3131 = vld [vmem:[%s35 + $0xfc] sm:$0xf]
      %v3132 = vld [vmem:[%s35 + $0x100] sm:$0xf]
      %v3133 = vld [vmem:[%s35 + $0x108] sm:$0xf]
      %v3134 = vld [vmem:[%s35 + $0x10c] sm:$0xf]
      %v3135 = vld [vmem:[%s35 + $0x114] sm:$0xf]
      %v3136 = vld [vmem:[%s35 + $0x118] sm:$0xf]
      %v3137 = vld [vmem:[%s35 + $0x120] sm:$0xf]
      %v3138 = vld [vmem:[%s35 + $0x124] sm:$0xf]
      %v3139 = vld [vmem:[%s35 + $0x12c] sm:$0xf]
      %v3140 = vld [vmem:[%s35 + $0x130] sm:$0xf]
      %v3141 = vld [vmem:[%s35 + $0x138] sm:$0xf]
      %v3142 = vld [vmem:[%s35 + $0x13c] sm:$0xf]
      %v3143 = vld [vmem:[%s35 + $0x144] sm:$0xf]
      %v3144 = vld [vmem:[%s35 + $0x148] sm:$0xf]
      %v3145 = vld [vmem:[%s35 + $0x150] sm:$0xf]
      %v3146 = vld [vmem:[%s35 + $0x154] sm:$0xf]
      %v3147 = vld [vmem:[%s35 + $0x15c] sm:$0xf]
      %v3148 = vld [vmem:[%s35 + $0x160] sm:$0xf]
      %v3149 = vld [vmem:[%s35 + $0x168] sm:$0xf]
      %v3150 = vld [vmem:[%s35 + $0x16c] sm:$0xf]
      %v3151 = vld [vmem:[%s35 + $0x174] sm:$0xf]
      %v3152 = vld [vmem:[%s35 + $0x178] sm:$0xf]
      %v3153 = vld [vmem:[%s35 + $0x180] sm:$0xf]
      %v3154 = vld [vmem:[%s35 + $0x184] sm:$0xf]
      %v3155 = vld [vmem:[%s35 + $0x18c] sm:$0xf]
      %v3156 = vld [vmem:[%s35 + $0x190] sm:$0xf]
      %3221 = vrot.lane.b32.xlu0 %v3093, 12
      %v3222 = vpop.permute.xlu0 %3221
      %3223 = vrot.lane.b32.xlu0 %v3094, 12
      %v3224 = vpop.permute.xlu0 %3223
      %3225 = vrot.lane.b32.xlu0 %v3095, 12
      %v3226 = vpop.permute.xlu0 %3225
      %3227 = vrot.lane.b32.xlu0 %v3096, 12
      %v3228 = vpop.permute.xlu0 %3227
      %3229 = vrot.lane.b32.xlu0 %v3097, 12
      %v3230 = vpop.permute.xlu0 %3229
      %3231 = vrot.lane.b32.xlu0 %v3098, 12
      %v3232 = vpop.permute.xlu0 %3231
      %3233 = vrot.lane.b32.xlu0 %v3099, 12
      %v3234 = vpop.permute.xlu0 %3233
      %3235 = vrot.lane.b32.xlu0 %v3100, 12
      %v3236 = vpop.permute.xlu0 %3235
      %3237 = vrot.lane.b32.xlu0 %v3101, 12
      %v3238 = vpop.permute.xlu0 %3237
      %3239 = vrot.lane.b32.xlu0 %v3102, 12
      %v3240 = vpop.permute.xlu0 %3239
      %3241 = vrot.lane.b32.xlu0 %v3103, 12
      %v3242 = vpop.permute.xlu0 %3241
      %3243 = vrot.lane.b32.xlu0 %v3104, 12
      %v3244 = vpop.permute.xlu0 %3243
      %3245 = vrot.lane.b32.xlu0 %v3105, 12
      %v3246 = vpop.permute.xlu0 %3245
      %3247 = vrot.lane.b32.xlu0 %v3106, 12
      %v3248 = vpop.permute.xlu0 %3247
      %3249 = vrot.lane.b32.xlu0 %v3107, 12
      %v3250 = vpop.permute.xlu0 %3249
      %3251 = vrot.lane.b32.xlu0 %v3108, 12
      %v3252 = vpop.permute.xlu0 %3251
      %3253 = vrot.lane.b32.xlu0 %v3109, 12
      %v3254 = vpop.permute.xlu0 %3253
      %3255 = vrot.lane.b32.xlu0 %v3110, 12
      %v3256 = vpop.permute.xlu0 %3255
      %3257 = vrot.lane.b32.xlu0 %v3111, 12
      %v3258 = vpop.permute.xlu0 %3257
      %3259 = vrot.lane.b32.xlu0 %v3112, 12
      %v3260 = vpop.permute.xlu0 %3259
      %3261 = vrot.lane.b32.xlu0 %v3113, 12
      %v3262 = vpop.permute.xlu0 %3261
      %3263 = vrot.lane.b32.xlu0 %v3114, 12
      %v3264 = vpop.permute.xlu0 %3263
      %3265 = vrot.lane.b32.xlu0 %v3115, 12
      %v3266 = vpop.permute.xlu0 %3265
      %3267 = vrot.lane.b32.xlu0 %v3116, 12
      %v3268 = vpop.permute.xlu0 %3267
      %3269 = vrot.lane.b32.xlu0 %v3117, 12
      %v3270 = vpop.permute.xlu0 %3269
      %3271 = vrot.lane.b32.xlu0 %v3118, 12
      %v3272 = vpop.permute.xlu0 %3271
      %3273 = vrot.lane.b32.xlu0 %v3119, 12
      %v3274 = vpop.permute.xlu0 %3273
      %3275 = vrot.lane.b32.xlu0 %v3120, 12
      %v3276 = vpop.permute.xlu0 %3275
      %3277 = vrot.lane.b32.xlu0 %v3121, 12
      %v3278 = vpop.permute.xlu0 %3277
      %3279 = vrot.lane.b32.xlu0 %v3122, 12
      %v3280 = vpop.permute.xlu0 %3279
      %3281 = vrot.lane.b32.xlu0 %v3123, 12
      %v3282 = vpop.permute.xlu0 %3281
      %3283 = vrot.lane.b32.xlu0 %v3124, 12
      %v3284 = vpop.permute.xlu0 %3283
      %3285 = vrot.lane.b32.xlu0 %v3125, 12
      %v3286 = vpop.permute.xlu0 %3285
      %3287 = vrot.lane.b32.xlu0 %v3126, 12
      %v3288 = vpop.permute.xlu0 %3287
      %3289 = vrot.lane.b32.xlu0 %v3127, 12
      %v3290 = vpop.permute.xlu0 %3289
      %3291 = vrot.lane.b32.xlu0 %v3128, 12
      %v3292 = vpop.permute.xlu0 %3291
      %3293 = vrot.lane.b32.xlu0 %v3129, 12
      %v3294 = vpop.permute.xlu0 %3293
      %3295 = vrot.lane.b32.xlu0 %v3130, 12
      %v3296 = vpop.permute.xlu0 %3295
      %3297 = vrot.lane.b32.xlu0 %v3131, 12
      %v3298 = vpop.permute.xlu0 %3297
      %3299 = vrot.lane.b32.xlu0 %v3132, 12
      %v3300 = vpop.permute.xlu0 %3299
      %3301 = vrot.lane.b32.xlu0 %v3133, 12
      %v3302 = vpop.permute.xlu0 %3301
      %3303 = vrot.lane.b32.xlu0 %v3134, 12
      %v3304 = vpop.permute.xlu0 %3303
      %3305 = vrot.lane.b32.xlu0 %v3135, 12
      %v3306 = vpop.permute.xlu0 %3305
      %3307 = vrot.lane.b32.xlu0 %v3136, 12
      %v3308 = vpop.permute.xlu0 %3307
      %3309 = vrot.lane.b32.xlu0 %v3137, 12
      %v3310 = vpop.permute.xlu0 %3309
      %3311 = vrot.lane.b32.xlu0 %v3138, 12
      %v3312 = vpop.permute.xlu0 %3311
      %3313 = vrot.lane.b32.xlu0 %v3139, 12
      %v3314 = vpop.permute.xlu0 %3313
      %3315 = vrot.lane.b32.xlu0 %v3140, 12
      %v3316 = vpop.permute.xlu0 %3315
      %3317 = vrot.lane.b32.xlu0 %v3141, 12
      %v3318 = vpop.permute.xlu0 %3317
      %3319 = vrot.lane.b32.xlu0 %v3142, 12
      %v3320 = vpop.permute.xlu0 %3319
      %3321 = vrot.lane.b32.xlu0 %v3143, 12
      %v3322 = vpop.permute.xlu0 %3321
      %3323 = vrot.lane.b32.xlu0 %v3144, 12
      %v3324 = vpop.permute.xlu0 %3323
      %3325 = vrot.lane.b32.xlu0 %v3145, 12
      %v3326 = vpop.permute.xlu0 %3325
      %3327 = vrot.lane.b32.xlu0 %v3146, 12
      %v3328 = vpop.permute.xlu0 %3327
      %3329 = vrot.lane.b32.xlu0 %v3147, 12
      %v3330 = vpop.permute.xlu0 %3329
      %3331 = vrot.lane.b32.xlu0 %v3148, 12
      %v3332 = vpop.permute.xlu0 %3331
      %3333 = vrot.lane.b32.xlu0 %v3149, 12
      %v3334 = vpop.permute.xlu0 %3333
      %3335 = vrot.lane.b32.xlu0 %v3150, 12
      %v3336 = vpop.permute.xlu0 %3335
      %3337 = vrot.lane.b32.xlu0 %v3151, 12
      %v3338 = vpop.permute.xlu0 %3337
      %3339 = vrot.lane.b32.xlu0 %v3152, 12
      %v3340 = vpop.permute.xlu0 %3339
      %3341 = vrot.lane.b32.xlu0 %v3153, 12
      %v3342 = vpop.permute.xlu0 %3341
      %3343 = vrot.lane.b32.xlu0 %v3154, 12
      %v3344 = vpop.permute.xlu0 %3343
      %3345 = vrot.lane.b32.xlu0 %v3155, 12
      %v3346 = vpop.permute.xlu0 %3345
      %3347 = vrot.lane.b32.xlu0 %v3156, 12
      %v3348 = vpop.permute.xlu0 %3347
      %vm3413 = vcmask 126048
      %3414 = vst.msk [vmem:[#allocation3] sm:$0xf] %vm3413, %v3222
      %3415 = vst.msk [vmem:[#allocation3 + $0x4] sm:$0xf] %vm3413, %v3224
      %3416 = vst.msk [vmem:[#allocation3 + $0x8] sm:$0xf] %vm3413, %v3226
      %3417 = vst.msk [vmem:[#allocation3 + $0xc] sm:$0xf] %vm3413, %v3228
      %3418 = vst.msk [vmem:[#allocation3 + $0x10] sm:$0xf] %vm3413, %v3230
      %3419 = vst.msk [vmem:[#allocation3 + $0x14] sm:$0xf] %vm3413, %v3232
      %3420 = vst.msk [vmem:[#allocation3 + $0x18] sm:$0xf] %vm3413, %v3234
      %3421 = vst.msk [vmem:[#allocation3 + $0x1c] sm:$0xf] %vm3413, %v3236
      %3422 = vst.msk [vmem:[#allocation3 + $0x20] sm:$0xf] %vm3413, %v3238
      %3423 = vst.msk [vmem:[#allocation3 + $0x24] sm:$0xf] %vm3413, %v3240
      %3424 = vst.msk [vmem:[#allocation3 + $0x28] sm:$0xf] %vm3413, %v3242
      %3425 = vst.msk [vmem:[#allocation3 + $0x2c] sm:$0xf] %vm3413, %v3244
      %3426 = vst.msk [vmem:[#allocation3 + $0x30] sm:$0xf] %vm3413, %v3246
      %3427 = vst.msk [vmem:[#allocation3 + $0x34] sm:$0xf] %vm3413, %v3248
      %3428 = vst.msk [vmem:[#allocation3 + $0x38] sm:$0xf] %vm3413, %v3250
      %3429 = vst.msk [vmem:[#allocation3 + $0x3c] sm:$0xf] %vm3413, %v3252
      %3430 = vst.msk [vmem:[#allocation3 + $0x40] sm:$0xf] %vm3413, %v3254
      %3431 = vst.msk [vmem:[#allocation3 + $0x44] sm:$0xf] %vm3413, %v3256
      %3432 = vst.msk [vmem:[#allocation3 + $0x48] sm:$0xf] %vm3413, %v3258
      %3433 = vst.msk [vmem:[#allocation3 + $0x4c] sm:$0xf] %vm3413, %v3260
      %3434 = vst.msk [vmem:[#allocation3 + $0x50] sm:$0xf] %vm3413, %v3262
      %3435 = vst.msk [vmem:[#allocation3 + $0x54] sm:$0xf] %vm3413, %v3264
      %3436 = vst.msk [vmem:[#allocation3 + $0x58] sm:$0xf] %vm3413, %v3266
      %3437 = vst.msk [vmem:[#allocation3 + $0x5c] sm:$0xf] %vm3413, %v3268
      %3438 = vst.msk [vmem:[#allocation3 + $0x60] sm:$0xf] %vm3413, %v3270
      %3439 = vst.msk [vmem:[#allocation3 + $0x64] sm:$0xf] %vm3413, %v3272
      %3440 = vst.msk [vmem:[#allocation3 + $0x68] sm:$0xf] %vm3413, %v3274
      %3441 = vst.msk [vmem:[#allocation3 + $0x6c] sm:$0xf] %vm3413, %v3276
      %3442 = vst.msk [vmem:[#allocation3 + $0x70] sm:$0xf] %vm3413, %v3278
      %3443 = vst.msk [vmem:[#allocation3 + $0x74] sm:$0xf] %vm3413, %v3280
      %3444 = vst.msk [vmem:[#allocation3 + $0x78] sm:$0xf] %vm3413, %v3282
      %3445 = vst.msk [vmem:[#allocation3 + $0x7c] sm:$0xf] %vm3413, %v3284
      %3446 = vst.msk [vmem:[#allocation3 + $0x80] sm:$0xf] %vm3413, %v3286
      %3447 = vst.msk [vmem:[#allocation3 + $0x84] sm:$0xf] %vm3413, %v3288
      %3448 = vst.msk [vmem:[#allocation3 + $0x88] sm:$0xf] %vm3413, %v3290
      %3449 = vst.msk [vmem:[#allocation3 + $0x8c] sm:$0xf] %vm3413, %v3292
      %3450 = vst.msk [vmem:[#allocation3 + $0x90] sm:$0xf] %vm3413, %v3294
      %3451 = vst.msk [vmem:[#allocation3 + $0x94] sm:$0xf] %vm3413, %v3296
      %3452 = vst.msk [vmem:[#allocation3 + $0x98] sm:$0xf] %vm3413, %v3298
      %3453 = vst.msk [vmem:[#allocation3 + $0x9c] sm:$0xf] %vm3413, %v3300
      %3454 = vst.msk [vmem:[#allocation3 + $0xa0] sm:$0xf] %vm3413, %v3302
      %3455 = vst.msk [vmem:[#allocation3 + $0xa4] sm:$0xf] %vm3413, %v3304
      %3456 = vst.msk [vmem:[#allocation3 + $0xa8] sm:$0xf] %vm3413, %v3306
      %3457 = vst.msk [vmem:[#allocation3 + $0xac] sm:$0xf] %vm3413, %v3308
      %3458 = vst.msk [vmem:[#allocation3 + $0xb0] sm:$0xf] %vm3413, %v3310
      %3459 = vst.msk [vmem:[#allocation3 + $0xb4] sm:$0xf] %vm3413, %v3312
      %3460 = vst.msk [vmem:[#allocation3 + $0xb8] sm:$0xf] %vm3413, %v3314
      %3461 = vst.msk [vmem:[#allocation3 + $0xbc] sm:$0xf] %vm3413, %v3316
      %3462 = vst.msk [vmem:[#allocation3 + $0xc0] sm:$0xf] %vm3413, %v3318
      %3463 = vst.msk [vmem:[#allocation3 + $0xc4] sm:$0xf] %vm3413, %v3320
      %3464 = vst.msk [vmem:[#allocation3 + $0xc8] sm:$0xf] %vm3413, %v3322
      %3465 = vst.msk [vmem:[#allocation3 + $0xcc] sm:$0xf] %vm3413, %v3324
      %3466 = vst.msk [vmem:[#allocation3 + $0xd0] sm:$0xf] %vm3413, %v3326
      %3467 = vst.msk [vmem:[#allocation3 + $0xd4] sm:$0xf] %vm3413, %v3328
      %3468 = vst.msk [vmem:[#allocation3 + $0xd8] sm:$0xf] %vm3413, %v3330
      %3469 = vst.msk [vmem:[#allocation3 + $0xdc] sm:$0xf] %vm3413, %v3332
      %3470 = vst.msk [vmem:[#allocation3 + $0xe0] sm:$0xf] %vm3413, %v3334
      %3471 = vst.msk [vmem:[#allocation3 + $0xe4] sm:$0xf] %vm3413, %v3336
      %3472 = vst.msk [vmem:[#allocation3 + $0xe8] sm:$0xf] %vm3413, %v3338
      %3473 = vst.msk [vmem:[#allocation3 + $0xec] sm:$0xf] %vm3413, %v3340
      %3474 = vst.msk [vmem:[#allocation3 + $0xf0] sm:$0xf] %vm3413, %v3342
      %3475 = vst.msk [vmem:[#allocation3 + $0xf4] sm:$0xf] %vm3413, %v3344
      %3476 = vst.msk [vmem:[#allocation3 + $0xf8] sm:$0xf] %vm3413, %v3346
      %3477 = vst.msk [vmem:[#allocation3 + $0xfc] sm:$0xf] %vm3413, %v3348
      %v3478 = vld [vmem:[%s35] sm:$0xf]
      %v3479 = vld [vmem:[%s35 + $0x4] sm:$0xf]
      %v3480 = vld [vmem:[%s35 + $0x8] sm:$0x1]
      %v3481 = vld [vmem:[%s35 + $0xc] sm:$0xf]
      %v3482 = vld [vmem:[%s35 + $0x10] sm:$0xf]
      %v3483 = vld [vmem:[%s35 + $0x14] sm:$0x1]
      %v3484 = vld [vmem:[%s35 + $0x18] sm:$0xf]
      %v3485 = vld [vmem:[%s35 + $0x1c] sm:$0xf]
      %v3486 = vld [vmem:[%s35 + $0x20] sm:$0x1]
      %v3487 = vld [vmem:[%s35 + $0x24] sm:$0xf]
      %v3488 = vld [vmem:[%s35 + $0x28] sm:$0xf]
      %v3489 = vld [vmem:[%s35 + $0x2c] sm:$0x1]
      %v3490 = vld [vmem:[%s35 + $0x30] sm:$0xf]
      %v3491 = vld [vmem:[%s35 + $0x34] sm:$0xf]
      %v3492 = vld [vmem:[%s35 + $0x38] sm:$0x1]
      %v3493 = vld [vmem:[%s35 + $0x3c] sm:$0xf]
      %v3494 = vld [vmem:[%s35 + $0x40] sm:$0xf]
      %v3495 = vld [vmem:[%s35 + $0x44] sm:$0x1]
      %v3496 = vld [vmem:[%s35 + $0x48] sm:$0xf]
      %v3497 = vld [vmem:[%s35 + $0x4c] sm:$0xf]
      %v3498 = vld [vmem:[%s35 + $0x50] sm:$0x1]
      %v3499 = vld [vmem:[%s35 + $0x54] sm:$0xf]
      %v3500 = vld [vmem:[%s35 + $0x58] sm:$0xf]
      %v3501 = vld [vmem:[%s35 + $0x5c] sm:$0x1]
      %v3502 = vld [vmem:[%s35 + $0x60] sm:$0xf]
      %v3503 = vld [vmem:[%s35 + $0x64] sm:$0xf]
      %v3504 = vld [vmem:[%s35 + $0x68] sm:$0x1]
      %v3505 = vld [vmem:[%s35 + $0x6c] sm:$0xf]
      %v3506 = vld [vmem:[%s35 + $0x70] sm:$0xf]
      %v3507 = vld [vmem:[%s35 + $0x74] sm:$0x1]
      %v3508 = vld [vmem:[%s35 + $0x78] sm:$0xf]
      %v3509 = vld [vmem:[%s35 + $0x7c] sm:$0xf]
      %v3510 = vld [vmem:[%s35 + $0x80] sm:$0x1]
      %v3511 = vld [vmem:[%s35 + $0x84] sm:$0xf]
      %v3512 = vld [vmem:[%s35 + $0x88] sm:$0xf]
      %v3513 = vld [vmem:[%s35 + $0x8c] sm:$0x1]
      %v3514 = vld [vmem:[%s35 + $0x90] sm:$0xf]
      %v3515 = vld [vmem:[%s35 + $0x94] sm:$0xf]
      %v3516 = vld [vmem:[%s35 + $0x98] sm:$0x1]
      %v3517 = vld [vmem:[%s35 + $0x9c] sm:$0xf]
      %v3518 = vld [vmem:[%s35 + $0xa0] sm:$0xf]
      %v3519 = vld [vmem:[%s35 + $0xa4] sm:$0x1]
      %v3520 = vld [vmem:[%s35 + $0xa8] sm:$0xf]
      %v3521 = vld [vmem:[%s35 + $0xac] sm:$0xf]
      %v3522 = vld [vmem:[%s35 + $0xb0] sm:$0x1]
      %v3523 = vld [vmem:[%s35 + $0xb4] sm:$0xf]
      %v3524 = vld [vmem:[%s35 + $0xb8] sm:$0xf]
      %v3525 = vld [vmem:[%s35 + $0xbc] sm:$0x1]
      %v3526 = vld [vmem:[%s35 + $0xd8] sm:$0xf]
      %v3527 = vld [vmem:[%s35 + $0xdc] sm:$0xf]
      %v3528 = vld [vmem:[%s35 + $0xe0] sm:$0x1]
      %v3529 = vld [vmem:[%s35 + $0xe4] sm:$0xf]
      %v3530 = vld [vmem:[%s35 + $0xe8] sm:$0xf]
      %v3531 = vld [vmem:[%s35 + $0xec] sm:$0x1]
      %v3532 = vld [vmem:[%s35 + $0xf0] sm:$0xf]
      %v3533 = vld [vmem:[%s35 + $0xf4] sm:$0xf]
      %v3534 = vld [vmem:[%s35 + $0xf8] sm:$0x1]
      %v3535 = vld [vmem:[%s35 + $0xfc] sm:$0xf]
      %v3536 = vld [vmem:[%s35 + $0x100] sm:$0xf]
      %v3537 = vld [vmem:[%s35 + $0x104] sm:$0x1]
      %v3538 = vld [vmem:[%s35 + $0x108] sm:$0xf]
      %v3539 = vld [vmem:[%s35 + $0x10c] sm:$0xf]
      %v3540 = vld [vmem:[%s35 + $0x110] sm:$0x1]
      %v3541 = vld [vmem:[%s35 + $0x114] sm:$0xf]
      %v3542 = vld [vmem:[%s35 + $0x118] sm:$0xf]
      %v3543 = vld [vmem:[%s35 + $0x11c] sm:$0x1]
      %v3544 = vld [vmem:[%s35 + $0x120] sm:$0xf]
      %v3545 = vld [vmem:[%s35 + $0x124] sm:$0xf]
      %v3546 = vld [vmem:[%s35 + $0x128] sm:$0x1]
      %v3547 = vld [vmem:[%s35 + $0x12c] sm:$0xf]
      %v3548 = vld [vmem:[%s35 + $0x130] sm:$0xf]
      %v3549 = vld [vmem:[%s35 + $0x134] sm:$0x1]
      %v3550 = vld [vmem:[%s35 + $0x138] sm:$0xf]
      %v3551 = vld [vmem:[%s35 + $0x13c] sm:$0xf]
      %v3552 = vld [vmem:[%s35 + $0x140] sm:$0x1]
      %v3553 = vld [vmem:[%s35 + $0x144] sm:$0xf]
      %v3554 = vld [vmem:[%s35 + $0x148] sm:$0xf]
      %v3555 = vld [vmem:[%s35 + $0x14c] sm:$0x1]
      %v3556 = vld [vmem:[%s35 + $0x150] sm:$0xf]
      %v3557 = vld [vmem:[%s35 + $0x154] sm:$0xf]
      %v3558 = vld [vmem:[%s35 + $0x158] sm:$0x1]
      %v3559 = vld [vmem:[%s35 + $0x15c] sm:$0xf]
      %v3560 = vld [vmem:[%s35 + $0x160] sm:$0xf]
      %v3561 = vld [vmem:[%s35 + $0x164] sm:$0x1]
      %v3562 = vld [vmem:[%s35 + $0x168] sm:$0xf]
      %v3563 = vld [vmem:[%s35 + $0x16c] sm:$0xf]
      %v3564 = vld [vmem:[%s35 + $0x170] sm:$0x1]
      %v3565 = vld [vmem:[%s35 + $0x174] sm:$0xf]
      %v3566 = vld [vmem:[%s35 + $0x178] sm:$0xf]
      %v3567 = vld [vmem:[%s35 + $0x17c] sm:$0x1]
      %v3568 = vld [vmem:[%s35 + $0x180] sm:$0xf]
      %v3569 = vld [vmem:[%s35 + $0x184] sm:$0xf]
      %v3570 = vld [vmem:[%s35 + $0x188] sm:$0x1]
      %v3571 = vld [vmem:[%s35 + $0x18c] sm:$0xf]
      %v3572 = vld [vmem:[%s35 + $0x190] sm:$0xf]
      %v3573 = vld [vmem:[%s35 + $0x194] sm:$0x1]
      %v3575 = vshrl.u32 %v3478, 16
      %v3577 = vrot.slane %v3575, 4
      %v3578 = vshll.u32 %v3478, 16
      %v3580 = vrot.slane %v3578, 5
      %v3581 = vor.u32 %v3577, %v3580
      %v3582 = vrot.slane %v3581, 4
      %v3584 = vshll.u32 %v3479, 16
      %v3586 = vrot.slane %v3584, 5
      %v3587 = vsel %vm1391, %v3582, %v3586
      %v3588 = vshrl.u32 %v3479, 16
      %v3590 = vrot.slane %v3588, 4
      %v3591 = vor.u32 %v3590, %v3586
      %v3592 = vrot.slane %v3591, 4
      %v3594 = vshll.u32 %v3480, 16
      %v3596 = vrot.slane %v3594, 5
      %v3597 = vsel %vm1391, %v3592, %v3596
      %v3599 = vshrl.u32 %v3481, 16
      %v3601 = vrot.slane %v3599, 4
      %v3602 = vshll.u32 %v3481, 16
      %v3604 = vrot.slane %v3602, 5
      %v3605 = vor.u32 %v3601, %v3604
      %v3606 = vrot.slane %v3605, 4
      %v3608 = vshll.u32 %v3482, 16
      %v3610 = vrot.slane %v3608, 5
      %v3611 = vsel %vm1391, %v3606, %v3610
      %v3612 = vshrl.u32 %v3482, 16
      %v3614 = vrot.slane %v3612, 4
      %v3615 = vor.u32 %v3614, %v3610
      %v3616 = vrot.slane %v3615, 4
      %v3618 = vshll.u32 %v3483, 16
      %v3620 = vrot.slane %v3618, 5
      %v3621 = vsel %vm1391, %v3616, %v3620
      %v3623 = vshrl.u32 %v3484, 16
      %v3625 = vrot.slane %v3623, 4
      %v3626 = vshll.u32 %v3484, 16
      %v3628 = vrot.slane %v3626, 5
      %v3629 = vor.u32 %v3625, %v3628
      %v3630 = vrot.slane %v3629, 4
      %v3632 = vshll.u32 %v3485, 16
      %v3634 = vrot.slane %v3632, 5
      %v3635 = vsel %vm1391, %v3630, %v3634
      %v3636 = vshrl.u32 %v3485, 16
      %v3638 = vrot.slane %v3636, 4
      %v3639 = vor.u32 %v3638, %v3634
      %v3640 = vrot.slane %v3639, 4
      %v3642 = vshll.u32 %v3486, 16
      %v3644 = vrot.slane %v3642, 5
      %v3645 = vsel %vm1391, %v3640, %v3644
      %v3647 = vshrl.u32 %v3487, 16
      %v3649 = vrot.slane %v3647, 4
      %v3650 = vshll.u32 %v3487, 16
      %v3652 = vrot.slane %v3650, 5
      %v3653 = vor.u32 %v3649, %v3652
      %v3654 = vrot.slane %v3653, 4
      %v3656 = vshll.u32 %v3488, 16
      %v3658 = vrot.slane %v3656, 5
      %v3659 = vsel %vm1391, %v3654, %v3658
      %v3660 = vshrl.u32 %v3488, 16
      %v3662 = vrot.slane %v3660, 4
      %v3663 = vor.u32 %v3662, %v3658
      %v3664 = vrot.slane %v3663, 4
      %v3666 = vshll.u32 %v3489, 16
      %v3668 = vrot.slane %v3666, 5
      %v3669 = vsel %vm1391, %v3664, %v3668
      %v3671 = vshrl.u32 %v3490, 16
      %v3673 = vrot.slane %v3671, 4
      %v3674 = vshll.u32 %v3490, 16
      %v3676 = vrot.slane %v3674, 5
      %v3677 = vor.u32 %v3673, %v3676
      %v3678 = vrot.slane %v3677, 4
      %v3680 = vshll.u32 %v3491, 16
      %v3682 = vrot.slane %v3680, 5
      %v3683 = vsel %vm1391, %v3678, %v3682
      %v3684 = vshrl.u32 %v3491, 16
      %v3686 = vrot.slane %v3684, 4
      %v3687 = vor.u32 %v3686, %v3682
      %v3688 = vrot.slane %v3687, 4
      %v3690 = vshll.u32 %v3492, 16
      %v3692 = vrot.slane %v3690, 5
      %v3693 = vsel %vm1391, %v3688, %v3692
      %v3695 = vshrl.u32 %v3493, 16
      %v3697 = vrot.slane %v3695, 4
      %v3698 = vshll.u32 %v3493, 16
      %v3700 = vrot.slane %v3698, 5
      %v3701 = vor.u32 %v3697, %v3700
      %v3702 = vrot.slane %v3701, 4
      %v3704 = vshll.u32 %v3494, 16
      %v3706 = vrot.slane %v3704, 5
      %v3707 = vsel %vm1391, %v3702, %v3706
      %v3708 = vshrl.u32 %v3494, 16
      %v3710 = vrot.slane %v3708, 4
      %v3711 = vor.u32 %v3710, %v3706
      %v3712 = vrot.slane %v3711, 4
      %v3714 = vshll.u32 %v3495, 16
      %v3716 = vrot.slane %v3714, 5
      %v3717 = vsel %vm1391, %v3712, %v3716
      %v3719 = vshrl.u32 %v3496, 16
      %v3721 = vrot.slane %v3719, 4
      %v3722 = vshll.u32 %v3496, 16
      %v3724 = vrot.slane %v3722, 5
      %v3725 = vor.u32 %v3721, %v3724
      %v3726 = vrot.slane %v3725, 4
      %v3728 = vshll.u32 %v3497, 16
      %v3730 = vrot.slane %v3728, 5
      %v3731 = vsel %vm1391, %v3726, %v3730
      %v3732 = vshrl.u32 %v3497, 16
      %v3734 = vrot.slane %v3732, 4
      %v3735 = vor.u32 %v3734, %v3730
      %v3736 = vrot.slane %v3735, 4
      %v3738 = vshll.u32 %v3498, 16
      %v3740 = vrot.slane %v3738, 5
      %v3741 = vsel %vm1391, %v3736, %v3740
      %v3743 = vshrl.u32 %v3499, 16
      %v3745 = vrot.slane %v3743, 4
      %v3746 = vshll.u32 %v3499, 16
      %v3748 = vrot.slane %v3746, 5
      %v3749 = vor.u32 %v3745, %v3748
      %v3750 = vrot.slane %v3749, 4
      %v3752 = vshll.u32 %v3500, 16
      %v3754 = vrot.slane %v3752, 5
      %v3755 = vsel %vm1391, %v3750, %v3754
      %v3756 = vshrl.u32 %v3500, 16
      %v3758 = vrot.slane %v3756, 4
      %v3759 = vor.u32 %v3758, %v3754
      %v3760 = vrot.slane %v3759, 4
      %v3762 = vshll.u32 %v3501, 16
      %v3764 = vrot.slane %v3762, 5
      %v3765 = vsel %vm1391, %v3760, %v3764
      %v3767 = vshrl.u32 %v3502, 16
      %v3769 = vrot.slane %v3767, 4
      %v3770 = vshll.u32 %v3502, 16
      %v3772 = vrot.slane %v3770, 5
      %v3773 = vor.u32 %v3769, %v3772
      %v3774 = vrot.slane %v3773, 4
      %v3776 = vshll.u32 %v3503, 16
      %v3778 = vrot.slane %v3776, 5
      %v3779 = vsel %vm1391, %v3774, %v3778
      %v3780 = vshrl.u32 %v3503, 16
      %v3782 = vrot.slane %v3780, 4
      %v3783 = vor.u32 %v3782, %v3778
      %v3784 = vrot.slane %v3783, 4
      %v3786 = vshll.u32 %v3504, 16
      %v3788 = vrot.slane %v3786, 5
      %v3789 = vsel %vm1391, %v3784, %v3788
      %v3791 = vshrl.u32 %v3505, 16
      %v3793 = vrot.slane %v3791, 4
      %v3794 = vshll.u32 %v3505, 16
      %v3796 = vrot.slane %v3794, 5
      %v3797 = vor.u32 %v3793, %v3796
      %v3798 = vrot.slane %v3797, 4
      %v3800 = vshll.u32 %v3506, 16
      %v3802 = vrot.slane %v3800, 5
      %v3803 = vsel %vm1391, %v3798, %v3802
      %v3804 = vshrl.u32 %v3506, 16
      %v3806 = vrot.slane %v3804, 4
      %v3807 = vor.u32 %v3806, %v3802
      %v3808 = vrot.slane %v3807, 4
      %v3810 = vshll.u32 %v3507, 16
      %v3812 = vrot.slane %v3810, 5
      %v3813 = vsel %vm1391, %v3808, %v3812
      %v3815 = vshrl.u32 %v3508, 16
      %v3817 = vrot.slane %v3815, 4
      %v3818 = vshll.u32 %v3508, 16
      %v3820 = vrot.slane %v3818, 5
      %v3821 = vor.u32 %v3817, %v3820
      %v3822 = vrot.slane %v3821, 4
      %v3824 = vshll.u32 %v3509, 16
      %v3826 = vrot.slane %v3824, 5
      %v3827 = vsel %vm1391, %v3822, %v3826
      %v3828 = vshrl.u32 %v3509, 16
      %v3830 = vrot.slane %v3828, 4
      %v3831 = vor.u32 %v3830, %v3826
      %v3832 = vrot.slane %v3831, 4
      %v3834 = vshll.u32 %v3510, 16
      %v3836 = vrot.slane %v3834, 5
      %v3837 = vsel %vm1391, %v3832, %v3836
      %v3839 = vshrl.u32 %v3511, 16
      %v3841 = vrot.slane %v3839, 4
      %v3842 = vshll.u32 %v3511, 16
      %v3844 = vrot.slane %v3842, 5
      %v3845 = vor.u32 %v3841, %v3844
      %v3846 = vrot.slane %v3845, 4
      %v3848 = vshll.u32 %v3512, 16
      %v3850 = vrot.slane %v3848, 5
      %v3851 = vsel %vm1391, %v3846, %v3850
      %v3852 = vshrl.u32 %v3512, 16
      %v3854 = vrot.slane %v3852, 4
      %v3855 = vor.u32 %v3854, %v3850
      %v3856 = vrot.slane %v3855, 4
      %v3858 = vshll.u32 %v3513, 16
      %v3860 = vrot.slane %v3858, 5
      %v3861 = vsel %vm1391, %v3856, %v3860
      %v3863 = vshrl.u32 %v3514, 16
      %v3865 = vrot.slane %v3863, 4
      %v3866 = vshll.u32 %v3514, 16
      %v3868 = vrot.slane %v3866, 5
      %v3869 = vor.u32 %v3865, %v3868
      %v3870 = vrot.slane %v3869, 4
      %v3872 = vshll.u32 %v3515, 16
      %v3874 = vrot.slane %v3872, 5
      %v3875 = vsel %vm1391, %v3870, %v3874
      %v3876 = vshrl.u32 %v3515, 16
      %v3878 = vrot.slane %v3876, 4
      %v3879 = vor.u32 %v3878, %v3874
      %v3880 = vrot.slane %v3879, 4
      %v3882 = vshll.u32 %v3516, 16
      %v3884 = vrot.slane %v3882, 5
      %v3885 = vsel %vm1391, %v3880, %v3884
      %v3887 = vshrl.u32 %v3517, 16
      %v3889 = vrot.slane %v3887, 4
      %v3890 = vshll.u32 %v3517, 16
      %v3892 = vrot.slane %v3890, 5
      %v3893 = vor.u32 %v3889, %v3892
      %v3894 = vrot.slane %v3893, 4
      %v3896 = vshll.u32 %v3518, 16
      %v3898 = vrot.slane %v3896, 5
      %v3899 = vsel %vm1391, %v3894, %v3898
      %v3900 = vshrl.u32 %v3518, 16
      %v3902 = vrot.slane %v3900, 4
      %v3903 = vor.u32 %v3902, %v3898
      %v3904 = vrot.slane %v3903, 4
      %v3906 = vshll.u32 %v3519, 16
      %v3908 = vrot.slane %v3906, 5
      %v3909 = vsel %vm1391, %v3904, %v3908
      %v3911 = vshrl.u32 %v3520, 16
      %v3913 = vrot.slane %v3911, 4
      %v3914 = vshll.u32 %v3520, 16
      %v3916 = vrot.slane %v3914, 5
      %v3917 = vor.u32 %v3913, %v3916
      %v3918 = vrot.slane %v3917, 4
      %v3920 = vshll.u32 %v3521, 16
      %v3922 = vrot.slane %v3920, 5
      %v3923 = vsel %vm1391, %v3918, %v3922
      %v3924 = vshrl.u32 %v3521, 16
      %v3926 = vrot.slane %v3924, 4
      %v3927 = vor.u32 %v3926, %v3922
      %v3928 = vrot.slane %v3927, 4
      %v3930 = vshll.u32 %v3522, 16
      %v3932 = vrot.slane %v3930, 5
      %v3933 = vsel %vm1391, %v3928, %v3932
      %v3935 = vshrl.u32 %v3523, 16
      %v3937 = vrot.slane %v3935, 4
      %v3938 = vshll.u32 %v3523, 16
      %v3940 = vrot.slane %v3938, 5
      %v3941 = vor.u32 %v3937, %v3940
      %v3942 = vrot.slane %v3941, 4
      %v3944 = vshll.u32 %v3524, 16
      %v3946 = vrot.slane %v3944, 5
      %v3947 = vsel %vm1391, %v3942, %v3946
      %v3948 = vshrl.u32 %v3524, 16
      %v3950 = vrot.slane %v3948, 4
      %v3951 = vor.u32 %v3950, %v3946
      %v3952 = vrot.slane %v3951, 4
      %v3954 = vshll.u32 %v3525, 16
      %v3956 = vrot.slane %v3954, 5
      %v3957 = vsel %vm1391, %v3952, %v3956
      %v3959 = vshrl.u32 %v3526, 16
      %v3961 = vrot.slane %v3959, 4
      %v3962 = vshll.u32 %v3526, 16
      %v3964 = vrot.slane %v3962, 5
      %v3965 = vor.u32 %v3961, %v3964
      %v3966 = vrot.slane %v3965, 4
      %v3968 = vshll.u32 %v3527, 16
      %v3970 = vrot.slane %v3968, 5
      %v3971 = vsel %vm1391, %v3966, %v3970
      %v3972 = vshrl.u32 %v3527, 16
      %v3974 = vrot.slane %v3972, 4
      %v3975 = vor.u32 %v3974, %v3970
      %v3976 = vrot.slane %v3975, 4
      %v3978 = vshll.u32 %v3528, 16
      %v3980 = vrot.slane %v3978, 5
      %v3981 = vsel %vm1391, %v3976, %v3980
      %v3983 = vshrl.u32 %v3529, 16
      %v3985 = vrot.slane %v3983, 4
      %v3986 = vshll.u32 %v3529, 16
      %v3988 = vrot.slane %v3986, 5
      %v3989 = vor.u32 %v3985, %v3988
      %v3990 = vrot.slane %v3989, 4
      %v3992 = vshll.u32 %v3530, 16
      %v3994 = vrot.slane %v3992, 5
      %v3995 = vsel %vm1391, %v3990, %v3994
      %v3996 = vshrl.u32 %v3530, 16
      %v3998 = vrot.slane %v3996, 4
      %v3999 = vor.u32 %v3998, %v3994
      %v4000 = vrot.slane %v3999, 4
      %v4002 = vshll.u32 %v3531, 16
      %v4004 = vrot.slane %v4002, 5
      %v4005 = vsel %vm1391, %v4000, %v4004
      %v4007 = vshrl.u32 %v3532, 16
      %v4009 = vrot.slane %v4007, 4
      %v4010 = vshll.u32 %v3532, 16
      %v4012 = vrot.slane %v4010, 5
      %v4013 = vor.u32 %v4009, %v4012
      %v4014 = vrot.slane %v4013, 4
      %v4016 = vshll.u32 %v3533, 16
      %v4018 = vrot.slane %v4016, 5
      %v4019 = vsel %vm1391, %v4014, %v4018
      %v4020 = vshrl.u32 %v3533, 16
      %v4022 = vrot.slane %v4020, 4
      %v4023 = vor.u32 %v4022, %v4018
      %v4024 = vrot.slane %v4023, 4
      %v4026 = vshll.u32 %v3534, 16
      %v4028 = vrot.slane %v4026, 5
      %v4029 = vsel %vm1391, %v4024, %v4028
      %v4031 = vshrl.u32 %v3535, 16
      %v4033 = vrot.slane %v4031, 4
      %v4034 = vshll.u32 %v3535, 16
      %v4036 = vrot.slane %v4034, 5
      %v4037 = vor.u32 %v4033, %v4036
      %v4038 = vrot.slane %v4037, 4
      %v4040 = vshll.u32 %v3536, 16
      %v4042 = vrot.slane %v4040, 5
      %v4043 = vsel %vm1391, %v4038, %v4042
      %v4044 = vshrl.u32 %v3536, 16
      %v4046 = vrot.slane %v4044, 4
      %v4047 = vor.u32 %v4046, %v4042
      %v4048 = vrot.slane %v4047, 4
      %v4050 = vshll.u32 %v3537, 16
      %v4052 = vrot.slane %v4050, 5
      %v4053 = vsel %vm1391, %v4048, %v4052
      %v4055 = vshrl.u32 %v3538, 16
      %v4057 = vrot.slane %v4055, 4
      %v4058 = vshll.u32 %v3538, 16
      %v4060 = vrot.slane %v4058, 5
      %v4061 = vor.u32 %v4057, %v4060
      %v4062 = vrot.slane %v4061, 4
      %v4064 = vshll.u32 %v3539, 16
      %v4066 = vrot.slane %v4064, 5
      %v4067 = vsel %vm1391, %v4062, %v4066
      %v4068 = vshrl.u32 %v3539, 16
      %v4070 = vrot.slane %v4068, 4
      %v4071 = vor.u32 %v4070, %v4066
      %v4072 = vrot.slane %v4071, 4
      %v4074 = vshll.u32 %v3540, 16
      %v4076 = vrot.slane %v4074, 5
      %v4077 = vsel %vm1391, %v4072, %v4076
      %v4079 = vshrl.u32 %v3541, 16
      %v4081 = vrot.slane %v4079, 4
      %v4082 = vshll.u32 %v3541, 16
      %v4084 = vrot.slane %v4082, 5
      %v4085 = vor.u32 %v4081, %v4084
      %v4086 = vrot.slane %v4085, 4
      %v4088 = vshll.u32 %v3542, 16
      %v4090 = vrot.slane %v4088, 5
      %v4091 = vsel %vm1391, %v4086, %v4090
      %v4092 = vshrl.u32 %v3542, 16
      %v4094 = vrot.slane %v4092, 4
      %v4095 = vor.u32 %v4094, %v4090
      %v4096 = vrot.slane %v4095, 4
      %v4098 = vshll.u32 %v3543, 16
      %v4100 = vrot.slane %v4098, 5
      %v4101 = vsel %vm1391, %v4096, %v4100
      %v4103 = vshrl.u32 %v3544, 16
      %v4105 = vrot.slane %v4103, 4
      %v4106 = vshll.u32 %v3544, 16
      %v4108 = vrot.slane %v4106, 5
      %v4109 = vor.u32 %v4105, %v4108
      %v4110 = vrot.slane %v4109, 4
      %v4112 = vshll.u32 %v3545, 16
      %v4114 = vrot.slane %v4112, 5
      %v4115 = vsel %vm1391, %v4110, %v4114
      %v4116 = vshrl.u32 %v3545, 16
      %v4118 = vrot.slane %v4116, 4
      %v4119 = vor.u32 %v4118, %v4114
      %v4120 = vrot.slane %v4119, 4
      %v4122 = vshll.u32 %v3546, 16
      %v4124 = vrot.slane %v4122, 5
      %v4125 = vsel %vm1391, %v4120, %v4124
      %v4127 = vshrl.u32 %v3547, 16
      %v4129 = vrot.slane %v4127, 4
      %v4130 = vshll.u32 %v3547, 16
      %v4132 = vrot.slane %v4130, 5
      %v4133 = vor.u32 %v4129, %v4132
      %v4134 = vrot.slane %v4133, 4
      %v4136 = vshll.u32 %v3548, 16
      %v4138 = vrot.slane %v4136, 5
      %v4139 = vsel %vm1391, %v4134, %v4138
      %v4140 = vshrl.u32 %v3548, 16
      %v4142 = vrot.slane %v4140, 4
      %v4143 = vor.u32 %v4142, %v4138
      %v4144 = vrot.slane %v4143, 4
      %v4146 = vshll.u32 %v3549, 16
      %v4148 = vrot.slane %v4146, 5
      %v4149 = vsel %vm1391, %v4144, %v4148
      %v4151 = vshrl.u32 %v3550, 16
      %v4153 = vrot.slane %v4151, 4
      %v4154 = vshll.u32 %v3550, 16
      %v4156 = vrot.slane %v4154, 5
      %v4157 = vor.u32 %v4153, %v4156
      %v4158 = vrot.slane %v4157, 4
      %v4160 = vshll.u32 %v3551, 16
      %v4162 = vrot.slane %v4160, 5
      %v4163 = vsel %vm1391, %v4158, %v4162
      %v4164 = vshrl.u32 %v3551, 16
      %v4166 = vrot.slane %v4164, 4
      %v4167 = vor.u32 %v4166, %v4162
      %v4168 = vrot.slane %v4167, 4
      %v4170 = vshll.u32 %v3552, 16
      %v4172 = vrot.slane %v4170, 5
      %v4173 = vsel %vm1391, %v4168, %v4172
      %v4175 = vshrl.u32 %v3553, 16
      %v4177 = vrot.slane %v4175, 4
      %v4178 = vshll.u32 %v3553, 16
      %v4180 = vrot.slane %v4178, 5
      %v4181 = vor.u32 %v4177, %v4180
      %v4182 = vrot.slane %v4181, 4
      %v4184 = vshll.u32 %v3554, 16
      %v4186 = vrot.slane %v4184, 5
      %v4187 = vsel %vm1391, %v4182, %v4186
      %v4188 = vshrl.u32 %v3554, 16
      %v4190 = vrot.slane %v4188, 4
      %v4191 = vor.u32 %v4190, %v4186
      %v4192 = vrot.slane %v4191, 4
      %v4194 = vshll.u32 %v3555, 16
      %v4196 = vrot.slane %v4194, 5
      %v4197 = vsel %vm1391, %v4192, %v4196
      %v4199 = vshrl.u32 %v3556, 16
      %v4201 = vrot.slane %v4199, 4
      %v4202 = vshll.u32 %v3556, 16
      %v4204 = vrot.slane %v4202, 5
      %v4205 = vor.u32 %v4201, %v4204
      %v4206 = vrot.slane %v4205, 4
      %v4208 = vshll.u32 %v3557, 16
      %v4210 = vrot.slane %v4208, 5
      %v4211 = vsel %vm1391, %v4206, %v4210
      %v4212 = vshrl.u32 %v3557, 16
      %v4214 = vrot.slane %v4212, 4
      %v4215 = vor.u32 %v4214, %v4210
      %v4216 = vrot.slane %v4215, 4
      %v4218 = vshll.u32 %v3558, 16
      %v4220 = vrot.slane %v4218, 5
      %v4221 = vsel %vm1391, %v4216, %v4220
      %v4223 = vshrl.u32 %v3559, 16
      %v4225 = vrot.slane %v4223, 4
      %v4226 = vshll.u32 %v3559, 16
      %v4228 = vrot.slane %v4226, 5
      %v4229 = vor.u32 %v4225, %v4228
      %v4230 = vrot.slane %v4229, 4
      %v4232 = vshll.u32 %v3560, 16
      %v4234 = vrot.slane %v4232, 5
      %v4235 = vsel %vm1391, %v4230, %v4234
      %v4236 = vshrl.u32 %v3560, 16
      %v4238 = vrot.slane %v4236, 4
      %v4239 = vor.u32 %v4238, %v4234
      %v4240 = vrot.slane %v4239, 4
      %v4242 = vshll.u32 %v3561, 16
      %v4244 = vrot.slane %v4242, 5
      %v4245 = vsel %vm1391, %v4240, %v4244
      %v4247 = vshrl.u32 %v3562, 16
      %v4249 = vrot.slane %v4247, 4
      %v4250 = vshll.u32 %v3562, 16
      %v4252 = vrot.slane %v4250, 5
      %v4253 = vor.u32 %v4249, %v4252
      %v4254 = vrot.slane %v4253, 4
      %v4256 = vshll.u32 %v3563, 16
      %v4258 = vrot.slane %v4256, 5
      %v4259 = vsel %vm1391, %v4254, %v4258
      %v4260 = vshrl.u32 %v3563, 16
      %v4262 = vrot.slane %v4260, 4
      %v4263 = vor.u32 %v4262, %v4258
      %v4264 = vrot.slane %v4263, 4
      %v4266 = vshll.u32 %v3564, 16
      %v4268 = vrot.slane %v4266, 5
      %v4269 = vsel %vm1391, %v4264, %v4268
      %v4271 = vshrl.u32 %v3565, 16
      %v4273 = vrot.slane %v4271, 4
      %v4274 = vshll.u32 %v3565, 16
      %v4276 = vrot.slane %v4274, 5
      %v4277 = vor.u32 %v4273, %v4276
      %v4278 = vrot.slane %v4277, 4
      %v4280 = vshll.u32 %v3566, 16
      %v4282 = vrot.slane %v4280, 5
      %v4283 = vsel %vm1391, %v4278, %v4282
      %v4284 = vshrl.u32 %v3566, 16
      %v4286 = vrot.slane %v4284, 4
      %v4287 = vor.u32 %v4286, %v4282
      %v4288 = vrot.slane %v4287, 4
      %v4290 = vshll.u32 %v3567, 16
      %v4292 = vrot.slane %v4290, 5
      %v4293 = vsel %vm1391, %v4288, %v4292
      %v4295 = vshrl.u32 %v3568, 16
      %v4297 = vrot.slane %v4295, 4
      %v4298 = vshll.u32 %v3568, 16
      %v4300 = vrot.slane %v4298, 5
      %v4301 = vor.u32 %v4297, %v4300
      %v4302 = vrot.slane %v4301, 4
      %v4304 = vshll.u32 %v3569, 16
      %v4306 = vrot.slane %v4304, 5
      %v4307 = vsel %vm1391, %v4302, %v4306
      %v4308 = vshrl.u32 %v3569, 16
      %v4310 = vrot.slane %v4308, 4
      %v4311 = vor.u32 %v4310, %v4306
      %v4312 = vrot.slane %v4311, 4
      %v4314 = vshll.u32 %v3570, 16
      %v4316 = vrot.slane %v4314, 5
      %v4317 = vsel %vm1391, %v4312, %v4316
      %v4319 = vshrl.u32 %v3571, 16
      %v4321 = vrot.slane %v4319, 4
      %v4322 = vshll.u32 %v3571, 16
      %v4324 = vrot.slane %v4322, 5
      %v4325 = vor.u32 %v4321, %v4324
      %v4326 = vrot.slane %v4325, 4
      %v4328 = vshll.u32 %v3572, 16
      %v4330 = vrot.slane %v4328, 5
      %v4331 = vsel %vm1391, %v4326, %v4330
      %v4332 = vshrl.u32 %v3572, 16
      %v4334 = vrot.slane %v4332, 4
      %v4335 = vor.u32 %v4334, %v4330
      %v4336 = vrot.slane %v4335, 4
      %v4338 = vshll.u32 %v3573, 16
      %v4340 = vrot.slane %v4338, 5
      %v4341 = vsel %vm1391, %v4336, %v4340
      %4342 = vrot.lane.b32.xlu0 %v3587, 16
      %v4343 = vpop.permute.xlu0 %4342
      %4344 = vrot.lane.b32.xlu0 %v3597, 16
      %v4345 = vpop.permute.xlu0 %4344
      %4346 = vrot.lane.b32.xlu0 %v3611, 16
      %v4347 = vpop.permute.xlu0 %4346
      %4348 = vrot.lane.b32.xlu0 %v3621, 16
      %v4349 = vpop.permute.xlu0 %4348
      %4350 = vrot.lane.b32.xlu0 %v3635, 16
      %v4351 = vpop.permute.xlu0 %4350
      %4352 = vrot.lane.b32.xlu0 %v3645, 16
      %v4353 = vpop.permute.xlu0 %4352
      %4354 = vrot.lane.b32.xlu0 %v3659, 16
      %v4355 = vpop.permute.xlu0 %4354
      %4356 = vrot.lane.b32.xlu0 %v3669, 16
      %v4357 = vpop.permute.xlu0 %4356
      %4358 = vrot.lane.b32.xlu0 %v3683, 16
      %v4359 = vpop.permute.xlu0 %4358
      %4360 = vrot.lane.b32.xlu0 %v3693, 16
      %v4361 = vpop.permute.xlu0 %4360
      %4362 = vrot.lane.b32.xlu0 %v3707, 16
      %v4363 = vpop.permute.xlu0 %4362
      %4364 = vrot.lane.b32.xlu0 %v3717, 16
      %v4365 = vpop.permute.xlu0 %4364
      %4366 = vrot.lane.b32.xlu0 %v3731, 16
      %v4367 = vpop.permute.xlu0 %4366
      %4368 = vrot.lane.b32.xlu0 %v3741, 16
      %v4369 = vpop.permute.xlu0 %4368
      %4370 = vrot.lane.b32.xlu0 %v3755, 16
      %v4371 = vpop.permute.xlu0 %4370
      %4372 = vrot.lane.b32.xlu0 %v3765, 16
      %v4373 = vpop.permute.xlu0 %4372
      %4374 = vrot.lane.b32.xlu0 %v3779, 16
      %v4375 = vpop.permute.xlu0 %4374
      %4376 = vrot.lane.b32.xlu0 %v3789, 16
      %v4377 = vpop.permute.xlu0 %4376
      %4378 = vrot.lane.b32.xlu0 %v3803, 16
      %v4379 = vpop.permute.xlu0 %4378
      %4380 = vrot.lane.b32.xlu0 %v3813, 16
      %v4381 = vpop.permute.xlu0 %4380
      %4382 = vrot.lane.b32.xlu0 %v3827, 16
      %v4383 = vpop.permute.xlu0 %4382
      %4384 = vrot.lane.b32.xlu0 %v3837, 16
      %v4385 = vpop.permute.xlu0 %4384
      %4386 = vrot.lane.b32.xlu0 %v3851, 16
      %v4387 = vpop.permute.xlu0 %4386
      %4388 = vrot.lane.b32.xlu0 %v3861, 16
      %v4389 = vpop.permute.xlu0 %4388
      %4390 = vrot.lane.b32.xlu0 %v3875, 16
      %v4391 = vpop.permute.xlu0 %4390
      %4392 = vrot.lane.b32.xlu0 %v3885, 16
      %v4393 = vpop.permute.xlu0 %4392
      %4394 = vrot.lane.b32.xlu0 %v3899, 16
      %v4395 = vpop.permute.xlu0 %4394
      %4396 = vrot.lane.b32.xlu0 %v3909, 16
      %v4397 = vpop.permute.xlu0 %4396
      %4398 = vrot.lane.b32.xlu0 %v3923, 16
      %v4399 = vpop.permute.xlu0 %4398
      %4400 = vrot.lane.b32.xlu0 %v3933, 16
      %v4401 = vpop.permute.xlu0 %4400
      %4402 = vrot.lane.b32.xlu0 %v3947, 16
      %v4403 = vpop.permute.xlu0 %4402
      %4404 = vrot.lane.b32.xlu0 %v3957, 16
      %v4405 = vpop.permute.xlu0 %4404
      %4406 = vrot.lane.b32.xlu0 %v3971, 16
      %v4407 = vpop.permute.xlu0 %4406
      %4408 = vrot.lane.b32.xlu0 %v3981, 16
      %v4409 = vpop.permute.xlu0 %4408
      %4410 = vrot.lane.b32.xlu0 %v3995, 16
      %v4411 = vpop.permute.xlu0 %4410
      %4412 = vrot.lane.b32.xlu0 %v4005, 16
      %v4413 = vpop.permute.xlu0 %4412
      %4414 = vrot.lane.b32.xlu0 %v4019, 16
      %v4415 = vpop.permute.xlu0 %4414
      %4416 = vrot.lane.b32.xlu0 %v4029, 16
      %v4417 = vpop.permute.xlu0 %4416
      %4418 = vrot.lane.b32.xlu0 %v4043, 16
      %v4419 = vpop.permute.xlu0 %4418
      %4420 = vrot.lane.b32.xlu0 %v4053, 16
      %v4421 = vpop.permute.xlu0 %4420
      %4422 = vrot.lane.b32.xlu0 %v4067, 16
      %v4423 = vpop.permute.xlu0 %4422
      %4424 = vrot.lane.b32.xlu0 %v4077, 16
      %v4425 = vpop.permute.xlu0 %4424
      %4426 = vrot.lane.b32.xlu0 %v4091, 16
      %v4427 = vpop.permute.xlu0 %4426
      %4428 = vrot.lane.b32.xlu0 %v4101, 16
      %v4429 = vpop.permute.xlu0 %4428
      %4430 = vrot.lane.b32.xlu0 %v4115, 16
      %v4431 = vpop.permute.xlu0 %4430
      %4432 = vrot.lane.b32.xlu0 %v4125, 16
      %v4433 = vpop.permute.xlu0 %4432
      %4434 = vrot.lane.b32.xlu0 %v4139, 16
      %v4435 = vpop.permute.xlu0 %4434
      %4436 = vrot.lane.b32.xlu0 %v4149, 16
      %v4437 = vpop.permute.xlu0 %4436
      %4438 = vrot.lane.b32.xlu0 %v4163, 16
      %v4439 = vpop.permute.xlu0 %4438
      %4440 = vrot.lane.b32.xlu0 %v4173, 16
      %v4441 = vpop.permute.xlu0 %4440
      %4442 = vrot.lane.b32.xlu0 %v4187, 16
      %v4443 = vpop.permute.xlu0 %4442
      %4444 = vrot.lane.b32.xlu0 %v4197, 16
      %v4445 = vpop.permute.xlu0 %4444
      %4446 = vrot.lane.b32.xlu0 %v4211, 16
      %v4447 = vpop.permute.xlu0 %4446
      %4448 = vrot.lane.b32.xlu0 %v4221, 16
      %v4449 = vpop.permute.xlu0 %4448
      %4450 = vrot.lane.b32.xlu0 %v4235, 16
      %v4451 = vpop.permute.xlu0 %4450
      %4452 = vrot.lane.b32.xlu0 %v4245, 16
      %v4453 = vpop.permute.xlu0 %4452
      %4454 = vrot.lane.b32.xlu0 %v4259, 16
      %v4455 = vpop.permute.xlu0 %4454
      %4456 = vrot.lane.b32.xlu0 %v4269, 16
      %v4457 = vpop.permute.xlu0 %4456
      %4458 = vrot.lane.b32.xlu0 %v4283, 16
      %v4459 = vpop.permute.xlu0 %4458
      %4460 = vrot.lane.b32.xlu0 %v4293, 16
      %v4461 = vpop.permute.xlu0 %4460
      %4462 = vrot.lane.b32.xlu0 %v4307, 16
      %v4463 = vpop.permute.xlu0 %4462
      %4464 = vrot.lane.b32.xlu0 %v4317, 16
      %v4465 = vpop.permute.xlu0 %4464
      %4466 = vrot.lane.b32.xlu0 %v4331, 16
      %v4467 = vpop.permute.xlu0 %4466
      %4468 = vrot.lane.b32.xlu0 %v4341, 16
      %v4469 = vpop.permute.xlu0 %4468
      %vm4534 = vcmask 158848
      %4535 = vst.msk [vmem:[#allocation3] sm:$0xf] %vm4534, %v4343
      %4536 = vst.msk [vmem:[#allocation3 + $0x4] sm:$0xf] %vm4534, %v4345
      %4537 = vst.msk [vmem:[#allocation3 + $0x8] sm:$0xf] %vm4534, %v4347
      %4538 = vst.msk [vmem:[#allocation3 + $0xc] sm:$0xf] %vm4534, %v4349
      %4539 = vst.msk [vmem:[#allocation3 + $0x10] sm:$0xf] %vm4534, %v4351
      %4540 = vst.msk [vmem:[#allocation3 + $0x14] sm:$0xf] %vm4534, %v4353
      %4541 = vst.msk [vmem:[#allocation3 + $0x18] sm:$0xf] %vm4534, %v4355
      %4542 = vst.msk [vmem:[#allocation3 + $0x1c] sm:$0xf] %vm4534, %v4357
      %4543 = vst.msk [vmem:[#allocation3 + $0x20] sm:$0xf] %vm4534, %v4359
      %4544 = vst.msk [vmem:[#allocation3 + $0x24] sm:$0xf] %vm4534, %v4361
      %4545 = vst.msk [vmem:[#allocation3 + $0x28] sm:$0xf] %vm4534, %v4363
      %4546 = vst.msk [vmem:[#allocation3 + $0x2c] sm:$0xf] %vm4534, %v4365
      %4547 = vst.msk [vmem:[#allocation3 + $0x30] sm:$0xf] %vm4534, %v4367
      %4548 = vst.msk [vmem:[#allocation3 + $0x34] sm:$0xf] %vm4534, %v4369
      %4549 = vst.msk [vmem:[#allocation3 + $0x38] sm:$0xf] %vm4534, %v4371
      %4550 = vst.msk [vmem:[#allocation3 + $0x3c] sm:$0xf] %vm4534, %v4373
      %4551 = vst.msk [vmem:[#allocation3 + $0x40] sm:$0xf] %vm4534, %v4375
      %4552 = vst.msk [vmem:[#allocation3 + $0x44] sm:$0xf] %vm4534, %v4377
      %4553 = vst.msk [vmem:[#allocation3 + $0x48] sm:$0xf] %vm4534, %v4379
      %4554 = vst.msk [vmem:[#allocation3 + $0x4c] sm:$0xf] %vm4534, %v4381
      %4555 = vst.msk [vmem:[#allocation3 + $0x50] sm:$0xf] %vm4534, %v4383
      %4556 = vst.msk [vmem:[#allocation3 + $0x54] sm:$0xf] %vm4534, %v4385
      %4557 = vst.msk [vmem:[#allocation3 + $0x58] sm:$0xf] %vm4534, %v4387
      %4558 = vst.msk [vmem:[#allocation3 + $0x5c] sm:$0xf] %vm4534, %v4389
      %4559 = vst.msk [vmem:[#allocation3 + $0x60] sm:$0xf] %vm4534, %v4391
      %4560 = vst.msk [vmem:[#allocation3 + $0x64] sm:$0xf] %vm4534, %v4393
      %4561 = vst.msk [vmem:[#allocation3 + $0x68] sm:$0xf] %vm4534, %v4395
      %4562 = vst.msk [vmem:[#allocation3 + $0x6c] sm:$0xf] %vm4534, %v4397
      %4563 = vst.msk [vmem:[#allocation3 + $0x70] sm:$0xf] %vm4534, %v4399
      %4564 = vst.msk [vmem:[#allocation3 + $0x74] sm:$0xf] %vm4534, %v4401
      %4565 = vst.msk [vmem:[#allocation3 + $0x78] sm:$0xf] %vm4534, %v4403
      %4566 = vst.msk [vmem:[#allocation3 + $0x7c] sm:$0xf] %vm4534, %v4405
      %4567 = vst.msk [vmem:[#allocation3 + $0x80] sm:$0xf] %vm4534, %v4407
      %4568 = vst.msk [vmem:[#allocation3 + $0x84] sm:$0xf] %vm4534, %v4409
      %4569 = vst.msk [vmem:[#allocation3 + $0x88] sm:$0xf] %vm4534, %v4411
      %4570 = vst.msk [vmem:[#allocation3 + $0x8c] sm:$0xf] %vm4534, %v4413
      %4571 = vst.msk [vmem:[#allocation3 + $0x90] sm:$0xf] %vm4534, %v4415
      %4572 = vst.msk [vmem:[#allocation3 + $0x94] sm:$0xf] %vm4534, %v4417
      %4573 = vst.msk [vmem:[#allocation3 + $0x98] sm:$0xf] %vm4534, %v4419
      %4574 = vst.msk [vmem:[#allocation3 + $0x9c] sm:$0xf] %vm4534, %v4421
      %4575 = vst.msk [vmem:[#allocation3 + $0xa0] sm:$0xf] %vm4534, %v4423
      %4576 = vst.msk [vmem:[#allocation3 + $0xa4] sm:$0xf] %vm4534, %v4425
      %4577 = vst.msk [vmem:[#allocation3 + $0xa8] sm:$0xf] %vm4534, %v4427
      %4578 = vst.msk [vmem:[#allocation3 + $0xac] sm:$0xf] %vm4534, %v4429
      %4579 = vst.msk [vmem:[#allocation3 + $0xb0] sm:$0xf] %vm4534, %v4431
      %4580 = vst.msk [vmem:[#allocation3 + $0xb4] sm:$0xf] %vm4534, %v4433
      %4581 = vst.msk [vmem:[#allocation3 + $0xb8] sm:$0xf] %vm4534, %v4435
      %4582 = vst.msk [vmem:[#allocation3 + $0xbc] sm:$0xf] %vm4534, %v4437
      %4583 = vst.msk [vmem:[#allocation3 + $0xc0] sm:$0xf] %vm4534, %v4439
      %4584 = vst.msk [vmem:[#allocation3 + $0xc4] sm:$0xf] %vm4534, %v4441
      %4585 = vst.msk [vmem:[#allocation3 + $0xc8] sm:$0xf] %vm4534, %v4443
      %4586 = vst.msk [vmem:[#allocation3 + $0xcc] sm:$0xf] %vm4534, %v4445
      %4587 = vst.msk [vmem:[#allocation3 + $0xd0] sm:$0xf] %vm4534, %v4447
      %4588 = vst.msk [vmem:[#allocation3 + $0xd4] sm:$0xf] %vm4534, %v4449
      %4589 = vst.msk [vmem:[#allocation3 + $0xd8] sm:$0xf] %vm4534, %v4451
      %4590 = vst.msk [vmem:[#allocation3 + $0xdc] sm:$0xf] %vm4534, %v4453
      %4591 = vst.msk [vmem:[#allocation3 + $0xe0] sm:$0xf] %vm4534, %v4455
      %4592 = vst.msk [vmem:[#allocation3 + $0xe4] sm:$0xf] %vm4534, %v4457
      %4593 = vst.msk [vmem:[#allocation3 + $0xe8] sm:$0xf] %vm4534, %v4459
      %4594 = vst.msk [vmem:[#allocation3 + $0xec] sm:$0xf] %vm4534, %v4461
      %4595 = vst.msk [vmem:[#allocation3 + $0xf0] sm:$0xf] %vm4534, %v4463
      %4596 = vst.msk [vmem:[#allocation3 + $0xf4] sm:$0xf] %vm4534, %v4465
      %4597 = vst.msk [vmem:[#allocation3 + $0xf8] sm:$0xf] %vm4534, %v4467
      %4598 = vst.msk [vmem:[#allocation3 + $0xfc] sm:$0xf] %vm4534, %v4469
      %v4599 = vld [vmem:[%s35] sm:$0xe]
      %v4600 = vld [vmem:[%s35 + $0x4] sm:$0xf]
      %v4601 = vld [vmem:[%s35 + $0x8] sm:$0x1]
      %v4602 = vld [vmem:[%s35 + $0xc] sm:$0xe]
      %v4603 = vld [vmem:[%s35 + $0x10] sm:$0xf]
      %v4604 = vld [vmem:[%s35 + $0x14] sm:$0x1]
      %v4605 = vld [vmem:[%s35 + $0x18] sm:$0xe]
      %v4606 = vld [vmem:[%s35 + $0x1c] sm:$0xf]
      %v4607 = vld [vmem:[%s35 + $0x20] sm:$0x1]
      %v4608 = vld [vmem:[%s35 + $0x24] sm:$0xe]
      %v4609 = vld [vmem:[%s35 + $0x28] sm:$0xf]
      %v4610 = vld [vmem:[%s35 + $0x2c] sm:$0x1]
      %v4611 = vld [vmem:[%s35 + $0x30] sm:$0xe]
      %v4612 = vld [vmem:[%s35 + $0x34] sm:$0xf]
      %v4613 = vld [vmem:[%s35 + $0x38] sm:$0x1]
      %v4614 = vld [vmem:[%s35 + $0x3c] sm:$0xe]
      %v4615 = vld [vmem:[%s35 + $0x40] sm:$0xf]
      %v4616 = vld [vmem:[%s35 + $0x44] sm:$0x1]
      %v4617 = vld [vmem:[%s35 + $0x48] sm:$0xe]
      %v4618 = vld [vmem:[%s35 + $0x4c] sm:$0xf]
      %v4619 = vld [vmem:[%s35 + $0x50] sm:$0x1]
      %v4620 = vld [vmem:[%s35 + $0x54] sm:$0xe]
      %v4621 = vld [vmem:[%s35 + $0x58] sm:$0xf]
      %v4622 = vld [vmem:[%s35 + $0x5c] sm:$0x1]
      %v4623 = vld [vmem:[%s35 + $0x60] sm:$0xe]
      %v4624 = vld [vmem:[%s35 + $0x64] sm:$0xf]
      %v4625 = vld [vmem:[%s35 + $0x68] sm:$0x1]
      %v4626 = vld [vmem:[%s35 + $0x6c] sm:$0xe]
      %v4627 = vld [vmem:[%s35 + $0x70] sm:$0xf]
      %v4628 = vld [vmem:[%s35 + $0x74] sm:$0x1]
      %v4629 = vld [vmem:[%s35 + $0x78] sm:$0xe]
      %v4630 = vld [vmem:[%s35 + $0x7c] sm:$0xf]
      %v4631 = vld [vmem:[%s35 + $0x80] sm:$0x1]
      %v4632 = vld [vmem:[%s35 + $0x84] sm:$0xe]
      %v4633 = vld [vmem:[%s35 + $0x88] sm:$0xf]
      %v4634 = vld [vmem:[%s35 + $0x8c] sm:$0x1]
      %v4635 = vld [vmem:[%s35 + $0x90] sm:$0xe]
      %v4636 = vld [vmem:[%s35 + $0x94] sm:$0xf]
      %v4637 = vld [vmem:[%s35 + $0x98] sm:$0x1]
      %v4638 = vld [vmem:[%s35 + $0x9c] sm:$0xe]
      %v4639 = vld [vmem:[%s35 + $0xa0] sm:$0xf]
      %v4640 = vld [vmem:[%s35 + $0xa4] sm:$0x1]
      %v4641 = vld [vmem:[%s35 + $0xa8] sm:$0xe]
      %v4642 = vld [vmem:[%s35 + $0xac] sm:$0xf]
      %v4643 = vld [vmem:[%s35 + $0xb0] sm:$0x1]
      %v4644 = vld [vmem:[%s35 + $0xb4] sm:$0xe]
      %v4645 = vld [vmem:[%s35 + $0xb8] sm:$0xf]
      %v4646 = vld [vmem:[%s35 + $0xbc] sm:$0x1]
      %v4647 = vld [vmem:[%s35 + $0xd8] sm:$0xe]
      %v4648 = vld [vmem:[%s35 + $0xdc] sm:$0xf]
      %v4649 = vld [vmem:[%s35 + $0xe0] sm:$0x1]
      %v4650 = vld [vmem:[%s35 + $0xe4] sm:$0xe]
      %v4651 = vld [vmem:[%s35 + $0xe8] sm:$0xf]
      %v4652 = vld [vmem:[%s35 + $0xec] sm:$0x1]
      %v4653 = vld [vmem:[%s35 + $0xf0] sm:$0xe]
      %v4654 = vld [vmem:[%s35 + $0xf4] sm:$0xf]
      %v4655 = vld [vmem:[%s35 + $0xf8] sm:$0x1]
      %v4656 = vld [vmem:[%s35 + $0xfc] sm:$0xe]
      %v4657 = vld [vmem:[%s35 + $0x100] sm:$0xf]
      %v4658 = vld [vmem:[%s35 + $0x104] sm:$0x1]
      %v4659 = vld [vmem:[%s35 + $0x108] sm:$0xe]
      %v4660 = vld [vmem:[%s35 + $0x10c] sm:$0xf]
      %v4661 = vld [vmem:[%s35 + $0x110] sm:$0x1]
      %v4662 = vld [vmem:[%s35 + $0x114] sm:$0xe]
      %v4663 = vld [vmem:[%s35 + $0x118] sm:$0xf]
      %v4664 = vld [vmem:[%s35 + $0x11c] sm:$0x1]
      %v4665 = vld [vmem:[%s35 + $0x120] sm:$0xe]
      %v4666 = vld [vmem:[%s35 + $0x124] sm:$0xf]
      %v4667 = vld [vmem:[%s35 + $0x128] sm:$0x1]
      %v4668 = vld [vmem:[%s35 + $0x12c] sm:$0xe]
      %v4669 = vld [vmem:[%s35 + $0x130] sm:$0xf]
      %v4670 = vld [vmem:[%s35 + $0x134] sm:$0x1]
      %v4671 = vld [vmem:[%s35 + $0x138] sm:$0xe]
      %v4672 = vld [vmem:[%s35 + $0x13c] sm:$0xf]
      %v4673 = vld [vmem:[%s35 + $0x140] sm:$0x1]
      %v4674 = vld [vmem:[%s35 + $0x144] sm:$0xe]
      %v4675 = vld [vmem:[%s35 + $0x148] sm:$0xf]
      %v4676 = vld [vmem:[%s35 + $0x14c] sm:$0x1]
      %v4677 = vld [vmem:[%s35 + $0x150] sm:$0xe]
      %v4678 = vld [vmem:[%s35 + $0x154] sm:$0xf]
      %v4679 = vld [vmem:[%s35 + $0x158] sm:$0x1]
      %v4680 = vld [vmem:[%s35 + $0x15c] sm:$0xe]
      %v4681 = vld [vmem:[%s35 + $0x160] sm:$0xf]
      %v4682 = vld [vmem:[%s35 + $0x164] sm:$0x1]
      %v4683 = vld [vmem:[%s35 + $0x168] sm:$0xe]
      %v4684 = vld [vmem:[%s35 + $0x16c] sm:$0xf]
      %v4685 = vld [vmem:[%s35 + $0x170] sm:$0x1]
      %v4686 = vld [vmem:[%s35 + $0x174] sm:$0xe]
      %v4687 = vld [vmem:[%s35 + $0x178] sm:$0xf]
      %v4688 = vld [vmem:[%s35 + $0x17c] sm:$0x1]
      %v4689 = vld [vmem:[%s35 + $0x180] sm:$0xe]
      %v4690 = vld [vmem:[%s35 + $0x184] sm:$0xf]
      %v4691 = vld [vmem:[%s35 + $0x188] sm:$0x1]
      %v4692 = vld [vmem:[%s35 + $0x18c] sm:$0xe]
      %v4693 = vld [vmem:[%s35 + $0x190] sm:$0xf]
      %v4694 = vld [vmem:[%s35 + $0x194] sm:$0x1]
      %v4791 = vrot.slane %v4599, 5
      %v4792 = vrot.slane %v4791, 4
      %v4793 = vrot.slane %v4600, 5
      %v4794 = vsel %vm2611, %v4792, %v4793
      %v4795 = vrot.slane %v4793, 4
      %v4796 = vrot.slane %v4601, 5
      %v4797 = vsel %vm2611, %v4795, %v4796
      %v4798 = vrot.slane %v4602, 5
      %v4799 = vrot.slane %v4798, 4
      %v4800 = vrot.slane %v4603, 5
      %v4801 = vsel %vm2611, %v4799, %v4800
      %v4802 = vrot.slane %v4800, 4
      %v4803 = vrot.slane %v4604, 5
      %v4804 = vsel %vm2611, %v4802, %v4803
      %v4805 = vrot.slane %v4605, 5
      %v4806 = vrot.slane %v4805, 4
      %v4807 = vrot.slane %v4606, 5
      %v4808 = vsel %vm2611, %v4806, %v4807
      %v4809 = vrot.slane %v4807, 4
      %v4810 = vrot.slane %v4607, 5
      %v4811 = vsel %vm2611, %v4809, %v4810
      %v4812 = vrot.slane %v4608, 5
      %v4813 = vrot.slane %v4812, 4
      %v4814 = vrot.slane %v4609, 5
      %v4815 = vsel %vm2611, %v4813, %v4814
      %v4816 = vrot.slane %v4814, 4
      %v4817 = vrot.slane %v4610, 5
      %v4818 = vsel %vm2611, %v4816, %v4817
      %v4819 = vrot.slane %v4611, 5
      %v4820 = vrot.slane %v4819, 4
      %v4821 = vrot.slane %v4612, 5
      %v4822 = vsel %vm2611, %v4820, %v4821
      %v4823 = vrot.slane %v4821, 4
      %v4824 = vrot.slane %v4613, 5
      %v4825 = vsel %vm2611, %v4823, %v4824
      %v4826 = vrot.slane %v4614, 5
      %v4827 = vrot.slane %v4826, 4
      %v4828 = vrot.slane %v4615, 5
      %v4829 = vsel %vm2611, %v4827, %v4828
      %v4830 = vrot.slane %v4828, 4
      %v4831 = vrot.slane %v4616, 5
      %v4832 = vsel %vm2611, %v4830, %v4831
      %v4833 = vrot.slane %v4617, 5
      %v4834 = vrot.slane %v4833, 4
      %v4835 = vrot.slane %v4618, 5
      %v4836 = vsel %vm2611, %v4834, %v4835
      %v4837 = vrot.slane %v4835, 4
      %v4838 = vrot.slane %v4619, 5
      %v4839 = vsel %vm2611, %v4837, %v4838
      %v4840 = vrot.slane %v4620, 5
      %v4841 = vrot.slane %v4840, 4
      %v4842 = vrot.slane %v4621, 5
      %v4843 = vsel %vm2611, %v4841, %v4842
      %v4844 = vrot.slane %v4842, 4
      %v4845 = vrot.slane %v4622, 5
      %v4846 = vsel %vm2611, %v4844, %v4845
      %v4847 = vrot.slane %v4623, 5
      %v4848 = vrot.slane %v4847, 4
      %v4849 = vrot.slane %v4624, 5
      %v4850 = vsel %vm2611, %v4848, %v4849
      %v4851 = vrot.slane %v4849, 4
      %v4852 = vrot.slane %v4625, 5
      %v4853 = vsel %vm2611, %v4851, %v4852
      %v4854 = vrot.slane %v4626, 5
      %v4855 = vrot.slane %v4854, 4
      %v4856 = vrot.slane %v4627, 5
      %v4857 = vsel %vm2611, %v4855, %v4856
      %v4858 = vrot.slane %v4856, 4
      %v4859 = vrot.slane %v4628, 5
      %v4860 = vsel %vm2611, %v4858, %v4859
      %v4861 = vrot.slane %v4629, 5
      %v4862 = vrot.slane %v4861, 4
      %v4863 = vrot.slane %v4630, 5
      %v4864 = vsel %vm2611, %v4862, %v4863
      %v4865 = vrot.slane %v4863, 4
      %v4866 = vrot.slane %v4631, 5
      %v4867 = vsel %vm2611, %v4865, %v4866
      %v4868 = vrot.slane %v4632, 5
      %v4869 = vrot.slane %v4868, 4
      %v4870 = vrot.slane %v4633, 5
      %v4871 = vsel %vm2611, %v4869, %v4870
      %v4872 = vrot.slane %v4870, 4
      %v4873 = vrot.slane %v4634, 5
      %v4874 = vsel %vm2611, %v4872, %v4873
      %v4875 = vrot.slane %v4635, 5
      %v4876 = vrot.slane %v4875, 4
      %v4877 = vrot.slane %v4636, 5
      %v4878 = vsel %vm2611, %v4876, %v4877
      %v4879 = vrot.slane %v4877, 4
      %v4880 = vrot.slane %v4637, 5
      %v4881 = vsel %vm2611, %v4879, %v4880
      %v4882 = vrot.slane %v4638, 5
      %v4883 = vrot.slane %v4882, 4
      %v4884 = vrot.slane %v4639, 5
      %v4885 = vsel %vm2611, %v4883, %v4884
      %v4886 = vrot.slane %v4884, 4
      %v4887 = vrot.slane %v4640, 5
      %v4888 = vsel %vm2611, %v4886, %v4887
      %v4889 = vrot.slane %v4641, 5
      %v4890 = vrot.slane %v4889, 4
      %v4891 = vrot.slane %v4642, 5
      %v4892 = vsel %vm2611, %v4890, %v4891
      %v4893 = vrot.slane %v4891, 4
      %v4894 = vrot.slane %v4643, 5
      %v4895 = vsel %vm2611, %v4893, %v4894
      %v4896 = vrot.slane %v4644, 5
      %v4897 = vrot.slane %v4896, 4
      %v4898 = vrot.slane %v4645, 5
      %v4899 = vsel %vm2611, %v4897, %v4898
      %v4900 = vrot.slane %v4898, 4
      %v4901 = vrot.slane %v4646, 5
      %v4902 = vsel %vm2611, %v4900, %v4901
      %v4903 = vrot.slane %v4647, 5
      %v4904 = vrot.slane %v4903, 4
      %v4905 = vrot.slane %v4648, 5
      %v4906 = vsel %vm2611, %v4904, %v4905
      %v4907 = vrot.slane %v4905, 4
      %v4908 = vrot.slane %v4649, 5
      %v4909 = vsel %vm2611, %v4907, %v4908
      %v4910 = vrot.slane %v4650, 5
      %v4911 = vrot.slane %v4910, 4
      %v4912 = vrot.slane %v4651, 5
      %v4913 = vsel %vm2611, %v4911, %v4912
      %v4914 = vrot.slane %v4912, 4
      %v4915 = vrot.slane %v4652, 5
      %v4916 = vsel %vm2611, %v4914, %v4915
      %v4917 = vrot.slane %v4653, 5
      %v4918 = vrot.slane %v4917, 4
      %v4919 = vrot.slane %v4654, 5
      %v4920 = vsel %vm2611, %v4918, %v4919
      %v4921 = vrot.slane %v4919, 4
      %v4922 = vrot.slane %v4655, 5
      %v4923 = vsel %vm2611, %v4921, %v4922
      %v4924 = vrot.slane %v4656, 5
      %v4925 = vrot.slane %v4924, 4
      %v4926 = vrot.slane %v4657, 5
      %v4927 = vsel %vm2611, %v4925, %v4926
      %v4928 = vrot.slane %v4926, 4
      %v4929 = vrot.slane %v4658, 5
      %v4930 = vsel %vm2611, %v4928, %v4929
      %v4931 = vrot.slane %v4659, 5
      %v4932 = vrot.slane %v4931, 4
      %v4933 = vrot.slane %v4660, 5
      %v4934 = vsel %vm2611, %v4932, %v4933
      %v4935 = vrot.slane %v4933, 4
      %v4936 = vrot.slane %v4661, 5
      %v4937 = vsel %vm2611, %v4935, %v4936
      %v4938 = vrot.slane %v4662, 5
      %v4939 = vrot.slane %v4938, 4
      %v4940 = vrot.slane %v4663, 5
      %v4941 = vsel %vm2611, %v4939, %v4940
      %v4942 = vrot.slane %v4940, 4
      %v4943 = vrot.slane %v4664, 5
      %v4944 = vsel %vm2611, %v4942, %v4943
      %v4945 = vrot.slane %v4665, 5
      %v4946 = vrot.slane %v4945, 4
      %v4947 = vrot.slane %v4666, 5
      %v4948 = vsel %vm2611, %v4946, %v4947
      %v4949 = vrot.slane %v4947, 4
      %v4950 = vrot.slane %v4667, 5
      %v4951 = vsel %vm2611, %v4949, %v4950
      %v4952 = vrot.slane %v4668, 5
      %v4953 = vrot.slane %v4952, 4
      %v4954 = vrot.slane %v4669, 5
      %v4955 = vsel %vm2611, %v4953, %v4954
      %v4956 = vrot.slane %v4954, 4
      %v4957 = vrot.slane %v4670, 5
      %v4958 = vsel %vm2611, %v4956, %v4957
      %v4959 = vrot.slane %v4671, 5
      %v4960 = vrot.slane %v4959, 4
      %v4961 = vrot.slane %v4672, 5
      %v4962 = vsel %vm2611, %v4960, %v4961
      %v4963 = vrot.slane %v4961, 4
      %v4964 = vrot.slane %v4673, 5
      %v4965 = vsel %vm2611, %v4963, %v4964
      %v4966 = vrot.slane %v4674, 5
      %v4967 = vrot.slane %v4966, 4
      %v4968 = vrot.slane %v4675, 5
      %v4969 = vsel %vm2611, %v4967, %v4968
      %v4970 = vrot.slane %v4968, 4
      %v4971 = vrot.slane %v4676, 5
      %v4972 = vsel %vm2611, %v4970, %v4971
      %v4973 = vrot.slane %v4677, 5
      %v4974 = vrot.slane %v4973, 4
      %v4975 = vrot.slane %v4678, 5
      %v4976 = vsel %vm2611, %v4974, %v4975
      %v4977 = vrot.slane %v4975, 4
      %v4978 = vrot.slane %v4679, 5
      %v4979 = vsel %vm2611, %v4977, %v4978
      %v4980 = vrot.slane %v4680, 5
      %v4981 = vrot.slane %v4980, 4
      %v4982 = vrot.slane %v4681, 5
      %v4983 = vsel %vm2611, %v4981, %v4982
      %v4984 = vrot.slane %v4982, 4
      %v4985 = vrot.slane %v4682, 5
      %v4986 = vsel %vm2611, %v4984, %v4985
      %v4987 = vrot.slane %v4683, 5
      %v4988 = vrot.slane %v4987, 4
      %v4989 = vrot.slane %v4684, 5
      %v4990 = vsel %vm2611, %v4988, %v4989
      %v4991 = vrot.slane %v4989, 4
      %v4992 = vrot.slane %v4685, 5
      %v4993 = vsel %vm2611, %v4991, %v4992
      %v4994 = vrot.slane %v4686, 5
      %v4995 = vrot.slane %v4994, 4
      %v4996 = vrot.slane %v4687, 5
      %v4997 = vsel %vm2611, %v4995, %v4996
      %v4998 = vrot.slane %v4996, 4
      %v4999 = vrot.slane %v4688, 5
      %v5000 = vsel %vm2611, %v4998, %v4999
      %v5001 = vrot.slane %v4689, 5
      %v5002 = vrot.slane %v5001, 4
      %v5003 = vrot.slane %v4690, 5
      %v5004 = vsel %vm2611, %v5002, %v5003
      %v5005 = vrot.slane %v5003, 4
      %v5006 = vrot.slane %v4691, 5
      %v5007 = vsel %vm2611, %v5005, %v5006
      %v5008 = vrot.slane %v4692, 5
      %v5009 = vrot.slane %v5008, 4
      %v5010 = vrot.slane %v4693, 5
      %v5011 = vsel %vm2611, %v5009, %v5010
      %v5012 = vrot.slane %v5010, 4
      %v5013 = vrot.slane %v4694, 5
      %v5014 = vsel %vm2611, %v5012, %v5013
      %5015 = vrot.lane.b32.xlu0 %v4794, 20
      %v5016 = vpop.permute.xlu0 %5015
      %5017 = vrot.lane.b32.xlu0 %v4797, 20
      %v5018 = vpop.permute.xlu0 %5017
      %5019 = vrot.lane.b32.xlu0 %v4801, 20
      %v5020 = vpop.permute.xlu0 %5019
      %5021 = vrot.lane.b32.xlu0 %v4804, 20
      %v5022 = vpop.permute.xlu0 %5021
      %5023 = vrot.lane.b32.xlu0 %v4808, 20
      %v5024 = vpop.permute.xlu0 %5023
      %5025 = vrot.lane.b32.xlu0 %v4811, 20
      %v5026 = vpop.permute.xlu0 %5025
      %5027 = vrot.lane.b32.xlu0 %v4815, 20
      %v5028 = vpop.permute.xlu0 %5027
      %5029 = vrot.lane.b32.xlu0 %v4818, 20
      %v5030 = vpop.permute.xlu0 %5029
      %5031 = vrot.lane.b32.xlu0 %v4822, 20
      %v5032 = vpop.permute.xlu0 %5031
      %5033 = vrot.lane.b32.xlu0 %v4825, 20
      %v5034 = vpop.permute.xlu0 %5033
      %5035 = vrot.lane.b32.xlu0 %v4829, 20
      %v5036 = vpop.permute.xlu0 %5035
      %5037 = vrot.lane.b32.xlu0 %v4832, 20
      %v5038 = vpop.permute.xlu0 %5037
      %5039 = vrot.lane.b32.xlu0 %v4836, 20
      %v5040 = vpop.permute.xlu0 %5039
      %5041 = vrot.lane.b32.xlu0 %v4839, 20
      %v5042 = vpop.permute.xlu0 %5041
      %5043 = vrot.lane.b32.xlu0 %v4843, 20
      %v5044 = vpop.permute.xlu0 %5043
      %5045 = vrot.lane.b32.xlu0 %v4846, 20
      %v5046 = vpop.permute.xlu0 %5045
      %5047 = vrot.lane.b32.xlu0 %v4850, 20
      %v5048 = vpop.permute.xlu0 %5047
      %5049 = vrot.lane.b32.xlu0 %v4853, 20
      %v5050 = vpop.permute.xlu0 %5049
      %5051 = vrot.lane.b32.xlu0 %v4857, 20
      %v5052 = vpop.permute.xlu0 %5051
      %5053 = vrot.lane.b32.xlu0 %v4860, 20
      %v5054 = vpop.permute.xlu0 %5053
      %5055 = vrot.lane.b32.xlu0 %v4864, 20
      %v5056 = vpop.permute.xlu0 %5055
      %5057 = vrot.lane.b32.xlu0 %v4867, 20
      %v5058 = vpop.permute.xlu0 %5057
      %5059 = vrot.lane.b32.xlu0 %v4871, 20
      %v5060 = vpop.permute.xlu0 %5059
      %5061 = vrot.lane.b32.xlu0 %v4874, 20
      %v5062 = vpop.permute.xlu0 %5061
      %5063 = vrot.lane.b32.xlu0 %v4878, 20
      %v5064 = vpop.permute.xlu0 %5063
      %5065 = vrot.lane.b32.xlu0 %v4881, 20
      %v5066 = vpop.permute.xlu0 %5065
      %5067 = vrot.lane.b32.xlu0 %v4885, 20
      %v5068 = vpop.permute.xlu0 %5067
      %5069 = vrot.lane.b32.xlu0 %v4888, 20
      %v5070 = vpop.permute.xlu0 %5069
      %5071 = vrot.lane.b32.xlu0 %v4892, 20
      %v5072 = vpop.permute.xlu0 %5071
      %5073 = vrot.lane.b32.xlu0 %v4895, 20
      %v5074 = vpop.permute.xlu0 %5073
      %5075 = vrot.lane.b32.xlu0 %v4899, 20
      %v5076 = vpop.permute.xlu0 %5075
      %5077 = vrot.lane.b32.xlu0 %v4902, 20
      %v5078 = vpop.permute.xlu0 %5077
      %5079 = vrot.lane.b32.xlu0 %v4906, 20
      %v5080 = vpop.permute.xlu0 %5079
      %5081 = vrot.lane.b32.xlu0 %v4909, 20
      %v5082 = vpop.permute.xlu0 %5081
      %5083 = vrot.lane.b32.xlu0 %v4913, 20
      %v5084 = vpop.permute.xlu0 %5083
      %5085 = vrot.lane.b32.xlu0 %v4916, 20
      %v5086 = vpop.permute.xlu0 %5085
      %5087 = vrot.lane.b32.xlu0 %v4920, 20
      %v5088 = vpop.permute.xlu0 %5087
      %5089 = vrot.lane.b32.xlu0 %v4923, 20
      %v5090 = vpop.permute.xlu0 %5089
      %5091 = vrot.lane.b32.xlu0 %v4927, 20
      %v5092 = vpop.permute.xlu0 %5091
      %5093 = vrot.lane.b32.xlu0 %v4930, 20
      %v5094 = vpop.permute.xlu0 %5093
      %5095 = vrot.lane.b32.xlu0 %v4934, 20
      %v5096 = vpop.permute.xlu0 %5095
      %5097 = vrot.lane.b32.xlu0 %v4937, 20
      %v5098 = vpop.permute.xlu0 %5097
      %5099 = vrot.lane.b32.xlu0 %v4941, 20
      %v5100 = vpop.permute.xlu0 %5099
      %5101 = vrot.lane.b32.xlu0 %v4944, 20
      %v5102 = vpop.permute.xlu0 %5101
      %5103 = vrot.lane.b32.xlu0 %v4948, 20
      %v5104 = vpop.permute.xlu0 %5103
      %5105 = vrot.lane.b32.xlu0 %v4951, 20
      %v5106 = vpop.permute.xlu0 %5105
      %5107 = vrot.lane.b32.xlu0 %v4955, 20
      %v5108 = vpop.permute.xlu0 %5107
      %5109 = vrot.lane.b32.xlu0 %v4958, 20
      %v5110 = vpop.permute.xlu0 %5109
      %5111 = vrot.lane.b32.xlu0 %v4962, 20
      %v5112 = vpop.permute.xlu0 %5111
      %5113 = vrot.lane.b32.xlu0 %v4965, 20
      %v5114 = vpop.permute.xlu0 %5113
      %5115 = vrot.lane.b32.xlu0 %v4969, 20
      %v5116 = vpop.permute.xlu0 %5115
      %5117 = vrot.lane.b32.xlu0 %v4972, 20
      %v5118 = vpop.permute.xlu0 %5117
      %5119 = vrot.lane.b32.xlu0 %v4976, 20
      %v5120 = vpop.permute.xlu0 %5119
      %5121 = vrot.lane.b32.xlu0 %v4979, 20
      %v5122 = vpop.permute.xlu0 %5121
      %5123 = vrot.lane.b32.xlu0 %v4983, 20
      %v5124 = vpop.permute.xlu0 %5123
      %5125 = vrot.lane.b32.xlu0 %v4986, 20
      %v5126 = vpop.permute.xlu0 %5125
      %5127 = vrot.lane.b32.xlu0 %v4990, 20
      %v5128 = vpop.permute.xlu0 %5127
      %5129 = vrot.lane.b32.xlu0 %v4993, 20
      %v5130 = vpop.permute.xlu0 %5129
      %5131 = vrot.lane.b32.xlu0 %v4997, 20
      %v5132 = vpop.permute.xlu0 %5131
      %5133 = vrot.lane.b32.xlu0 %v5000, 20
      %v5134 = vpop.permute.xlu0 %5133
      %5135 = vrot.lane.b32.xlu0 %v5004, 20
      %v5136 = vpop.permute.xlu0 %5135
      %5137 = vrot.lane.b32.xlu0 %v5007, 20
      %v5138 = vpop.permute.xlu0 %5137
      %5139 = vrot.lane.b32.xlu0 %v5011, 20
      %v5140 = vpop.permute.xlu0 %5139
      %5141 = vrot.lane.b32.xlu0 %v5014, 20
      %v5142 = vpop.permute.xlu0 %5141
      %vm5207 = vcmask 191648
      %5208 = vst.msk [vmem:[#allocation3] sm:$0xf] %vm5207, %v5016
      %5209 = vst.msk [vmem:[#allocation3 + $0x4] sm:$0xf] %vm5207, %v5018
      %5210 = vst.msk [vmem:[#allocation3 + $0x8] sm:$0xf] %vm5207, %v5020
      %5211 = vst.msk [vmem:[#allocation3 + $0xc] sm:$0xf] %vm5207, %v5022
      %5212 = vst.msk [vmem:[#allocation3 + $0x10] sm:$0xf] %vm5207, %v5024
      %5213 = vst.msk [vmem:[#allocation3 + $0x14] sm:$0xf] %vm5207, %v5026
      %5214 = vst.msk [vmem:[#allocation3 + $0x18] sm:$0xf] %vm5207, %v5028
      %5215 = vst.msk [vmem:[#allocation3 + $0x1c] sm:$0xf] %vm5207, %v5030
      %5216 = vst.msk [vmem:[#allocation3 + $0x20] sm:$0xf] %vm5207, %v5032
      %5217 = vst.msk [vmem:[#allocation3 + $0x24] sm:$0xf] %vm5207, %v5034
      %5218 = vst.msk [vmem:[#allocation3 + $0x28] sm:$0xf] %vm5207, %v5036
      %5219 = vst.msk [vmem:[#allocation3 + $0x2c] sm:$0xf] %vm5207, %v5038
      %5220 = vst.msk [vmem:[#allocation3 + $0x30] sm:$0xf] %vm5207, %v5040
      %5221 = vst.msk [vmem:[#allocation3 + $0x34] sm:$0xf] %vm5207, %v5042
      %5222 = vst.msk [vmem:[#allocation3 + $0x38] sm:$0xf] %vm5207, %v5044
      %5223 = vst.msk [vmem:[#allocation3 + $0x3c] sm:$0xf] %vm5207, %v5046
      %5224 = vst.msk [vmem:[#allocation3 + $0x40] sm:$0xf] %vm5207, %v5048
      %5225 = vst.msk [vmem:[#allocation3 + $0x44] sm:$0xf] %vm5207, %v5050
      %5226 = vst.msk [vmem:[#allocation3 + $0x48] sm:$0xf] %vm5207, %v5052
      %5227 = vst.msk [vmem:[#allocation3 + $0x4c] sm:$0xf] %vm5207, %v5054
      %5228 = vst.msk [vmem:[#allocation3 + $0x50] sm:$0xf] %vm5207, %v5056
      %5229 = vst.msk [vmem:[#allocation3 + $0x54] sm:$0xf] %vm5207, %v5058
      %5230 = vst.msk [vmem:[#allocation3 + $0x58] sm:$0xf] %vm5207, %v5060
      %5231 = vst.msk [vmem:[#allocation3 + $0x5c] sm:$0xf] %vm5207, %v5062
      %5232 = vst.msk [vmem:[#allocation3 + $0x60] sm:$0xf] %vm5207, %v5064
      %5233 = vst.msk [vmem:[#allocation3 + $0x64] sm:$0xf] %vm5207, %v5066
      %5234 = vst.msk [vmem:[#allocation3 + $0x68] sm:$0xf] %vm5207, %v5068
      %5235 = vst.msk [vmem:[#allocation3 + $0x6c] sm:$0xf] %vm5207, %v5070
      %5236 = vst.msk [vmem:[#allocation3 + $0x70] sm:$0xf] %vm5207, %v5072
      %5237 = vst.msk [vmem:[#allocation3 + $0x74] sm:$0xf] %vm5207, %v5074
      %5238 = vst.msk [vmem:[#allocation3 + $0x78] sm:$0xf] %vm5207, %v5076
      %5239 = vst.msk [vmem:[#allocation3 + $0x7c] sm:$0xf] %vm5207, %v5078
      %5240 = vst.msk [vmem:[#allocation3 + $0x80] sm:$0xf] %vm5207, %v5080
      %5241 = vst.msk [vmem:[#allocation3 + $0x84] sm:$0xf] %vm5207, %v5082
      %5242 = vst.msk [vmem:[#allocation3 + $0x88] sm:$0xf] %vm5207, %v5084
      %5243 = vst.msk [vmem:[#allocation3 + $0x8c] sm:$0xf] %vm5207, %v5086
      %5244 = vst.msk [vmem:[#allocation3 + $0x90] sm:$0xf] %vm5207, %v5088
      %5245 = vst.msk [vmem:[#allocation3 + $0x94] sm:$0xf] %vm5207, %v5090
      %5246 = vst.msk [vmem:[#allocation3 + $0x98] sm:$0xf] %vm5207, %v5092
      %5247 = vst.msk [vmem:[#allocation3 + $0x9c] sm:$0xf] %vm5207, %v5094
      %5248 = vst.msk [vmem:[#allocation3 + $0xa0] sm:$0xf] %vm5207, %v5096
      %5249 = vst.msk [vmem:[#allocation3 + $0xa4] sm:$0xf] %vm5207, %v5098
      %5250 = vst.msk [vmem:[#allocation3 + $0xa8] sm:$0xf] %vm5207, %v5100
      %5251 = vst.msk [vmem:[#allocation3 + $0xac] sm:$0xf] %vm5207, %v5102
      %5252 = vst.msk [vmem:[#allocation3 + $0xb0] sm:$0xf] %vm5207, %v5104
      %5253 = vst.msk [vmem:[#allocation3 + $0xb4] sm:$0xf] %vm5207, %v5106
      %5254 = vst.msk [vmem:[#allocation3 + $0xb8] sm:$0xf] %vm5207, %v5108
      %5255 = vst.msk [vmem:[#allocation3 + $0xbc] sm:$0xf] %vm5207, %v5110
      %5256 = vst.msk [vmem:[#allocation3 + $0xc0] sm:$0xf] %vm5207, %v5112
      %5257 = vst.msk [vmem:[#allocation3 + $0xc4] sm:$0xf] %vm5207, %v5114
      %5258 = vst.msk [vmem:[#allocation3 + $0xc8] sm:$0xf] %vm5207, %v5116
      %5259 = vst.msk [vmem:[#allocation3 + $0xcc] sm:$0xf] %vm5207, %v5118
      %5260 = vst.msk [vmem:[#allocation3 + $0xd0] sm:$0xf] %vm5207, %v5120
      %5261 = vst.msk [vmem:[#allocation3 + $0xd4] sm:$0xf] %vm5207, %v5122
      %5262 = vst.msk [vmem:[#allocation3 + $0xd8] sm:$0xf] %vm5207, %v5124
      %5263 = vst.msk [vmem:[#allocation3 + $0xdc] sm:$0xf] %vm5207, %v5126
      %5264 = vst.msk [vmem:[#allocation3 + $0xe0] sm:$0xf] %vm5207, %v5128
      %5265 = vst.msk [vmem:[#allocation3 + $0xe4] sm:$0xf] %vm5207, %v5130
      %5266 = vst.msk [vmem:[#allocation3 + $0xe8] sm:$0xf] %vm5207, %v5132
      %5267 = vst.msk [vmem:[#allocation3 + $0xec] sm:$0xf] %vm5207, %v5134
      %5268 = vst.msk [vmem:[#allocation3 + $0xf0] sm:$0xf] %vm5207, %v5136
      %5269 = vst.msk [vmem:[#allocation3 + $0xf4] sm:$0xf] %vm5207, %v5138
      %5270 = vst.msk [vmem:[#allocation3 + $0xf8] sm:$0xf] %vm5207, %v5140
      %5271 = vst.msk [vmem:[#allocation3 + $0xfc] sm:$0xf] %vm5207, %v5142
      %s5272 = scalar_lea.vmem [#allocation2], 24
      %v5273 = vld [vmem:[%s5272] sm:$0xf]
      %v5274 = vld [vmem:[%s5272 + $0x4] sm:$0xf]
      %v5275 = vld [vmem:[%s5272 + $0xc] sm:$0xf]
      %v5276 = vld [vmem:[%s5272 + $0x10] sm:$0xf]
      %v5277 = vld [vmem:[%s5272 + $0x18] sm:$0xf]
      %v5278 = vld [vmem:[%s5272 + $0x1c] sm:$0xf]
      %v5279 = vld [vmem:[%s5272 + $0x24] sm:$0xf]
      %v5280 = vld [vmem:[%s5272 + $0x28] sm:$0xf]
      %v5281 = vld [vmem:[%s5272 + $0x30] sm:$0xf]
      %v5282 = vld [vmem:[%s5272 + $0x34] sm:$0xf]
      %v5283 = vld [vmem:[%s5272 + $0x3c] sm:$0xf]
      %v5284 = vld [vmem:[%s5272 + $0x40] sm:$0xf]
      %v5285 = vld [vmem:[%s5272 + $0x48] sm:$0xf]
      %v5286 = vld [vmem:[%s5272 + $0x4c] sm:$0xf]
      %v5287 = vld [vmem:[%s5272 + $0x54] sm:$0xf]
      %v5288 = vld [vmem:[%s5272 + $0x58] sm:$0xf]
      %v5289 = vld [vmem:[%s5272 + $0x60] sm:$0xf]
      %v5290 = vld [vmem:[%s5272 + $0x64] sm:$0xf]
      %v5291 = vld [vmem:[%s5272 + $0x6c] sm:$0xf]
      %v5292 = vld [vmem:[%s5272 + $0x70] sm:$0xf]
      %v5293 = vld [vmem:[%s5272 + $0x78] sm:$0xf]
      %v5294 = vld [vmem:[%s5272 + $0x7c] sm:$0xf]
      %v5295 = vld [vmem:[%s5272 + $0x84] sm:$0xf]
      %v5296 = vld [vmem:[%s5272 + $0x88] sm:$0xf]
      %v5297 = vld [vmem:[%s5272 + $0x90] sm:$0xf]
      %v5298 = vld [vmem:[%s5272 + $0x94] sm:$0xf]
      %v5299 = vld [vmem:[%s5272 + $0x9c] sm:$0xf]
      %v5300 = vld [vmem:[%s5272 + $0xa0] sm:$0xf]
      %v5301 = vld [vmem:[%s5272 + $0xa8] sm:$0xf]
      %v5302 = vld [vmem:[%s5272 + $0xac] sm:$0xf]
      %v5303 = vld [vmem:[%s5272 + $0xb4] sm:$0xf]
      %v5304 = vld [vmem:[%s5272 + $0xb8] sm:$0xf]
      %v5305 = vld [vmem:[%s5272 + $0xd8] sm:$0xf]
      %v5306 = vld [vmem:[%s5272 + $0xdc] sm:$0xf]
      %v5307 = vld [vmem:[%s5272 + $0xe4] sm:$0xf]
      %v5308 = vld [vmem:[%s5272 + $0xe8] sm:$0xf]
      %v5309 = vld [vmem:[%s5272 + $0xf0] sm:$0xf]
      %v5310 = vld [vmem:[%s5272 + $0xf4] sm:$0xf]
      %v5311 = vld [vmem:[%s5272 + $0xfc] sm:$0xf]
      %v5312 = vld [vmem:[%s5272 + $0x100] sm:$0xf]
      %v5313 = vld [vmem:[%s5272 + $0x108] sm:$0xf]
      %v5314 = vld [vmem:[%s5272 + $0x10c] sm:$0xf]
      %v5315 = vld [vmem:[%s5272 + $0x114] sm:$0xf]
      %v5316 = vld [vmem:[%s5272 + $0x118] sm:$0xf]
      %v5317 = vld [vmem:[%s5272 + $0x120] sm:$0xf]
      %v5318 = vld [vmem:[%s5272 + $0x124] sm:$0xf]
      %v5319 = vld [vmem:[%s5272 + $0x12c] sm:$0xf]
      %v5320 = vld [vmem:[%s5272 + $0x130] sm:$0xf]
      %v5321 = vld [vmem:[%s5272 + $0x138] sm:$0xf]
      %v5322 = vld [vmem:[%s5272 + $0x13c] sm:$0xf]
      %v5323 = vld [vmem:[%s5272 + $0x144] sm:$0xf]
      %v5324 = vld [vmem:[%s5272 + $0x148] sm:$0xf]
      %v5325 = vld [vmem:[%s5272 + $0x150] sm:$0xf]
      %v5326 = vld [vmem:[%s5272 + $0x154] sm:$0xf]
      %v5327 = vld [vmem:[%s5272 + $0x15c] sm:$0xf]
      %v5328 = vld [vmem:[%s5272 + $0x160] sm:$0xf]
      %v5329 = vld [vmem:[%s5272 + $0x168] sm:$0xf]
      %v5330 = vld [vmem:[%s5272 + $0x16c] sm:$0xf]
      %v5331 = vld [vmem:[%s5272 + $0x174] sm:$0xf]
      %v5332 = vld [vmem:[%s5272 + $0x178] sm:$0xf]
      %v5333 = vld [vmem:[%s5272 + $0x180] sm:$0xf]
      %v5334 = vld [vmem:[%s5272 + $0x184] sm:$0xf]
      %v5335 = vld [vmem:[%s5272 + $0x18c] sm:$0xf]
      %v5336 = vld [vmem:[%s5272 + $0x190] sm:$0xf]
      %5401 = vrot.lane.b32.xlu0 %v5273, 24
      %v5402 = vpop.permute.xlu0 %5401
      %5403 = vrot.lane.b32.xlu0 %v5274, 24
      %v5404 = vpop.permute.xlu0 %5403
      %5405 = vrot.lane.b32.xlu0 %v5275, 24
      %v5406 = vpop.permute.xlu0 %5405
      %5407 = vrot.lane.b32.xlu0 %v5276, 24
      %v5408 = vpop.permute.xlu0 %5407
      %5409 = vrot.lane.b32.xlu0 %v5277, 24
      %v5410 = vpop.permute.xlu0 %5409
      %5411 = vrot.lane.b32.xlu0 %v5278, 24
      %v5412 = vpop.permute.xlu0 %5411
      %5413 = vrot.lane.b32.xlu0 %v5279, 24
      %v5414 = vpop.permute.xlu0 %5413
      %5415 = vrot.lane.b32.xlu0 %v5280, 24
      %v5416 = vpop.permute.xlu0 %5415
      %5417 = vrot.lane.b32.xlu0 %v5281, 24
      %v5418 = vpop.permute.xlu0 %5417
      %5419 = vrot.lane.b32.xlu0 %v5282, 24
      %v5420 = vpop.permute.xlu0 %5419
      %5421 = vrot.lane.b32.xlu0 %v5283, 24
      %v5422 = vpop.permute.xlu0 %5421
      %5423 = vrot.lane.b32.xlu0 %v5284, 24
      %v5424 = vpop.permute.xlu0 %5423
      %5425 = vrot.lane.b32.xlu0 %v5285, 24
      %v5426 = vpop.permute.xlu0 %5425
      %5427 = vrot.lane.b32.xlu0 %v5286, 24
      %v5428 = vpop.permute.xlu0 %5427
      %5429 = vrot.lane.b32.xlu0 %v5287, 24
      %v5430 = vpop.permute.xlu0 %5429
      %5431 = vrot.lane.b32.xlu0 %v5288, 24
      %v5432 = vpop.permute.xlu0 %5431
      %5433 = vrot.lane.b32.xlu0 %v5289, 24
      %v5434 = vpop.permute.xlu0 %5433
      %5435 = vrot.lane.b32.xlu0 %v5290, 24
      %v5436 = vpop.permute.xlu0 %5435
      %5437 = vrot.lane.b32.xlu0 %v5291, 24
      %v5438 = vpop.permute.xlu0 %5437
      %5439 = vrot.lane.b32.xlu0 %v5292, 24
      %v5440 = vpop.permute.xlu0 %5439
      %5441 = vrot.lane.b32.xlu0 %v5293, 24
      %v5442 = vpop.permute.xlu0 %5441
      %5443 = vrot.lane.b32.xlu0 %v5294, 24
      %v5444 = vpop.permute.xlu0 %5443
      %5445 = vrot.lane.b32.xlu0 %v5295, 24
      %v5446 = vpop.permute.xlu0 %5445
      %5447 = vrot.lane.b32.xlu0 %v5296, 24
      %v5448 = vpop.permute.xlu0 %5447
      %5449 = vrot.lane.b32.xlu0 %v5297, 24
      %v5450 = vpop.permute.xlu0 %5449
      %5451 = vrot.lane.b32.xlu0 %v5298, 24
      %v5452 = vpop.permute.xlu0 %5451
      %5453 = vrot.lane.b32.xlu0 %v5299, 24
      %v5454 = vpop.permute.xlu0 %5453
      %5455 = vrot.lane.b32.xlu0 %v5300, 24
      %v5456 = vpop.permute.xlu0 %5455
      %5457 = vrot.lane.b32.xlu0 %v5301, 24
      %v5458 = vpop.permute.xlu0 %5457
      %5459 = vrot.lane.b32.xlu0 %v5302, 24
      %v5460 = vpop.permute.xlu0 %5459
      %5461 = vrot.lane.b32.xlu0 %v5303, 24
      %v5462 = vpop.permute.xlu0 %5461
      %5463 = vrot.lane.b32.xlu0 %v5304, 24
      %v5464 = vpop.permute.xlu0 %5463
      %5465 = vrot.lane.b32.xlu0 %v5305, 24
      %v5466 = vpop.permute.xlu0 %5465
      %5467 = vrot.lane.b32.xlu0 %v5306, 24
      %v5468 = vpop.permute.xlu0 %5467
      %5469 = vrot.lane.b32.xlu0 %v5307, 24
      %v5470 = vpop.permute.xlu0 %5469
      %5471 = vrot.lane.b32.xlu0 %v5308, 24
      %v5472 = vpop.permute.xlu0 %5471
      %5473 = vrot.lane.b32.xlu0 %v5309, 24
      %v5474 = vpop.permute.xlu0 %5473
      %5475 = vrot.lane.b32.xlu0 %v5310, 24
      %v5476 = vpop.permute.xlu0 %5475
      %5477 = vrot.lane.b32.xlu0 %v5311, 24
      %v5478 = vpop.permute.xlu0 %5477
      %5479 = vrot.lane.b32.xlu0 %v5312, 24
      %v5480 = vpop.permute.xlu0 %5479
      %5481 = vrot.lane.b32.xlu0 %v5313, 24
      %v5482 = vpop.permute.xlu0 %5481
      %5483 = vrot.lane.b32.xlu0 %v5314, 24
      %v5484 = vpop.permute.xlu0 %5483
      %5485 = vrot.lane.b32.xlu0 %v5315, 24
      %v5486 = vpop.permute.xlu0 %5485
      %5487 = vrot.lane.b32.xlu0 %v5316, 24
      %v5488 = vpop.permute.xlu0 %5487
      %5489 = vrot.lane.b32.xlu0 %v5317, 24
      %v5490 = vpop.permute.xlu0 %5489
      %5491 = vrot.lane.b32.xlu0 %v5318, 24
      %v5492 = vpop.permute.xlu0 %5491
      %5493 = vrot.lane.b32.xlu0 %v5319, 24
      %v5494 = vpop.permute.xlu0 %5493
      %5495 = vrot.lane.b32.xlu0 %v5320, 24
      %v5496 = vpop.permute.xlu0 %5495
      %5497 = vrot.lane.b32.xlu0 %v5321, 24
      %v5498 = vpop.permute.xlu0 %5497
      %5499 = vrot.lane.b32.xlu0 %v5322, 24
      %v5500 = vpop.permute.xlu0 %5499
      %5501 = vrot.lane.b32.xlu0 %v5323, 24
      %v5502 = vpop.permute.xlu0 %5501
      %5503 = vrot.lane.b32.xlu0 %v5324, 24
      %v5504 = vpop.permute.xlu0 %5503
      %5505 = vrot.lane.b32.xlu0 %v5325, 24
      %v5506 = vpop.permute.xlu0 %5505
      %5507 = vrot.lane.b32.xlu0 %v5326, 24
      %v5508 = vpop.permute.xlu0 %5507
      %5509 = vrot.lane.b32.xlu0 %v5327, 24
      %v5510 = vpop.permute.xlu0 %5509
      %5511 = vrot.lane.b32.xlu0 %v5328, 24
      %v5512 = vpop.permute.xlu0 %5511
      %5513 = vrot.lane.b32.xlu0 %v5329, 24
      %v5514 = vpop.permute.xlu0 %5513
      %5515 = vrot.lane.b32.xlu0 %v5330, 24
      %v5516 = vpop.permute.xlu0 %5515
      %5517 = vrot.lane.b32.xlu0 %v5331, 24
      %v5518 = vpop.permute.xlu0 %5517
      %5519 = vrot.lane.b32.xlu0 %v5332, 24
      %v5520 = vpop.permute.xlu0 %5519
      %5521 = vrot.lane.b32.xlu0 %v5333, 24
      %v5522 = vpop.permute.xlu0 %5521
      %5523 = vrot.lane.b32.xlu0 %v5334, 24
      %v5524 = vpop.permute.xlu0 %5523
      %5525 = vrot.lane.b32.xlu0 %v5335, 24
      %v5526 = vpop.permute.xlu0 %5525
      %5527 = vrot.lane.b32.xlu0 %v5336, 24
      %v5528 = vpop.permute.xlu0 %5527
      %vm5593 = vcmask 224448
      %5594 = vst.msk [vmem:[#allocation3] sm:$0xf] %vm5593, %v5402
      %5595 = vst.msk [vmem:[#allocation3 + $0x4] sm:$0xf] %vm5593, %v5404
      %5596 = vst.msk [vmem:[#allocation3 + $0x8] sm:$0xf] %vm5593, %v5406
      %5597 = vst.msk [vmem:[#allocation3 + $0xc] sm:$0xf] %vm5593, %v5408
      %5598 = vst.msk [vmem:[#allocation3 + $0x10] sm:$0xf] %vm5593, %v5410
      %5599 = vst.msk [vmem:[#allocation3 + $0x14] sm:$0xf] %vm5593, %v5412
      %5600 = vst.msk [vmem:[#allocation3 + $0x18] sm:$0xf] %vm5593, %v5414
      %5601 = vst.msk [vmem:[#allocation3 + $0x1c] sm:$0xf] %vm5593, %v5416
      %5602 = vst.msk [vmem:[#allocation3 + $0x20] sm:$0xf] %vm5593, %v5418
      %5603 = vst.msk [vmem:[#allocation3 + $0x24] sm:$0xf] %vm5593, %v5420
      %5604 = vst.msk [vmem:[#allocation3 + $0x28] sm:$0xf] %vm5593, %v5422
      %5605 = vst.msk [vmem:[#allocation3 + $0x2c] sm:$0xf] %vm5593, %v5424
      %5606 = vst.msk [vmem:[#allocation3 + $0x30] sm:$0xf] %vm5593, %v5426
      %5607 = vst.msk [vmem:[#allocation3 + $0x34] sm:$0xf] %vm5593, %v5428
      %5608 = vst.msk [vmem:[#allocation3 + $0x38] sm:$0xf] %vm5593, %v5430
      %5609 = vst.msk [vmem:[#allocation3 + $0x3c] sm:$0xf] %vm5593, %v5432
      %5610 = vst.msk [vmem:[#allocation3 + $0x40] sm:$0xf] %vm5593, %v5434
      %5611 = vst.msk [vmem:[#allocation3 + $0x44] sm:$0xf] %vm5593, %v5436
      %5612 = vst.msk [vmem:[#allocation3 + $0x48] sm:$0xf] %vm5593, %v5438
      %5613 = vst.msk [vmem:[#allocation3 + $0x4c] sm:$0xf] %vm5593, %v5440
      %5614 = vst.msk [vmem:[#allocation3 + $0x50] sm:$0xf] %vm5593, %v5442
      %5615 = vst.msk [vmem:[#allocation3 + $0x54] sm:$0xf] %vm5593, %v5444
      %5616 = vst.msk [vmem:[#allocation3 + $0x58] sm:$0xf] %vm5593, %v5446
      %5617 = vst.msk [vmem:[#allocation3 + $0x5c] sm:$0xf] %vm5593, %v5448
      %5618 = vst.msk [vmem:[#allocation3 + $0x60] sm:$0xf] %vm5593, %v5450
      %5619 = vst.msk [vmem:[#allocation3 + $0x64] sm:$0xf] %vm5593, %v5452
      %5620 = vst.msk [vmem:[#allocation3 + $0x68] sm:$0xf] %vm5593, %v5454
      %5621 = vst.msk [vmem:[#allocation3 + $0x6c] sm:$0xf] %vm5593, %v5456
      %5622 = vst.msk [vmem:[#allocation3 + $0x70] sm:$0xf] %vm5593, %v5458
      %5623 = vst.msk [vmem:[#allocation3 + $0x74] sm:$0xf] %vm5593, %v5460
      %5624 = vst.msk [vmem:[#allocation3 + $0x78] sm:$0xf] %vm5593, %v5462
      %5625 = vst.msk [vmem:[#allocation3 + $0x7c] sm:$0xf] %vm5593, %v5464
      %5626 = vst.msk [vmem:[#allocation3 + $0x80] sm:$0xf] %vm5593, %v5466
      %5627 = vst.msk [vmem:[#allocation3 + $0x84] sm:$0xf] %vm5593, %v5468
      %5628 = vst.msk [vmem:[#allocation3 + $0x88] sm:$0xf] %vm5593, %v5470
      %5629 = vst.msk [vmem:[#allocation3 + $0x8c] sm:$0xf] %vm5593, %v5472
      %5630 = vst.msk [vmem:[#allocation3 + $0x90] sm:$0xf] %vm5593, %v5474
      %5631 = vst.msk [vmem:[#allocation3 + $0x94] sm:$0xf] %vm5593, %v5476
      %5632 = vst.msk [vmem:[#allocation3 + $0x98] sm:$0xf] %vm5593, %v5478
      %5633 = vst.msk [vmem:[#allocation3 + $0x9c] sm:$0xf] %vm5593, %v5480
      %5634 = vst.msk [vmem:[#allocation3 + $0xa0] sm:$0xf] %vm5593, %v5482
      %5635 = vst.msk [vmem:[#allocation3 + $0xa4] sm:$0xf] %vm5593, %v5484
      %5636 = vst.msk [vmem:[#allocation3 + $0xa8] sm:$0xf] %vm5593, %v5486
      %5637 = vst.msk [vmem:[#allocation3 + $0xac] sm:$0xf] %vm5593, %v5488
      %5638 = vst.msk [vmem:[#allocation3 + $0xb0] sm:$0xf] %vm5593, %v5490
      %5639 = vst.msk [vmem:[#allocation3 + $0xb4] sm:$0xf] %vm5593, %v5492
      %5640 = vst.msk [vmem:[#allocation3 + $0xb8] sm:$0xf] %vm5593, %v5494
      %5641 = vst.msk [vmem:[#allocation3 + $0xbc] sm:$0xf] %vm5593, %v5496
      %5642 = vst.msk [vmem:[#allocation3 + $0xc0] sm:$0xf] %vm5593, %v5498
      %5643 = vst.msk [vmem:[#allocation3 + $0xc4] sm:$0xf] %vm5593, %v5500
      %5644 = vst.msk [vmem:[#allocation3 + $0xc8] sm:$0xf] %vm5593, %v5502
      %5645 = vst.msk [vmem:[#allocation3 + $0xcc] sm:$0xf] %vm5593, %v5504
      %5646 = vst.msk [vmem:[#allocation3 + $0xd0] sm:$0xf] %vm5593, %v5506
      %5647 = vst.msk [vmem:[#allocation3 + $0xd4] sm:$0xf] %vm5593, %v5508
      %5648 = vst.msk [vmem:[#allocation3 + $0xd8] sm:$0xf] %vm5593, %v5510
      %5649 = vst.msk [vmem:[#allocation3 + $0xdc] sm:$0xf] %vm5593, %v5512
      %5650 = vst.msk [vmem:[#allocation3 + $0xe0] sm:$0xf] %vm5593, %v5514
      %5651 = vst.msk [vmem:[#allocation3 + $0xe4] sm:$0xf] %vm5593, %v5516
      %5652 = vst.msk [vmem:[#allocation3 + $0xe8] sm:$0xf] %vm5593, %v5518
      %5653 = vst.msk [vmem:[#allocation3 + $0xec] sm:$0xf] %vm5593, %v5520
      %5654 = vst.msk [vmem:[#allocation3 + $0xf0] sm:$0xf] %vm5593, %v5522
      %5655 = vst.msk [vmem:[#allocation3 + $0xf4] sm:$0xf] %vm5593, %v5524
      %5656 = vst.msk [vmem:[#allocation3 + $0xf8] sm:$0xf] %vm5593, %v5526
      %5657 = vst.msk [vmem:[#allocation3 + $0xfc] sm:$0xf] %vm5593, %v5528
      %v5658 = vld [vmem:[%s5272] sm:$0xf]
      %v5659 = vld [vmem:[%s5272 + $0x4] sm:$0xf]
      %v5660 = vld [vmem:[%s5272 + $0x8] sm:$0x1]
      %v5661 = vld [vmem:[%s5272 + $0xc] sm:$0xf]
      %v5662 = vld [vmem:[%s5272 + $0x10] sm:$0xf]
      %v5663 = vld [vmem:[%s5272 + $0x14] sm:$0x1]
      %v5664 = vld [vmem:[%s5272 + $0x18] sm:$0xf]
      %v5665 = vld [vmem:[%s5272 + $0x1c] sm:$0xf]
      %v5666 = vld [vmem:[%s5272 + $0x20] sm:$0x1]
      %v5667 = vld [vmem:[%s5272 + $0x24] sm:$0xf]
      %v5668 = vld [vmem:[%s5272 + $0x28] sm:$0xf]
      %v5669 = vld [vmem:[%s5272 + $0x2c] sm:$0x1]
      %v5670 = vld [vmem:[%s5272 + $0x30] sm:$0xf]
      %v5671 = vld [vmem:[%s5272 + $0x34] sm:$0xf]
      %v5672 = vld [vmem:[%s5272 + $0x38] sm:$0x1]
      %v5673 = vld [vmem:[%s5272 + $0x3c] sm:$0xf]
      %v5674 = vld [vmem:[%s5272 + $0x40] sm:$0xf]
      %v5675 = vld [vmem:[%s5272 + $0x44] sm:$0x1]
      %v5676 = vld [vmem:[%s5272 + $0x48] sm:$0xf]
      %v5677 = vld [vmem:[%s5272 + $0x4c] sm:$0xf]
      %v5678 = vld [vmem:[%s5272 + $0x50] sm:$0x1]
      %v5679 = vld [vmem:[%s5272 + $0x54] sm:$0xf]
      %v5680 = vld [vmem:[%s5272 + $0x58] sm:$0xf]
      %v5681 = vld [vmem:[%s5272 + $0x5c] sm:$0x1]
      %v5682 = vld [vmem:[%s5272 + $0x60] sm:$0xf]
      %v5683 = vld [vmem:[%s5272 + $0x64] sm:$0xf]
      %v5684 = vld [vmem:[%s5272 + $0x68] sm:$0x1]
      %v5685 = vld [vmem:[%s5272 + $0x6c] sm:$0xf]
      %v5686 = vld [vmem:[%s5272 + $0x70] sm:$0xf]
      %v5687 = vld [vmem:[%s5272 + $0x74] sm:$0x1]
      %v5688 = vld [vmem:[%s5272 + $0x78] sm:$0xf]
      %v5689 = vld [vmem:[%s5272 + $0x7c] sm:$0xf]
      %v5690 = vld [vmem:[%s5272 + $0x80] sm:$0x1]
      %v5691 = vld [vmem:[%s5272 + $0x84] sm:$0xf]
      %v5692 = vld [vmem:[%s5272 + $0x88] sm:$0xf]
      %v5693 = vld [vmem:[%s5272 + $0x8c] sm:$0x1]
      %v5694 = vld [vmem:[%s5272 + $0x90] sm:$0xf]
      %v5695 = vld [vmem:[%s5272 + $0x94] sm:$0xf]
      %v5696 = vld [vmem:[%s5272 + $0x98] sm:$0x1]
      %v5697 = vld [vmem:[%s5272 + $0x9c] sm:$0xf]
      %v5698 = vld [vmem:[%s5272 + $0xa0] sm:$0xf]
      %v5699 = vld [vmem:[%s5272 + $0xa4] sm:$0x1]
      %v5700 = vld [vmem:[%s5272 + $0xa8] sm:$0xf]
      %v5701 = vld [vmem:[%s5272 + $0xac] sm:$0xf]
      %v5702 = vld [vmem:[%s5272 + $0xb0] sm:$0x1]
      %v5703 = vld [vmem:[%s5272 + $0xb4] sm:$0xf]
      %v5704 = vld [vmem:[%s5272 + $0xb8] sm:$0xf]
      %v5705 = vld [vmem:[%s5272 + $0xbc] sm:$0x1]
      %v5706 = vld [vmem:[%s5272 + $0xd8] sm:$0xf]
      %v5707 = vld [vmem:[%s5272 + $0xdc] sm:$0xf]
      %v5708 = vld [vmem:[%s5272 + $0xe0] sm:$0x1]
      %v5709 = vld [vmem:[%s5272 + $0xe4] sm:$0xf]
      %v5710 = vld [vmem:[%s5272 + $0xe8] sm:$0xf]
      %v5711 = vld [vmem:[%s5272 + $0xec] sm:$0x1]
      %v5712 = vld [vmem:[%s5272 + $0xf0] sm:$0xf]
      %v5713 = vld [vmem:[%s5272 + $0xf4] sm:$0xf]
      %v5714 = vld [vmem:[%s5272 + $0xf8] sm:$0x1]
      %v5715 = vld [vmem:[%s5272 + $0xfc] sm:$0xf]
      %v5716 = vld [vmem:[%s5272 + $0x100] sm:$0xf]
      %v5717 = vld [vmem:[%s5272 + $0x104] sm:$0x1]
      %v5718 = vld [vmem:[%s5272 + $0x108] sm:$0xf]
      %v5719 = vld [vmem:[%s5272 + $0x10c] sm:$0xf]
      %v5720 = vld [vmem:[%s5272 + $0x110] sm:$0x1]
      %v5721 = vld [vmem:[%s5272 + $0x114] sm:$0xf]
      %v5722 = vld [vmem:[%s5272 + $0x118] sm:$0xf]
      %v5723 = vld [vmem:[%s5272 + $0x11c] sm:$0x1]
      %v5724 = vld [vmem:[%s5272 + $0x120] sm:$0xf]
      %v5725 = vld [vmem:[%s5272 + $0x124] sm:$0xf]
      %v5726 = vld [vmem:[%s5272 + $0x128] sm:$0x1]
      %v5727 = vld [vmem:[%s5272 + $0x12c] sm:$0xf]
      %v5728 = vld [vmem:[%s5272 + $0x130] sm:$0xf]
      %v5729 = vld [vmem:[%s5272 + $0x134] sm:$0x1]
      %v5730 = vld [vmem:[%s5272 + $0x138] sm:$0xf]
      %v5731 = vld [vmem:[%s5272 + $0x13c] sm:$0xf]
      %v5732 = vld [vmem:[%s5272 + $0x140] sm:$0x1]
      %v5733 = vld [vmem:[%s5272 + $0x144] sm:$0xf]
      %v5734 = vld [vmem:[%s5272 + $0x148] sm:$0xf]
      %v5735 = vld [vmem:[%s5272 + $0x14c] sm:$0x1]
      %v5736 = vld [vmem:[%s5272 + $0x150] sm:$0xf]
      %v5737 = vld [vmem:[%s5272 + $0x154] sm:$0xf]
      %v5738 = vld [vmem:[%s5272 + $0x158] sm:$0x1]
      %v5739 = vld [vmem:[%s5272 + $0x15c] sm:$0xf]
      %v5740 = vld [vmem:[%s5272 + $0x160] sm:$0xf]
      %v5741 = vld [vmem:[%s5272 + $0x164] sm:$0x1]
      %v5742 = vld [vmem:[%s5272 + $0x168] sm:$0xf]
      %v5743 = vld [vmem:[%s5272 + $0x16c] sm:$0xf]
      %v5744 = vld [vmem:[%s5272 + $0x170] sm:$0x1]
      %v5745 = vld [vmem:[%s5272 + $0x174] sm:$0xf]
      %v5746 = vld [vmem:[%s5272 + $0x178] sm:$0xf]
      %v5747 = vld [vmem:[%s5272 + $0x17c] sm:$0x1]
      %v5748 = vld [vmem:[%s5272 + $0x180] sm:$0xf]
      %v5749 = vld [vmem:[%s5272 + $0x184] sm:$0xf]
      %v5750 = vld [vmem:[%s5272 + $0x188] sm:$0x1]
      %v5751 = vld [vmem:[%s5272 + $0x18c] sm:$0xf]
      %v5752 = vld [vmem:[%s5272 + $0x190] sm:$0xf]
      %v5753 = vld [vmem:[%s5272 + $0x194] sm:$0x1]
      %v5755 = vshrl.u32 %v5658, 16
      %v5757 = vrot.slane %v5755, 4
      %v5758 = vshll.u32 %v5658, 16
      %v5760 = vrot.slane %v5758, 5
      %v5761 = vor.u32 %v5757, %v5760
      %v5762 = vrot.slane %v5761, 4
      %v5764 = vshll.u32 %v5659, 16
      %v5766 = vrot.slane %v5764, 5
      %v5767 = vsel %vm1391, %v5762, %v5766
      %v5768 = vshrl.u32 %v5659, 16
      %v5770 = vrot.slane %v5768, 4
      %v5771 = vor.u32 %v5770, %v5766
      %v5772 = vrot.slane %v5771, 4
      %v5774 = vshll.u32 %v5660, 16
      %v5776 = vrot.slane %v5774, 5
      %v5777 = vsel %vm1391, %v5772, %v5776
      %v5779 = vshrl.u32 %v5661, 16
      %v5781 = vrot.slane %v5779, 4
      %v5782 = vshll.u32 %v5661, 16
      %v5784 = vrot.slane %v5782, 5
      %v5785 = vor.u32 %v5781, %v5784
      %v5786 = vrot.slane %v5785, 4
      %v5788 = vshll.u32 %v5662, 16
      %v5790 = vrot.slane %v5788, 5
      %v5791 = vsel %vm1391, %v5786, %v5790
      %v5792 = vshrl.u32 %v5662, 16
      %v5794 = vrot.slane %v5792, 4
      %v5795 = vor.u32 %v5794, %v5790
      %v5796 = vrot.slane %v5795, 4
      %v5798 = vshll.u32 %v5663, 16
      %v5800 = vrot.slane %v5798, 5
      %v5801 = vsel %vm1391, %v5796, %v5800
      %v5803 = vshrl.u32 %v5664, 16
      %v5805 = vrot.slane %v5803, 4
      %v5806 = vshll.u32 %v5664, 16
      %v5808 = vrot.slane %v5806, 5
      %v5809 = vor.u32 %v5805, %v5808
      %v5810 = vrot.slane %v5809, 4
      %v5812 = vshll.u32 %v5665, 16
      %v5814 = vrot.slane %v5812, 5
      %v5815 = vsel %vm1391, %v5810, %v5814
      %v5816 = vshrl.u32 %v5665, 16
      %v5818 = vrot.slane %v5816, 4
      %v5819 = vor.u32 %v5818, %v5814
      %v5820 = vrot.slane %v5819, 4
      %v5822 = vshll.u32 %v5666, 16
      %v5824 = vrot.slane %v5822, 5
      %v5825 = vsel %vm1391, %v5820, %v5824
      %v5827 = vshrl.u32 %v5667, 16
      %v5829 = vrot.slane %v5827, 4
      %v5830 = vshll.u32 %v5667, 16
      %v5832 = vrot.slane %v5830, 5
      %v5833 = vor.u32 %v5829, %v5832
      %v5834 = vrot.slane %v5833, 4
      %v5836 = vshll.u32 %v5668, 16
      %v5838 = vrot.slane %v5836, 5
      %v5839 = vsel %vm1391, %v5834, %v5838
      %v5840 = vshrl.u32 %v5668, 16
      %v5842 = vrot.slane %v5840, 4
      %v5843 = vor.u32 %v5842, %v5838
      %v5844 = vrot.slane %v5843, 4
      %v5846 = vshll.u32 %v5669, 16
      %v5848 = vrot.slane %v5846, 5
      %v5849 = vsel %vm1391, %v5844, %v5848
      %v5851 = vshrl.u32 %v5670, 16
      %v5853 = vrot.slane %v5851, 4
      %v5854 = vshll.u32 %v5670, 16
      %v5856 = vrot.slane %v5854, 5
      %v5857 = vor.u32 %v5853, %v5856
      %v5858 = vrot.slane %v5857, 4
      %v5860 = vshll.u32 %v5671, 16
      %v5862 = vrot.slane %v5860, 5
      %v5863 = vsel %vm1391, %v5858, %v5862
      %v5864 = vshrl.u32 %v5671, 16
      %v5866 = vrot.slane %v5864, 4
      %v5867 = vor.u32 %v5866, %v5862
      %v5868 = vrot.slane %v5867, 4
      %v5870 = vshll.u32 %v5672, 16
      %v5872 = vrot.slane %v5870, 5
      %v5873 = vsel %vm1391, %v5868, %v5872
      %v5875 = vshrl.u32 %v5673, 16
      %v5877 = vrot.slane %v5875, 4
      %v5878 = vshll.u32 %v5673, 16
      %v5880 = vrot.slane %v5878, 5
      %v5881 = vor.u32 %v5877, %v5880
      %v5882 = vrot.slane %v5881, 4
      %v5884 = vshll.u32 %v5674, 16
      %v5886 = vrot.slane %v5884, 5
      %v5887 = vsel %vm1391, %v5882, %v5886
      %v5888 = vshrl.u32 %v5674, 16
      %v5890 = vrot.slane %v5888, 4
      %v5891 = vor.u32 %v5890, %v5886
      %v5892 = vrot.slane %v5891, 4
      %v5894 = vshll.u32 %v5675, 16
      %v5896 = vrot.slane %v5894, 5
      %v5897 = vsel %vm1391, %v5892, %v5896
      %v5899 = vshrl.u32 %v5676, 16
      %v5901 = vrot.slane %v5899, 4
      %v5902 = vshll.u32 %v5676, 16
      %v5904 = vrot.slane %v5902, 5
      %v5905 = vor.u32 %v5901, %v5904
      %v5906 = vrot.slane %v5905, 4
      %v5908 = vshll.u32 %v5677, 16
      %v5910 = vrot.slane %v5908, 5
      %v5911 = vsel %vm1391, %v5906, %v5910
      %v5912 = vshrl.u32 %v5677, 16
      %v5914 = vrot.slane %v5912, 4
      %v5915 = vor.u32 %v5914, %v5910
      %v5916 = vrot.slane %v5915, 4
      %v5918 = vshll.u32 %v5678, 16
      %v5920 = vrot.slane %v5918, 5
      %v5921 = vsel %vm1391, %v5916, %v5920
      %v5923 = vshrl.u32 %v5679, 16
      %v5925 = vrot.slane %v5923, 4
      %v5926 = vshll.u32 %v5679, 16
      %v5928 = vrot.slane %v5926, 5
      %v5929 = vor.u32 %v5925, %v5928
      %v5930 = vrot.slane %v5929, 4
      %v5932 = vshll.u32 %v5680, 16
      %v5934 = vrot.slane %v5932, 5
      %v5935 = vsel %vm1391, %v5930, %v5934
      %v5936 = vshrl.u32 %v5680, 16
      %v5938 = vrot.slane %v5936, 4
      %v5939 = vor.u32 %v5938, %v5934
      %v5940 = vrot.slane %v5939, 4
      %v5942 = vshll.u32 %v5681, 16
      %v5944 = vrot.slane %v5942, 5
      %v5945 = vsel %vm1391, %v5940, %v5944
      %v5947 = vshrl.u32 %v5682, 16
      %v5949 = vrot.slane %v5947, 4
      %v5950 = vshll.u32 %v5682, 16
      %v5952 = vrot.slane %v5950, 5
      %v5953 = vor.u32 %v5949, %v5952
      %v5954 = vrot.slane %v5953, 4
      %v5956 = vshll.u32 %v5683, 16
      %v5958 = vrot.slane %v5956, 5
      %v5959 = vsel %vm1391, %v5954, %v5958
      %v5960 = vshrl.u32 %v5683, 16
      %v5962 = vrot.slane %v5960, 4
      %v5963 = vor.u32 %v5962, %v5958
      %v5964 = vrot.slane %v5963, 4
      %v5966 = vshll.u32 %v5684, 16
      %v5968 = vrot.slane %v5966, 5
      %v5969 = vsel %vm1391, %v5964, %v5968
      %v5971 = vshrl.u32 %v5685, 16
      %v5973 = vrot.slane %v5971, 4
      %v5974 = vshll.u32 %v5685, 16
      %v5976 = vrot.slane %v5974, 5
      %v5977 = vor.u32 %v5973, %v5976
      %v5978 = vrot.slane %v5977, 4
      %v5980 = vshll.u32 %v5686, 16
      %v5982 = vrot.slane %v5980, 5
      %v5983 = vsel %vm1391, %v5978, %v5982
      %v5984 = vshrl.u32 %v5686, 16
      %v5986 = vrot.slane %v5984, 4
      %v5987 = vor.u32 %v5986, %v5982
      %v5988 = vrot.slane %v5987, 4
      %v5990 = vshll.u32 %v5687, 16
      %v5992 = vrot.slane %v5990, 5
      %v5993 = vsel %vm1391, %v5988, %v5992
      %v5995 = vshrl.u32 %v5688, 16
      %v5997 = vrot.slane %v5995, 4
      %v5998 = vshll.u32 %v5688, 16
      %v6000 = vrot.slane %v5998, 5
      %v6001 = vor.u32 %v5997, %v6000
      %v6002 = vrot.slane %v6001, 4
      %v6004 = vshll.u32 %v5689, 16
      %v6006 = vrot.slane %v6004, 5
      %v6007 = vsel %vm1391, %v6002, %v6006
      %v6008 = vshrl.u32 %v5689, 16
      %v6010 = vrot.slane %v6008, 4
      %v6011 = vor.u32 %v6010, %v6006
      %v6012 = vrot.slane %v6011, 4
      %v6014 = vshll.u32 %v5690, 16
      %v6016 = vrot.slane %v6014, 5
      %v6017 = vsel %vm1391, %v6012, %v6016
      %v6019 = vshrl.u32 %v5691, 16
      %v6021 = vrot.slane %v6019, 4
      %v6022 = vshll.u32 %v5691, 16
      %v6024 = vrot.slane %v6022, 5
      %v6025 = vor.u32 %v6021, %v6024
      %v6026 = vrot.slane %v6025, 4
      %v6028 = vshll.u32 %v5692, 16
      %v6030 = vrot.slane %v6028, 5
      %v6031 = vsel %vm1391, %v6026, %v6030
      %v6032 = vshrl.u32 %v5692, 16
      %v6034 = vrot.slane %v6032, 4
      %v6035 = vor.u32 %v6034, %v6030
      %v6036 = vrot.slane %v6035, 4
      %v6038 = vshll.u32 %v5693, 16
      %v6040 = vrot.slane %v6038, 5
      %v6041 = vsel %vm1391, %v6036, %v6040
      %v6043 = vshrl.u32 %v5694, 16
      %v6045 = vrot.slane %v6043, 4
      %v6046 = vshll.u32 %v5694, 16
      %v6048 = vrot.slane %v6046, 5
      %v6049 = vor.u32 %v6045, %v6048
      %v6050 = vrot.slane %v6049, 4
      %v6052 = vshll.u32 %v5695, 16
      %v6054 = vrot.slane %v6052, 5
      %v6055 = vsel %vm1391, %v6050, %v6054
      %v6056 = vshrl.u32 %v5695, 16
      %v6058 = vrot.slane %v6056, 4
      %v6059 = vor.u32 %v6058, %v6054
      %v6060 = vrot.slane %v6059, 4
      %v6062 = vshll.u32 %v5696, 16
      %v6064 = vrot.slane %v6062, 5
      %v6065 = vsel %vm1391, %v6060, %v6064
      %v6067 = vshrl.u32 %v5697, 16
      %v6069 = vrot.slane %v6067, 4
      %v6070 = vshll.u32 %v5697, 16
      %v6072 = vrot.slane %v6070, 5
      %v6073 = vor.u32 %v6069, %v6072
      %v6074 = vrot.slane %v6073, 4
      %v6076 = vshll.u32 %v5698, 16
      %v6078 = vrot.slane %v6076, 5
      %v6079 = vsel %vm1391, %v6074, %v6078
      %v6080 = vshrl.u32 %v5698, 16
      %v6082 = vrot.slane %v6080, 4
      %v6083 = vor.u32 %v6082, %v6078
      %v6084 = vrot.slane %v6083, 4
      %v6086 = vshll.u32 %v5699, 16
      %v6088 = vrot.slane %v6086, 5
      %v6089 = vsel %vm1391, %v6084, %v6088
      %v6091 = vshrl.u32 %v5700, 16
      %v6093 = vrot.slane %v6091, 4
      %v6094 = vshll.u32 %v5700, 16
      %v6096 = vrot.slane %v6094, 5
      %v6097 = vor.u32 %v6093, %v6096
      %v6098 = vrot.slane %v6097, 4
      %v6100 = vshll.u32 %v5701, 16
      %v6102 = vrot.slane %v6100, 5
      %v6103 = vsel %vm1391, %v6098, %v6102
      %v6104 = vshrl.u32 %v5701, 16
      %v6106 = vrot.slane %v6104, 4
      %v6107 = vor.u32 %v6106, %v6102
      %v6108 = vrot.slane %v6107, 4
      %v6110 = vshll.u32 %v5702, 16
      %v6112 = vrot.slane %v6110, 5
      %v6113 = vsel %vm1391, %v6108, %v6112
      %v6115 = vshrl.u32 %v5703, 16
      %v6117 = vrot.slane %v6115, 4
      %v6118 = vshll.u32 %v5703, 16
      %v6120 = vrot.slane %v6118, 5
      %v6121 = vor.u32 %v6117, %v6120
      %v6122 = vrot.slane %v6121, 4
      %v6124 = vshll.u32 %v5704, 16
      %v6126 = vrot.slane %v6124, 5
      %v6127 = vsel %vm1391, %v6122, %v6126
      %v6128 = vshrl.u32 %v5704, 16
      %v6130 = vrot.slane %v6128, 4
      %v6131 = vor.u32 %v6130, %v6126
      %v6132 = vrot.slane %v6131, 4
      %v6134 = vshll.u32 %v5705, 16
      %v6136 = vrot.slane %v6134, 5
      %v6137 = vsel %vm1391, %v6132, %v6136
      %v6139 = vshrl.u32 %v5706, 16
      %v6141 = vrot.slane %v6139, 4
      %v6142 = vshll.u32 %v5706, 16
      %v6144 = vrot.slane %v6142, 5
      %v6145 = vor.u32 %v6141, %v6144
      %v6146 = vrot.slane %v6145, 4
      %v6148 = vshll.u32 %v5707, 16
      %v6150 = vrot.slane %v6148, 5
      %v6151 = vsel %vm1391, %v6146, %v6150
      %v6152 = vshrl.u32 %v5707, 16
      %v6154 = vrot.slane %v6152, 4
      %v6155 = vor.u32 %v6154, %v6150
      %v6156 = vrot.slane %v6155, 4
      %v6158 = vshll.u32 %v5708, 16
      %v6160 = vrot.slane %v6158, 5
      %v6161 = vsel %vm1391, %v6156, %v6160
      %v6163 = vshrl.u32 %v5709, 16
      %v6165 = vrot.slane %v6163, 4
      %v6166 = vshll.u32 %v5709, 16
      %v6168 = vrot.slane %v6166, 5
      %v6169 = vor.u32 %v6165, %v6168
      %v6170 = vrot.slane %v6169, 4
      %v6172 = vshll.u32 %v5710, 16
      %v6174 = vrot.slane %v6172, 5
      %v6175 = vsel %vm1391, %v6170, %v6174
      %v6176 = vshrl.u32 %v5710, 16
      %v6178 = vrot.slane %v6176, 4
      %v6179 = vor.u32 %v6178, %v6174
      %v6180 = vrot.slane %v6179, 4
      %v6182 = vshll.u32 %v5711, 16
      %v6184 = vrot.slane %v6182, 5
      %v6185 = vsel %vm1391, %v6180, %v6184
      %v6187 = vshrl.u32 %v5712, 16
      %v6189 = vrot.slane %v6187, 4
      %v6190 = vshll.u32 %v5712, 16
      %v6192 = vrot.slane %v6190, 5
      %v6193 = vor.u32 %v6189, %v6192
      %v6194 = vrot.slane %v6193, 4
      %v6196 = vshll.u32 %v5713, 16
      %v6198 = vrot.slane %v6196, 5
      %v6199 = vsel %vm1391, %v6194, %v6198
      %v6200 = vshrl.u32 %v5713, 16
      %v6202 = vrot.slane %v6200, 4
      %v6203 = vor.u32 %v6202, %v6198
      %v6204 = vrot.slane %v6203, 4
      %v6206 = vshll.u32 %v5714, 16
      %v6208 = vrot.slane %v6206, 5
      %v6209 = vsel %vm1391, %v6204, %v6208
      %v6211 = vshrl.u32 %v5715, 16
      %v6213 = vrot.slane %v6211, 4
      %v6214 = vshll.u32 %v5715, 16
      %v6216 = vrot.slane %v6214, 5
      %v6217 = vor.u32 %v6213, %v6216
      %v6218 = vrot.slane %v6217, 4
      %v6220 = vshll.u32 %v5716, 16
      %v6222 = vrot.slane %v6220, 5
      %v6223 = vsel %vm1391, %v6218, %v6222
      %v6224 = vshrl.u32 %v5716, 16
      %v6226 = vrot.slane %v6224, 4
      %v6227 = vor.u32 %v6226, %v6222
      %v6228 = vrot.slane %v6227, 4
      %v6230 = vshll.u32 %v5717, 16
      %v6232 = vrot.slane %v6230, 5
      %v6233 = vsel %vm1391, %v6228, %v6232
      %v6235 = vshrl.u32 %v5718, 16
      %v6237 = vrot.slane %v6235, 4
      %v6238 = vshll.u32 %v5718, 16
      %v6240 = vrot.slane %v6238, 5
      %v6241 = vor.u32 %v6237, %v6240
      %v6242 = vrot.slane %v6241, 4
      %v6244 = vshll.u32 %v5719, 16
      %v6246 = vrot.slane %v6244, 5
      %v6247 = vsel %vm1391, %v6242, %v6246
      %v6248 = vshrl.u32 %v5719, 16
      %v6250 = vrot.slane %v6248, 4
      %v6251 = vor.u32 %v6250, %v6246
      %v6252 = vrot.slane %v6251, 4
      %v6254 = vshll.u32 %v5720, 16
      %v6256 = vrot.slane %v6254, 5
      %v6257 = vsel %vm1391, %v6252, %v6256
      %v6259 = vshrl.u32 %v5721, 16
      %v6261 = vrot.slane %v6259, 4
      %v6262 = vshll.u32 %v5721, 16
      %v6264 = vrot.slane %v6262, 5
      %v6265 = vor.u32 %v6261, %v6264
      %v6266 = vrot.slane %v6265, 4
      %v6268 = vshll.u32 %v5722, 16
      %v6270 = vrot.slane %v6268, 5
      %v6271 = vsel %vm1391, %v6266, %v6270
      %v6272 = vshrl.u32 %v5722, 16
      %v6274 = vrot.slane %v6272, 4
      %v6275 = vor.u32 %v6274, %v6270
      %v6276 = vrot.slane %v6275, 4
      %v6278 = vshll.u32 %v5723, 16
      %v6280 = vrot.slane %v6278, 5
      %v6281 = vsel %vm1391, %v6276, %v6280
      %v6283 = vshrl.u32 %v5724, 16
      %v6285 = vrot.slane %v6283, 4
      %v6286 = vshll.u32 %v5724, 16
      %v6288 = vrot.slane %v6286, 5
      %v6289 = vor.u32 %v6285, %v6288
      %v6290 = vrot.slane %v6289, 4
      %v6292 = vshll.u32 %v5725, 16
      %v6294 = vrot.slane %v6292, 5
      %v6295 = vsel %vm1391, %v6290, %v6294
      %v6296 = vshrl.u32 %v5725, 16
      %v6298 = vrot.slane %v6296, 4
      %v6299 = vor.u32 %v6298, %v6294
      %v6300 = vrot.slane %v6299, 4
      %v6302 = vshll.u32 %v5726, 16
      %v6304 = vrot.slane %v6302, 5
      %v6305 = vsel %vm1391, %v6300, %v6304
      %v6307 = vshrl.u32 %v5727, 16
      %v6309 = vrot.slane %v6307, 4
      %v6310 = vshll.u32 %v5727, 16
      %v6312 = vrot.slane %v6310, 5
      %v6313 = vor.u32 %v6309, %v6312
      %v6314 = vrot.slane %v6313, 4
      %v6316 = vshll.u32 %v5728, 16
      %v6318 = vrot.slane %v6316, 5
      %v6319 = vsel %vm1391, %v6314, %v6318
      %v6320 = vshrl.u32 %v5728, 16
      %v6322 = vrot.slane %v6320, 4
      %v6323 = vor.u32 %v6322, %v6318
      %v6324 = vrot.slane %v6323, 4
      %v6326 = vshll.u32 %v5729, 16
      %v6328 = vrot.slane %v6326, 5
      %v6329 = vsel %vm1391, %v6324, %v6328
      %v6331 = vshrl.u32 %v5730, 16
      %v6333 = vrot.slane %v6331, 4
      %v6334 = vshll.u32 %v5730, 16
      %v6336 = vrot.slane %v6334, 5
      %v6337 = vor.u32 %v6333, %v6336
      %v6338 = vrot.slane %v6337, 4
      %v6340 = vshll.u32 %v5731, 16
      %v6342 = vrot.slane %v6340, 5
      %v6343 = vsel %vm1391, %v6338, %v6342
      %v6344 = vshrl.u32 %v5731, 16
      %v6346 = vrot.slane %v6344, 4
      %v6347 = vor.u32 %v6346, %v6342
      %v6348 = vrot.slane %v6347, 4
      %v6350 = vshll.u32 %v5732, 16
      %v6352 = vrot.slane %v6350, 5
      %v6353 = vsel %vm1391, %v6348, %v6352
      %v6355 = vshrl.u32 %v5733, 16
      %v6357 = vrot.slane %v6355, 4
      %v6358 = vshll.u32 %v5733, 16
      %v6360 = vrot.slane %v6358, 5
      %v6361 = vor.u32 %v6357, %v6360
      %v6362 = vrot.slane %v6361, 4
      %v6364 = vshll.u32 %v5734, 16
      %v6366 = vrot.slane %v6364, 5
      %v6367 = vsel %vm1391, %v6362, %v6366
      %v6368 = vshrl.u32 %v5734, 16
      %v6370 = vrot.slane %v6368, 4
      %v6371 = vor.u32 %v6370, %v6366
      %v6372 = vrot.slane %v6371, 4
      %v6374 = vshll.u32 %v5735, 16
      %v6376 = vrot.slane %v6374, 5
      %v6377 = vsel %vm1391, %v6372, %v6376
      %v6379 = vshrl.u32 %v5736, 16
      %v6381 = vrot.slane %v6379, 4
      %v6382 = vshll.u32 %v5736, 16
      %v6384 = vrot.slane %v6382, 5
      %v6385 = vor.u32 %v6381, %v6384
      %v6386 = vrot.slane %v6385, 4
      %v6388 = vshll.u32 %v5737, 16
      %v6390 = vrot.slane %v6388, 5
      %v6391 = vsel %vm1391, %v6386, %v6390
      %v6392 = vshrl.u32 %v5737, 16
      %v6394 = vrot.slane %v6392, 4
      %v6395 = vor.u32 %v6394, %v6390
      %v6396 = vrot.slane %v6395, 4
      %v6398 = vshll.u32 %v5738, 16
      %v6400 = vrot.slane %v6398, 5
      %v6401 = vsel %vm1391, %v6396, %v6400
      %v6403 = vshrl.u32 %v5739, 16
      %v6405 = vrot.slane %v6403, 4
      %v6406 = vshll.u32 %v5739, 16
      %v6408 = vrot.slane %v6406, 5
      %v6409 = vor.u32 %v6405, %v6408
      %v6410 = vrot.slane %v6409, 4
      %v6412 = vshll.u32 %v5740, 16
      %v6414 = vrot.slane %v6412, 5
      %v6415 = vsel %vm1391, %v6410, %v6414
      %v6416 = vshrl.u32 %v5740, 16
      %v6418 = vrot.slane %v6416, 4
      %v6419 = vor.u32 %v6418, %v6414
      %v6420 = vrot.slane %v6419, 4
      %v6422 = vshll.u32 %v5741, 16
      %v6424 = vrot.slane %v6422, 5
      %v6425 = vsel %vm1391, %v6420, %v6424
      %v6427 = vshrl.u32 %v5742, 16
      %v6429 = vrot.slane %v6427, 4
      %v6430 = vshll.u32 %v5742, 16
      %v6432 = vrot.slane %v6430, 5
      %v6433 = vor.u32 %v6429, %v6432
      %v6434 = vrot.slane %v6433, 4
      %v6436 = vshll.u32 %v5743, 16
      %v6438 = vrot.slane %v6436, 5
      %v6439 = vsel %vm1391, %v6434, %v6438
      %v6440 = vshrl.u32 %v5743, 16
      %v6442 = vrot.slane %v6440, 4
      %v6443 = vor.u32 %v6442, %v6438
      %v6444 = vrot.slane %v6443, 4
      %v6446 = vshll.u32 %v5744, 16
      %v6448 = vrot.slane %v6446, 5
      %v6449 = vsel %vm1391, %v6444, %v6448
      %v6451 = vshrl.u32 %v5745, 16
      %v6453 = vrot.slane %v6451, 4
      %v6454 = vshll.u32 %v5745, 16
      %v6456 = vrot.slane %v6454, 5
      %v6457 = vor.u32 %v6453, %v6456
      %v6458 = vrot.slane %v6457, 4
      %v6460 = vshll.u32 %v5746, 16
      %v6462 = vrot.slane %v6460, 5
      %v6463 = vsel %vm1391, %v6458, %v6462
      %v6464 = vshrl.u32 %v5746, 16
      %v6466 = vrot.slane %v6464, 4
      %v6467 = vor.u32 %v6466, %v6462
      %v6468 = vrot.slane %v6467, 4
      %v6470 = vshll.u32 %v5747, 16
      %v6472 = vrot.slane %v6470, 5
      %v6473 = vsel %vm1391, %v6468, %v6472
      %v6475 = vshrl.u32 %v5748, 16
      %v6477 = vrot.slane %v6475, 4
      %v6478 = vshll.u32 %v5748, 16
      %v6480 = vrot.slane %v6478, 5
      %v6481 = vor.u32 %v6477, %v6480
      %v6482 = vrot.slane %v6481, 4
      %v6484 = vshll.u32 %v5749, 16
      %v6486 = vrot.slane %v6484, 5
      %v6487 = vsel %vm1391, %v6482, %v6486
      %v6488 = vshrl.u32 %v5749, 16
      %v6490 = vrot.slane %v6488, 4
      %v6491 = vor.u32 %v6490, %v6486
      %v6492 = vrot.slane %v6491, 4
      %v6494 = vshll.u32 %v5750, 16
      %v6496 = vrot.slane %v6494, 5
      %v6497 = vsel %vm1391, %v6492, %v6496
      %v6499 = vshrl.u32 %v5751, 16
      %v6501 = vrot.slane %v6499, 4
      %v6502 = vshll.u32 %v5751, 16
      %v6504 = vrot.slane %v6502, 5
      %v6505 = vor.u32 %v6501, %v6504
      %v6506 = vrot.slane %v6505, 4
      %v6508 = vshll.u32 %v5752, 16
      %v6510 = vrot.slane %v6508, 5
      %v6511 = vsel %vm1391, %v6506, %v6510
      %v6512 = vshrl.u32 %v5752, 16
      %v6514 = vrot.slane %v6512, 4
      %v6515 = vor.u32 %v6514, %v6510
      %v6516 = vrot.slane %v6515, 4
      %v6518 = vshll.u32 %v5753, 16
      %v6520 = vrot.slane %v6518, 5
      %v6521 = vsel %vm1391, %v6516, %v6520
      %6522 = vrot.lane.b32.xlu0 %v5767, 28
      %v6523 = vpop.permute.xlu0 %6522
      %6524 = vrot.lane.b32.xlu0 %v5777, 28
      %v6525 = vpop.permute.xlu0 %6524
      %6526 = vrot.lane.b32.xlu0 %v5791, 28
      %v6527 = vpop.permute.xlu0 %6526
      %6528 = vrot.lane.b32.xlu0 %v5801, 28
      %v6529 = vpop.permute.xlu0 %6528
      %6530 = vrot.lane.b32.xlu0 %v5815, 28
      %v6531 = vpop.permute.xlu0 %6530
      %6532 = vrot.lane.b32.xlu0 %v5825, 28
      %v6533 = vpop.permute.xlu0 %6532
      %6534 = vrot.lane.b32.xlu0 %v5839, 28
      %v6535 = vpop.permute.xlu0 %6534
      %6536 = vrot.lane.b32.xlu0 %v5849, 28
      %v6537 = vpop.permute.xlu0 %6536
      %6538 = vrot.lane.b32.xlu0 %v5863, 28
      %v6539 = vpop.permute.xlu0 %6538
      %6540 = vrot.lane.b32.xlu0 %v5873, 28
      %v6541 = vpop.permute.xlu0 %6540
      %6542 = vrot.lane.b32.xlu0 %v5887, 28
      %v6543 = vpop.permute.xlu0 %6542
      %6544 = vrot.lane.b32.xlu0 %v5897, 28
      %v6545 = vpop.permute.xlu0 %6544
      %6546 = vrot.lane.b32.xlu0 %v5911, 28
      %v6547 = vpop.permute.xlu0 %6546
      %6548 = vrot.lane.b32.xlu0 %v5921, 28
      %v6549 = vpop.permute.xlu0 %6548
      %6550 = vrot.lane.b32.xlu0 %v5935, 28
      %v6551 = vpop.permute.xlu0 %6550
      %6552 = vrot.lane.b32.xlu0 %v5945, 28
      %v6553 = vpop.permute.xlu0 %6552
      %6554 = vrot.lane.b32.xlu0 %v5959, 28
      %v6555 = vpop.permute.xlu0 %6554
      %6556 = vrot.lane.b32.xlu0 %v5969, 28
      %v6557 = vpop.permute.xlu0 %6556
      %6558 = vrot.lane.b32.xlu0 %v5983, 28
      %v6559 = vpop.permute.xlu0 %6558
      %6560 = vrot.lane.b32.xlu0 %v5993, 28
      %v6561 = vpop.permute.xlu0 %6560
      %6562 = vrot.lane.b32.xlu0 %v6007, 28
      %v6563 = vpop.permute.xlu0 %6562
      %6564 = vrot.lane.b32.xlu0 %v6017, 28
      %v6565 = vpop.permute.xlu0 %6564
      %6566 = vrot.lane.b32.xlu0 %v6031, 28
      %v6567 = vpop.permute.xlu0 %6566
      %6568 = vrot.lane.b32.xlu0 %v6041, 28
      %v6569 = vpop.permute.xlu0 %6568
      %6570 = vrot.lane.b32.xlu0 %v6055, 28
      %v6571 = vpop.permute.xlu0 %6570
      %6572 = vrot.lane.b32.xlu0 %v6065, 28
      %v6573 = vpop.permute.xlu0 %6572
      %6574 = vrot.lane.b32.xlu0 %v6079, 28
      %v6575 = vpop.permute.xlu0 %6574
      %6576 = vrot.lane.b32.xlu0 %v6089, 28
      %v6577 = vpop.permute.xlu0 %6576
      %6578 = vrot.lane.b32.xlu0 %v6103, 28
      %v6579 = vpop.permute.xlu0 %6578
      %6580 = vrot.lane.b32.xlu0 %v6113, 28
      %v6581 = vpop.permute.xlu0 %6580
      %6582 = vrot.lane.b32.xlu0 %v6127, 28
      %v6583 = vpop.permute.xlu0 %6582
      %6584 = vrot.lane.b32.xlu0 %v6137, 28
      %v6585 = vpop.permute.xlu0 %6584
      %6586 = vrot.lane.b32.xlu0 %v6151, 28
      %v6587 = vpop.permute.xlu0 %6586
      %6588 = vrot.lane.b32.xlu0 %v6161, 28
      %v6589 = vpop.permute.xlu0 %6588
      %6590 = vrot.lane.b32.xlu0 %v6175, 28
      %v6591 = vpop.permute.xlu0 %6590
      %6592 = vrot.lane.b32.xlu0 %v6185, 28
      %v6593 = vpop.permute.xlu0 %6592
      %6594 = vrot.lane.b32.xlu0 %v6199, 28
      %v6595 = vpop.permute.xlu0 %6594
      %6596 = vrot.lane.b32.xlu0 %v6209, 28
      %v6597 = vpop.permute.xlu0 %6596
      %6598 = vrot.lane.b32.xlu0 %v6223, 28
      %v6599 = vpop.permute.xlu0 %6598
      %6600 = vrot.lane.b32.xlu0 %v6233, 28
      %v6601 = vpop.permute.xlu0 %6600
      %6602 = vrot.lane.b32.xlu0 %v6247, 28
      %v6603 = vpop.permute.xlu0 %6602
      %6604 = vrot.lane.b32.xlu0 %v6257, 28
      %v6605 = vpop.permute.xlu0 %6604
      %6606 = vrot.lane.b32.xlu0 %v6271, 28
      %v6607 = vpop.permute.xlu0 %6606
      %6608 = vrot.lane.b32.xlu0 %v6281, 28
      %v6609 = vpop.permute.xlu0 %6608
      %6610 = vrot.lane.b32.xlu0 %v6295, 28
      %v6611 = vpop.permute.xlu0 %6610
      %6612 = vrot.lane.b32.xlu0 %v6305, 28
      %v6613 = vpop.permute.xlu0 %6612
      %6614 = vrot.lane.b32.xlu0 %v6319, 28
      %v6615 = vpop.permute.xlu0 %6614
      %6616 = vrot.lane.b32.xlu0 %v6329, 28
      %v6617 = vpop.permute.xlu0 %6616
      %6618 = vrot.lane.b32.xlu0 %v6343, 28
      %v6619 = vpop.permute.xlu0 %6618
      %6620 = vrot.lane.b32.xlu0 %v6353, 28
      %v6621 = vpop.permute.xlu0 %6620
      %6622 = vrot.lane.b32.xlu0 %v6367, 28
      %v6623 = vpop.permute.xlu0 %6622
      %6624 = vrot.lane.b32.xlu0 %v6377, 28
      %v6625 = vpop.permute.xlu0 %6624
      %6626 = vrot.lane.b32.xlu0 %v6391, 28
      %v6627 = vpop.permute.xlu0 %6626
      %6628 = vrot.lane.b32.xlu0 %v6401, 28
      %v6629 = vpop.permute.xlu0 %6628
      %6630 = vrot.lane.b32.xlu0 %v6415, 28
      %v6631 = vpop.permute.xlu0 %6630
      %6632 = vrot.lane.b32.xlu0 %v6425, 28
      %v6633 = vpop.permute.xlu0 %6632
      %6634 = vrot.lane.b32.xlu0 %v6439, 28
      %v6635 = vpop.permute.xlu0 %6634
      %6636 = vrot.lane.b32.xlu0 %v6449, 28
      %v6637 = vpop.permute.xlu0 %6636
      %6638 = vrot.lane.b32.xlu0 %v6463, 28
      %v6639 = vpop.permute.xlu0 %6638
      %6640 = vrot.lane.b32.xlu0 %v6473, 28
      %v6641 = vpop.permute.xlu0 %6640
      %6642 = vrot.lane.b32.xlu0 %v6487, 28
      %v6643 = vpop.permute.xlu0 %6642
      %6644 = vrot.lane.b32.xlu0 %v6497, 28
      %v6645 = vpop.permute.xlu0 %6644
      %6646 = vrot.lane.b32.xlu0 %v6511, 28
      %v6647 = vpop.permute.xlu0 %6646
      %6648 = vrot.lane.b32.xlu0 %v6521, 28
      %v6649 = vpop.permute.xlu0 %6648
      %vm6714 = vcmask 257248
      %6715 = vst.msk [vmem:[#allocation3] sm:$0xf] %vm6714, %v6523
      %6716 = vst.msk [vmem:[#allocation3 + $0x4] sm:$0xf] %vm6714, %v6525
      %6717 = vst.msk [vmem:[#allocation3 + $0x8] sm:$0xf] %vm6714, %v6527
      %6718 = vst.msk [vmem:[#allocation3 + $0xc] sm:$0xf] %vm6714, %v6529
      %6719 = vst.msk [vmem:[#allocation3 + $0x10] sm:$0xf] %vm6714, %v6531
      %6720 = vst.msk [vmem:[#allocation3 + $0x14] sm:$0xf] %vm6714, %v6533
      %6721 = vst.msk [vmem:[#allocation3 + $0x18] sm:$0xf] %vm6714, %v6535
      %6722 = vst.msk [vmem:[#allocation3 + $0x1c] sm:$0xf] %vm6714, %v6537
      %6723 = vst.msk [vmem:[#allocation3 + $0x20] sm:$0xf] %vm6714, %v6539
      %6724 = vst.msk [vmem:[#allocation3 + $0x24] sm:$0xf] %vm6714, %v6541
      %6725 = vst.msk [vmem:[#allocation3 + $0x28] sm:$0xf] %vm6714, %v6543
      %6726 = vst.msk [vmem:[#allocation3 + $0x2c] sm:$0xf] %vm6714, %v6545
      %6727 = vst.msk [vmem:[#allocation3 + $0x30] sm:$0xf] %vm6714, %v6547
      %6728 = vst.msk [vmem:[#allocation3 + $0x34] sm:$0xf] %vm6714, %v6549
      %6729 = vst.msk [vmem:[#allocation3 + $0x38] sm:$0xf] %vm6714, %v6551
      %6730 = vst.msk [vmem:[#allocation3 + $0x3c] sm:$0xf] %vm6714, %v6553
      %6731 = vst.msk [vmem:[#allocation3 + $0x40] sm:$0xf] %vm6714, %v6555
      %6732 = vst.msk [vmem:[#allocation3 + $0x44] sm:$0xf] %vm6714, %v6557
      %6733 = vst.msk [vmem:[#allocation3 + $0x48] sm:$0xf] %vm6714, %v6559
      %6734 = vst.msk [vmem:[#allocation3 + $0x4c] sm:$0xf] %vm6714, %v6561
      %6735 = vst.msk [vmem:[#allocation3 + $0x50] sm:$0xf] %vm6714, %v6563
      %6736 = vst.msk [vmem:[#allocation3 + $0x54] sm:$0xf] %vm6714, %v6565
      %6737 = vst.msk [vmem:[#allocation3 + $0x58] sm:$0xf] %vm6714, %v6567
      %6738 = vst.msk [vmem:[#allocation3 + $0x5c] sm:$0xf] %vm6714, %v6569
      %6739 = vst.msk [vmem:[#allocation3 + $0x60] sm:$0xf] %vm6714, %v6571
      %6740 = vst.msk [vmem:[#allocation3 + $0x64] sm:$0xf] %vm6714, %v6573
      %6741 = vst.msk [vmem:[#allocation3 + $0x68] sm:$0xf] %vm6714, %v6575
      %6742 = vst.msk [vmem:[#allocation3 + $0x6c] sm:$0xf] %vm6714, %v6577
      %6743 = vst.msk [vmem:[#allocation3 + $0x70] sm:$0xf] %vm6714, %v6579
      %6744 = vst.msk [vmem:[#allocation3 + $0x74] sm:$0xf] %vm6714, %v6581
      %6745 = vst.msk [vmem:[#allocation3 + $0x78] sm:$0xf] %vm6714, %v6583
      %6746 = vst.msk [vmem:[#allocation3 + $0x7c] sm:$0xf] %vm6714, %v6585
      %6747 = vst.msk [vmem:[#allocation3 + $0x80] sm:$0xf] %vm6714, %v6587
      %6748 = vst.msk [vmem:[#allocation3 + $0x84] sm:$0xf] %vm6714, %v6589
      %6749 = vst.msk [vmem:[#allocation3 + $0x88] sm:$0xf] %vm6714, %v6591
      %6750 = vst.msk [vmem:[#allocation3 + $0x8c] sm:$0xf] %vm6714, %v6593
      %6751 = vst.msk [vmem:[#allocation3 + $0x90] sm:$0xf] %vm6714, %v6595
      %6752 = vst.msk [vmem:[#allocation3 + $0x94] sm:$0xf] %vm6714, %v6597
      %6753 = vst.msk [vmem:[#allocation3 + $0x98] sm:$0xf] %vm6714, %v6599
      %6754 = vst.msk [vmem:[#allocation3 + $0x9c] sm:$0xf] %vm6714, %v6601
      %6755 = vst.msk [vmem:[#allocation3 + $0xa0] sm:$0xf] %vm6714, %v6603
      %6756 = vst.msk [vmem:[#allocation3 + $0xa4] sm:$0xf] %vm6714, %v6605
      %6757 = vst.msk [vmem:[#allocation3 + $0xa8] sm:$0xf] %vm6714, %v6607
      %6758 = vst.msk [vmem:[#allocation3 + $0xac] sm:$0xf] %vm6714, %v6609
      %6759 = vst.msk [vmem:[#allocation3 + $0xb0] sm:$0xf] %vm6714, %v6611
      %6760 = vst.msk [vmem:[#allocation3 + $0xb4] sm:$0xf] %vm6714, %v6613
      %6761 = vst.msk [vmem:[#allocation3 + $0xb8] sm:$0xf] %vm6714, %v6615
      %6762 = vst.msk [vmem:[#allocation3 + $0xbc] sm:$0xf] %vm6714, %v6617
      %6763 = vst.msk [vmem:[#allocation3 + $0xc0] sm:$0xf] %vm6714, %v6619
      %6764 = vst.msk [vmem:[#allocation3 + $0xc4] sm:$0xf] %vm6714, %v6621
      %6765 = vst.msk [vmem:[#allocation3 + $0xc8] sm:$0xf] %vm6714, %v6623
      %6766 = vst.msk [vmem:[#allocation3 + $0xcc] sm:$0xf] %vm6714, %v6625
      %6767 = vst.msk [vmem:[#allocation3 + $0xd0] sm:$0xf] %vm6714, %v6627
      %6768 = vst.msk [vmem:[#allocation3 + $0xd4] sm:$0xf] %vm6714, %v6629
      %6769 = vst.msk [vmem:[#allocation3 + $0xd8] sm:$0xf] %vm6714, %v6631
      %6770 = vst.msk [vmem:[#allocation3 + $0xdc] sm:$0xf] %vm6714, %v6633
      %6771 = vst.msk [vmem:[#allocation3 + $0xe0] sm:$0xf] %vm6714, %v6635
      %6772 = vst.msk [vmem:[#allocation3 + $0xe4] sm:$0xf] %vm6714, %v6637
      %6773 = vst.msk [vmem:[#allocation3 + $0xe8] sm:$0xf] %vm6714, %v6639
      %6774 = vst.msk [vmem:[#allocation3 + $0xec] sm:$0xf] %vm6714, %v6641
      %6775 = vst.msk [vmem:[#allocation3 + $0xf0] sm:$0xf] %vm6714, %v6643
      %6776 = vst.msk [vmem:[#allocation3 + $0xf4] sm:$0xf] %vm6714, %v6645
      %6777 = vst.msk [vmem:[#allocation3 + $0xf8] sm:$0xf] %vm6714, %v6647
      %6778 = vst.msk [vmem:[#allocation3 + $0xfc] sm:$0xf] %vm6714, %v6649
      %v6779 = vld [vmem:[%s5272] sm:$0xe]
      %v6780 = vld [vmem:[%s5272 + $0x4] sm:$0xf]
      %v6781 = vld [vmem:[%s5272 + $0x8] sm:$0x1]
      %v6782 = vld [vmem:[%s5272 + $0xc] sm:$0xe]
      %v6783 = vld [vmem:[%s5272 + $0x10] sm:$0xf]
      %v6784 = vld [vmem:[%s5272 + $0x14] sm:$0x1]
      %v6785 = vld [vmem:[%s5272 + $0x18] sm:$0xe]
      %v6786 = vld [vmem:[%s5272 + $0x1c] sm:$0xf]
      %v6787 = vld [vmem:[%s5272 + $0x20] sm:$0x1]
      %v6788 = vld [vmem:[%s5272 + $0x24] sm:$0xe]
      %v6789 = vld [vmem:[%s5272 + $0x28] sm:$0xf]
      %v6790 = vld [vmem:[%s5272 + $0x2c] sm:$0x1]
      %v6791 = vld [vmem:[%s5272 + $0x30] sm:$0xe]
      %v6792 = vld [vmem:[%s5272 + $0x34] sm:$0xf]
      %v6793 = vld [vmem:[%s5272 + $0x38] sm:$0x1]
      %v6794 = vld [vmem:[%s5272 + $0x3c] sm:$0xe]
      %v6795 = vld [vmem:[%s5272 + $0x40] sm:$0xf]
      %v6796 = vld [vmem:[%s5272 + $0x44] sm:$0x1]
      %v6797 = vld [vmem:[%s5272 + $0x48] sm:$0xe]
      %v6798 = vld [vmem:[%s5272 + $0x4c] sm:$0xf]
      %v6799 = vld [vmem:[%s5272 + $0x50] sm:$0x1]
      %v6800 = vld [vmem:[%s5272 + $0x54] sm:$0xe]
      %v6801 = vld [vmem:[%s5272 + $0x58] sm:$0xf]
      %v6802 = vld [vmem:[%s5272 + $0x5c] sm:$0x1]
      %v6803 = vld [vmem:[%s5272 + $0x60] sm:$0xe]
      %v6804 = vld [vmem:[%s5272 + $0x64] sm:$0xf]
      %v6805 = vld [vmem:[%s5272 + $0x68] sm:$0x1]
      %v6806 = vld [vmem:[%s5272 + $0x6c] sm:$0xe]
      %v6807 = vld [vmem:[%s5272 + $0x70] sm:$0xf]
      %v6808 = vld [vmem:[%s5272 + $0x74] sm:$0x1]
      %v6809 = vld [vmem:[%s5272 + $0x78] sm:$0xe]
      %v6810 = vld [vmem:[%s5272 + $0x7c] sm:$0xf]
      %v6811 = vld [vmem:[%s5272 + $0x80] sm:$0x1]
      %v6812 = vld [vmem:[%s5272 + $0x84] sm:$0xe]
      %v6813 = vld [vmem:[%s5272 + $0x88] sm:$0xf]
      %v6814 = vld [vmem:[%s5272 + $0x8c] sm:$0x1]
      %v6815 = vld [vmem:[%s5272 + $0x90] sm:$0xe]
      %v6816 = vld [vmem:[%s5272 + $0x94] sm:$0xf]
      %v6817 = vld [vmem:[%s5272 + $0x98] sm:$0x1]
      %v6818 = vld [vmem:[%s5272 + $0x9c] sm:$0xe]
      %v6819 = vld [vmem:[%s5272 + $0xa0] sm:$0xf]
      %v6820 = vld [vmem:[%s5272 + $0xa4] sm:$0x1]
      %v6821 = vld [vmem:[%s5272 + $0xa8] sm:$0xe]
      %v6822 = vld [vmem:[%s5272 + $0xac] sm:$0xf]
      %v6823 = vld [vmem:[%s5272 + $0xb0] sm:$0x1]
      %v6824 = vld [vmem:[%s5272 + $0xb4] sm:$0xe]
      %v6825 = vld [vmem:[%s5272 + $0xb8] sm:$0xf]
      %v6826 = vld [vmem:[%s5272 + $0xbc] sm:$0x1]
      %v6827 = vld [vmem:[%s5272 + $0xd8] sm:$0xe]
      %v6828 = vld [vmem:[%s5272 + $0xdc] sm:$0xf]
      %v6829 = vld [vmem:[%s5272 + $0xe0] sm:$0x1]
      %v6830 = vld [vmem:[%s5272 + $0xe4] sm:$0xe]
      %v6831 = vld [vmem:[%s5272 + $0xe8] sm:$0xf]
      %v6832 = vld [vmem:[%s5272 + $0xec] sm:$0x1]
      %v6833 = vld [vmem:[%s5272 + $0xf0] sm:$0xe]
      %v6834 = vld [vmem:[%s5272 + $0xf4] sm:$0xf]
      %v6835 = vld [vmem:[%s5272 + $0xf8] sm:$0x1]
      %v6836 = vld [vmem:[%s5272 + $0xfc] sm:$0xe]
      %v6837 = vld [vmem:[%s5272 + $0x100] sm:$0xf]
      %v6838 = vld [vmem:[%s5272 + $0x104] sm:$0x1]
      %v6839 = vld [vmem:[%s5272 + $0x108] sm:$0xe]
      %v6840 = vld [vmem:[%s5272 + $0x10c] sm:$0xf]
      %v6841 = vld [vmem:[%s5272 + $0x110] sm:$0x1]
      %v6842 = vld [vmem:[%s5272 + $0x114] sm:$0xe]
      %v6843 = vld [vmem:[%s5272 + $0x118] sm:$0xf]
      %v6844 = vld [vmem:[%s5272 + $0x11c] sm:$0x1]
      %v6845 = vld [vmem:[%s5272 + $0x120] sm:$0xe]
      %v6846 = vld [vmem:[%s5272 + $0x124] sm:$0xf]
      %v6847 = vld [vmem:[%s5272 + $0x128] sm:$0x1]
      %v6848 = vld [vmem:[%s5272 + $0x12c] sm:$0xe]
      %v6849 = vld [vmem:[%s5272 + $0x130] sm:$0xf]
      %v6850 = vld [vmem:[%s5272 + $0x134] sm:$0x1]
      %v6851 = vld [vmem:[%s5272 + $0x138] sm:$0xe]
      %v6852 = vld [vmem:[%s5272 + $0x13c] sm:$0xf]
      %v6853 = vld [vmem:[%s5272 + $0x140] sm:$0x1]
      %v6854 = vld [vmem:[%s5272 + $0x144] sm:$0xe]
      %v6855 = vld [vmem:[%s5272 + $0x148] sm:$0xf]
      %v6856 = vld [vmem:[%s5272 + $0x14c] sm:$0x1]
      %v6857 = vld [vmem:[%s5272 + $0x150] sm:$0xe]
      %v6858 = vld [vmem:[%s5272 + $0x154] sm:$0xf]
      %v6859 = vld [vmem:[%s5272 + $0x158] sm:$0x1]
      %v6860 = vld [vmem:[%s5272 + $0x15c] sm:$0xe]
      %v6861 = vld [vmem:[%s5272 + $0x160] sm:$0xf]
      %v6862 = vld [vmem:[%s5272 + $0x164] sm:$0x1]
      %v6863 = vld [vmem:[%s5272 + $0x168] sm:$0xe]
      %v6864 = vld [vmem:[%s5272 + $0x16c] sm:$0xf]
      %v6865 = vld [vmem:[%s5272 + $0x170] sm:$0x1]
      %v6866 = vld [vmem:[%s5272 + $0x174] sm:$0xe]
      %v6867 = vld [vmem:[%s5272 + $0x178] sm:$0xf]
      %v6868 = vld [vmem:[%s5272 + $0x17c] sm:$0x1]
      %v6869 = vld [vmem:[%s5272 + $0x180] sm:$0xe]
      %v6870 = vld [vmem:[%s5272 + $0x184] sm:$0xf]
      %v6871 = vld [vmem:[%s5272 + $0x188] sm:$0x1]
      %v6872 = vld [vmem:[%s5272 + $0x18c] sm:$0xe]
      %v6873 = vld [vmem:[%s5272 + $0x190] sm:$0xf]
      %v6874 = vld [vmem:[%s5272 + $0x194] sm:$0x1]
      %v6971 = vrot.slane %v6779, 5
      %v6972 = vrot.slane %v6971, 4
      %v6973 = vrot.slane %v6780, 5
      %v6974 = vsel %vm2611, %v6972, %v6973
      %v6975 = vrot.slane %v6973, 4
      %v6976 = vrot.slane %v6781, 5
      %v6977 = vsel %vm2611, %v6975, %v6976
      %v6978 = vrot.slane %v6782, 5
      %v6979 = vrot.slane %v6978, 4
      %v6980 = vrot.slane %v6783, 5
      %v6981 = vsel %vm2611, %v6979, %v6980
      %v6982 = vrot.slane %v6980, 4
      %v6983 = vrot.slane %v6784, 5
      %v6984 = vsel %vm2611, %v6982, %v6983
      %v6985 = vrot.slane %v6785, 5
      %v6986 = vrot.slane %v6985, 4
      %v6987 = vrot.slane %v6786, 5
      %v6988 = vsel %vm2611, %v6986, %v6987
      %v6989 = vrot.slane %v6987, 4
      %v6990 = vrot.slane %v6787, 5
      %v6991 = vsel %vm2611, %v6989, %v6990
      %v6992 = vrot.slane %v6788, 5
      %v6993 = vrot.slane %v6992, 4
      %v6994 = vrot.slane %v6789, 5
      %v6995 = vsel %vm2611, %v6993, %v6994
      %v6996 = vrot.slane %v6994, 4
      %v6997 = vrot.slane %v6790, 5
      %v6998 = vsel %vm2611, %v6996, %v6997
      %v6999 = vrot.slane %v6791, 5
      %v7000 = vrot.slane %v6999, 4
      %v7001 = vrot.slane %v6792, 5
      %v7002 = vsel %vm2611, %v7000, %v7001
      %v7003 = vrot.slane %v7001, 4
      %v7004 = vrot.slane %v6793, 5
      %v7005 = vsel %vm2611, %v7003, %v7004
      %v7006 = vrot.slane %v6794, 5
      %v7007 = vrot.slane %v7006, 4
      %v7008 = vrot.slane %v6795, 5
      %v7009 = vsel %vm2611, %v7007, %v7008
      %v7010 = vrot.slane %v7008, 4
      %v7011 = vrot.slane %v6796, 5
      %v7012 = vsel %vm2611, %v7010, %v7011
      %v7013 = vrot.slane %v6797, 5
      %v7014 = vrot.slane %v7013, 4
      %v7015 = vrot.slane %v6798, 5
      %v7016 = vsel %vm2611, %v7014, %v7015
      %v7017 = vrot.slane %v7015, 4
      %v7018 = vrot.slane %v6799, 5
      %v7019 = vsel %vm2611, %v7017, %v7018
      %v7020 = vrot.slane %v6800, 5
      %v7021 = vrot.slane %v7020, 4
      %v7022 = vrot.slane %v6801, 5
      %v7023 = vsel %vm2611, %v7021, %v7022
      %v7024 = vrot.slane %v7022, 4
      %v7025 = vrot.slane %v6802, 5
      %v7026 = vsel %vm2611, %v7024, %v7025
      %v7027 = vrot.slane %v6803, 5
      %v7028 = vrot.slane %v7027, 4
      %v7029 = vrot.slane %v6804, 5
      %v7030 = vsel %vm2611, %v7028, %v7029
      %v7031 = vrot.slane %v7029, 4
      %v7032 = vrot.slane %v6805, 5
      %v7033 = vsel %vm2611, %v7031, %v7032
      %v7034 = vrot.slane %v6806, 5
      %v7035 = vrot.slane %v7034, 4
      %v7036 = vrot.slane %v6807, 5
      %v7037 = vsel %vm2611, %v7035, %v7036
      %v7038 = vrot.slane %v7036, 4
      %v7039 = vrot.slane %v6808, 5
      %v7040 = vsel %vm2611, %v7038, %v7039
      %v7041 = vrot.slane %v6809, 5
      %v7042 = vrot.slane %v7041, 4
      %v7043 = vrot.slane %v6810, 5
      %v7044 = vsel %vm2611, %v7042, %v7043
      %v7045 = vrot.slane %v7043, 4
      %v7046 = vrot.slane %v6811, 5
      %v7047 = vsel %vm2611, %v7045, %v7046
      %v7048 = vrot.slane %v6812, 5
      %v7049 = vrot.slane %v7048, 4
      %v7050 = vrot.slane %v6813, 5
      %v7051 = vsel %vm2611, %v7049, %v7050
      %v7052 = vrot.slane %v7050, 4
      %v7053 = vrot.slane %v6814, 5
      %v7054 = vsel %vm2611, %v7052, %v7053
      %v7055 = vrot.slane %v6815, 5
      %v7056 = vrot.slane %v7055, 4
      %v7057 = vrot.slane %v6816, 5
      %v7058 = vsel %vm2611, %v7056, %v7057
      %v7059 = vrot.slane %v7057, 4
      %v7060 = vrot.slane %v6817, 5
      %v7061 = vsel %vm2611, %v7059, %v7060
      %v7062 = vrot.slane %v6818, 5
      %v7063 = vrot.slane %v7062, 4
      %v7064 = vrot.slane %v6819, 5
      %v7065 = vsel %vm2611, %v7063, %v7064
      %v7066 = vrot.slane %v7064, 4
      %v7067 = vrot.slane %v6820, 5
      %v7068 = vsel %vm2611, %v7066, %v7067
      %v7069 = vrot.slane %v6821, 5
      %v7070 = vrot.slane %v7069, 4
      %v7071 = vrot.slane %v6822, 5
      %v7072 = vsel %vm2611, %v7070, %v7071
      %v7073 = vrot.slane %v7071, 4
      %v7074 = vrot.slane %v6823, 5
      %v7075 = vsel %vm2611, %v7073, %v7074
      %v7076 = vrot.slane %v6824, 5
      %v7077 = vrot.slane %v7076, 4
      %v7078 = vrot.slane %v6825, 5
      %v7079 = vsel %vm2611, %v7077, %v7078
      %v7080 = vrot.slane %v7078, 4
      %v7081 = vrot.slane %v6826, 5
      %v7082 = vsel %vm2611, %v7080, %v7081
      %v7083 = vrot.slane %v6827, 5
      %v7084 = vrot.slane %v7083, 4
      %v7085 = vrot.slane %v6828, 5
      %v7086 = vsel %vm2611, %v7084, %v7085
      %v7087 = vrot.slane %v7085, 4
      %v7088 = vrot.slane %v6829, 5
      %v7089 = vsel %vm2611, %v7087, %v7088
      %v7090 = vrot.slane %v6830, 5
      %v7091 = vrot.slane %v7090, 4
      %v7092 = vrot.slane %v6831, 5
      %v7093 = vsel %vm2611, %v7091, %v7092
      %v7094 = vrot.slane %v7092, 4
      %v7095 = vrot.slane %v6832, 5
      %v7096 = vsel %vm2611, %v7094, %v7095
      %v7097 = vrot.slane %v6833, 5
      %v7098 = vrot.slane %v7097, 4
      %v7099 = vrot.slane %v6834, 5
      %v7100 = vsel %vm2611, %v7098, %v7099
      %v7101 = vrot.slane %v7099, 4
      %v7102 = vrot.slane %v6835, 5
      %v7103 = vsel %vm2611, %v7101, %v7102
      %v7104 = vrot.slane %v6836, 5
      %v7105 = vrot.slane %v7104, 4
      %v7106 = vrot.slane %v6837, 5
      %v7107 = vsel %vm2611, %v7105, %v7106
      %v7108 = vrot.slane %v7106, 4
      %v7109 = vrot.slane %v6838, 5
      %v7110 = vsel %vm2611, %v7108, %v7109
      %v7111 = vrot.slane %v6839, 5
      %v7112 = vrot.slane %v7111, 4
      %v7113 = vrot.slane %v6840, 5
      %v7114 = vsel %vm2611, %v7112, %v7113
      %v7115 = vrot.slane %v7113, 4
      %v7116 = vrot.slane %v6841, 5
      %v7117 = vsel %vm2611, %v7115, %v7116
      %v7118 = vrot.slane %v6842, 5
      %v7119 = vrot.slane %v7118, 4
      %v7120 = vrot.slane %v6843, 5
      %v7121 = vsel %vm2611, %v7119, %v7120
      %v7122 = vrot.slane %v7120, 4
      %v7123 = vrot.slane %v6844, 5
      %v7124 = vsel %vm2611, %v7122, %v7123
      %v7125 = vrot.slane %v6845, 5
      %v7126 = vrot.slane %v7125, 4
      %v7127 = vrot.slane %v6846, 5
      %v7128 = vsel %vm2611, %v7126, %v7127
      %v7129 = vrot.slane %v7127, 4
      %v7130 = vrot.slane %v6847, 5
      %v7131 = vsel %vm2611, %v7129, %v7130
      %v7132 = vrot.slane %v6848, 5
      %v7133 = vrot.slane %v7132, 4
      %v7134 = vrot.slane %v6849, 5
      %v7135 = vsel %vm2611, %v7133, %v7134
      %v7136 = vrot.slane %v7134, 4
      %v7137 = vrot.slane %v6850, 5
      %v7138 = vsel %vm2611, %v7136, %v7137
      %v7139 = vrot.slane %v6851, 5
      %v7140 = vrot.slane %v7139, 4
      %v7141 = vrot.slane %v6852, 5
      %v7142 = vsel %vm2611, %v7140, %v7141
      %v7143 = vrot.slane %v7141, 4
      %v7144 = vrot.slane %v6853, 5
      %v7145 = vsel %vm2611, %v7143, %v7144
      %v7146 = vrot.slane %v6854, 5
      %v7147 = vrot.slane %v7146, 4
      %v7148 = vrot.slane %v6855, 5
      %v7149 = vsel %vm2611, %v7147, %v7148
      %v7150 = vrot.slane %v7148, 4
      %v7151 = vrot.slane %v6856, 5
      %v7152 = vsel %vm2611, %v7150, %v7151
      %v7153 = vrot.slane %v6857, 5
      %v7154 = vrot.slane %v7153, 4
      %v7155 = vrot.slane %v6858, 5
      %v7156 = vsel %vm2611, %v7154, %v7155
      %v7157 = vrot.slane %v7155, 4
      %v7158 = vrot.slane %v6859, 5
      %v7159 = vsel %vm2611, %v7157, %v7158
      %v7160 = vrot.slane %v6860, 5
      %v7161 = vrot.slane %v7160, 4
      %v7162 = vrot.slane %v6861, 5
      %v7163 = vsel %vm2611, %v7161, %v7162
      %v7164 = vrot.slane %v7162, 4
      %v7165 = vrot.slane %v6862, 5
      %v7166 = vsel %vm2611, %v7164, %v7165
      %v7167 = vrot.slane %v6863, 5
      %v7168 = vrot.slane %v7167, 4
      %v7169 = vrot.slane %v6864, 5
      %v7170 = vsel %vm2611, %v7168, %v7169
      %v7171 = vrot.slane %v7169, 4
      %v7172 = vrot.slane %v6865, 5
      %v7173 = vsel %vm2611, %v7171, %v7172
      %v7174 = vrot.slane %v6866, 5
      %v7175 = vrot.slane %v7174, 4
      %v7176 = vrot.slane %v6867, 5
      %v7177 = vsel %vm2611, %v7175, %v7176
      %v7178 = vrot.slane %v7176, 4
      %v7179 = vrot.slane %v6868, 5
      %v7180 = vsel %vm2611, %v7178, %v7179
      %v7181 = vrot.slane %v6869, 5
      %v7182 = vrot.slane %v7181, 4
      %v7183 = vrot.slane %v6870, 5
      %v7184 = vsel %vm2611, %v7182, %v7183
      %v7185 = vrot.slane %v7183, 4
      %v7186 = vrot.slane %v6871, 5
      %v7187 = vsel %vm2611, %v7185, %v7186
      %v7188 = vrot.slane %v6872, 5
      %v7189 = vrot.slane %v7188, 4
      %v7190 = vrot.slane %v6873, 5
      %v7191 = vsel %vm2611, %v7189, %v7190
      %v7192 = vrot.slane %v7190, 4
      %v7193 = vrot.slane %v6874, 5
      %v7194 = vsel %vm2611, %v7192, %v7193
      %7195 = vrot.lane.b32.xlu0 %v6974, 32
      %v7196 = vpop.permute.xlu0 %7195
      %7197 = vrot.lane.b32.xlu0 %v6977, 32
      %v7198 = vpop.permute.xlu0 %7197
      %7199 = vrot.lane.b32.xlu0 %v6981, 32
      %v7200 = vpop.permute.xlu0 %7199
      %7201 = vrot.lane.b32.xlu0 %v6984, 32
      %v7202 = vpop.permute.xlu0 %7201
      %7203 = vrot.lane.b32.xlu0 %v6988, 32
      %v7204 = vpop.permute.xlu0 %7203
      %7205 = vrot.lane.b32.xlu0 %v6991, 32
      %v7206 = vpop.permute.xlu0 %7205
      %7207 = vrot.lane.b32.xlu0 %v6995, 32
      %v7208 = vpop.permute.xlu0 %7207
      %7209 = vrot.lane.b32.xlu0 %v6998, 32
      %v7210 = vpop.permute.xlu0 %7209
      %7211 = vrot.lane.b32.xlu0 %v7002, 32
      %v7212 = vpop.permute.xlu0 %7211
      %7213 = vrot.lane.b32.xlu0 %v7005, 32
      %v7214 = vpop.permute.xlu0 %7213
      %7215 = vrot.lane.b32.xlu0 %v7009, 32
      %v7216 = vpop.permute.xlu0 %7215
      %7217 = vrot.lane.b32.xlu0 %v7012, 32
      %v7218 = vpop.permute.xlu0 %7217
      %7219 = vrot.lane.b32.xlu0 %v7016, 32
      %v7220 = vpop.permute.xlu0 %7219
      %7221 = vrot.lane.b32.xlu0 %v7019, 32
      %v7222 = vpop.permute.xlu0 %7221
      %7223 = vrot.lane.b32.xlu0 %v7023, 32
      %v7224 = vpop.permute.xlu0 %7223
      %7225 = vrot.lane.b32.xlu0 %v7026, 32
      %v7226 = vpop.permute.xlu0 %7225
      %7227 = vrot.lane.b32.xlu0 %v7030, 32
      %v7228 = vpop.permute.xlu0 %7227
      %7229 = vrot.lane.b32.xlu0 %v7033, 32
      %v7230 = vpop.permute.xlu0 %7229
      %7231 = vrot.lane.b32.xlu0 %v7037, 32
      %v7232 = vpop.permute.xlu0 %7231
      %7233 = vrot.lane.b32.xlu0 %v7040, 32
      %v7234 = vpop.permute.xlu0 %7233
      %7235 = vrot.lane.b32.xlu0 %v7044, 32
      %v7236 = vpop.permute.xlu0 %7235
      %7237 = vrot.lane.b32.xlu0 %v7047, 32
      %v7238 = vpop.permute.xlu0 %7237
      %7239 = vrot.lane.b32.xlu0 %v7051, 32
      %v7240 = vpop.permute.xlu0 %7239
      %7241 = vrot.lane.b32.xlu0 %v7054, 32
      %v7242 = vpop.permute.xlu0 %7241
      %7243 = vrot.lane.b32.xlu0 %v7058, 32
      %v7244 = vpop.permute.xlu0 %7243
      %7245 = vrot.lane.b32.xlu0 %v7061, 32
      %v7246 = vpop.permute.xlu0 %7245
      %7247 = vrot.lane.b32.xlu0 %v7065, 32
      %v7248 = vpop.permute.xlu0 %7247
      %7249 = vrot.lane.b32.xlu0 %v7068, 32
      %v7250 = vpop.permute.xlu0 %7249
      %7251 = vrot.lane.b32.xlu0 %v7072, 32
      %v7252 = vpop.permute.xlu0 %7251
      %7253 = vrot.lane.b32.xlu0 %v7075, 32
      %v7254 = vpop.permute.xlu0 %7253
      %7255 = vrot.lane.b32.xlu0 %v7079, 32
      %v7256 = vpop.permute.xlu0 %7255
      %7257 = vrot.lane.b32.xlu0 %v7082, 32
      %v7258 = vpop.permute.xlu0 %7257
      %7259 = vrot.lane.b32.xlu0 %v7086, 32
      %v7260 = vpop.permute.xlu0 %7259
      %7261 = vrot.lane.b32.xlu0 %v7089, 32
      %v7262 = vpop.permute.xlu0 %7261
      %7263 = vrot.lane.b32.xlu0 %v7093, 32
      %v7264 = vpop.permute.xlu0 %7263
      %7265 = vrot.lane.b32.xlu0 %v7096, 32
      %v7266 = vpop.permute.xlu0 %7265
      %7267 = vrot.lane.b32.xlu0 %v7100, 32
      %v7268 = vpop.permute.xlu0 %7267
      %7269 = vrot.lane.b32.xlu0 %v7103, 32
      %v7270 = vpop.permute.xlu0 %7269
      %7271 = vrot.lane.b32.xlu0 %v7107, 32
      %v7272 = vpop.permute.xlu0 %7271
      %7273 = vrot.lane.b32.xlu0 %v7110, 32
      %v7274 = vpop.permute.xlu0 %7273
      %7275 = vrot.lane.b32.xlu0 %v7114, 32
      %v7276 = vpop.permute.xlu0 %7275
      %7277 = vrot.lane.b32.xlu0 %v7117, 32
      %v7278 = vpop.permute.xlu0 %7277
      %7279 = vrot.lane.b32.xlu0 %v7121, 32
      %v7280 = vpop.permute.xlu0 %7279
      %7281 = vrot.lane.b32.xlu0 %v7124, 32
      %v7282 = vpop.permute.xlu0 %7281
      %7283 = vrot.lane.b32.xlu0 %v7128, 32
      %v7284 = vpop.permute.xlu0 %7283
      %7285 = vrot.lane.b32.xlu0 %v7131, 32
      %v7286 = vpop.permute.xlu0 %7285
      %7287 = vrot.lane.b32.xlu0 %v7135, 32
      %v7288 = vpop.permute.xlu0 %7287
      %7289 = vrot.lane.b32.xlu0 %v7138, 32
      %v7290 = vpop.permute.xlu0 %7289
      %7291 = vrot.lane.b32.xlu0 %v7142, 32
      %v7292 = vpop.permute.xlu0 %7291
      %7293 = vrot.lane.b32.xlu0 %v7145, 32
      %v7294 = vpop.permute.xlu0 %7293
      %7295 = vrot.lane.b32.xlu0 %v7149, 32
      %v7296 = vpop.permute.xlu0 %7295
      %7297 = vrot.lane.b32.xlu0 %v7152, 32
      %v7298 = vpop.permute.xlu0 %7297
      %7299 = vrot.lane.b32.xlu0 %v7156, 32
      %v7300 = vpop.permute.xlu0 %7299
      %7301 = vrot.lane.b32.xlu0 %v7159, 32
      %v7302 = vpop.permute.xlu0 %7301
      %7303 = vrot.lane.b32.xlu0 %v7163, 32
      %v7304 = vpop.permute.xlu0 %7303
      %7305 = vrot.lane.b32.xlu0 %v7166, 32
      %v7306 = vpop.permute.xlu0 %7305
      %7307 = vrot.lane.b32.xlu0 %v7170, 32
      %v7308 = vpop.permute.xlu0 %7307
      %7309 = vrot.lane.b32.xlu0 %v7173, 32
      %v7310 = vpop.permute.xlu0 %7309
      %7311 = vrot.lane.b32.xlu0 %v7177, 32
      %v7312 = vpop.permute.xlu0 %7311
      %7313 = vrot.lane.b32.xlu0 %v7180, 32
      %v7314 = vpop.permute.xlu0 %7313
      %7315 = vrot.lane.b32.xlu0 %v7184, 32
      %v7316 = vpop.permute.xlu0 %7315
      %7317 = vrot.lane.b32.xlu0 %v7187, 32
      %v7318 = vpop.permute.xlu0 %7317
      %7319 = vrot.lane.b32.xlu0 %v7191, 32
      %v7320 = vpop.permute.xlu0 %7319
      %7321 = vrot.lane.b32.xlu0 %v7194, 32
      %v7322 = vpop.permute.xlu0 %7321
      %vm7387 = vcmask 290048
      %7388 = vst.msk [vmem:[#allocation3] sm:$0xf] %vm7387, %v7196
      %7389 = vst.msk [vmem:[#allocation3 + $0x4] sm:$0xf] %vm7387, %v7198
      %7390 = vst.msk [vmem:[#allocation3 + $0x8] sm:$0xf] %vm7387, %v7200
      %7391 = vst.msk [vmem:[#allocation3 + $0xc] sm:$0xf] %vm7387, %v7202
      %7392 = vst.msk [vmem:[#allocation3 + $0x10] sm:$0xf] %vm7387, %v7204
      %7393 = vst.msk [vmem:[#allocation3 + $0x14] sm:$0xf] %vm7387, %v7206
      %7394 = vst.msk [vmem:[#allocation3 + $0x18] sm:$0xf] %vm7387, %v7208
      %7395 = vst.msk [vmem:[#allocation3 + $0x1c] sm:$0xf] %vm7387, %v7210
      %7396 = vst.msk [vmem:[#allocation3 + $0x20] sm:$0xf] %vm7387, %v7212
      %7397 = vst.msk [vmem:[#allocation3 + $0x24] sm:$0xf] %vm7387, %v7214
      %7398 = vst.msk [vmem:[#allocation3 + $0x28] sm:$0xf] %vm7387, %v7216
      %7399 = vst.msk [vmem:[#allocation3 + $0x2c] sm:$0xf] %vm7387, %v7218
      %7400 = vst.msk [vmem:[#allocation3 + $0x30] sm:$0xf] %vm7387, %v7220
      %7401 = vst.msk [vmem:[#allocation3 + $0x34] sm:$0xf] %vm7387, %v7222
      %7402 = vst.msk [vmem:[#allocation3 + $0x38] sm:$0xf] %vm7387, %v7224
      %7403 = vst.msk [vmem:[#allocation3 + $0x3c] sm:$0xf] %vm7387, %v7226
      %7404 = vst.msk [vmem:[#allocation3 + $0x40] sm:$0xf] %vm7387, %v7228
      %7405 = vst.msk [vmem:[#allocation3 + $0x44] sm:$0xf] %vm7387, %v7230
      %7406 = vst.msk [vmem:[#allocation3 + $0x48] sm:$0xf] %vm7387, %v7232
      %7407 = vst.msk [vmem:[#allocation3 + $0x4c] sm:$0xf] %vm7387, %v7234
      %7408 = vst.msk [vmem:[#allocation3 + $0x50] sm:$0xf] %vm7387, %v7236
      %7409 = vst.msk [vmem:[#allocation3 + $0x54] sm:$0xf] %vm7387, %v7238
      %7410 = vst.msk [vmem:[#allocation3 + $0x58] sm:$0xf] %vm7387, %v7240
      %7411 = vst.msk [vmem:[#allocation3 + $0x5c] sm:$0xf] %vm7387, %v7242
      %7412 = vst.msk [vmem:[#allocation3 + $0x60] sm:$0xf] %vm7387, %v7244
      %7413 = vst.msk [vmem:[#allocation3 + $0x64] sm:$0xf] %vm7387, %v7246
      %7414 = vst.msk [vmem:[#allocation3 + $0x68] sm:$0xf] %vm7387, %v7248
      %7415 = vst.msk [vmem:[#allocation3 + $0x6c] sm:$0xf] %vm7387, %v7250
      %7416 = vst.msk [vmem:[#allocation3 + $0x70] sm:$0xf] %vm7387, %v7252
      %7417 = vst.msk [vmem:[#allocation3 + $0x74] sm:$0xf] %vm7387, %v7254
      %7418 = vst.msk [vmem:[#allocation3 + $0x78] sm:$0xf] %vm7387, %v7256
      %7419 = vst.msk [vmem:[#allocation3 + $0x7c] sm:$0xf] %vm7387, %v7258
      %7420 = vst.msk [vmem:[#allocation3 + $0x80] sm:$0xf] %vm7387, %v7260
      %7421 = vst.msk [vmem:[#allocation3 + $0x84] sm:$0xf] %vm7387, %v7262
      %7422 = vst.msk [vmem:[#allocation3 + $0x88] sm:$0xf] %vm7387, %v7264
      %7423 = vst.msk [vmem:[#allocation3 + $0x8c] sm:$0xf] %vm7387, %v7266
      %7424 = vst.msk [vmem:[#allocation3 + $0x90] sm:$0xf] %vm7387, %v7268
      %7425 = vst.msk [vmem:[#allocation3 + $0x94] sm:$0xf] %vm7387, %v7270
      %7426 = vst.msk [vmem:[#allocation3 + $0x98] sm:$0xf] %vm7387, %v7272
      %7427 = vst.msk [vmem:[#allocation3 + $0x9c] sm:$0xf] %vm7387, %v7274
      %7428 = vst.msk [vmem:[#allocation3 + $0xa0] sm:$0xf] %vm7387, %v7276
      %7429 = vst.msk [vmem:[#allocation3 + $0xa4] sm:$0xf] %vm7387, %v7278
      %7430 = vst.msk [vmem:[#allocation3 + $0xa8] sm:$0xf] %vm7387, %v7280
      %7431 = vst.msk [vmem:[#allocation3 + $0xac] sm:$0xf] %vm7387, %v7282
      %7432 = vst.msk [vmem:[#allocation3 + $0xb0] sm:$0xf] %vm7387, %v7284
      %7433 = vst.msk [vmem:[#allocation3 + $0xb4] sm:$0xf] %vm7387, %v7286
      %7434 = vst.msk [vmem:[#allocation3 + $0xb8] sm:$0xf] %vm7387, %v7288
      %7435 = vst.msk [vmem:[#allocation3 + $0xbc] sm:$0xf] %vm7387, %v7290
      %7436 = vst.msk [vmem:[#allocation3 + $0xc0] sm:$0xf] %vm7387, %v7292
      %7437 = vst.msk [vmem:[#allocation3 + $0xc4] sm:$0xf] %vm7387, %v7294
      %7438 = vst.msk [vmem:[#allocation3 + $0xc8] sm:$0xf] %vm7387, %v7296
      %7439 = vst.msk [vmem:[#allocation3 + $0xcc] sm:$0xf] %vm7387, %v7298
      %7440 = vst.msk [vmem:[#allocation3 + $0xd0] sm:$0xf] %vm7387, %v7300
      %7441 = vst.msk [vmem:[#allocation3 + $0xd4] sm:$0xf] %vm7387, %v7302
      %7442 = vst.msk [vmem:[#allocation3 + $0xd8] sm:$0xf] %vm7387, %v7304
      %7443 = vst.msk [vmem:[#allocation3 + $0xdc] sm:$0xf] %vm7387, %v7306
      %7444 = vst.msk [vmem:[#allocation3 + $0xe0] sm:$0xf] %vm7387, %v7308
      %7445 = vst.msk [vmem:[#allocation3 + $0xe4] sm:$0xf] %vm7387, %v7310
      %7446 = vst.msk [vmem:[#allocation3 + $0xe8] sm:$0xf] %vm7387, %v7312
      %7447 = vst.msk [vmem:[#allocation3 + $0xec] sm:$0xf] %vm7387, %v7314
      %7448 = vst.msk [vmem:[#allocation3 + $0xf0] sm:$0xf] %vm7387, %v7316
      %7449 = vst.msk [vmem:[#allocation3 + $0xf4] sm:$0xf] %vm7387, %v7318
      %7450 = vst.msk [vmem:[#allocation3 + $0xf8] sm:$0xf] %vm7387, %v7320
      %7451 = vst.msk [vmem:[#allocation3 + $0xfc] sm:$0xf] %vm7387, %v7322
    $region17: #{tpu_custom_call.1} parent=1 // pred_fallthru
      _
    %v7452 = vld [vmem:[#allocation3] sm:$0xf]
    %v7453 = vld [vmem:[#allocation3 + $0x4] sm:$0xf]
    %v7454 = vld [vmem:[#allocation3 + $0x8] sm:$0xf]
    %v7455 = vld [vmem:[#allocation3 + $0xc] sm:$0xf]
    %v7456 = vld [vmem:[#allocation3 + $0x10] sm:$0xf]
    %v7457 = vld [vmem:[#allocation3 + $0x14] sm:$0xf]
    %v7458 = vld [vmem:[#allocation3 + $0x18] sm:$0xf]
    %v7459 = vld [vmem:[#allocation3 + $0x1c] sm:$0xf]
    %v7460 = vld [vmem:[#allocation3 + $0x20] sm:$0xf]
    %v7461 = vld [vmem:[#allocation3 + $0x24] sm:$0xf]
    %v7462 = vld [vmem:[#allocation3 + $0x28] sm:$0xf]
    %v7463 = vld [vmem:[#allocation3 + $0x2c] sm:$0xf]
    %v7464 = vld [vmem:[#allocation3 + $0x30] sm:$0xf]
    %v7465 = vld [vmem:[#allocation3 + $0x34] sm:$0xf]
    %v7466 = vld [vmem:[#allocation3 + $0x38] sm:$0xf]
    %v7467 = vld [vmem:[#allocation3 + $0x3c] sm:$0xf]
    %v7468 = vld [vmem:[#allocation3 + $0x40] sm:$0xf]
    %v7469 = vld [vmem:[#allocation3 + $0x44] sm:$0xf]
    %v7470 = vld [vmem:[#allocation3 + $0x48] sm:$0xf]
    %v7471 = vld [vmem:[#allocation3 + $0x4c] sm:$0xf]
    %v7472 = vld [vmem:[#allocation3 + $0x50] sm:$0xf]
    %v7473 = vld [vmem:[#allocation3 + $0x54] sm:$0xf]
    %v7474 = vld [vmem:[#allocation3 + $0x58] sm:$0xf]
    %v7475 = vld [vmem:[#allocation3 + $0x5c] sm:$0xf]
    %v7476 = vld [vmem:[#allocation3 + $0x60] sm:$0xf]
    %v7477 = vld [vmem:[#allocation3 + $0x64] sm:$0xf]
    %v7478 = vld [vmem:[#allocation3 + $0x68] sm:$0xf]
    %v7479 = vld [vmem:[#allocation3 + $0x6c] sm:$0xf]
    %v7480 = vld [vmem:[#allocation3 + $0x70] sm:$0xf]
    %v7481 = vld [vmem:[#allocation3 + $0x74] sm:$0xf]
    %v7482 = vld [vmem:[#allocation3 + $0x78] sm:$0xf]
    %v7483 = vld [vmem:[#allocation3 + $0x7c] sm:$0xf]
    %v7484 = vld [vmem:[#allocation3 + $0x80] sm:$0xf]
    %v7485 = vld [vmem:[#allocation3 + $0x84] sm:$0xf]
    %v7486 = vld [vmem:[#allocation3 + $0x88] sm:$0xf]
    %v7487 = vld [vmem:[#allocation3 + $0x8c] sm:$0xf]
    %v7488 = vld [vmem:[#allocation3 + $0x90] sm:$0xf]
    %v7489 = vld [vmem:[#allocation3 + $0x94] sm:$0xf]
    %v7490 = vld [vmem:[#allocation3 + $0x98] sm:$0xf]
    %v7491 = vld [vmem:[#allocation3 + $0x9c] sm:$0xf]
    %v7492 = vld [vmem:[#allocation3 + $0xa0] sm:$0xf]
    %v7493 = vld [vmem:[#allocation3 + $0xa4] sm:$0xf]
    %v7494 = vld [vmem:[#allocation3 + $0xa8] sm:$0xf]
    %v7495 = vld [vmem:[#allocation3 + $0xac] sm:$0xf]
    %v7496 = vld [vmem:[#allocation3 + $0xb0] sm:$0xf]
    %v7497 = vld [vmem:[#allocation3 + $0xb4] sm:$0xf]
    %v7498 = vld [vmem:[#allocation3 + $0xb8] sm:$0xf]
    %v7499 = vld [vmem:[#allocation3 + $0xbc] sm:$0xf]
    %v7500 = vld [vmem:[#allocation3 + $0xc0] sm:$0xf]
    %v7501 = vld [vmem:[#allocation3 + $0xc4] sm:$0xf]
    %v7502 = vld [vmem:[#allocation3 + $0xc8] sm:$0xf]
    %v7503 = vld [vmem:[#allocation3 + $0xcc] sm:$0xf]
    %v7504 = vld [vmem:[#allocation3 + $0xd0] sm:$0xf]
    %v7505 = vld [vmem:[#allocation3 + $0xd4] sm:$0xf]
    %v7506 = vld [vmem:[#allocation3 + $0xd8] sm:$0xf]
    %v7507 = vld [vmem:[#allocation3 + $0xdc] sm:$0xf]
    %v7508 = vld [vmem:[#allocation3 + $0xe0] sm:$0xf]
    %v7509 = vld [vmem:[#allocation3 + $0xe4] sm:$0xf]
    %v7510 = vld [vmem:[#allocation3 + $0xe8] sm:$0xf]
    %v7511 = vld [vmem:[#allocation3 + $0xec] sm:$0xf]
    %v7512 = vld [vmem:[#allocation3 + $0xf0] sm:$0xf]
    %v7513 = vld [vmem:[#allocation3 + $0xf4] sm:$0xf]
    %v7514 = vld [vmem:[#allocation3 + $0xf8] sm:$0xf]
    %v7515 = vld [vmem:[#allocation3 + $0xfc] sm:$0xf]
    %v7516 = vld [vmem:[%s1] sm:$0xf]
    %v7517 = vld [vmem:[%s1 + $0x4] sm:$0xf]
    %v7518 = vld [vmem:[%s1 + $0x8] sm:$0xf]
    %v7519 = vld [vmem:[%s1 + $0xc] sm:$0xf]
    %v7520 = vld [vmem:[%s1 + $0x10] sm:$0x3]
    %v7521 = vld [vmem:[%s2] sm:$0x1]
    %v7523 = vlaneseq
    %v7524 = vshrl.u32 %v7523, 7
    %v7525 = vsub.s32 0, %v7524
    %v7526 = vrot.slane %v7521, %v7525
    %v7592 = vunpack.c.l.b16 %v7452
    %v7593 = vunpack.c.l.b16 %v7453
    %v7594 = vunpack.c.l.b16 %v7454
    %v7595 = vunpack.c.l.b16 %v7455
    %v7596 = vunpack.c.l.b16 %v7456
    %v7597 = vunpack.c.l.b16 %v7457
    %v7598 = vunpack.c.l.b16 %v7458
    %v7599 = vunpack.c.l.b16 %v7459
    %v7600 = vunpack.c.l.b16 %v7460
    %v7601 = vunpack.c.l.b16 %v7461
    %v7602 = vunpack.c.l.b16 %v7462
    %v7603 = vunpack.c.l.b16 %v7463
    %v7604 = vunpack.c.l.b16 %v7464
    %v7605 = vunpack.c.l.b16 %v7465
    %v7606 = vunpack.c.l.b16 %v7466
    %v7607 = vunpack.c.l.b16 %v7467
    %v7608 = vunpack.c.l.b16 %v7468
    %v7609 = vunpack.c.l.b16 %v7469
    %v7610 = vunpack.c.l.b16 %v7470
    %v7611 = vunpack.c.l.b16 %v7471
    %v7612 = vunpack.c.l.b16 %v7472
    %v7613 = vunpack.c.l.b16 %v7473
    %v7614 = vunpack.c.l.b16 %v7474
    %v7615 = vunpack.c.l.b16 %v7475
    %v7616 = vunpack.c.l.b16 %v7476
    %v7617 = vunpack.c.l.b16 %v7477
    %v7618 = vunpack.c.l.b16 %v7478
    %v7619 = vunpack.c.l.b16 %v7479
    %v7620 = vunpack.c.l.b16 %v7480
    %v7621 = vunpack.c.l.b16 %v7481
    %v7622 = vunpack.c.l.b16 %v7482
    %v7623 = vunpack.c.l.b16 %v7483
    %v7624 = vunpack.c.l.b16 %v7484
    %v7625 = vunpack.c.l.b16 %v7485
    %v7626 = vunpack.c.l.b16 %v7486
    %v7627 = vunpack.c.l.b16 %v7487
    %v7628 = vunpack.c.l.b16 %v7488
    %v7629 = vunpack.c.l.b16 %v7489
    %v7630 = vunpack.c.l.b16 %v7490
    %v7631 = vunpack.c.l.b16 %v7491
    %v7632 = vunpack.c.l.b16 %v7492
    %v7633 = vunpack.c.l.b16 %v7493
    %v7634 = vunpack.c.l.b16 %v7494
    %v7635 = vunpack.c.l.b16 %v7495
    %v7636 = vunpack.c.l.b16 %v7496
    %v7637 = vunpack.c.l.b16 %v7497
    %v7638 = vunpack.c.l.b16 %v7498
    %v7639 = vunpack.c.l.b16 %v7499
    %v7640 = vunpack.c.l.b16 %v7500
    %v7641 = vunpack.c.l.b16 %v7501
    %v7642 = vunpack.c.l.b16 %v7502
    %v7643 = vunpack.c.l.b16 %v7503
    %v7644 = vunpack.c.l.b16 %v7504
    %v7645 = vunpack.c.l.b16 %v7505
    %v7646 = vunpack.c.l.b16 %v7506
    %v7647 = vunpack.c.l.b16 %v7507
    %v7648 = vunpack.c.l.b16 %v7508
    %v7649 = vunpack.c.l.b16 %v7509
    %v7650 = vunpack.c.l.b16 %v7510
    %v7651 = vunpack.c.l.b16 %v7511
    %v7652 = vunpack.c.l.b16 %v7512
    %v7653 = vunpack.c.l.b16 %v7513
    %v7654 = vunpack.c.l.b16 %v7514
    %v7655 = vunpack.c.l.b16 %v7515
    %v7656 = vpack.c.b16 %v7593, %v7592
    %v7657 = vpack.c.b16 %v7595, %v7594
    %v7658 = vpack.c.b16 %v7597, %v7596
    %v7659 = vpack.c.b16 %v7599, %v7598
    %v7660 = vpack.c.b16 %v7601, %v7600
    %v7661 = vpack.c.b16 %v7603, %v7602
    %v7662 = vpack.c.b16 %v7605, %v7604
    %v7663 = vpack.c.b16 %v7607, %v7606
    %v7664 = vpack.c.b16 %v7609, %v7608
    %v7665 = vpack.c.b16 %v7611, %v7610
    %v7666 = vpack.c.b16 %v7613, %v7612
    %v7667 = vpack.c.b16 %v7615, %v7614
    %v7668 = vpack.c.b16 %v7617, %v7616
    %v7669 = vpack.c.b16 %v7619, %v7618
    %v7670 = vpack.c.b16 %v7621, %v7620
    %v7671 = vpack.c.b16 %v7623, %v7622
    %v7672 = vpack.c.b16 %v7625, %v7624
    %v7673 = vpack.c.b16 %v7627, %v7626
    %v7674 = vpack.c.b16 %v7629, %v7628
    %v7675 = vpack.c.b16 %v7631, %v7630
    %v7676 = vpack.c.b16 %v7633, %v7632
    %v7677 = vpack.c.b16 %v7635, %v7634
    %v7678 = vpack.c.b16 %v7637, %v7636
    %v7679 = vpack.c.b16 %v7639, %v7638
    %v7680 = vpack.c.b16 %v7641, %v7640
    %v7681 = vpack.c.b16 %v7643, %v7642
    %v7682 = vpack.c.b16 %v7645, %v7644
    %v7683 = vpack.c.b16 %v7647, %v7646
    %v7684 = vpack.c.b16 %v7649, %v7648
    %v7685 = vpack.c.b16 %v7651, %v7650
    %v7686 = vpack.c.b16 %v7653, %v7652
    %v7687 = vpack.c.b16 %v7655, %v7654
    %v7693 = vunpack.c.l.b16 %v7516
    %v7694 = vunpack.c.l.b16 %v7517
    %v7695 = vunpack.c.l.b16 %v7518
    %v7696 = vunpack.c.l.b16 %v7519
    %v7697 = vunpack.c.l.b16 %v7520
    %v7698 = vpack.c.b16 %v7694, %v7693
    %v7699 = vpack.c.b16 %v7696, %v7695
    %v7700 = vpack.c.b16 %v7697, %v7697
    %vm7703 = vcmask 293888
    %v7705 = vsel %vm7703, %v7656, 0
    %v7708 = vsel %vm7703, %v7657, 0
    %v7711 = vsel %vm7703, %v7658, 0
    %v7714 = vsel %vm7703, %v7659, 0
    %v7717 = vsel %vm7703, %v7660, 0
    %v7720 = vsel %vm7703, %v7661, 0
    %v7723 = vsel %vm7703, %v7662, 0
    %v7726 = vsel %vm7703, %v7663, 0
    %v7729 = vsel %vm7703, %v7664, 0
    %v7732 = vsel %vm7703, %v7665, 0
    %v7735 = vsel %vm7703, %v7666, 0
    %v7738 = vsel %vm7703, %v7667, 0
    %v7741 = vsel %vm7703, %v7668, 0
    %v7744 = vsel %vm7703, %v7669, 0
    %v7747 = vsel %vm7703, %v7670, 0
    %v7750 = vsel %vm7703, %v7671, 0
    %v7753 = vsel %vm7703, %v7672, 0
    %v7756 = vsel %vm7703, %v7673, 0
    %v7759 = vsel %vm7703, %v7674, 0
    %v7762 = vsel %vm7703, %v7675, 0
    %v7765 = vsel %vm7703, %v7676, 0
    %v7768 = vsel %vm7703, %v7677, 0
    %v7771 = vsel %vm7703, %v7678, 0
    %v7774 = vsel %vm7703, %v7679, 0
    %v7777 = vsel %vm7703, %v7680, 0
    %v7780 = vsel %vm7703, %v7681, 0
    %v7783 = vsel %vm7703, %v7682, 0
    %v7786 = vsel %vm7703, %v7683, 0
    %v7789 = vsel %vm7703, %v7684, 0
    %v7792 = vsel %vm7703, %v7685, 0
    %v7795 = vsel %vm7703, %v7686, 0
    %v7798 = vsel %vm7703, %v7687, 0
    %vm7800 = vcmask 1041408
    %v7802 = vsel %vm7800, %v7700, 0
    %7804 = vmatprep.subr.bf16.mxu0 0
    %7805 = vmatpush1.bf16.msra.mxu0 0
    %7806 = vmatprep.subr.bf16.mxu0 0
    %7807 = vmatpush1.bf16.msra.mxu0 0
    %7808 = vmatprep.subr.bf16.mxu0 0
    %7809 = vmatpush1.bf16.msra.mxu0 0
    %7810 = vmatprep.subr.bf16.mxu0 0
    %7811 = vmatpush1.bf16.msra.mxu0 0
    %7812 = vmatprep.subr.bf16.mxu0 0
    %7813 = vmatpush1.bf16.msra.mxu0 0
    %7814 = vmatprep.subr.bf16.mxu0 0
    %7815 = vmatpush1.bf16.msra.mxu0 %v7802
    %7816 = vmatprep.subr.bf16.mxu0 0
    %7817 = vmatpush1.bf16.msra.mxu0 %v7699
    %7818 = vmatprep.subr.bf16.mxu0 0
    %7819 = vmatpush1.bf16.msra.mxu0 %v7698
    %7820 = vmatprep.subr.bf16.mxu0 0
    %7821 = vmatpush2.bf16.msra.mxu0 0
    %7822 = vmatprep.subr.bf16.mxu0 0
    %7823 = vmatpush2.bf16.msra.mxu0 0
    %7824 = vmatprep.subr.bf16.mxu0 0
    %7825 = vmatpush2.bf16.msra.mxu0 0
    %7826 = vmatprep.subr.bf16.mxu0 0
    %7827 = vmatpush2.bf16.msra.mxu0 0
    %7828 = vmatprep.subr.bf16.mxu0 0
    %7829 = vmatpush2.bf16.msra.mxu0 0
    %7830 = vmatprep.subr.bf16.mxu0 0
    %7831 = vmatpush2.bf16.msra.mxu0 0
    %7832 = vmatprep.subr.bf16.mxu0 0
    %7833 = vmatpush2.bf16.msra.mxu0 0
    %7834 = vmatprep.subr.bf16.mxu0 0
    %7835 = vmatpush2.bf16.msra.mxu0 0
    %7836 = vmatprep.mubr.bf16.mxu0 0
    %7837 = vmatmul.mubr.bf16.gmra.mxu0 %v7705
    %v7838 = vpop.f32.mrf.mxu0
    %v7839 = vadd.f32 %v7526, %v7838
    %v7840 = vpop.f32.mrf.mxu0
    %v7841 = vpop.f32.mrf.mxu0
    %v7842 = vadd.f32 %v7526, %v7841
    %v7843 = vpop.f32.mrf.mxu0
    %7844 = vmatprep.mubr.bf16.mxu0 0
    %7845 = vmatmul.mubr.bf16.gmra.mxu0 %v7708
    %v7846 = vpop.f32.mrf.mxu0
    %v7847 = vadd.f32 %v7526, %v7846
    %v7848 = vpop.f32.mrf.mxu0
    %v7849 = vpop.f32.mrf.mxu0
    %v7850 = vadd.f32 %v7526, %v7849
    %v7851 = vpop.f32.mrf.mxu0
    %7852 = vmatprep.mubr.bf16.mxu0 0
    %7853 = vmatmul.mubr.bf16.gmra.mxu0 %v7711
    %v7854 = vpop.f32.mrf.mxu0
    %v7855 = vadd.f32 %v7526, %v7854
    %v7856 = vpop.f32.mrf.mxu0
    %v7857 = vpop.f32.mrf.mxu0
    %v7858 = vadd.f32 %v7526, %v7857
    %v7859 = vpop.f32.mrf.mxu0
    %7860 = vmatprep.mubr.bf16.mxu0 0
    %7861 = vmatmul.mubr.bf16.gmra.mxu0 %v7714
    %v7862 = vpop.f32.mrf.mxu0
    %v7863 = vadd.f32 %v7526, %v7862
    %v7864 = vpop.f32.mrf.mxu0
    %v7865 = vpop.f32.mrf.mxu0
    %v7866 = vadd.f32 %v7526, %v7865
    %v7867 = vpop.f32.mrf.mxu0
    %7868 = vmatprep.mubr.bf16.mxu0 0
    %7869 = vmatmul.mubr.bf16.gmra.mxu0 %v7717
    %v7870 = vpop.f32.mrf.mxu0
    %v7871 = vadd.f32 %v7526, %v7870
    %v7872 = vpop.f32.mrf.mxu0
    %v7873 = vpop.f32.mrf.mxu0
    %v7874 = vadd.f32 %v7526, %v7873
    %v7875 = vpop.f32.mrf.mxu0
    %7876 = vmatprep.mubr.bf16.mxu0 0
    %7877 = vmatmul.mubr.bf16.gmra.mxu0 %v7720
    %v7878 = vpop.f32.mrf.mxu0
    %v7879 = vadd.f32 %v7526, %v7878
    %v7880 = vpop.f32.mrf.mxu0
    %v7881 = vpop.f32.mrf.mxu0
    %v7882 = vadd.f32 %v7526, %v7881
    %v7883 = vpop.f32.mrf.mxu0
    %7884 = vmatprep.mubr.bf16.mxu0 0
    %7885 = vmatmul.mubr.bf16.gmra.mxu0 %v7723
    %v7886 = vpop.f32.mrf.mxu0
    %v7887 = vadd.f32 %v7526, %v7886
    %v7888 = vpop.f32.mrf.mxu0
    %v7889 = vpop.f32.mrf.mxu0
    %v7890 = vadd.f32 %v7526, %v7889
    %v7891 = vpop.f32.mrf.mxu0
    %7892 = vmatprep.mubr.bf16.mxu0 0
    %7893 = vmatmul.mubr.bf16.gmra.mxu0 %v7726
    %v7894 = vpop.f32.mrf.mxu0
    %v7895 = vadd.f32 %v7526, %v7894
    %v7896 = vpop.f32.mrf.mxu0
    %v7897 = vpop.f32.mrf.mxu0
    %v7898 = vadd.f32 %v7526, %v7897
    %v7899 = vpop.f32.mrf.mxu0
    %7900 = vmatprep.mubr.bf16.mxu0 0
    %7901 = vmatmul.mubr.bf16.gmra.mxu0 %v7729
    %v7902 = vpop.f32.mrf.mxu0
    %v7903 = vadd.f32 %v7526, %v7902
    %v7904 = vpop.f32.mrf.mxu0
    %v7905 = vpop.f32.mrf.mxu0
    %v7906 = vadd.f32 %v7526, %v7905
    %v7907 = vpop.f32.mrf.mxu0
    %7908 = vmatprep.mubr.bf16.mxu0 0
    %7909 = vmatmul.mubr.bf16.gmra.mxu0 %v7732
    %v7910 = vpop.f32.mrf.mxu0
    %v7911 = vadd.f32 %v7526, %v7910
    %v7912 = vpop.f32.mrf.mxu0
    %v7913 = vpop.f32.mrf.mxu0
    %v7914 = vadd.f32 %v7526, %v7913
    %v7915 = vpop.f32.mrf.mxu0
    %7916 = vmatprep.mubr.bf16.mxu0 0
    %7917 = vmatmul.mubr.bf16.gmra.mxu0 %v7735
    %v7918 = vpop.f32.mrf.mxu0
    %v7919 = vadd.f32 %v7526, %v7918
    %v7920 = vpop.f32.mrf.mxu0
    %v7921 = vpop.f32.mrf.mxu0
    %v7922 = vadd.f32 %v7526, %v7921
    %v7923 = vpop.f32.mrf.mxu0
    %7924 = vmatprep.mubr.bf16.mxu0 0
    %7925 = vmatmul.mubr.bf16.gmra.mxu0 %v7738
    %v7926 = vpop.f32.mrf.mxu0
    %v7927 = vadd.f32 %v7526, %v7926
    %v7928 = vpop.f32.mrf.mxu0
    %v7929 = vpop.f32.mrf.mxu0
    %v7930 = vadd.f32 %v7526, %v7929
    %v7931 = vpop.f32.mrf.mxu0
    %7932 = vmatprep.mubr.bf16.mxu0 0
    %7933 = vmatmul.mubr.bf16.gmra.mxu0 %v7741
    %v7934 = vpop.f32.mrf.mxu0
    %v7935 = vadd.f32 %v7526, %v7934
    %v7936 = vpop.f32.mrf.mxu0
    %v7937 = vpop.f32.mrf.mxu0
    %v7938 = vadd.f32 %v7526, %v7937
    %v7939 = vpop.f32.mrf.mxu0
    %7940 = vmatprep.mubr.bf16.mxu0 0
    %7941 = vmatmul.mubr.bf16.gmra.mxu0 %v7744
    %v7942 = vpop.f32.mrf.mxu0
    %v7943 = vadd.f32 %v7526, %v7942
    %v7944 = vpop.f32.mrf.mxu0
    %v7945 = vpop.f32.mrf.mxu0
    %v7946 = vadd.f32 %v7526, %v7945
    %v7947 = vpop.f32.mrf.mxu0
    %7948 = vmatprep.mubr.bf16.mxu0 0
    %7949 = vmatmul.mubr.bf16.gmra.mxu0 %v7747
    %v7950 = vpop.f32.mrf.mxu0
    %v7951 = vadd.f32 %v7526, %v7950
    %v7952 = vpop.f32.mrf.mxu0
    %v7953 = vpop.f32.mrf.mxu0
    %v7954 = vadd.f32 %v7526, %v7953
    %v7955 = vpop.f32.mrf.mxu0
    %7956 = vmatprep.mubr.bf16.mxu0 0
    %7957 = vmatmul.mubr.bf16.gmra.mxu0 %v7750
    %v7958 = vpop.f32.mrf.mxu0
    %v7959 = vadd.f32 %v7526, %v7958
    %v7960 = vpop.f32.mrf.mxu0
    %v7961 = vpop.f32.mrf.mxu0
    %v7962 = vadd.f32 %v7526, %v7961
    %v7963 = vpop.f32.mrf.mxu0
    %7964 = vmatprep.mubr.bf16.mxu0 0
    %7965 = vmatmul.mubr.bf16.gmra.mxu0 %v7753
    %v7966 = vpop.f32.mrf.mxu0
    %v7967 = vadd.f32 %v7526, %v7966
    %v7968 = vpop.f32.mrf.mxu0
    %v7969 = vpop.f32.mrf.mxu0
    %v7970 = vadd.f32 %v7526, %v7969
    %v7971 = vpop.f32.mrf.mxu0
    %7972 = vmatprep.mubr.bf16.mxu0 0
    %7973 = vmatmul.mubr.bf16.gmra.mxu0 %v7756
    %v7974 = vpop.f32.mrf.mxu0
    %v7975 = vadd.f32 %v7526, %v7974
    %v7976 = vpop.f32.mrf.mxu0
    %v7977 = vpop.f32.mrf.mxu0
    %v7978 = vadd.f32 %v7526, %v7977
    %v7979 = vpop.f32.mrf.mxu0
    %7980 = vmatprep.mubr.bf16.mxu0 0
    %7981 = vmatmul.mubr.bf16.gmra.mxu0 %v7759
    %v7982 = vpop.f32.mrf.mxu0
    %v7983 = vadd.f32 %v7526, %v7982
    %v7984 = vpop.f32.mrf.mxu0
    %v7985 = vpop.f32.mrf.mxu0
    %v7986 = vadd.f32 %v7526, %v7985
    %v7987 = vpop.f32.mrf.mxu0
    %7988 = vmatprep.mubr.bf16.mxu0 0
    %7989 = vmatmul.mubr.bf16.gmra.mxu0 %v7762
    %v7990 = vpop.f32.mrf.mxu0
    %v7991 = vadd.f32 %v7526, %v7990
    %v7992 = vpop.f32.mrf.mxu0
    %v7993 = vpop.f32.mrf.mxu0
    %v7994 = vadd.f32 %v7526, %v7993
    %v7995 = vpop.f32.mrf.mxu0
    %7996 = vmatprep.mubr.bf16.mxu0 0
    %7997 = vmatmul.mubr.bf16.gmra.mxu0 %v7765
    %v7998 = vpop.f32.mrf.mxu0
    %v7999 = vadd.f32 %v7526, %v7998
    %v8000 = vpop.f32.mrf.mxu0
    %v8001 = vpop.f32.mrf.mxu0
    %v8002 = vadd.f32 %v7526, %v8001
    %v8003 = vpop.f32.mrf.mxu0
    %8004 = vmatprep.mubr.bf16.mxu0 0
    %8005 = vmatmul.mubr.bf16.gmra.mxu0 %v7768
    %v8006 = vpop.f32.mrf.mxu0
    %v8007 = vadd.f32 %v7526, %v8006
    %v8008 = vpop.f32.mrf.mxu0
    %v8009 = vpop.f32.mrf.mxu0
    %v8010 = vadd.f32 %v7526, %v8009
    %v8011 = vpop.f32.mrf.mxu0
    %8012 = vmatprep.mubr.bf16.mxu0 0
    %8013 = vmatmul.mubr.bf16.gmra.mxu0 %v7771
    %v8014 = vpop.f32.mrf.mxu0
    %v8015 = vadd.f32 %v7526, %v8014
    %v8016 = vpop.f32.mrf.mxu0
    %v8017 = vpop.f32.mrf.mxu0
    %v8018 = vadd.f32 %v7526, %v8017
    %v8019 = vpop.f32.mrf.mxu0
    %8020 = vmatprep.mubr.bf16.mxu0 0
    %8021 = vmatmul.mubr.bf16.gmra.mxu0 %v7774
    %v8022 = vpop.f32.mrf.mxu0
    %v8023 = vadd.f32 %v7526, %v8022
    %v8024 = vpop.f32.mrf.mxu0
    %v8025 = vpop.f32.mrf.mxu0
    %v8026 = vadd.f32 %v7526, %v8025
    %v8027 = vpop.f32.mrf.mxu0
    %8028 = vmatprep.mubr.bf16.mxu0 0
    %8029 = vmatmul.mubr.bf16.gmra.mxu0 %v7777
    %v8030 = vpop.f32.mrf.mxu0
    %v8031 = vadd.f32 %v7526, %v8030
    %v8032 = vpop.f32.mrf.mxu0
    %v8033 = vpop.f32.mrf.mxu0
    %v8034 = vadd.f32 %v7526, %v8033
    %v8035 = vpop.f32.mrf.mxu0
    %8036 = vmatprep.mubr.bf16.mxu0 0
    %8037 = vmatmul.mubr.bf16.gmra.mxu0 %v7780
    %v8038 = vpop.f32.mrf.mxu0
    %v8039 = vadd.f32 %v7526, %v8038
    %v8040 = vpop.f32.mrf.mxu0
    %v8041 = vpop.f32.mrf.mxu0
    %v8042 = vadd.f32 %v7526, %v8041
    %v8043 = vpop.f32.mrf.mxu0
    %8044 = vmatprep.mubr.bf16.mxu0 0
    %8045 = vmatmul.mubr.bf16.gmra.mxu0 %v7783
    %v8046 = vpop.f32.mrf.mxu0
    %v8047 = vadd.f32 %v7526, %v8046
    %v8048 = vpop.f32.mrf.mxu0
    %v8049 = vpop.f32.mrf.mxu0
    %v8050 = vadd.f32 %v7526, %v8049
    %v8051 = vpop.f32.mrf.mxu0
    %8052 = vmatprep.mubr.bf16.mxu0 0
    %8053 = vmatmul.mubr.bf16.gmra.mxu0 %v7786
    %v8054 = vpop.f32.mrf.mxu0
    %v8055 = vadd.f32 %v7526, %v8054
    %v8056 = vpop.f32.mrf.mxu0
    %v8057 = vpop.f32.mrf.mxu0
    %v8058 = vadd.f32 %v7526, %v8057
    %v8059 = vpop.f32.mrf.mxu0
    %8060 = vmatprep.mubr.bf16.mxu0 0
    %8061 = vmatmul.mubr.bf16.gmra.mxu0 %v7789
    %v8062 = vpop.f32.mrf.mxu0
    %v8063 = vadd.f32 %v7526, %v8062
    %v8064 = vpop.f32.mrf.mxu0
    %v8065 = vpop.f32.mrf.mxu0
    %v8066 = vadd.f32 %v7526, %v8065
    %v8067 = vpop.f32.mrf.mxu0
    %8068 = vmatprep.mubr.bf16.mxu0 0
    %8069 = vmatmul.mubr.bf16.gmra.mxu0 %v7792
    %v8070 = vpop.f32.mrf.mxu0
    %v8071 = vadd.f32 %v7526, %v8070
    %v8072 = vpop.f32.mrf.mxu0
    %v8073 = vpop.f32.mrf.mxu0
    %v8074 = vadd.f32 %v7526, %v8073
    %v8075 = vpop.f32.mrf.mxu0
    %8076 = vmatprep.mubr.bf16.mxu0 0
    %8077 = vmatmul.mubr.bf16.gmra.mxu0 %v7795
    %v8078 = vpop.f32.mrf.mxu0
    %v8079 = vadd.f32 %v7526, %v8078
    %v8080 = vpop.f32.mrf.mxu0
    %v8081 = vpop.f32.mrf.mxu0
    %v8082 = vadd.f32 %v7526, %v8081
    %v8083 = vpop.f32.mrf.mxu0
    %8084 = vmatprep.mubr.bf16.mxu0 0
    %8085 = vmatmul.mubr.bf16.gmra.mxu0 %v7798
    %v8086 = vpop.f32.mrf.mxu0
    %v8087 = vadd.f32 %v7526, %v8086
    %v8088 = vpop.f32.mrf.mxu0
    %v8089 = vpop.f32.mrf.mxu0
    %v8090 = vadd.f32 %v7526, %v8089
    %v8091 = vpop.f32.mrf.mxu0
    %8092 = vdwg.mxu0
    %v8093 = vmax.f32 %v7839, 0.0
    %v8094 = vmax.f32 %v7842, 0.0
    %v8095 = vmax.f32 %v7847, 0.0
    %v8096 = vmax.f32 %v7850, 0.0
    %v8097 = vmax.f32 %v7855, 0.0
    %v8098 = vmax.f32 %v7858, 0.0
    %v8099 = vmax.f32 %v7863, 0.0
    %v8100 = vmax.f32 %v7866, 0.0
    %v8101 = vmax.f32 %v7871, 0.0
    %v8102 = vmax.f32 %v7874, 0.0
    %v8103 = vmax.f32 %v7879, 0.0
    %v8104 = vmax.f32 %v7882, 0.0
    %v8105 = vmax.f32 %v7887, 0.0
    %v8106 = vmax.f32 %v7890, 0.0
    %v8107 = vmax.f32 %v7895, 0.0
    %v8108 = vmax.f32 %v7898, 0.0
    %v8109 = vmax.f32 %v7903, 0.0
    %v8110 = vmax.f32 %v7906, 0.0
    %v8111 = vmax.f32 %v7911, 0.0
    %v8112 = vmax.f32 %v7914, 0.0
    %v8113 = vmax.f32 %v7919, 0.0
    %v8114 = vmax.f32 %v7922, 0.0
    %v8115 = vmax.f32 %v7927, 0.0
    %v8116 = vmax.f32 %v7930, 0.0
    %v8117 = vmax.f32 %v7935, 0.0
    %v8118 = vmax.f32 %v7938, 0.0
    %v8119 = vmax.f32 %v7943, 0.0
    %v8120 = vmax.f32 %v7946, 0.0
    %v8121 = vmax.f32 %v7951, 0.0
    %v8122 = vmax.f32 %v7954, 0.0
    %v8123 = vmax.f32 %v7959, 0.0
    %v8124 = vmax.f32 %v7962, 0.0
    %v8125 = vmax.f32 %v7967, 0.0
    %v8126 = vmax.f32 %v7970, 0.0
    %v8127 = vmax.f32 %v7975, 0.0
    %v8128 = vmax.f32 %v7978, 0.0
    %v8129 = vmax.f32 %v7983, 0.0
    %v8130 = vmax.f32 %v7986, 0.0
    %v8131 = vmax.f32 %v7991, 0.0
    %v8132 = vmax.f32 %v7994, 0.0
    %v8133 = vmax.f32 %v7999, 0.0
    %v8134 = vmax.f32 %v8002, 0.0
    %v8135 = vmax.f32 %v8007, 0.0
    %v8136 = vmax.f32 %v8010, 0.0
    %v8137 = vmax.f32 %v8015, 0.0
    %v8138 = vmax.f32 %v8018, 0.0
    %v8139 = vmax.f32 %v8023, 0.0
    %v8140 = vmax.f32 %v8026, 0.0
    %v8141 = vmax.f32 %v8031, 0.0
    %v8142 = vmax.f32 %v8034, 0.0
    %v8143 = vmax.f32 %v8039, 0.0
    %v8144 = vmax.f32 %v8042, 0.0
    %v8145 = vmax.f32 %v8047, 0.0
    %v8146 = vmax.f32 %v8050, 0.0
    %v8147 = vmax.f32 %v8055, 0.0
    %v8148 = vmax.f32 %v8058, 0.0
    %v8149 = vmax.f32 %v8063, 0.0
    %v8150 = vmax.f32 %v8066, 0.0
    %v8151 = vmax.f32 %v8071, 0.0
    %v8152 = vmax.f32 %v8074, 0.0
    %v8153 = vmax.f32 %v8079, 0.0
    %v8154 = vmax.f32 %v8082, 0.0
    %v8155 = vmax.f32 %v8087, 0.0
    %v8156 = vmax.f32 %v8090, 0.0
    %8157 = vst [vmem:[#allocation4] sm:$0xff] %v8093
    %8158 = vst [vmem:[#allocation4 + $0x8] sm:$0xff] %v8094
    %8159 = vst [vmem:[#allocation4 + $0x10] sm:$0xff] %v8095
    %8160 = vst [vmem:[#allocation4 + $0x18] sm:$0xff] %v8096
    %8161 = vst [vmem:[#allocation4 + $0x20] sm:$0xff] %v8097
    %8162 = vst [vmem:[#allocation4 + $0x28] sm:$0xff] %v8098
    %8163 = vst [vmem:[#allocation4 + $0x30] sm:$0xff] %v8099
    %8164 = vst [vmem:[#allocation4 + $0x38] sm:$0xff] %v8100
    %8165 = vst [vmem:[#allocation4 + $0x40] sm:$0xff] %v8101
    %8166 = vst [vmem:[#allocation4 + $0x48] sm:$0xff] %v8102
    %8167 = vst [vmem:[#allocation4 + $0x50] sm:$0xff] %v8103
    %8168 = vst [vmem:[#allocation4 + $0x58] sm:$0xff] %v8104
    %8169 = vst [vmem:[#allocation4 + $0x60] sm:$0xff] %v8105
    %8170 = vst [vmem:[#allocation4 + $0x68] sm:$0xff] %v8106
    %8171 = vst [vmem:[#allocation4 + $0x70] sm:$0xff] %v8107
    %8172 = vst [vmem:[#allocation4 + $0x78] sm:$0xff] %v8108
    %8173 = vst [vmem:[#allocation4 + $0x80] sm:$0xff] %v8109
    %8174 = vst [vmem:[#allocation4 + $0x88] sm:$0xff] %v8110
    %8175 = vst [vmem:[#allocation4 + $0x90] sm:$0xff] %v8111
    %8176 = vst [vmem:[#allocation4 + $0x98] sm:$0xff] %v8112
    %8177 = vst [vmem:[#allocation4 + $0xa0] sm:$0xff] %v8113
    %8178 = vst [vmem:[#allocation4 + $0xa8] sm:$0xff] %v8114
    %8179 = vst [vmem:[#allocation4 + $0xb0] sm:$0xff] %v8115
    %8180 = vst [vmem:[#allocation4 + $0xb8] sm:$0xff] %v8116
    %8181 = vst [vmem:[#allocation4 + $0xc0] sm:$0xff] %v8117
    %8182 = vst [vmem:[#allocation4 + $0xc8] sm:$0xff] %v8118
    %8183 = vst [vmem:[#allocation4 + $0xd0] sm:$0xff] %v8119
    %8184 = vst [vmem:[#allocation4 + $0xd8] sm:$0xff] %v8120
    %8185 = vst [vmem:[#allocation4 + $0xe0] sm:$0xff] %v8121
    %8186 = vst [vmem:[#allocation4 + $0xe8] sm:$0xff] %v8122
    %8187 = vst [vmem:[#allocation4 + $0xf0] sm:$0xff] %v8123
    %8188 = vst [vmem:[#allocation4 + $0xf8] sm:$0xff] %v8124
    %8189 = vst [vmem:[#allocation4 + $0x100] sm:$0xff] %v8125
    %8190 = vst [vmem:[#allocation4 + $0x108] sm:$0xff] %v8126
    %8191 = vst [vmem:[#allocation4 + $0x110] sm:$0xff] %v8127
    %8192 = vst [vmem:[#allocation4 + $0x118] sm:$0xff] %v8128
    %8193 = vst [vmem:[#allocation4 + $0x120] sm:$0xff] %v8129
    %8194 = vst [vmem:[#allocation4 + $0x128] sm:$0xff] %v8130
    %8195 = vst [vmem:[#allocation4 + $0x130] sm:$0xff] %v8131
    %8196 = vst [vmem:[#allocation4 + $0x138] sm:$0xff] %v8132
    %8197 = vst [vmem:[#allocation4 + $0x140] sm:$0xff] %v8133
    %8198 = vst [vmem:[#allocation4 + $0x148] sm:$0xff] %v8134
    %8199 = vst [vmem:[#allocation4 + $0x150] sm:$0xff] %v8135
    %8200 = vst [vmem:[#allocation4 + $0x158] sm:$0xff] %v8136
    %8201 = vst [vmem:[#allocation4 + $0x160] sm:$0xff] %v8137
    %8202 = vst [vmem:[#allocation4 + $0x168] sm:$0xff] %v8138
    %8203 = vst [vmem:[#allocation4 + $0x170] sm:$0xff] %v8139
    %8204 = vst [vmem:[#allocation4 + $0x178] sm:$0xff] %v8140
    %8205 = vst [vmem:[#allocation4 + $0x180] sm:$0xff] %v8141
    %8206 = vst [vmem:[#allocation4 + $0x188] sm:$0xff] %v8142
    %8207 = vst [vmem:[#allocation4 + $0x190] sm:$0xff] %v8143
    %8208 = vst [vmem:[#allocation4 + $0x198] sm:$0xff] %v8144
    %8209 = vst [vmem:[#allocation4 + $0x1a0] sm:$0xff] %v8145
    %8210 = vst [vmem:[#allocation4 + $0x1a8] sm:$0xff] %v8146
    %8211 = vst [vmem:[#allocation4 + $0x1b0] sm:$0xff] %v8147
    %8212 = vst [vmem:[#allocation4 + $0x1b8] sm:$0xff] %v8148
    %8213 = vst [vmem:[#allocation4 + $0x1c0] sm:$0xff] %v8149
    %8214 = vst [vmem:[#allocation4 + $0x1c8] sm:$0xff] %v8150
    %8215 = vst [vmem:[#allocation4 + $0x1d0] sm:$0xff] %v8151
    %8216 = vst [vmem:[#allocation4 + $0x1d8] sm:$0xff] %v8152
    %8217 = vst [vmem:[#allocation4 + $0x1e0] sm:$0xff] %v8153
    %8218 = vst [vmem:[#allocation4 + $0x1e8] sm:$0xff] %v8154
    %8219 = vst [vmem:[#allocation4 + $0x1f0] sm:$0xff] %v8155
    %8220 = vst [vmem:[#allocation4 + $0x1f8] sm:$0xff] %v8156
    // Predicated region
    $region18: #{tpu_custom_call.1} parent=1 // pred_check
      _
    $region19: #{tpu_custom_call.1} parent=1 // pred_check_branch
      %8222 = sbr.rel (0) target = $region21
    $region20: #{tpu_custom_call.1} parent=1 // pred_region
      %s8224 = ssub.s32 8192, 8192
      %8225 = vsyncadd [#allocation5], %s8224
      %s8226 = sshll.u32 [#allocation4], 4
      %s8227 = int_to_ptr.vmem [resolvable:$true] %s8226
      %8232 = dma.vmem_to_hbm [thread:$0]  %s8227, 8192, %s3, [#allocation5], 128, 128, 8
    $region21: #{tpu_custom_call.1} parent=1 // pred_fallthru
      _
    // Predicated region
    $region22: #{tpu_custom_call.1} parent=1 // pred_check
      _
    $region23: #{tpu_custom_call.1} parent=1 // pred_check_branch
      %8234 = sbr.rel (0) target = $region25
    $region24: #{tpu_custom_call.1} parent=1 // pred_region
      %8235 = dma.done [#allocation5], 8192
    $region25: #{tpu_custom_call.1} parent=1 // pred_fallthru
      _
    %8236 = vsyncpa [#allocation5], 1

</llo_original>
